<compile_context>
chip_gen: v7x
topology: tpu7x:2x2x1
jax: 0.10.0
libtpu: 0.0.40
codegen_flags: <defaults>
</compile_context>

<pallas_src>
import math

import jax
import jax.numpy as jnp
from jax.experimental import pallas as pl
from jax.experimental.pallas import tpu as pltpu

# ---------------- synthetic tiny-BERT config ----------------
VOCAB = 100
PAD_ID = 0
MAX_POS = 64
HIDDEN = 32
NUM_HEADS = 2
HEAD_DIM = HIDDEN // NUM_HEADS
INTERMEDIATE = 64
NUM_LAYERS = 2
LN_EPS = 1e-12
CAN_NUM = 7
NUM_SEQ = 1 + CAN_NUM        # per batch element: [contents, cand_0 .. cand_6]


def _layer_norm(x, g, b):
    mu = jnp.mean(x, axis=-1, keepdims=True)
    var = jnp.mean((x - mu) ** 2, axis=-1, keepdims=True)
    return (x - mu) * jax.lax.rsqrt(var + LN_EPS) * g + b


# ======================= fused Pallas kernel =======================
def _retriever_kernel(
    x_ref,          # [BB, ROWS, H] f32   word+pos embeddings (pre emb-LN), ROWS = NUM_SEQ*L
    biask_ref,      # [BB, 1, ROWS] f32   per-key pad bias ((mask - 1) * 1e9)
    sel_ref,        # [BB, NUM_SEQ, ROWS] f32  row0 = [MASK] one-hot, rows 1..7 = candidate CLS
    blockdiag_ref,  # [ROWS, ROWS] f32    block-diagonal sequence mask (0 / -1e9), grid-invariant
    embg_ref, embb_ref,            # [1, H] f32
    wqkv_ref, bqkv_ref,            # [NL, H, 3H] bf16, [NL, 1, 3H] f32
    wo_ref, bo_ref,                # [NL, H, H] bf16,  [NL, 1, H] f32
    ln1g_ref, ln1b_ref,            # [NL, 1, H] f32
    w1_ref, b1_ref,                # [NL, H, I] bf16,  [NL, 1, I] f32
    w2_ref, b2_ref,                # [NL, I, H] bf16,  [NL, 1, H] f32
    ln2g_ref, ln2b_ref,            # [NL, 1, H] f32
    pw_ref, pb_ref,                # [H, H] f32, [1, H] f32
    out_ref,        # [1, BB, CAN_NUM]
):
    bb, rows, hid = x_ref.shape
    m = bb * rows
    scale = 1.0 / math.sqrt(HEAD_DIM)
    bf16 = jnp.bfloat16

    # --- embeddings -> LayerNorm over all BB*NUM_SEQ*L rows (f32) ---
    x2 = _layer_norm(x_ref[...].reshape(m, hid), embg_ref[...], embb_ref[...])

    # --- attention bias: hoisted ONCE, reused by all layers/heads ---
    mask_bias = blockdiag_ref[...][None, :, :] + biask_ref[...]      # [bb, rows, rows]

    # --- transformer layers (unrolled); activations stay VMEM/vreg resident ---
    for l in range(NUM_LAYERS):
        # fused QKV across q/k/v and heads: one [m, H] @ [H, 3H] MXU matmul
        qkv = jnp.dot(x2.astype(bf16), wqkv_ref[l],
                      preferred_element_type=jnp.float32) + bqkv_ref[l]
        ctx_heads = []
        for h in range(NUM_HEADS):
            q0 = h * HEAD_DIM
            qh = qkv[:, q0:q0 + HEAD_DIM].reshape(bb, rows, HEAD_DIM)
            kh = qkv[:, HIDDEN + q0:HIDDEN + q0 + HEAD_DIM].reshape(bb, rows, HEAD_DIM)
            vh = qkv[:, 2 * HIDDEN + q0:2 * HIDDEN + q0 + HEAD_DIM].reshape(bb, rows, HEAD_DIM)
            # block-diagonal attention over the flat 128-row tile of each item
            s = jnp.einsum("bqd,bkd->bqk", qh.astype(bf16), kh.astype(bf16),
                           preferred_element_type=jnp.float32) * scale + mask_bias
            s = s - jnp.max(s, axis=-1, keepdims=True)
            p = jnp.exp(s)
            p = p * pl.reciprocal(jnp.sum(p, axis=-1, keepdims=True), approx=True)
            ctx = jnp.einsum("bqk,bkd->bqd", p.astype(bf16), vh.astype(bf16),
                             preferred_element_type=jnp.float32)
            ctx_heads.append(ctx.reshape(m, HEAD_DIM))
        # fused output projection across heads: one [m, H] @ [H, H] matmul
        ctx_all = jnp.concatenate(ctx_heads, axis=-1)
        attn = jnp.dot(ctx_all.astype(bf16), wo_ref[l],
                       preferred_element_type=jnp.float32) + bo_ref[l]
        x2 = _layer_norm(x2 + attn, ln1g_ref[l], ln1b_ref[l])

        ff = jnp.dot(x2.astype(bf16), w1_ref[l],
                     preferred_element_type=jnp.float32) + b1_ref[l]
        ff = jax.nn.gelu(ff)            # tanh approximation (f32, EUP)
        ff = jnp.dot(ff.astype(bf16), w2_ref[l],
                     preferred_element_type=jnp.float32) + b2_ref[l]
        x2 = _layer_norm(x2 + ff, ln2g_ref[l], ln2b_ref[l])

    # --- single selector matmul: [MASK]-gather (row 0) + 7 candidate CLS rows ---
    x3 = x2.reshape(bb, rows, hid)
    rep = jnp.einsum("bsr,brh->bsh", sel_ref[...], x3,
                     preferred_element_type=jnp.float32)             # [bb, NS, H]
    # pooler tanh(CLS @ W_p + b_p); computed on all NS rows (row 0 discarded)
    pooled_all = jnp.tanh(
        jnp.dot(rep.reshape(bb * NUM_SEQ, hid), pw_ref[...],
                preferred_element_type=jnp.float32) + pb_ref[...]
    ).reshape(bb, NUM_SEQ, hid)
    gathered = rep[:, 0:1, :]                                        # contents rep at [MASK]
    pooled = pooled_all[:, 1:, :]                                    # candidate pooler outputs
    # dot_product = candidate_rep . contents_rep / sqrt(H) (dropout = identity)
    scores = jnp.sum(pooled * gathered, axis=-1) * (1.0 / math.sqrt(hid))   # [bb, 7]
    out_ref[0] = scores.astype(out_ref.dtype)


# ======================= params & input packing =======================
def init_params(key):
    def nrm(k, shape, scale=0.02):
        return scale * jax.random.normal(k, shape, dtype=jnp.float32)

    ks = jax.random.split(key, 7)
    return {
        "word_emb": nrm(ks[0], (VOCAB, HIDDEN)),
        "pos_emb": nrm(ks[1], (MAX_POS, HIDDEN)),
        "emb_ln_g": jnp.ones((1, HIDDEN), jnp.float32),
        "emb_ln_b": jnp.zeros((1, HIDDEN), jnp.float32),
        # QKV fused across q/k/v AND heads: columns = [q_h0|q_h1|k_h0|k_h1|v_h0|v_h1]
        "wqkv": nrm(ks[2], (NUM_LAYERS, HIDDEN, 3 * HIDDEN)).astype(jnp.bfloat16),
        "bqkv": jnp.zeros((NUM_LAYERS, 1, 3 * HIDDEN), jnp.float32),
        # output projection with head-concatenated rows [ctx_h0; ctx_h1]
        "wo": nrm(ks[3], (NUM_LAYERS, HIDDEN, HIDDEN)).astype(jnp.bfloat16),
        "bo": jnp.zeros((NUM_LAYERS, 1, HIDDEN), jnp.float32),
        "ln1_g": jnp.ones((NUM_LAYERS, 1, HIDDEN), jnp.float32),
        "ln1_b": jnp.zeros((NUM_LAYERS, 1, HIDDEN), jnp.float32),
        "w1": nrm(ks[4], (NUM_LAYERS, HIDDEN, INTERMEDIATE)).astype(jnp.bfloat16),
        "b1": jnp.zeros((NUM_LAYERS, 1, INTERMEDIATE), jnp.float32),
        "w2": nrm(ks[5], (NUM_LAYERS, INTERMEDIATE, HIDDEN)).astype(jnp.bfloat16),
        "b2": jnp.zeros((NUM_LAYERS, 1, HIDDEN), jnp.float32),
        "ln2_g": jnp.ones((NUM_LAYERS, 1, HIDDEN), jnp.float32),
        "ln2_b": jnp.zeros((NUM_LAYERS, 1, HIDDEN), jnp.float32),
        "pooler_w": nrm(ks[6], (HIDDEN, HIDDEN)),
        "pooler_b": jnp.zeros((1, HIDDEN), jnp.float32),
    }


_WEIGHT_NAMES = ("emb_ln_g", "emb_ln_b", "wqkv", "bqkv", "wo", "bo",
                 "ln1_g", "ln1_b", "w1", "b1", "w2", "b2", "ln2_g", "ln2_b",
                 "pooler_w", "pooler_b")


def _prepare_inputs(params, contents, candidate_idioms, mask_locations):
    bsz, can_num, idiom_len = candidate_idioms.shape
    L = contents.shape[1]
    assert can_num == CAN_NUM and idiom_len <= L and L <= MAX_POS
    rows = NUM_SEQ * L

    # Pad candidate token ids to the contents length; the attention mask makes
    # the extra PAD positions inert, so pooled/contents outputs are unchanged.
    cand_padded = jnp.pad(candidate_idioms,
                          ((0, 0), (0, 0), (0, L - idiom_len)),
                          constant_values=PAD_ID)
    all_ids = jnp.concatenate([contents[:, None, :], cand_padded], axis=1)   # [B, NS, L]

    mask = (all_ids != PAD_ID).astype(jnp.float32)                           # get_mask
    biask = ((mask - 1.0) * 1e9).reshape(bsz, 1, rows)                       # per-key bias

    # block-diagonal sequence mask (grid-invariant, shipped once)
    seq_id = jnp.arange(rows, dtype=jnp.int32) // L
    blockdiag = jnp.where(seq_id[:, None] == seq_id[None, :],
                          0.0, -1e9).astype(jnp.float32)                     # [rows, rows]

    # fused selector: row 0 = [MASK] one-hot (contents seq), rows 1..7 = CLS rows
    pos = jnp.arange(rows, dtype=jnp.int32)
    cls_pos = jnp.arange(1, NUM_SEQ, dtype=jnp.int32) * L                    # [7]
    target = jnp.concatenate(
        [mask_locations[:, None].astype(jnp.int32),
         jnp.broadcast_to(cls_pos[None, :], (bsz, CAN_NUM))], axis=1)        # [B, NS]
    sel = (pos[None, None, :] == target[:, :, None]).astype(jnp.float32)     # [B, NS, rows]

    # token-id embedding lookup (gather) stays in JAX; everything else is fused
    x_emb = params["word_emb"][all_ids] + params["pos_emb"][:L][None, None, :, :]
    x_emb = x_emb.reshape(bsz, rows, HIDDEN)                                 # lane-dense, flat
    return x_emb, biask, sel, blockdiag


# ======================= pallas_call wrapper =======================
@jax.jit
def retriever_forward(params, contents, candidate_idioms, mask_locations):
    """contents [B,Lc] i32, candidate_idioms [B,7,Li] i32, mask_locations [B] i32
       -> dot_product [B, 7] f32  (PyTorch Retriever.forward semantics, eval mode)."""
    bsz, L = contents.shape
    rows = NUM_SEQ * L
    x_emb, biask, sel, blockdiag = _prepare_inputs(params, contents,
                                                   candidate_idioms, mask_locations)

    # Batch blocking: amortize the ~600-cycle per-grid-step overhead while keeping
    # >= 2 grid steps so v7x's two TensorCores both get work on the "parallel" axis.
    bb = 1
    for cand in range(min(8, bsz // 2), 0, -1):
        if bsz % cand == 0:
            bb = cand
            break
    num_blocks = bsz // bb

    weights = [params[n] for n in _WEIGHT_NAMES]

    def _rep_spec(arr):
        zeros = (0,) * arr.ndim
        return pl.BlockSpec(arr.shape, lambda i, _z=zeros: _z)   # grid-invariant weights

    in_specs = [
        pl.BlockSpec((bb, rows, HIDDEN), lambda i: (i, 0, 0)),
        pl.BlockSpec((bb, 1, rows), lambda i: (i, 0, 0)),
        pl.BlockSpec((bb, NUM_SEQ, rows), lambda i: (i, 0, 0)),
        pl.BlockSpec((rows, rows), lambda i: (0, 0)),
    ] + [_rep_spec(w) for w in weights]

    out = pl.pallas_call(
        _retriever_kernel,
        out_shape=jax.ShapeDtypeStruct((num_blocks, bb, CAN_NUM), jnp.float32),
        grid=(num_blocks,),
        in_specs=in_specs,
        out_specs=pl.BlockSpec((1, bb, CAN_NUM), lambda i: (i, 0, 0)),
        compiler_params=pltpu.CompilerParams(
            dimension_semantics=("parallel",)),   # shard batch blocks over TCs
    )(x_emb, biask, sel, blockdiag, *weights)
    return out.reshape(bsz, CAN_NUM)


# ======================= pure-JAX reference (same math) =======================
@jax.jit
def reference_forward(params, contents, candidate_idioms, mask_locations):
    x, biask, sel, blockdiag = _prepare_inputs(params, contents,
                                               candidate_idioms, mask_locations)
    bf16 = jnp.bfloat16
    scale = 1.0 / math.sqrt(HEAD_DIM)
    mask_bias = blockdiag[None, :, :] + biask
    x = _layer_norm(x, params["emb_ln_g"], params["emb_ln_b"])
    for l in range(NUM_LAYERS):
        qkv = jnp.einsum("brh,hc->brc", x.astype(bf16), params["wqkv"][l],
                         preferred_element_type=jnp.float32) + params["bqkv"][l]
        ctx_heads = []
        for h in range(NUM_HEADS):
            q0 = h * HEAD_DIM
            qh = qkv[..., q0:q0 + HEAD_DIM]
            kh = qkv[..., HIDDEN + q0:HIDDEN + q0 + HEAD_DIM]
            vh = qkv[..., 2 * HIDDEN + q0:2 * HIDDEN + q0 + HEAD_DIM]
            s = jnp.einsum("bqd,bkd->bqk", qh.astype(bf16), kh.astype(bf16),
                           preferred_element_type=jnp.float32) * scale + mask_bias
            p = jax.nn.softmax(s, axis=-1)
            ctx_heads.append(jnp.einsum("bqk,bkd->bqd", p.astype(bf16), vh.astype(bf16),
                                        preferred_element_type=jnp.float32))
        ctx_all = jnp.concatenate(ctx_heads, axis=-1)
        attn = jnp.einsum("brh,hc->brc", ctx_all.astype(bf16), params["wo"][l],
                          preferred_element_type=jnp.float32) + params["bo"][l]
        x = _layer_norm(x + attn, params["ln1_g"][l], params["ln1_b"][l])
        ff = jnp.einsum("brh,hc->brc", x.astype(bf16), params["w1"][l],
                        preferred_element_type=jnp.float32) + params["b1"][l]
        ff = jax.nn.gelu(ff)
        ff = jnp.einsum("brh,hc->brc", ff.astype(bf16), params["w2"][l],
                        preferred_element_type=jnp.float32) + params["b2"][l]
        x = _layer_norm(x + ff, params["ln2_g"][l], params["ln2_b"][l])
    rep = jnp.einsum("bsr,brh->bsh", sel, x, preferred_element_type=jnp.float32)
    gathered = rep[:, 0:1, :]
    pooled = jnp.tanh(jnp.einsum("bch,hk->bck", rep[:, 1:, :], params["pooler_w"],
                                 preferred_element_type=jnp.float32) + params["pooler_b"])
    return jnp.sum(pooled * gathered, axis=-1) / math.sqrt(HIDDEN)


if __name__ == "__main__":
    key = jax.random.PRNGKey(0)
    pkey, k1, k2 = jax.random.split(key, 3)
    params = init_params(pkey)

    bsz, len_content, can_num, idiom_len = 2, 16, CAN_NUM, 8
    contents = jax.random.randint(k1, (bsz, len_content), 1, VOCAB, dtype=jnp.int32)
    contents = contents.at[:, 13:].set(PAD_ID)                  # trailing padding
    candidate_idioms = jax.random.randint(
        k2, (bsz, can_num, idiom_len), 1, VOCAB, dtype=jnp.int32)
    candidate_idioms = candidate_idioms.at[:, :, 6:].set(PAD_ID)
    mask_locations = jnp.array([3, 7], dtype=jnp.int32)

    out = jax.block_until_ready(
        retriever_forward(params, contents, candidate_idioms, mask_locations))
    assert out.shape == (bsz, can_num) and out.dtype == jnp.float32
    assert bool(jnp.all(jnp.isfinite(out)))

    ref = jax.block_until_ready(
        reference_forward(params, contents, candidate_idioms, mask_locations))
    assert bool(jnp.allclose(out, ref, atol=5e-3, rtol=5e-3)), (out, ref)

    print("KERNEL_OK")
</pallas_src>

<mosaic_0001>
module attributes {stable_mosaic.version = 11 : i64} {
  func.func @_retriever_kernel(%arg0: i32, %arg1: memref<1x128x32xf32, #tpu.memory_space<vmem>>, %arg2: memref<1x1x128xf32, #tpu.memory_space<vmem>>, %arg3: memref<1x8x128xf32, #tpu.memory_space<vmem>>, %arg4: memref<128x128xf32, #tpu.memory_space<vmem>>, %arg5: memref<1x32xf32, #tpu.memory_space<vmem>>, %arg6: memref<1x32xf32, #tpu.memory_space<vmem>>, %arg7: memref<2x32x96xbf16, #tpu.memory_space<vmem>>, %arg8: memref<2x1x96xf32, #tpu.memory_space<vmem>>, %arg9: memref<2x32x32xbf16, #tpu.memory_space<vmem>>, %arg10: memref<2x1x32xf32, #tpu.memory_space<vmem>>, %arg11: memref<2x1x32xf32, #tpu.memory_space<vmem>>, %arg12: memref<2x1x32xf32, #tpu.memory_space<vmem>>, %arg13: memref<2x32x64xbf16, #tpu.memory_space<vmem>>, %arg14: memref<2x1x64xf32, #tpu.memory_space<vmem>>, %arg15: memref<2x64x32xbf16, #tpu.memory_space<vmem>>, %arg16: memref<2x1x32xf32, #tpu.memory_space<vmem>>, %arg17: memref<2x1x32xf32, #tpu.memory_space<vmem>>, %arg18: memref<2x1x32xf32, #tpu.memory_space<vmem>>, %arg19: memref<32x32xf32, #tpu.memory_space<vmem>>, %arg20: memref<1x32xf32, #tpu.memory_space<vmem>>, %arg21: memref<1x1x7xf32, #tpu.memory_space<vmem>>) attributes {dimension_semantics = [#tpu.dimension_semantics<parallel>], iteration_bounds = array<i64: 2>, scalar_prefetch = 0 : i64, scratch_operands = 0 : i64, tpu.core_type = #tpu.core_type<tc>, window_params = [{transform_indices = @transform_0, window_bounds = array<i64: 1, 128, 32>}, {transform_indices = @transform_1, window_bounds = array<i64: 1, 1, 128>}, {transform_indices = @transform_2, window_bounds = array<i64: 1, 8, 128>}, {pipeline_mode = #tpu.pipeline_mode<synchronous>, transform_indices = @transform_3, window_bounds = array<i64: 128, 128>}, {pipeline_mode = #tpu.pipeline_mode<synchronous>, transform_indices = @transform_4, window_bounds = array<i64: 1, 32>}, {pipeline_mode = #tpu.pipeline_mode<synchronous>, transform_indices = @transform_5, window_bounds = array<i64: 1, 32>}, {pipeline_mode = #tpu.pipeline_mode<synchronous>, transform_indices = @transform_6, window_bounds = array<i64: 2, 32, 96>}, {pipeline_mode = #tpu.pipeline_mode<synchronous>, transform_indices = @transform_7, window_bounds = array<i64: 2, 1, 96>}, {pipeline_mode = #tpu.pipeline_mode<synchronous>, transform_indices = @transform_8, window_bounds = array<i64: 2, 32, 32>}, {pipeline_mode = #tpu.pipeline_mode<synchronous>, transform_indices = @transform_9, window_bounds = array<i64: 2, 1, 32>}, {pipeline_mode = #tpu.pipeline_mode<synchronous>, transform_indices = @transform_10, window_bounds = array<i64: 2, 1, 32>}, {pipeline_mode = #tpu.pipeline_mode<synchronous>, transform_indices = @transform_11, window_bounds = array<i64: 2, 1, 32>}, {pipeline_mode = #tpu.pipeline_mode<synchronous>, transform_indices = @transform_12, window_bounds = array<i64: 2, 32, 64>}, {pipeline_mode = #tpu.pipeline_mode<synchronous>, transform_indices = @transform_13, window_bounds = array<i64: 2, 1, 64>}, {pipeline_mode = #tpu.pipeline_mode<synchronous>, transform_indices = @transform_14, window_bounds = array<i64: 2, 64, 32>}, {pipeline_mode = #tpu.pipeline_mode<synchronous>, transform_indices = @transform_15, window_bounds = array<i64: 2, 1, 32>}, {pipeline_mode = #tpu.pipeline_mode<synchronous>, transform_indices = @transform_16, window_bounds = array<i64: 2, 1, 32>}, {pipeline_mode = #tpu.pipeline_mode<synchronous>, transform_indices = @transform_17, window_bounds = array<i64: 2, 1, 32>}, {pipeline_mode = #tpu.pipeline_mode<synchronous>, transform_indices = @transform_18, window_bounds = array<i64: 32, 32>}, {pipeline_mode = #tpu.pipeline_mode<synchronous>, transform_indices = @transform_19, window_bounds = array<i64: 1, 32>}, {transform_indices = @transform_20, window_bounds = array<i64: 1, 1, 7>}]} {
    %c0 = arith.constant 0 : index
    %c0_0 = arith.constant 0 : index
    %c0_1 = arith.constant 0 : index
    %0 = vector.load %arg1[%c0, %c0_0, %c0_1] : memref<1x128x32xf32, #tpu.memory_space<vmem>>, vector<1x128x32xf32>
    %1 = vector.shape_cast %0 : vector<1x128x32xf32> to vector<128x32xf32>
    %c0_2 = arith.constant 0 : index
    %c0_3 = arith.constant 0 : index
    %2 = vector.load %arg5[%c0_2, %c0_3] : memref<1x32xf32, #tpu.memory_space<vmem>>, vector<1x32xf32>
    %c0_4 = arith.constant 0 : index
    %c0_5 = arith.constant 0 : index
    %3 = vector.load %arg6[%c0_4, %c0_5] : memref<1x32xf32, #tpu.memory_space<vmem>>, vector<1x32xf32>
    %cst = arith.constant dense<0.000000e+00> : vector<128xf32>
    %4 = vector.multi_reduction <add>, %1, %cst [1] : vector<128x32xf32> to vector<128xf32>
    %5 = vector.shape_cast %4 : vector<128xf32> to vector<128x1xf32>
    %cst_6 = arith.constant 3.200000e+01 : f32
    %6 = vector.broadcast %cst_6 : f32 to vector<128x1xf32>
    %7 = arith.divf %5, %6 : vector<128x1xf32>
    %8 = vector.broadcast %7 : vector<128x1xf32> to vector<128x32xf32>
    %9 = arith.subf %1, %8 : vector<128x32xf32>
    %10 = arith.mulf %9, %9 : vector<128x32xf32>
    %cst_7 = arith.constant dense<0.000000e+00> : vector<128xf32>
    %11 = vector.multi_reduction <add>, %10, %cst_7 [1] : vector<128x32xf32> to vector<128xf32>
    %12 = vector.shape_cast %11 : vector<128xf32> to vector<128x1xf32>
    %cst_8 = arith.constant 3.200000e+01 : f32
    %13 = vector.broadcast %cst_8 : f32 to vector<128x1xf32>
    %14 = arith.divf %12, %13 : vector<128x1xf32>
    %15 = vector.broadcast %7 : vector<128x1xf32> to vector<128x32xf32>
    %16 = arith.subf %1, %15 : vector<128x32xf32>
    %cst_9 = arith.constant 9.99999996E-13 : f32
    %17 = vector.broadcast %cst_9 : f32 to vector<128x1xf32>
    %18 = arith.addf %14, %17 : vector<128x1xf32>
    %19 = math.rsqrt %18 : vector<128x1xf32>
    %20 = vector.broadcast %19 : vector<128x1xf32> to vector<128x32xf32>
    %21 = arith.mulf %16, %20 : vector<128x32xf32>
    %22 = vector.broadcast %2 : vector<1x32xf32> to vector<128x32xf32>
    %23 = arith.mulf %21, %22 : vector<128x32xf32>
    %24 = vector.broadcast %3 : vector<1x32xf32> to vector<128x32xf32>
    %25 = arith.addf %23, %24 : vector<128x32xf32>
    %c0_10 = arith.constant 0 : index
    %c0_11 = arith.constant 0 : index
    %26 = vector.load %arg4[%c0_10, %c0_11] : memref<128x128xf32, #tpu.memory_space<vmem>>, vector<128x128xf32>
    %27 = vector.shape_cast %26 : vector<128x128xf32> to vector<1x128x128xf32>
    %c0_12 = arith.constant 0 : index
    %c0_13 = arith.constant 0 : index
    %c0_14 = arith.constant 0 : index
    %28 = vector.load %arg2[%c0_12, %c0_13, %c0_14] : memref<1x1x128xf32, #tpu.memory_space<vmem>>, vector<1x1x128xf32>
    %29 = vector.broadcast %28 : vector<1x1x128xf32> to vector<1x128x128xf32>
    %30 = arith.addf %27, %29 : vector<1x128x128xf32>
    %31 = arith.truncf %25 : vector<128x32xf32> to vector<128x32xbf16>
    %c0_15 = arith.constant 0 : index
    %c0_16 = arith.constant 0 : index
    %c0_17 = arith.constant 0 : index
    %32 = vector.load %arg7[%c0_15, %c0_16, %c0_17] : memref<2x32x96xbf16, #tpu.memory_space<vmem>>, vector<1x32x96xbf16>
    %33 = vector.shape_cast %32 : vector<1x32x96xbf16> to vector<32x96xbf16>
    %cst_18 = arith.constant dense<0.000000e+00> : vector<128x96xf32>
    %34 = tpu.matmul %31, %33, %cst_18 {dimension_numbers = #tpu.dot_dimension_numbers<[1], [0], [0], [1], [0, 0, 1, 1], [], []>} : vector<128x32xbf16>, vector<32x96xbf16>, vector<128x96xf32> -> vector<128x96xf32>
    %c0_19 = arith.constant 0 : index
    %c0_20 = arith.constant 0 : index
    %c0_21 = arith.constant 0 : index
    %35 = vector.load %arg8[%c0_19, %c0_20, %c0_21] : memref<2x1x96xf32, #tpu.memory_space<vmem>>, vector<1x1x96xf32>
    %36 = vector.shape_cast %35 : vector<1x1x96xf32> to vector<1x96xf32>
    %37 = vector.broadcast %36 : vector<1x96xf32> to vector<128x96xf32>
    %38 = arith.addf %34, %37 : vector<128x96xf32>
    %39 = vector.extract_strided_slice %38 {offsets = [0, 0], sizes = [128, 16], strides = [1, 1]} : vector<128x96xf32> to vector<128x16xf32>
    %40 = vector.shape_cast %39 : vector<128x16xf32> to vector<1x128x16xf32>
    %41 = vector.extract_strided_slice %38 {offsets = [0, 32], sizes = [128, 16], strides = [1, 1]} : vector<128x96xf32> to vector<128x16xf32>
    %42 = vector.shape_cast %41 : vector<128x16xf32> to vector<1x128x16xf32>
    %43 = vector.extract_strided_slice %38 {offsets = [0, 64], sizes = [128, 16], strides = [1, 1]} : vector<128x96xf32> to vector<128x16xf32>
    %44 = vector.shape_cast %43 : vector<128x16xf32> to vector<1x128x16xf32>
    %45 = arith.truncf %40 : vector<1x128x16xf32> to vector<1x128x16xbf16>
    %46 = arith.truncf %42 : vector<1x128x16xf32> to vector<1x128x16xbf16>
    "tpu.trace_start"() <{level = 10 : i32, message = "bqd,bkd->bqk"}> : () -> ()
    %cst_22 = arith.constant dense<0.000000e+00> : vector<1x128x128xf32>
    %47 = tpu.matmul %45, %46, %cst_22 {dimension_numbers = #tpu.dot_dimension_numbers<[2], [2], [1], [1], [0, 0, 0, 1, 1, 1], [0], [0]>} : vector<1x128x16xbf16>, vector<1x128x16xbf16>, vector<1x128x128xf32> -> vector<1x128x128xf32>
    "tpu.trace_stop"() : () -> ()
    %cst_23 = arith.constant 2.500000e-01 : f32
    %48 = vector.broadcast %cst_23 : f32 to vector<1x128x128xf32>
    %49 = arith.mulf %47, %48 : vector<1x128x128xf32>
    %50 = arith.addf %49, %30 : vector<1x128x128xf32>
    %cst_24 = arith.constant dense<0xFF800000> : vector<1x128xf32>
    %51 = vector.multi_reduction <maximumf>, %50, %cst_24 [2] : vector<1x128x128xf32> to vector<1x128xf32>
    %52 = vector.shape_cast %51 : vector<1x128xf32> to vector<1x128x1xf32>
    %53 = vector.broadcast %52 : vector<1x128x1xf32> to vector<1x128x128xf32>
    %54 = arith.subf %50, %53 : vector<1x128x128xf32>
    %55 = math.exp %54 : vector<1x128x128xf32>
    %cst_25 = arith.constant dense<0.000000e+00> : vector<1x128xf32>
    %56 = vector.multi_reduction <add>, %55, %cst_25 [2] : vector<1x128x128xf32> to vector<1x128xf32>
    %57 = vector.shape_cast %56 : vector<1x128xf32> to vector<1x128x1xf32>
    %58 = tpu.reciprocal %57 {approx = true} : vector<1x128x1xf32> -> vector<1x128x1xf32>
    %59 = vector.broadcast %58 : vector<1x128x1xf32> to vector<1x128x128xf32>
    %60 = arith.mulf %55, %59 : vector<1x128x128xf32>
    %61 = arith.truncf %60 : vector<1x128x128xf32> to vector<1x128x128xbf16>
    %62 = arith.truncf %44 : vector<1x128x16xf32> to vector<1x128x16xbf16>
    "tpu.trace_start"() <{level = 10 : i32, message = "bqk,bkd->bqd"}> : () -> ()
    %cst_26 = arith.constant dense<0.000000e+00> : vector<1x128x16xf32>
    %63 = tpu.matmul %61, %62, %cst_26 {dimension_numbers = #tpu.dot_dimension_numbers<[2], [1], [1], [2], [0, 0, 0, 1, 1, 2], [0], [0]>} : vector<1x128x128xbf16>, vector<1x128x16xbf16>, vector<1x128x16xf32> -> vector<1x128x16xf32>
    "tpu.trace_stop"() : () -> ()
    %64 = vector.shape_cast %63 : vector<1x128x16xf32> to vector<128x16xf32>
    %65 = vector.extract_strided_slice %38 {offsets = [0, 16], sizes = [128, 16], strides = [1, 1]} : vector<128x96xf32> to vector<128x16xf32>
    %66 = vector.shape_cast %65 : vector<128x16xf32> to vector<1x128x16xf32>
    %67 = vector.extract_strided_slice %38 {offsets = [0, 48], sizes = [128, 16], strides = [1, 1]} : vector<128x96xf32> to vector<128x16xf32>
    %68 = vector.shape_cast %67 : vector<128x16xf32> to vector<1x128x16xf32>
    %69 = vector.extract_strided_slice %38 {offsets = [0, 80], sizes = [128, 16], strides = [1, 1]} : vector<128x96xf32> to vector<128x16xf32>
    %70 = vector.shape_cast %69 : vector<128x16xf32> to vector<1x128x16xf32>
    %71 = arith.truncf %66 : vector<1x128x16xf32> to vector<1x128x16xbf16>
    %72 = arith.truncf %68 : vector<1x128x16xf32> to vector<1x128x16xbf16>
    "tpu.trace_start"() <{level = 10 : i32, message = "bqd,bkd->bqk"}> : () -> ()
    %cst_27 = arith.constant dense<0.000000e+00> : vector<1x128x128xf32>
    %73 = tpu.matmul %71, %72, %cst_27 {dimension_numbers = #tpu.dot_dimension_numbers<[2], [2], [1], [1], [0, 0, 0, 1, 1, 1], [0], [0]>} : vector<1x128x16xbf16>, vector<1x128x16xbf16>, vector<1x128x128xf32> -> vector<1x128x128xf32>
    "tpu.trace_stop"() : () -> ()
    %cst_28 = arith.constant 2.500000e-01 : f32
    %74 = vector.broadcast %cst_28 : f32 to vector<1x128x128xf32>
    %75 = arith.mulf %73, %74 : vector<1x128x128xf32>
    %76 = arith.addf %75, %30 : vector<1x128x128xf32>
    %cst_29 = arith.constant dense<0xFF800000> : vector<1x128xf32>
    %77 = vector.multi_reduction <maximumf>, %76, %cst_29 [2] : vector<1x128x128xf32> to vector<1x128xf32>
    %78 = vector.shape_cast %77 : vector<1x128xf32> to vector<1x128x1xf32>
    %79 = vector.broadcast %78 : vector<1x128x1xf32> to vector<1x128x128xf32>
    %80 = arith.subf %76, %79 : vector<1x128x128xf32>
    %81 = math.exp %80 : vector<1x128x128xf32>
    %cst_30 = arith.constant dense<0.000000e+00> : vector<1x128xf32>
    %82 = vector.multi_reduction <add>, %81, %cst_30 [2] : vector<1x128x128xf32> to vector<1x128xf32>
    %83 = vector.shape_cast %82 : vector<1x128xf32> to vector<1x128x1xf32>
    %84 = tpu.reciprocal %83 {approx = true} : vector<1x128x1xf32> -> vector<1x128x1xf32>
    %85 = vector.broadcast %84 : vector<1x128x1xf32> to vector<1x128x128xf32>
    %86 = arith.mulf %81, %85 : vector<1x128x128xf32>
    %87 = arith.truncf %86 : vector<1x128x128xf32> to vector<1x128x128xbf16>
    %88 = arith.truncf %70 : vector<1x128x16xf32> to vector<1x128x16xbf16>
    "tpu.trace_start"() <{level = 10 : i32, message = "bqk,bkd->bqd"}> : () -> ()
    %cst_31 = arith.constant dense<0.000000e+00> : vector<1x128x16xf32>
    %89 = tpu.matmul %87, %88, %cst_31 {dimension_numbers = #tpu.dot_dimension_numbers<[2], [1], [1], [2], [0, 0, 0, 1, 1, 2], [0], [0]>} : vector<1x128x128xbf16>, vector<1x128x16xbf16>, vector<1x128x16xf32> -> vector<1x128x16xf32>
    "tpu.trace_stop"() : () -> ()
    %90 = vector.shape_cast %89 : vector<1x128x16xf32> to vector<128x16xf32>
    %91 = tpu.concatenate %64, %90 in 1 : vector<128x16xf32>, vector<128x16xf32> -> vector<128x32xf32>
    %92 = arith.truncf %91 : vector<128x32xf32> to vector<128x32xbf16>
    %c0_32 = arith.constant 0 : index
    %c0_33 = arith.constant 0 : index
    %c0_34 = arith.constant 0 : index
    %93 = vector.load %arg9[%c0_32, %c0_33, %c0_34] : memref<2x32x32xbf16, #tpu.memory_space<vmem>>, vector<1x32x32xbf16>
    %94 = vector.shape_cast %93 : vector<1x32x32xbf16> to vector<32x32xbf16>
    %cst_35 = arith.constant dense<0.000000e+00> : vector<128x32xf32>
    %95 = tpu.matmul %92, %94, %cst_35 {dimension_numbers = #tpu.dot_dimension_numbers<[1], [0], [0], [1], [0, 0, 1, 1], [], []>} : vector<128x32xbf16>, vector<32x32xbf16>, vector<128x32xf32> -> vector<128x32xf32>
    %c0_36 = arith.constant 0 : index
    %c0_37 = arith.constant 0 : index
    %c0_38 = arith.constant 0 : index
    %96 = vector.load %arg10[%c0_36, %c0_37, %c0_38] : memref<2x1x32xf32, #tpu.memory_space<vmem>>, vector<1x1x32xf32>
    %97 = vector.shape_cast %96 : vector<1x1x32xf32> to vector<1x32xf32>
    %98 = vector.broadcast %97 : vector<1x32xf32> to vector<128x32xf32>
    %99 = arith.addf %95, %98 : vector<128x32xf32>
    %100 = arith.addf %25, %99 : vector<128x32xf32>
    %c0_39 = arith.constant 0 : index
    %c0_40 = arith.constant 0 : index
    %c0_41 = arith.constant 0 : index
    %101 = vector.load %arg11[%c0_39, %c0_40, %c0_41] : memref<2x1x32xf32, #tpu.memory_space<vmem>>, vector<1x1x32xf32>
    %102 = vector.shape_cast %101 : vector<1x1x32xf32> to vector<1x32xf32>
    %c0_42 = arith.constant 0 : index
    %c0_43 = arith.constant 0 : index
    %c0_44 = arith.constant 0 : index
    %103 = vector.load %arg12[%c0_42, %c0_43, %c0_44] : memref<2x1x32xf32, #tpu.memory_space<vmem>>, vector<1x1x32xf32>
    %104 = vector.shape_cast %103 : vector<1x1x32xf32> to vector<1x32xf32>
    %cst_45 = arith.constant dense<0.000000e+00> : vector<128xf32>
    %105 = vector.multi_reduction <add>, %100, %cst_45 [1] : vector<128x32xf32> to vector<128xf32>
    %106 = vector.shape_cast %105 : vector<128xf32> to vector<128x1xf32>
    %cst_46 = arith.constant 3.200000e+01 : f32
    %107 = vector.broadcast %cst_46 : f32 to vector<128x1xf32>
    %108 = arith.divf %106, %107 : vector<128x1xf32>
    %109 = vector.broadcast %108 : vector<128x1xf32> to vector<128x32xf32>
    %110 = arith.subf %100, %109 : vector<128x32xf32>
    %111 = arith.mulf %110, %110 : vector<128x32xf32>
    %cst_47 = arith.constant dense<0.000000e+00> : vector<128xf32>
    %112 = vector.multi_reduction <add>, %111, %cst_47 [1] : vector<128x32xf32> to vector<128xf32>
    %113 = vector.shape_cast %112 : vector<128xf32> to vector<128x1xf32>
    %cst_48 = arith.constant 3.200000e+01 : f32
    %114 = vector.broadcast %cst_48 : f32 to vector<128x1xf32>
    %115 = arith.divf %113, %114 : vector<128x1xf32>
    %116 = vector.broadcast %108 : vector<128x1xf32> to vector<128x32xf32>
    %117 = arith.subf %100, %116 : vector<128x32xf32>
    %cst_49 = arith.constant 9.99999996E-13 : f32
    %118 = vector.broadcast %cst_49 : f32 to vector<128x1xf32>
    %119 = arith.addf %115, %118 : vector<128x1xf32>
    %120 = math.rsqrt %119 : vector<128x1xf32>
    %121 = vector.broadcast %120 : vector<128x1xf32> to vector<128x32xf32>
    %122 = arith.mulf %117, %121 : vector<128x32xf32>
    %123 = vector.broadcast %102 : vector<1x32xf32> to vector<128x32xf32>
    %124 = arith.mulf %122, %123 : vector<128x32xf32>
    %125 = vector.broadcast %104 : vector<1x32xf32> to vector<128x32xf32>
    %126 = arith.addf %124, %125 : vector<128x32xf32>
    %127 = arith.truncf %126 : vector<128x32xf32> to vector<128x32xbf16>
    %c0_50 = arith.constant 0 : index
    %c0_51 = arith.constant 0 : index
    %c0_52 = arith.constant 0 : index
    %128 = vector.load %arg13[%c0_50, %c0_51, %c0_52] : memref<2x32x64xbf16, #tpu.memory_space<vmem>>, vector<1x32x64xbf16>
    %129 = vector.shape_cast %128 : vector<1x32x64xbf16> to vector<32x64xbf16>
    %cst_53 = arith.constant dense<0.000000e+00> : vector<128x64xf32>
    %130 = tpu.matmul %127, %129, %cst_53 {dimension_numbers = #tpu.dot_dimension_numbers<[1], [0], [0], [1], [0, 0, 1, 1], [], []>} : vector<128x32xbf16>, vector<32x64xbf16>, vector<128x64xf32> -> vector<128x64xf32>
    %c0_54 = arith.constant 0 : index
    %c0_55 = arith.constant 0 : index
    %c0_56 = arith.constant 0 : index
    %131 = vector.load %arg14[%c0_54, %c0_55, %c0_56] : memref<2x1x64xf32, #tpu.memory_space<vmem>>, vector<1x1x64xf32>
    %132 = vector.shape_cast %131 : vector<1x1x64xf32> to vector<1x64xf32>
    %133 = vector.broadcast %132 : vector<1x64xf32> to vector<128x64xf32>
    %134 = arith.addf %130, %133 : vector<128x64xf32>
    %135 = arith.mulf %134, %134 : vector<128x64xf32>
    %136 = arith.mulf %134, %135 : vector<128x64xf32>
    %cst_57 = arith.constant 4.471500e-02 : f32
    %137 = vector.broadcast %cst_57 : f32 to vector<128x64xf32>
    %138 = arith.mulf %137, %136 : vector<128x64xf32>
    %139 = arith.addf %134, %138 : vector<128x64xf32>
    %cst_58 = arith.constant 0.797884583 : f32
    %140 = vector.broadcast %cst_58 : f32 to vector<128x64xf32>
    %141 = arith.mulf %140, %139 : vector<128x64xf32>
    %142 = math.tanh %141 : vector<128x64xf32>
    %cst_59 = arith.constant 1.000000e+00 : f32
    %143 = vector.broadcast %cst_59 : f32 to vector<128x64xf32>
    %144 = arith.addf %143, %142 : vector<128x64xf32>
    %cst_60 = arith.constant 5.000000e-01 : f32
    %145 = vector.broadcast %cst_60 : f32 to vector<128x64xf32>
    %146 = arith.mulf %145, %144 : vector<128x64xf32>
    %147 = arith.mulf %134, %146 : vector<128x64xf32>
    %148 = arith.truncf %147 : vector<128x64xf32> to vector<128x64xbf16>
    %c0_61 = arith.constant 0 : index
    %c0_62 = arith.constant 0 : index
    %c0_63 = arith.constant 0 : index
    %149 = vector.load %arg15[%c0_61, %c0_62, %c0_63] : memref<2x64x32xbf16, #tpu.memory_space<vmem>>, vector<1x64x32xbf16>
    %150 = vector.shape_cast %149 : vector<1x64x32xbf16> to vector<64x32xbf16>
    %cst_64 = arith.constant dense<0.000000e+00> : vector<128x32xf32>
    %151 = tpu.matmul %148, %150, %cst_64 {dimension_numbers = #tpu.dot_dimension_numbers<[1], [0], [0], [1], [0, 0, 1, 1], [], []>} : vector<128x64xbf16>, vector<64x32xbf16>, vector<128x32xf32> -> vector<128x32xf32>
    %c0_65 = arith.constant 0 : index
    %c0_66 = arith.constant 0 : index
    %c0_67 = arith.constant 0 : index
    %152 = vector.load %arg16[%c0_65, %c0_66, %c0_67] : memref<2x1x32xf32, #tpu.memory_space<vmem>>, vector<1x1x32xf32>
    %153 = vector.shape_cast %152 : vector<1x1x32xf32> to vector<1x32xf32>
    %154 = vector.broadcast %153 : vector<1x32xf32> to vector<128x32xf32>
    %155 = arith.addf %151, %154 : vector<128x32xf32>
    %156 = arith.addf %126, %155 : vector<128x32xf32>
    %c0_68 = arith.constant 0 : index
    %c0_69 = arith.constant 0 : index
    %c0_70 = arith.constant 0 : index
    %157 = vector.load %arg17[%c0_68, %c0_69, %c0_70] : memref<2x1x32xf32, #tpu.memory_space<vmem>>, vector<1x1x32xf32>
    %158 = vector.shape_cast %157 : vector<1x1x32xf32> to vector<1x32xf32>
    %c0_71 = arith.constant 0 : index
    %c0_72 = arith.constant 0 : index
    %c0_73 = arith.constant 0 : index
    %159 = vector.load %arg18[%c0_71, %c0_72, %c0_73] : memref<2x1x32xf32, #tpu.memory_space<vmem>>, vector<1x1x32xf32>
    %160 = vector.shape_cast %159 : vector<1x1x32xf32> to vector<1x32xf32>
    %cst_74 = arith.constant dense<0.000000e+00> : vector<128xf32>
    %161 = vector.multi_reduction <add>, %156, %cst_74 [1] : vector<128x32xf32> to vector<128xf32>
    %162 = vector.shape_cast %161 : vector<128xf32> to vector<128x1xf32>
    %cst_75 = arith.constant 3.200000e+01 : f32
    %163 = vector.broadcast %cst_75 : f32 to vector<128x1xf32>
    %164 = arith.divf %162, %163 : vector<128x1xf32>
    %165 = vector.broadcast %164 : vector<128x1xf32> to vector<128x32xf32>
    %166 = arith.subf %156, %165 : vector<128x32xf32>
    %167 = arith.mulf %166, %166 : vector<128x32xf32>
    %cst_76 = arith.constant dense<0.000000e+00> : vector<128xf32>
    %168 = vector.multi_reduction <add>, %167, %cst_76 [1] : vector<128x32xf32> to vector<128xf32>
    %169 = vector.shape_cast %168 : vector<128xf32> to vector<128x1xf32>
    %cst_77 = arith.constant 3.200000e+01 : f32
    %170 = vector.broadcast %cst_77 : f32 to vector<128x1xf32>
    %171 = arith.divf %169, %170 : vector<128x1xf32>
    %172 = vector.broadcast %164 : vector<128x1xf32> to vector<128x32xf32>
    %173 = arith.subf %156, %172 : vector<128x32xf32>
    %cst_78 = arith.constant 9.99999996E-13 : f32
    %174 = vector.broadcast %cst_78 : f32 to vector<128x1xf32>
    %175 = arith.addf %171, %174 : vector<128x1xf32>
    %176 = math.rsqrt %175 : vector<128x1xf32>
    %177 = vector.broadcast %176 : vector<128x1xf32> to vector<128x32xf32>
    %178 = arith.mulf %173, %177 : vector<128x32xf32>
    %179 = vector.broadcast %158 : vector<1x32xf32> to vector<128x32xf32>
    %180 = arith.mulf %178, %179 : vector<128x32xf32>
    %181 = vector.broadcast %160 : vector<1x32xf32> to vector<128x32xf32>
    %182 = arith.addf %180, %181 : vector<128x32xf32>
    %183 = arith.truncf %182 : vector<128x32xf32> to vector<128x32xbf16>
    %c1 = arith.constant 1 : index
    %c0_79 = arith.constant 0 : index
    %c0_80 = arith.constant 0 : index
    %184 = vector.load %arg7[%c1, %c0_79, %c0_80] : memref<2x32x96xbf16, #tpu.memory_space<vmem>>, vector<1x32x96xbf16>
    %185 = vector.shape_cast %184 : vector<1x32x96xbf16> to vector<32x96xbf16>
    %cst_81 = arith.constant dense<0.000000e+00> : vector<128x96xf32>
    %186 = tpu.matmul %183, %185, %cst_81 {dimension_numbers = #tpu.dot_dimension_numbers<[1], [0], [0], [1], [0, 0, 1, 1], [], []>} : vector<128x32xbf16>, vector<32x96xbf16>, vector<128x96xf32> -> vector<128x96xf32>
    %c1_82 = arith.constant 1 : index
    %c0_83 = arith.constant 0 : index
    %c0_84 = arith.constant 0 : index
    %187 = vector.load %arg8[%c1_82, %c0_83, %c0_84] : memref<2x1x96xf32, #tpu.memory_space<vmem>>, vector<1x1x96xf32>
    %188 = vector.shape_cast %187 : vector<1x1x96xf32> to vector<1x96xf32>
    %189 = vector.broadcast %188 : vector<1x96xf32> to vector<128x96xf32>
    %190 = arith.addf %186, %189 : vector<128x96xf32>
    %191 = vector.extract_strided_slice %190 {offsets = [0, 0], sizes = [128, 16], strides = [1, 1]} : vector<128x96xf32> to vector<128x16xf32>
    %192 = vector.shape_cast %191 : vector<128x16xf32> to vector<1x128x16xf32>
    %193 = vector.extract_strided_slice %190 {offsets = [0, 32], sizes = [128, 16], strides = [1, 1]} : vector<128x96xf32> to vector<128x16xf32>
    %194 = vector.shape_cast %193 : vector<128x16xf32> to vector<1x128x16xf32>
    %195 = vector.extract_strided_slice %190 {offsets = [0, 64], sizes = [128, 16], strides = [1, 1]} : vector<128x96xf32> to vector<128x16xf32>
    %196 = vector.shape_cast %195 : vector<128x16xf32> to vector<1x128x16xf32>
    %197 = arith.truncf %192 : vector<1x128x16xf32> to vector<1x128x16xbf16>
    %198 = arith.truncf %194 : vector<1x128x16xf32> to vector<1x128x16xbf16>
    "tpu.trace_start"() <{level = 10 : i32, message = "bqd,bkd->bqk"}> : () -> ()
    %cst_85 = arith.constant dense<0.000000e+00> : vector<1x128x128xf32>
    %199 = tpu.matmul %197, %198, %cst_85 {dimension_numbers = #tpu.dot_dimension_numbers<[2], [2], [1], [1], [0, 0, 0, 1, 1, 1], [0], [0]>} : vector<1x128x16xbf16>, vector<1x128x16xbf16>, vector<1x128x128xf32> -> vector<1x128x128xf32>
    "tpu.trace_stop"() : () -> ()
    %cst_86 = arith.constant 2.500000e-01 : f32
    %200 = vector.broadcast %cst_86 : f32 to vector<1x128x128xf32>
    %201 = arith.mulf %199, %200 : vector<1x128x128xf32>
    %202 = arith.addf %201, %30 : vector<1x128x128xf32>
    %cst_87 = arith.constant dense<0xFF800000> : vector<1x128xf32>
    %203 = vector.multi_reduction <maximumf>, %202, %cst_87 [2] : vector<1x128x128xf32> to vector<1x128xf32>
    %204 = vector.shape_cast %203 : vector<1x128xf32> to vector<1x128x1xf32>
    %205 = vector.broadcast %204 : vector<1x128x1xf32> to vector<1x128x128xf32>
    %206 = arith.subf %202, %205 : vector<1x128x128xf32>
    %207 = math.exp %206 : vector<1x128x128xf32>
    %cst_88 = arith.constant dense<0.000000e+00> : vector<1x128xf32>
    %208 = vector.multi_reduction <add>, %207, %cst_88 [2] : vector<1x128x128xf32> to vector<1x128xf32>
    %209 = vector.shape_cast %208 : vector<1x128xf32> to vector<1x128x1xf32>
    %210 = tpu.reciprocal %209 {approx = true} : vector<1x128x1xf32> -> vector<1x128x1xf32>
    %211 = vector.broadcast %210 : vector<1x128x1xf32> to vector<1x128x128xf32>
    %212 = arith.mulf %207, %211 : vector<1x128x128xf32>
    %213 = arith.truncf %212 : vector<1x128x128xf32> to vector<1x128x128xbf16>
    %214 = arith.truncf %196 : vector<1x128x16xf32> to vector<1x128x16xbf16>
    "tpu.trace_start"() <{level = 10 : i32, message = "bqk,bkd->bqd"}> : () -> ()
    %cst_89 = arith.constant dense<0.000000e+00> : vector<1x128x16xf32>
    %215 = tpu.matmul %213, %214, %cst_89 {dimension_numbers = #tpu.dot_dimension_numbers<[2], [1], [1], [2], [0, 0, 0, 1, 1, 2], [0], [0]>} : vector<1x128x128xbf16>, vector<1x128x16xbf16>, vector<1x128x16xf32> -> vector<1x128x16xf32>
    "tpu.trace_stop"() : () -> ()
    %216 = vector.shape_cast %215 : vector<1x128x16xf32> to vector<128x16xf32>
    %217 = vector.extract_strided_slice %190 {offsets = [0, 16], sizes = [128, 16], strides = [1, 1]} : vector<128x96xf32> to vector<128x16xf32>
    %218 = vector.shape_cast %217 : vector<128x16xf32> to vector<1x128x16xf32>
    %219 = vector.extract_strided_slice %190 {offsets = [0, 48], sizes = [128, 16], strides = [1, 1]} : vector<128x96xf32> to vector<128x16xf32>
    %220 = vector.shape_cast %219 : vector<128x16xf32> to vector<1x128x16xf32>
    %221 = vector.extract_strided_slice %190 {offsets = [0, 80], sizes = [128, 16], strides = [1, 1]} : vector<128x96xf32> to vector<128x16xf32>
    %222 = vector.shape_cast %221 : vector<128x16xf32> to vector<1x128x16xf32>
    %223 = arith.truncf %218 : vector<1x128x16xf32> to vector<1x128x16xbf16>
    %224 = arith.truncf %220 : vector<1x128x16xf32> to vector<1x128x16xbf16>
    "tpu.trace_start"() <{level = 10 : i32, message = "bqd,bkd->bqk"}> : () -> ()
    %cst_90 = arith.constant dense<0.000000e+00> : vector<1x128x128xf32>
    %225 = tpu.matmul %223, %224, %cst_90 {dimension_numbers = #tpu.dot_dimension_numbers<[2], [2], [1], [1], [0, 0, 0, 1, 1, 1], [0], [0]>} : vector<1x128x16xbf16>, vector<1x128x16xbf16>, vector<1x128x128xf32> -> vector<1x128x128xf32>
    "tpu.trace_stop"() : () -> ()
    %cst_91 = arith.constant 2.500000e-01 : f32
    %226 = vector.broadcast %cst_91 : f32 to vector<1x128x128xf32>
    %227 = arith.mulf %225, %226 : vector<1x128x128xf32>
    %228 = arith.addf %227, %30 : vector<1x128x128xf32>
    %cst_92 = arith.constant dense<0xFF800000> : vector<1x128xf32>
    %229 = vector.multi_reduction <maximumf>, %228, %cst_92 [2] : vector<1x128x128xf32> to vector<1x128xf32>
    %230 = vector.shape_cast %229 : vector<1x128xf32> to vector<1x128x1xf32>
    %231 = vector.broadcast %230 : vector<1x128x1xf32> to vector<1x128x128xf32>
    %232 = arith.subf %228, %231 : vector<1x128x128xf32>
    %233 = math.exp %232 : vector<1x128x128xf32>
    %cst_93 = arith.constant dense<0.000000e+00> : vector<1x128xf32>
    %234 = vector.multi_reduction <add>, %233, %cst_93 [2] : vector<1x128x128xf32> to vector<1x128xf32>
    %235 = vector.shape_cast %234 : vector<1x128xf32> to vector<1x128x1xf32>
    %236 = tpu.reciprocal %235 {approx = true} : vector<1x128x1xf32> -> vector<1x128x1xf32>
    %237 = vector.broadcast %236 : vector<1x128x1xf32> to vector<1x128x128xf32>
    %238 = arith.mulf %233, %237 : vector<1x128x128xf32>
    %239 = arith.truncf %238 : vector<1x128x128xf32> to vector<1x128x128xbf16>
    %240 = arith.truncf %222 : vector<1x128x16xf32> to vector<1x128x16xbf16>
    "tpu.trace_start"() <{level = 10 : i32, message = "bqk,bkd->bqd"}> : () -> ()
    %cst_94 = arith.constant dense<0.000000e+00> : vector<1x128x16xf32>
    %241 = tpu.matmul %239, %240, %cst_94 {dimension_numbers = #tpu.dot_dimension_numbers<[2], [1], [1], [2], [0, 0, 0, 1, 1, 2], [0], [0]>} : vector<1x128x128xbf16>, vector<1x128x16xbf16>, vector<1x128x16xf32> -> vector<1x128x16xf32>
    "tpu.trace_stop"() : () -> ()
    %242 = vector.shape_cast %241 : vector<1x128x16xf32> to vector<128x16xf32>
    %243 = tpu.concatenate %216, %242 in 1 : vector<128x16xf32>, vector<128x16xf32> -> vector<128x32xf32>
    %244 = arith.truncf %243 : vector<128x32xf32> to vector<128x32xbf16>
    %c1_95 = arith.constant 1 : index
    %c0_96 = arith.constant 0 : index
    %c0_97 = arith.constant 0 : index
    %245 = vector.load %arg9[%c1_95, %c0_96, %c0_97] : memref<2x32x32xbf16, #tpu.memory_space<vmem>>, vector<1x32x32xbf16>
    %246 = vector.shape_cast %245 : vector<1x32x32xbf16> to vector<32x32xbf16>
    %cst_98 = arith.constant dense<0.000000e+00> : vector<128x32xf32>
    %247 = tpu.matmul %244, %246, %cst_98 {dimension_numbers = #tpu.dot_dimension_numbers<[1], [0], [0], [1], [0, 0, 1, 1], [], []>} : vector<128x32xbf16>, vector<32x32xbf16>, vector<128x32xf32> -> vector<128x32xf32>
    %c1_99 = arith.constant 1 : index
    %c0_100 = arith.constant 0 : index
    %c0_101 = arith.constant 0 : index
    %248 = vector.load %arg10[%c1_99, %c0_100, %c0_101] : memref<2x1x32xf32, #tpu.memory_space<vmem>>, vector<1x1x32xf32>
    %249 = vector.shape_cast %248 : vector<1x1x32xf32> to vector<1x32xf32>
    %250 = vector.broadcast %249 : vector<1x32xf32> to vector<128x32xf32>
    %251 = arith.addf %247, %250 : vector<128x32xf32>
    %252 = arith.addf %182, %251 : vector<128x32xf32>
    %c1_102 = arith.constant 1 : index
    %c0_103 = arith.constant 0 : index
    %c0_104 = arith.constant 0 : index
    %253 = vector.load %arg11[%c1_102, %c0_103, %c0_104] : memref<2x1x32xf32, #tpu.memory_space<vmem>>, vector<1x1x32xf32>
    %254 = vector.shape_cast %253 : vector<1x1x32xf32> to vector<1x32xf32>
    %c1_105 = arith.constant 1 : index
    %c0_106 = arith.constant 0 : index
    %c0_107 = arith.constant 0 : index
    %255 = vector.load %arg12[%c1_105, %c0_106, %c0_107] : memref<2x1x32xf32, #tpu.memory_space<vmem>>, vector<1x1x32xf32>
    %256 = vector.shape_cast %255 : vector<1x1x32xf32> to vector<1x32xf32>
    %cst_108 = arith.constant dense<0.000000e+00> : vector<128xf32>
    %257 = vector.multi_reduction <add>, %252, %cst_108 [1] : vector<128x32xf32> to vector<128xf32>
    %258 = vector.shape_cast %257 : vector<128xf32> to vector<128x1xf32>
    %cst_109 = arith.constant 3.200000e+01 : f32
    %259 = vector.broadcast %cst_109 : f32 to vector<128x1xf32>
    %260 = arith.divf %258, %259 : vector<128x1xf32>
    %261 = vector.broadcast %260 : vector<128x1xf32> to vector<128x32xf32>
    %262 = arith.subf %252, %261 : vector<128x32xf32>
    %263 = arith.mulf %262, %262 : vector<128x32xf32>
    %cst_110 = arith.constant dense<0.000000e+00> : vector<128xf32>
    %264 = vector.multi_reduction <add>, %263, %cst_110 [1] : vector<128x32xf32> to vector<128xf32>
    %265 = vector.shape_cast %264 : vector<128xf32> to vector<128x1xf32>
    %cst_111 = arith.constant 3.200000e+01 : f32
    %266 = vector.broadcast %cst_111 : f32 to vector<128x1xf32>
    %267 = arith.divf %265, %266 : vector<128x1xf32>
    %268 = vector.broadcast %260 : vector<128x1xf32> to vector<128x32xf32>
    %269 = arith.subf %252, %268 : vector<128x32xf32>
    %cst_112 = arith.constant 9.99999996E-13 : f32
    %270 = vector.broadcast %cst_112 : f32 to vector<128x1xf32>
    %271 = arith.addf %267, %270 : vector<128x1xf32>
    %272 = math.rsqrt %271 : vector<128x1xf32>
    %273 = vector.broadcast %272 : vector<128x1xf32> to vector<128x32xf32>
    %274 = arith.mulf %269, %273 : vector<128x32xf32>
    %275 = vector.broadcast %254 : vector<1x32xf32> to vector<128x32xf32>
    %276 = arith.mulf %274, %275 : vector<128x32xf32>
    %277 = vector.broadcast %256 : vector<1x32xf32> to vector<128x32xf32>
    %278 = arith.addf %276, %277 : vector<128x32xf32>
    %279 = arith.truncf %278 : vector<128x32xf32> to vector<128x32xbf16>
    %c1_113 = arith.constant 1 : index
    %c0_114 = arith.constant 0 : index
    %c0_115 = arith.constant 0 : index
    %280 = vector.load %arg13[%c1_113, %c0_114, %c0_115] : memref<2x32x64xbf16, #tpu.memory_space<vmem>>, vector<1x32x64xbf16>
    %281 = vector.shape_cast %280 : vector<1x32x64xbf16> to vector<32x64xbf16>
    %cst_116 = arith.constant dense<0.000000e+00> : vector<128x64xf32>
    %282 = tpu.matmul %279, %281, %cst_116 {dimension_numbers = #tpu.dot_dimension_numbers<[1], [0], [0], [1], [0, 0, 1, 1], [], []>} : vector<128x32xbf16>, vector<32x64xbf16>, vector<128x64xf32> -> vector<128x64xf32>
    %c1_117 = arith.constant 1 : index
    %c0_118 = arith.constant 0 : index
    %c0_119 = arith.constant 0 : index
    %283 = vector.load %arg14[%c1_117, %c0_118, %c0_119] : memref<2x1x64xf32, #tpu.memory_space<vmem>>, vector<1x1x64xf32>
    %284 = vector.shape_cast %283 : vector<1x1x64xf32> to vector<1x64xf32>
    %285 = vector.broadcast %284 : vector<1x64xf32> to vector<128x64xf32>
    %286 = arith.addf %282, %285 : vector<128x64xf32>
    %287 = arith.mulf %286, %286 : vector<128x64xf32>
    %288 = arith.mulf %286, %287 : vector<128x64xf32>
    %cst_120 = arith.constant 4.471500e-02 : f32
    %289 = vector.broadcast %cst_120 : f32 to vector<128x64xf32>
    %290 = arith.mulf %289, %288 : vector<128x64xf32>
    %291 = arith.addf %286, %290 : vector<128x64xf32>
    %cst_121 = arith.constant 0.797884583 : f32
    %292 = vector.broadcast %cst_121 : f32 to vector<128x64xf32>
    %293 = arith.mulf %292, %291 : vector<128x64xf32>
    %294 = math.tanh %293 : vector<128x64xf32>
    %cst_122 = arith.constant 1.000000e+00 : f32
    %295 = vector.broadcast %cst_122 : f32 to vector<128x64xf32>
    %296 = arith.addf %295, %294 : vector<128x64xf32>
    %cst_123 = arith.constant 5.000000e-01 : f32
    %297 = vector.broadcast %cst_123 : f32 to vector<128x64xf32>
    %298 = arith.mulf %297, %296 : vector<128x64xf32>
    %299 = arith.mulf %286, %298 : vector<128x64xf32>
    %300 = arith.truncf %299 : vector<128x64xf32> to vector<128x64xbf16>
    %c1_124 = arith.constant 1 : index
    %c0_125 = arith.constant 0 : index
    %c0_126 = arith.constant 0 : index
    %301 = vector.load %arg15[%c1_124, %c0_125, %c0_126] : memref<2x64x32xbf16, #tpu.memory_space<vmem>>, vector<1x64x32xbf16>
    %302 = vector.shape_cast %301 : vector<1x64x32xbf16> to vector<64x32xbf16>
    %cst_127 = arith.constant dense<0.000000e+00> : vector<128x32xf32>
    %303 = tpu.matmul %300, %302, %cst_127 {dimension_numbers = #tpu.dot_dimension_numbers<[1], [0], [0], [1], [0, 0, 1, 1], [], []>} : vector<128x64xbf16>, vector<64x32xbf16>, vector<128x32xf32> -> vector<128x32xf32>
    %c1_128 = arith.constant 1 : index
    %c0_129 = arith.constant 0 : index
    %c0_130 = arith.constant 0 : index
    %304 = vector.load %arg16[%c1_128, %c0_129, %c0_130] : memref<2x1x32xf32, #tpu.memory_space<vmem>>, vector<1x1x32xf32>
    %305 = vector.shape_cast %304 : vector<1x1x32xf32> to vector<1x32xf32>
    %306 = vector.broadcast %305 : vector<1x32xf32> to vector<128x32xf32>
    %307 = arith.addf %303, %306 : vector<128x32xf32>
    %308 = arith.addf %278, %307 : vector<128x32xf32>
    %c1_131 = arith.constant 1 : index
    %c0_132 = arith.constant 0 : index
    %c0_133 = arith.constant 0 : index
    %309 = vector.load %arg17[%c1_131, %c0_132, %c0_133] : memref<2x1x32xf32, #tpu.memory_space<vmem>>, vector<1x1x32xf32>
    %310 = vector.shape_cast %309 : vector<1x1x32xf32> to vector<1x32xf32>
    %c1_134 = arith.constant 1 : index
    %c0_135 = arith.constant 0 : index
    %c0_136 = arith.constant 0 : index
    %311 = vector.load %arg18[%c1_134, %c0_135, %c0_136] : memref<2x1x32xf32, #tpu.memory_space<vmem>>, vector<1x1x32xf32>
    %312 = vector.shape_cast %311 : vector<1x1x32xf32> to vector<1x32xf32>
    %cst_137 = arith.constant dense<0.000000e+00> : vector<128xf32>
    %313 = vector.multi_reduction <add>, %308, %cst_137 [1] : vector<128x32xf32> to vector<128xf32>
    %314 = vector.shape_cast %313 : vector<128xf32> to vector<128x1xf32>
    %cst_138 = arith.constant 3.200000e+01 : f32
    %315 = vector.broadcast %cst_138 : f32 to vector<128x1xf32>
    %316 = arith.divf %314, %315 : vector<128x1xf32>
    %317 = vector.broadcast %316 : vector<128x1xf32> to vector<128x32xf32>
    %318 = arith.subf %308, %317 : vector<128x32xf32>
    %319 = arith.mulf %318, %318 : vector<128x32xf32>
    %cst_139 = arith.constant dense<0.000000e+00> : vector<128xf32>
    %320 = vector.multi_reduction <add>, %319, %cst_139 [1] : vector<128x32xf32> to vector<128xf32>
    %321 = vector.shape_cast %320 : vector<128xf32> to vector<128x1xf32>
    %cst_140 = arith.constant 3.200000e+01 : f32
    %322 = vector.broadcast %cst_140 : f32 to vector<128x1xf32>
    %323 = arith.divf %321, %322 : vector<128x1xf32>
    %324 = vector.broadcast %316 : vector<128x1xf32> to vector<128x32xf32>
    %325 = arith.subf %308, %324 : vector<128x32xf32>
    %cst_141 = arith.constant 9.99999996E-13 : f32
    %326 = vector.broadcast %cst_141 : f32 to vector<128x1xf32>
    %327 = arith.addf %323, %326 : vector<128x1xf32>
    %328 = math.rsqrt %327 : vector<128x1xf32>
    %329 = vector.broadcast %328 : vector<128x1xf32> to vector<128x32xf32>
    %330 = arith.mulf %325, %329 : vector<128x32xf32>
    %331 = vector.broadcast %310 : vector<1x32xf32> to vector<128x32xf32>
    %332 = arith.mulf %330, %331 : vector<128x32xf32>
    %333 = vector.broadcast %312 : vector<1x32xf32> to vector<128x32xf32>
    %334 = arith.addf %332, %333 : vector<128x32xf32>
    %335 = vector.shape_cast %334 : vector<128x32xf32> to vector<1x128x32xf32>
    %c0_142 = arith.constant 0 : index
    %c0_143 = arith.constant 0 : index
    %c0_144 = arith.constant 0 : index
    %336 = vector.load %arg3[%c0_142, %c0_143, %c0_144] : memref<1x8x128xf32, #tpu.memory_space<vmem>>, vector<1x8x128xf32>
    "tpu.trace_start"() <{level = 10 : i32, message = "bsr,brh->bsh"}> : () -> ()
    %cst_145 = arith.constant dense<0.000000e+00> : vector<1x8x32xf32>
    %337 = tpu.matmul %336, %335, %cst_145 {dimension_numbers = #tpu.dot_dimension_numbers<[2], [1], [1], [2], [0, 0, 0, 1, 1, 2], [0], [0]>} : vector<1x8x128xf32>, vector<1x128x32xf32>, vector<1x8x32xf32> -> vector<1x8x32xf32>
    "tpu.trace_stop"() : () -> ()
    %338 = vector.shape_cast %337 : vector<1x8x32xf32> to vector<8x32xf32>
    %c0_146 = arith.constant 0 : index
    %c0_147 = arith.constant 0 : index
    %339 = vector.load %arg19[%c0_146, %c0_147] : memref<32x32xf32, #tpu.memory_space<vmem>>, vector<32x32xf32>
    %cst_148 = arith.constant dense<0.000000e+00> : vector<8x32xf32>
    %340 = tpu.matmul %338, %339, %cst_148 {dimension_numbers = #tpu.dot_dimension_numbers<[1], [0], [0], [1], [0, 0, 1, 1], [], []>} : vector<8x32xf32>, vector<32x32xf32>, vector<8x32xf32> -> vector<8x32xf32>
    %c0_149 = arith.constant 0 : index
    %c0_150 = arith.constant 0 : index
    %341 = vector.load %arg20[%c0_149, %c0_150] : memref<1x32xf32, #tpu.memory_space<vmem>>, vector<1x32xf32>
    %342 = vector.broadcast %341 : vector<1x32xf32> to vector<8x32xf32>
    %343 = arith.addf %340, %342 : vector<8x32xf32>
    %344 = math.tanh %343 : vector<8x32xf32>
    %345 = vector.shape_cast %344 : vector<8x32xf32> to vector<1x8x32xf32>
    %346 = vector.extract_strided_slice %337 {offsets = [0, 0, 0], sizes = [1, 1, 32], strides = [1, 1, 1]} : vector<1x8x32xf32> to vector<1x1x32xf32>
    %347 = vector.extract_strided_slice %345 {offsets = [0, 1, 0], sizes = [1, 7, 32], strides = [1, 1, 1]} : vector<1x8x32xf32> to vector<1x7x32xf32>
    %348 = vector.broadcast %346 : vector<1x1x32xf32> to vector<1x7x32xf32>
    %349 = arith.mulf %347, %348 : vector<1x7x32xf32>
    %cst_151 = arith.constant dense<0.000000e+00> : vector<1x7xf32>
    %350 = vector.multi_reduction <add>, %349, %cst_151 [2] : vector<1x7x32xf32> to vector<1x7xf32>
    %cst_152 = arith.constant 0.176776692 : f32
    %351 = vector.broadcast %cst_152 : f32 to vector<1x7xf32>
    %352 = arith.mulf %350, %351 : vector<1x7xf32>
    %c0_153 = arith.constant 0 : index
    %c0_154 = arith.constant 0 : index
    %c0_155 = arith.constant 0 : index
    %353 = vector.load %arg21[%c0_153, %c0_154, %c0_155] : memref<1x1x7xf32, #tpu.memory_space<vmem>>, vector<1x1x7xf32>
    %354 = vector.shape_cast %353 : vector<1x1x7xf32> to vector<1x7xf32>
    %355 = vector.shape_cast %352 : vector<1x7xf32> to vector<1x1x7xf32>
    tpu.vector_store %arg21[%c0_153, %c0_154, %c0_155], %355 {strides = array<i32>} : memref<1x1x7xf32, #tpu.memory_space<vmem>>, vector<1x1x7xf32>,
    return
  }
  func.func @transform_0(%arg0: i32) -> (i32, i32, i32) {
    %c0_i32 = arith.constant 0 : i32
    %c0_i32_0 = arith.constant 0 : i32
    %c0_i32_1 = arith.constant 0 : i32
    return %arg0, %c0_i32, %c0_i32_0 : i32, i32, i32
  }
  func.func @transform_1(%arg0: i32) -> (i32, i32, i32) {
    %c0_i32 = arith.constant 0 : i32
    %c0_i32_0 = arith.constant 0 : i32
    %c0_i32_1 = arith.constant 0 : i32
    return %arg0, %c0_i32, %c0_i32_0 : i32, i32, i32
  }
  func.func @transform_2(%arg0: i32) -> (i32, i32, i32) {
    %c0_i32 = arith.constant 0 : i32
    %c0_i32_0 = arith.constant 0 : i32
    %c0_i32_1 = arith.constant 0 : i32
    return %arg0, %c0_i32, %c0_i32_0 : i32, i32, i32
  }
  func.func @transform_3(%arg0: i32) -> (i32, i32) {
    %c0_i32 = arith.constant 0 : i32
    %c0_i32_0 = arith.constant 0 : i32
    %c0_i32_1 = arith.constant 0 : i32
    return %c0_i32, %c0_i32_0 : i32, i32
  }
  func.func @transform_4(%arg0: i32) -> (i32, i32) {
    %c0_i32 = arith.constant 0 : i32
    %c0_i32_0 = arith.constant 0 : i32
    %c0_i32_1 = arith.constant 0 : i32
    return %c0_i32, %c0_i32_0 : i32, i32
  }
  func.func @transform_5(%arg0: i32) -> (i32, i32) {
    %c0_i32 = arith.constant 0 : i32
    %c0_i32_0 = arith.constant 0 : i32
    %c0_i32_1 = arith.constant 0 : i32
    return %c0_i32, %c0_i32_0 : i32, i32
  }
  func.func @transform_6(%arg0: i32) -> (i32, i32, i32) {
    %c0_i32 = arith.constant 0 : i32
    %c0_i32_0 = arith.constant 0 : i32
    %c0_i32_1 = arith.constant 0 : i32
    %c0_i32_2 = arith.constant 0 : i32
    return %c0_i32, %c0_i32_0, %c0_i32_1 : i32, i32, i32
  }
  func.func @transform_7(%arg0: i32) -> (i32, i32, i32) {
    %c0_i32 = arith.constant 0 : i32
    %c0_i32_0 = arith.constant 0 : i32
    %c0_i32_1 = arith.constant 0 : i32
    %c0_i32_2 = arith.constant 0 : i32
    return %c0_i32, %c0_i32_0, %c0_i32_1 : i32, i32, i32
  }
  func.func @transform_8(%arg0: i32) -> (i32, i32, i32) {
    %c0_i32 = arith.constant 0 : i32
    %c0_i32_0 = arith.constant 0 : i32
    %c0_i32_1 = arith.constant 0 : i32
    %c0_i32_2 = arith.constant 0 : i32
    return %c0_i32, %c0_i32_0, %c0_i32_1 : i32, i32, i32
  }
  func.func @transform_9(%arg0: i32) -> (i32, i32, i32) {
    %c0_i32 = arith.constant 0 : i32
    %c0_i32_0 = arith.constant 0 : i32
    %c0_i32_1 = arith.constant 0 : i32
    %c0_i32_2 = arith.constant 0 : i32
    return %c0_i32, %c0_i32_0, %c0_i32_1 : i32, i32, i32
  }
  func.func @transform_10(%arg0: i32) -> (i32, i32, i32) {
    %c0_i32 = arith.constant 0 : i32
    %c0_i32_0 = arith.constant 0 : i32
    %c0_i32_1 = arith.constant 0 : i32
    %c0_i32_2 = arith.constant 0 : i32
    return %c0_i32, %c0_i32_0, %c0_i32_1 : i32, i32, i32
  }
  func.func @transform_11(%arg0: i32) -> (i32, i32, i32) {
    %c0_i32 = arith.constant 0 : i32
    %c0_i32_0 = arith.constant 0 : i32
    %c0_i32_1 = arith.constant 0 : i32
    %c0_i32_2 = arith.constant 0 : i32
    return %c0_i32, %c0_i32_0, %c0_i32_1 : i32, i32, i32
  }
  func.func @transform_12(%arg0: i32) -> (i32, i32, i32) {
    %c0_i32 = arith.constant 0 : i32
    %c0_i32_0 = arith.constant 0 : i32
    %c0_i32_1 = arith.constant 0 : i32
    %c0_i32_2 = arith.constant 0 : i32
    return %c0_i32, %c0_i32_0, %c0_i32_1 : i32, i32, i32
  }
  func.func @transform_13(%arg0: i32) -> (i32, i32, i32) {
    %c0_i32 = arith.constant 0 : i32
    %c0_i32_0 = arith.constant 0 : i32
    %c0_i32_1 = arith.constant 0 : i32
    %c0_i32_2 = arith.constant 0 : i32
    return %c0_i32, %c0_i32_0, %c0_i32_1 : i32, i32, i32
  }
  func.func @transform_14(%arg0: i32) -> (i32, i32, i32) {
    %c0_i32 = arith.constant 0 : i32
    %c0_i32_0 = arith.constant 0 : i32
    %c0_i32_1 = arith.constant 0 : i32
    %c0_i32_2 = arith.constant 0 : i32
    return %c0_i32, %c0_i32_0, %c0_i32_1 : i32, i32, i32
  }
  func.func @transform_15(%arg0: i32) -> (i32, i32, i32) {
    %c0_i32 = arith.constant 0 : i32
    %c0_i32_0 = arith.constant 0 : i32
    %c0_i32_1 = arith.constant 0 : i32
    %c0_i32_2 = arith.constant 0 : i32
    return %c0_i32, %c0_i32_0, %c0_i32_1 : i32, i32, i32
  }
  func.func @transform_16(%arg0: i32) -> (i32, i32, i32) {
    %c0_i32 = arith.constant 0 : i32
    %c0_i32_0 = arith.constant 0 : i32
    %c0_i32_1 = arith.constant 0 : i32
    %c0_i32_2 = arith.constant 0 : i32
    return %c0_i32, %c0_i32_0, %c0_i32_1 : i32, i32, i32
  }
  func.func @transform_17(%arg0: i32) -> (i32, i32, i32) {
    %c0_i32 = arith.constant 0 : i32
    %c0_i32_0 = arith.constant 0 : i32
    %c0_i32_1 = arith.constant 0 : i32
    %c0_i32_2 = arith.constant 0 : i32
    return %c0_i32, %c0_i32_0, %c0_i32_1 : i32, i32, i32
  }
  func.func @transform_18(%arg0: i32) -> (i32, i32) {
    %c0_i32 = arith.constant 0 : i32
    %c0_i32_0 = arith.constant 0 : i32
    %c0_i32_1 = arith.constant 0 : i32
    return %c0_i32, %c0_i32_0 : i32, i32
  }
  func.func @transform_19(%arg0: i32) -> (i32, i32) {
    %c0_i32 = arith.constant 0 : i32
    %c0_i32_0 = arith.constant 0 : i32
    %c0_i32_1 = arith.constant 0 : i32
    return %c0_i32, %c0_i32_0 : i32, i32
  }
  func.func @transform_20(%arg0: i32) -> (i32, i32, i32) {
    %c0_i32 = arith.constant 0 : i32
    %c0_i32_0 = arith.constant 0 : i32
    %c0_i32_1 = arith.constant 0 : i32
    return %arg0, %c0_i32, %c0_i32_0 : i32, i32, i32
  }
}

</mosaic_0001>

<llo_original>
// kernel: retriever_forward.1
$region0: #{retriever_forward.1}
  #allocation0 [shape = 'u32[]', space=smem, size = 0x4, offset = 0x4, fixed_abs, tag = 'smem constant byte address 0x4 - core index']
  #allocation1 [shape = 'u32[144,128]{1,0:T(1,128)}', space=vmem, size = 0x12000, scoped, tag = 'internal scratch']
  %s0 = inlined_call_operand.vmem [shape: f32[2,128,32], index: 0, kind: input, shape index: {}]
  %s1 = inlined_call_operand.vmem [shape: f32[2,1,128], index: 1, kind: input, shape index: {}]
  %s2 = inlined_call_operand.vmem [shape: f32[2,8,128], index: 2, kind: input, shape index: {}]
  %s3 = inlined_call_operand.vmem [shape: f32[128,128], index: 3, kind: input, shape index: {}]
  %s4 = inlined_call_operand.vmem [shape: f32[1,32], index: 4, kind: input, shape index: {}]
  %s5 = inlined_call_operand.vmem [shape: f32[1,32], index: 5, kind: input, shape index: {}]
  %s6 = inlined_call_operand.vmem [shape: bf16[2,32,96], index: 6, kind: input, shape index: {}]
  %s7 = inlined_call_operand.vmem [shape: f32[2,1,96], index: 7, kind: input, shape index: {}]
  %s8 = inlined_call_operand.vmem [shape: bf16[2,32,32], index: 8, kind: input, shape index: {}]
  %s9 = inlined_call_operand.vmem [shape: f32[2,1,32], index: 9, kind: input, shape index: {}]
  %s10 = inlined_call_operand.vmem [shape: f32[2,1,32], index: 10, kind: input, shape index: {}]
  %s11 = inlined_call_operand.vmem [shape: f32[2,1,32], index: 11, kind: input, shape index: {}]
  %s12 = inlined_call_operand.vmem [shape: bf16[2,32,64], index: 12, kind: input, shape index: {}]
  %s13 = inlined_call_operand.vmem [shape: f32[2,1,64], index: 13, kind: input, shape index: {}]
  %s14 = inlined_call_operand.vmem [shape: bf16[2,64,32], index: 14, kind: input, shape index: {}]
  %s15 = inlined_call_operand.vmem [shape: f32[2,1,32], index: 15, kind: input, shape index: {}]
  %s16 = inlined_call_operand.vmem [shape: f32[2,1,32], index: 16, kind: input, shape index: {}]
  %s17 = inlined_call_operand.vmem [shape: f32[2,1,32], index: 17, kind: input, shape index: {}]
  %s18 = inlined_call_operand.vmem [shape: f32[32,32], index: 18, kind: input, shape index: {}]
  %s19 = inlined_call_operand.vmem [shape: f32[1,32], index: 19, kind: input, shape index: {}]
  %s20 = inlined_call_operand.hbm [shape: f32[2,1,7], index: 20, kind: output, shape index: {}]
  %s21 = sld [smem:[#allocation0]]
  $region113: #{retriever_forward.1} parent=0
    _
  %s23 = ssub.s32 1, %s21
  %s24 = scalar_select 0, %s23, %s21
  $region1: #{retriever_forward.1} parent=0
    #allocation2 [shape = 'u8[1024]{0}', space=vmem, size = 0x400, scoped, tag = 'output window, operand 0']
    #allocation3 [shape = 's32[2]{0}', space=sflag, size = 0x8, scoped, tag = 'scoped memory for retriever_forward.1']
    %25 = vsyncpa [#allocation3], 0
    %s26 = scalar_lea.sflag [#allocation3], 1
    %27 = vsyncpa %s26, 0
    loop: start=0, step=1, limit=4
    $region2: #{retriever_forward.1} parent=1 // loop_pre_header
      _
    $region3: #{retriever_forward.1} parent=1 // loop_header
      %s29 = sphi 0, %s33
      %p30 = scmp.ge.s32.totalorder %s29, 4
      %s39 = sphi 0, %s41
      %s42 = sphi 0, %s39
      %s43 = sphi 0, %s42
      %s59 = sphi 0, %s43
      %s65 = sphi 0, %s67
      %s68 = sphi 0, %s65
      %s69 = sphi 0, %s68
      %s85 = sphi 0, %s69
      %s91 = sphi 0, %s93
      %s94 = sphi 0, %s91
      %s95 = sphi 0, %s94
      %s111 = sphi 0, %s95
      %s115 = sphi 0, %s115
      %s117 = sphi 0, %s115
      %s118 = sphi 0, %s117
      %s132 = sphi 0, %s118
      %s136 = sphi 0, %s136
      %s138 = sphi 0, %s136
      %s139 = sphi 0, %s138
      %s153 = sphi 0, %s139
      %s157 = sphi 0, %s157
      %s159 = sphi 0, %s157
      %s160 = sphi 0, %s159
      %s174 = sphi 0, %s160
      %s178 = sphi 0, %s178
      %s180 = sphi 0, %s178
      %s181 = sphi 0, %s180
      %s195 = sphi 0, %s181
      %s199 = sphi 0, %s199
      %s201 = sphi 0, %s199
      %s202 = sphi 0, %s201
      %s216 = sphi 0, %s202
      %s220 = sphi 0, %s220
      %s222 = sphi 0, %s220
      %s223 = sphi 0, %s222
      %s237 = sphi 0, %s223
      %s241 = sphi 0, %s241
      %s243 = sphi 0, %s241
      %s244 = sphi 0, %s243
      %s258 = sphi 0, %s244
      %s262 = sphi 0, %s262
      %s264 = sphi 0, %s262
      %s265 = sphi 0, %s264
      %s279 = sphi 0, %s265
      %s283 = sphi 0, %s283
      %s285 = sphi 0, %s283
      %s286 = sphi 0, %s285
      %s300 = sphi 0, %s286
      %s304 = sphi 0, %s304
      %s306 = sphi 0, %s304
      %s307 = sphi 0, %s306
      %s321 = sphi 0, %s307
      %s325 = sphi 0, %s325
      %s327 = sphi 0, %s325
      %s328 = sphi 0, %s327
      %s342 = sphi 0, %s328
      %s346 = sphi 0, %s346
      %s348 = sphi 0, %s346
      %s349 = sphi 0, %s348
      %s363 = sphi 0, %s349
      %s367 = sphi 0, %s367
      %s369 = sphi 0, %s367
      %s370 = sphi 0, %s369
      %s384 = sphi 0, %s370
      %s388 = sphi 0, %s388
      %s390 = sphi 0, %s388
      %s391 = sphi 0, %s390
      %s405 = sphi 0, %s391
      %s409 = sphi 0, %s409
      %s411 = sphi 0, %s409
      %s412 = sphi 0, %s411
      %s426 = sphi 0, %s412
      %s430 = sphi 0, %s430
      %s432 = sphi 0, %s430
      %s433 = sphi 0, %s432
      %s447 = sphi 0, %s433
      %s451 = sphi 0, %s451
      %s453 = sphi 0, %s451
      %s454 = sphi 0, %s453
      %s468 = sphi 0, %s454
      %s474 = sphi 0, %s476
      %s477 = sphi 0, %s474
      %s478 = sphi 0, %s477
      %s494 = sphi 0, %s478
    $region4: #{retriever_forward.1} parent=1 // loop_header_branch
      %32 = sbr.rel (%p30) target = $region8
    $region5: #{retriever_forward.1} parent=1 // loop_body
      %s34 = ssub.s32 %s29, 1
      %s35 = ssub.s32 %s29, 2
      %s36 = sadd.s32 %s29, 1
      %s37 = ssub.s32 %s29, %s36
      %p38 = scmp.eq.s32.totalorder %s37, 0
      %s40 = sadd.s32 %s39, 1
      %s41 = scalar_select %p38, %s39, %s40
      %p44 = pneg %p38
      %p45 = scmp.eq.s32.totalorder %s29, 1
      %p46 = por %p44, %p45
      %p47 = scmp.ne.s32.totalorder %s39, %s42
      %p48 = scmp.eq.s32.totalorder %s29, 0
      %p49 = por %p47, %p48
      %p50 = scmp.ne.s32.totalorder %s39, %s42
      %p51 = scmp.eq.s32.totalorder %s34, 1
      %p52 = por %p50, %p51
      %p53 = scmp.ne.s32.totalorder %s42, %s43
      %p54 = scmp.eq.s32.totalorder %s34, 0
      %p55 = por %p53, %p54
      %p56 = scmp.ne.s32.totalorder %s42, %s43
      %p57 = scmp.eq.s32.totalorder %s35, 1
      %p58 = por %p56, %p57
      %p60 = scmp.ne.s32.totalorder %s43, %s59
      %p61 = scmp.eq.s32.totalorder %s35, 0
      %p62 = por %p60, %p61
      %s63 = ssub.s32 %s29, %s36
      %p64 = scmp.eq.s32.totalorder %s63, 0
      %s66 = sadd.s32 %s65, 1
      %s67 = scalar_select %p64, %s65, %s66
      %p70 = pneg %p64
      %p71 = scmp.eq.s32.totalorder %s29, 1
      %p72 = por %p70, %p71
      %p73 = scmp.ne.s32.totalorder %s65, %s68
      %p74 = scmp.eq.s32.totalorder %s29, 0
      %p75 = por %p73, %p74
      %p76 = scmp.ne.s32.totalorder %s65, %s68
      %p77 = scmp.eq.s32.totalorder %s34, 1
      %p78 = por %p76, %p77
      %p79 = scmp.ne.s32.totalorder %s68, %s69
      %p80 = scmp.eq.s32.totalorder %s34, 0
      %p81 = por %p79, %p80
      %p82 = scmp.ne.s32.totalorder %s68, %s69
      %p83 = scmp.eq.s32.totalorder %s35, 1
      %p84 = por %p82, %p83
      %p86 = scmp.ne.s32.totalorder %s69, %s85
      %p87 = scmp.eq.s32.totalorder %s35, 0
      %p88 = por %p86, %p87
      %s89 = ssub.s32 %s29, %s36
      %p90 = scmp.eq.s32.totalorder %s89, 0
      %s92 = sadd.s32 %s91, 1
      %s93 = scalar_select %p90, %s91, %s92
      %p96 = pneg %p90
      %p97 = scmp.eq.s32.totalorder %s29, 1
      %p98 = por %p96, %p97
      %p99 = scmp.ne.s32.totalorder %s91, %s94
      %p100 = scmp.eq.s32.totalorder %s29, 0
      %p101 = por %p99, %p100
      %p102 = scmp.ne.s32.totalorder %s91, %s94
      %p103 = scmp.eq.s32.totalorder %s34, 1
      %p104 = por %p102, %p103
      %p105 = scmp.ne.s32.totalorder %s94, %s95
      %p106 = scmp.eq.s32.totalorder %s34, 0
      %p107 = por %p105, %p106
      %p108 = scmp.ne.s32.totalorder %s94, %s95
      %p109 = scmp.eq.s32.totalorder %s35, 1
      %p110 = por %p108, %p109
      %p112 = scmp.ne.s32.totalorder %s95, %s111
      %p113 = scmp.eq.s32.totalorder %s35, 0
      %p114 = por %p112, %p113
      %s116 = sadd.s32 %s115, 1
      %p119 = scmp.eq.s32.totalorder %s29, 1
      %p120 = scmp.ne.s32.totalorder %s115, %s117
      %p121 = scmp.eq.s32.totalorder %s29, 0
      %p122 = por %p120, %p121
      %p123 = scmp.ne.s32.totalorder %s115, %s117
      %p124 = scmp.eq.s32.totalorder %s34, 1
      %p125 = por %p123, %p124
      %p126 = scmp.ne.s32.totalorder %s117, %s118
      %p127 = scmp.eq.s32.totalorder %s34, 0
      %p128 = por %p126, %p127
      %p129 = scmp.ne.s32.totalorder %s117, %s118
      %p130 = scmp.eq.s32.totalorder %s35, 1
      %p131 = por %p129, %p130
      %p133 = scmp.ne.s32.totalorder %s118, %s132
      %p134 = scmp.eq.s32.totalorder %s35, 0
      %p135 = por %p133, %p134
      %s137 = sadd.s32 %s136, 1
      %p140 = scmp.eq.s32.totalorder %s29, 1
      %p141 = scmp.ne.s32.totalorder %s136, %s138
      %p142 = scmp.eq.s32.totalorder %s29, 0
      %p143 = por %p141, %p142
      %p144 = scmp.ne.s32.totalorder %s136, %s138
      %p145 = scmp.eq.s32.totalorder %s34, 1
      %p146 = por %p144, %p145
      %p147 = scmp.ne.s32.totalorder %s138, %s139
      %p148 = scmp.eq.s32.totalorder %s34, 0
      %p149 = por %p147, %p148
      %p150 = scmp.ne.s32.totalorder %s138, %s139
      %p151 = scmp.eq.s32.totalorder %s35, 1
      %p152 = por %p150, %p151
      %p154 = scmp.ne.s32.totalorder %s139, %s153
      %p155 = scmp.eq.s32.totalorder %s35, 0
      %p156 = por %p154, %p155
      %s158 = sadd.s32 %s157, 1
      %p161 = scmp.eq.s32.totalorder %s29, 1
      %p162 = scmp.ne.s32.totalorder %s157, %s159
      %p163 = scmp.eq.s32.totalorder %s29, 0
      %p164 = por %p162, %p163
      %p165 = scmp.ne.s32.totalorder %s157, %s159
      %p166 = scmp.eq.s32.totalorder %s34, 1
      %p167 = por %p165, %p166
      %p168 = scmp.ne.s32.totalorder %s159, %s160
      %p169 = scmp.eq.s32.totalorder %s34, 0
      %p170 = por %p168, %p169
      %p171 = scmp.ne.s32.totalorder %s159, %s160
      %p172 = scmp.eq.s32.totalorder %s35, 1
      %p173 = por %p171, %p172
      %p175 = scmp.ne.s32.totalorder %s160, %s174
      %p176 = scmp.eq.s32.totalorder %s35, 0
      %p177 = por %p175, %p176
      %s179 = sadd.s32 %s178, 1
      %p182 = scmp.eq.s32.totalorder %s29, 1
      %p183 = scmp.ne.s32.totalorder %s178, %s180
      %p184 = scmp.eq.s32.totalorder %s29, 0
      %p185 = por %p183, %p184
      %p186 = scmp.ne.s32.totalorder %s178, %s180
      %p187 = scmp.eq.s32.totalorder %s34, 1
      %p188 = por %p186, %p187
      %p189 = scmp.ne.s32.totalorder %s180, %s181
      %p190 = scmp.eq.s32.totalorder %s34, 0
      %p191 = por %p189, %p190
      %p192 = scmp.ne.s32.totalorder %s180, %s181
      %p193 = scmp.eq.s32.totalorder %s35, 1
      %p194 = por %p192, %p193
      %p196 = scmp.ne.s32.totalorder %s181, %s195
      %p197 = scmp.eq.s32.totalorder %s35, 0
      %p198 = por %p196, %p197
      %s200 = sadd.s32 %s199, 1
      %p203 = scmp.eq.s32.totalorder %s29, 1
      %p204 = scmp.ne.s32.totalorder %s199, %s201
      %p205 = scmp.eq.s32.totalorder %s29, 0
      %p206 = por %p204, %p205
      %p207 = scmp.ne.s32.totalorder %s199, %s201
      %p208 = scmp.eq.s32.totalorder %s34, 1
      %p209 = por %p207, %p208
      %p210 = scmp.ne.s32.totalorder %s201, %s202
      %p211 = scmp.eq.s32.totalorder %s34, 0
      %p212 = por %p210, %p211
      %p213 = scmp.ne.s32.totalorder %s201, %s202
      %p214 = scmp.eq.s32.totalorder %s35, 1
      %p215 = por %p213, %p214
      %p217 = scmp.ne.s32.totalorder %s202, %s216
      %p218 = scmp.eq.s32.totalorder %s35, 0
      %p219 = por %p217, %p218
      %s221 = sadd.s32 %s220, 1
      %p224 = scmp.eq.s32.totalorder %s29, 1
      %p225 = scmp.ne.s32.totalorder %s220, %s222
      %p226 = scmp.eq.s32.totalorder %s29, 0
      %p227 = por %p225, %p226
      %p228 = scmp.ne.s32.totalorder %s220, %s222
      %p229 = scmp.eq.s32.totalorder %s34, 1
      %p230 = por %p228, %p229
      %p231 = scmp.ne.s32.totalorder %s222, %s223
      %p232 = scmp.eq.s32.totalorder %s34, 0
      %p233 = por %p231, %p232
      %p234 = scmp.ne.s32.totalorder %s222, %s223
      %p235 = scmp.eq.s32.totalorder %s35, 1
      %p236 = por %p234, %p235
      %p238 = scmp.ne.s32.totalorder %s223, %s237
      %p239 = scmp.eq.s32.totalorder %s35, 0
      %p240 = por %p238, %p239
      %s242 = sadd.s32 %s241, 1
      %p245 = scmp.eq.s32.totalorder %s29, 1
      %p246 = scmp.ne.s32.totalorder %s241, %s243
      %p247 = scmp.eq.s32.totalorder %s29, 0
      %p248 = por %p246, %p247
      %p249 = scmp.ne.s32.totalorder %s241, %s243
      %p250 = scmp.eq.s32.totalorder %s34, 1
      %p251 = por %p249, %p250
      %p252 = scmp.ne.s32.totalorder %s243, %s244
      %p253 = scmp.eq.s32.totalorder %s34, 0
      %p254 = por %p252, %p253
      %p255 = scmp.ne.s32.totalorder %s243, %s244
      %p256 = scmp.eq.s32.totalorder %s35, 1
      %p257 = por %p255, %p256
      %p259 = scmp.ne.s32.totalorder %s244, %s258
      %p260 = scmp.eq.s32.totalorder %s35, 0
      %p261 = por %p259, %p260
      %s263 = sadd.s32 %s262, 1
      %p266 = scmp.eq.s32.totalorder %s29, 1
      %p267 = scmp.ne.s32.totalorder %s262, %s264
      %p268 = scmp.eq.s32.totalorder %s29, 0
      %p269 = por %p267, %p268
      %p270 = scmp.ne.s32.totalorder %s262, %s264
      %p271 = scmp.eq.s32.totalorder %s34, 1
      %p272 = por %p270, %p271
      %p273 = scmp.ne.s32.totalorder %s264, %s265
      %p274 = scmp.eq.s32.totalorder %s34, 0
      %p275 = por %p273, %p274
      %p276 = scmp.ne.s32.totalorder %s264, %s265
      %p277 = scmp.eq.s32.totalorder %s35, 1
      %p278 = por %p276, %p277
      %p280 = scmp.ne.s32.totalorder %s265, %s279
      %p281 = scmp.eq.s32.totalorder %s35, 0
      %p282 = por %p280, %p281
      %s284 = sadd.s32 %s283, 1
      %p287 = scmp.eq.s32.totalorder %s29, 1
      %p288 = scmp.ne.s32.totalorder %s283, %s285
      %p289 = scmp.eq.s32.totalorder %s29, 0
      %p290 = por %p288, %p289
      %p291 = scmp.ne.s32.totalorder %s283, %s285
      %p292 = scmp.eq.s32.totalorder %s34, 1
      %p293 = por %p291, %p292
      %p294 = scmp.ne.s32.totalorder %s285, %s286
      %p295 = scmp.eq.s32.totalorder %s34, 0
      %p296 = por %p294, %p295
      %p297 = scmp.ne.s32.totalorder %s285, %s286
      %p298 = scmp.eq.s32.totalorder %s35, 1
      %p299 = por %p297, %p298
      %p301 = scmp.ne.s32.totalorder %s286, %s300
      %p302 = scmp.eq.s32.totalorder %s35, 0
      %p303 = por %p301, %p302
      %s305 = sadd.s32 %s304, 1
      %p308 = scmp.eq.s32.totalorder %s29, 1
      %p309 = scmp.ne.s32.totalorder %s304, %s306
      %p310 = scmp.eq.s32.totalorder %s29, 0
      %p311 = por %p309, %p310
      %p312 = scmp.ne.s32.totalorder %s304, %s306
      %p313 = scmp.eq.s32.totalorder %s34, 1
      %p314 = por %p312, %p313
      %p315 = scmp.ne.s32.totalorder %s306, %s307
      %p316 = scmp.eq.s32.totalorder %s34, 0
      %p317 = por %p315, %p316
      %p318 = scmp.ne.s32.totalorder %s306, %s307
      %p319 = scmp.eq.s32.totalorder %s35, 1
      %p320 = por %p318, %p319
      %p322 = scmp.ne.s32.totalorder %s307, %s321
      %p323 = scmp.eq.s32.totalorder %s35, 0
      %p324 = por %p322, %p323
      %s326 = sadd.s32 %s325, 1
      %p329 = scmp.eq.s32.totalorder %s29, 1
      %p330 = scmp.ne.s32.totalorder %s325, %s327
      %p331 = scmp.eq.s32.totalorder %s29, 0
      %p332 = por %p330, %p331
      %p333 = scmp.ne.s32.totalorder %s325, %s327
      %p334 = scmp.eq.s32.totalorder %s34, 1
      %p335 = por %p333, %p334
      %p336 = scmp.ne.s32.totalorder %s327, %s328
      %p337 = scmp.eq.s32.totalorder %s34, 0
      %p338 = por %p336, %p337
      %p339 = scmp.ne.s32.totalorder %s327, %s328
      %p340 = scmp.eq.s32.totalorder %s35, 1
      %p341 = por %p339, %p340
      %p343 = scmp.ne.s32.totalorder %s328, %s342
      %p344 = scmp.eq.s32.totalorder %s35, 0
      %p345 = por %p343, %p344
      %s347 = sadd.s32 %s346, 1
      %p350 = scmp.eq.s32.totalorder %s29, 1
      %p351 = scmp.ne.s32.totalorder %s346, %s348
      %p352 = scmp.eq.s32.totalorder %s29, 0
      %p353 = por %p351, %p352
      %p354 = scmp.ne.s32.totalorder %s346, %s348
      %p355 = scmp.eq.s32.totalorder %s34, 1
      %p356 = por %p354, %p355
      %p357 = scmp.ne.s32.totalorder %s348, %s349
      %p358 = scmp.eq.s32.totalorder %s34, 0
      %p359 = por %p357, %p358
      %p360 = scmp.ne.s32.totalorder %s348, %s349
      %p361 = scmp.eq.s32.totalorder %s35, 1
      %p362 = por %p360, %p361
      %p364 = scmp.ne.s32.totalorder %s349, %s363
      %p365 = scmp.eq.s32.totalorder %s35, 0
      %p366 = por %p364, %p365
      %s368 = sadd.s32 %s367, 1
      %p371 = scmp.eq.s32.totalorder %s29, 1
      %p372 = scmp.ne.s32.totalorder %s367, %s369
      %p373 = scmp.eq.s32.totalorder %s29, 0
      %p374 = por %p372, %p373
      %p375 = scmp.ne.s32.totalorder %s367, %s369
      %p376 = scmp.eq.s32.totalorder %s34, 1
      %p377 = por %p375, %p376
      %p378 = scmp.ne.s32.totalorder %s369, %s370
      %p379 = scmp.eq.s32.totalorder %s34, 0
      %p380 = por %p378, %p379
      %p381 = scmp.ne.s32.totalorder %s369, %s370
      %p382 = scmp.eq.s32.totalorder %s35, 1
      %p383 = por %p381, %p382
      %p385 = scmp.ne.s32.totalorder %s370, %s384
      %p386 = scmp.eq.s32.totalorder %s35, 0
      %p387 = por %p385, %p386
      %s389 = sadd.s32 %s388, 1
      %p392 = scmp.eq.s32.totalorder %s29, 1
      %p393 = scmp.ne.s32.totalorder %s388, %s390
      %p394 = scmp.eq.s32.totalorder %s29, 0
      %p395 = por %p393, %p394
      %p396 = scmp.ne.s32.totalorder %s388, %s390
      %p397 = scmp.eq.s32.totalorder %s34, 1
      %p398 = por %p396, %p397
      %p399 = scmp.ne.s32.totalorder %s390, %s391
      %p400 = scmp.eq.s32.totalorder %s34, 0
      %p401 = por %p399, %p400
      %p402 = scmp.ne.s32.totalorder %s390, %s391
      %p403 = scmp.eq.s32.totalorder %s35, 1
      %p404 = por %p402, %p403
      %p406 = scmp.ne.s32.totalorder %s391, %s405
      %p407 = scmp.eq.s32.totalorder %s35, 0
      %p408 = por %p406, %p407
      %s410 = sadd.s32 %s409, 1
      %p413 = scmp.eq.s32.totalorder %s29, 1
      %p414 = scmp.ne.s32.totalorder %s409, %s411
      %p415 = scmp.eq.s32.totalorder %s29, 0
      %p416 = por %p414, %p415
      %p417 = scmp.ne.s32.totalorder %s409, %s411
      %p418 = scmp.eq.s32.totalorder %s34, 1
      %p419 = por %p417, %p418
      %p420 = scmp.ne.s32.totalorder %s411, %s412
      %p421 = scmp.eq.s32.totalorder %s34, 0
      %p422 = por %p420, %p421
      %p423 = scmp.ne.s32.totalorder %s411, %s412
      %p424 = scmp.eq.s32.totalorder %s35, 1
      %p425 = por %p423, %p424
      %p427 = scmp.ne.s32.totalorder %s412, %s426
      %p428 = scmp.eq.s32.totalorder %s35, 0
      %p429 = por %p427, %p428
      %s431 = sadd.s32 %s430, 1
      %p434 = scmp.eq.s32.totalorder %s29, 1
      %p435 = scmp.ne.s32.totalorder %s430, %s432
      %p436 = scmp.eq.s32.totalorder %s29, 0
      %p437 = por %p435, %p436
      %p438 = scmp.ne.s32.totalorder %s430, %s432
      %p439 = scmp.eq.s32.totalorder %s34, 1
      %p440 = por %p438, %p439
      %p441 = scmp.ne.s32.totalorder %s432, %s433
      %p442 = scmp.eq.s32.totalorder %s34, 0
      %p443 = por %p441, %p442
      %p444 = scmp.ne.s32.totalorder %s432, %s433
      %p445 = scmp.eq.s32.totalorder %s35, 1
      %p446 = por %p444, %p445
      %p448 = scmp.ne.s32.totalorder %s433, %s447
      %p449 = scmp.eq.s32.totalorder %s35, 0
      %p450 = por %p448, %p449
      %s452 = sadd.s32 %s451, 1
      %p455 = scmp.eq.s32.totalorder %s29, 1
      %p456 = scmp.ne.s32.totalorder %s451, %s453
      %p457 = scmp.eq.s32.totalorder %s29, 0
      %p458 = por %p456, %p457
      %p459 = scmp.ne.s32.totalorder %s451, %s453
      %p460 = scmp.eq.s32.totalorder %s34, 1
      %p461 = por %p459, %p460
      %p462 = scmp.ne.s32.totalorder %s453, %s454
      %p463 = scmp.eq.s32.totalorder %s34, 0
      %p464 = por %p462, %p463
      %p465 = scmp.ne.s32.totalorder %s453, %s454
      %p466 = scmp.eq.s32.totalorder %s35, 1
      %p467 = por %p465, %p466
      %p469 = scmp.ne.s32.totalorder %s454, %s468
      %p470 = scmp.eq.s32.totalorder %s35, 0
      %p471 = por %p469, %p470
      %s472 = ssub.s32 %s29, %s36
      %p473 = scmp.eq.s32.totalorder %s472, 0
      %s475 = sadd.s32 %s474, 1
      %s476 = scalar_select %p473, %s474, %s475
      %p479 = pneg %p473
      %p480 = scmp.eq.s32.totalorder %s29, 1
      %p481 = por %p479, %p480
      %p482 = scmp.ne.s32.totalorder %s474, %s477
      %p483 = scmp.eq.s32.totalorder %s29, 0
      %p484 = por %p482, %p483
      %p485 = scmp.ne.s32.totalorder %s474, %s477
      %p486 = scmp.eq.s32.totalorder %s34, 1
      %p487 = por %p485, %p486
      %p488 = scmp.ne.s32.totalorder %s477, %s478
      %p489 = scmp.eq.s32.totalorder %s34, 0
      %p490 = por %p488, %p489
      %p491 = scmp.ne.s32.totalorder %s477, %s478
      %p492 = scmp.eq.s32.totalorder %s35, 1
      %p493 = por %p491, %p492
      %p495 = scmp.ne.s32.totalorder %s478, %s494
      %p496 = scmp.eq.s32.totalorder %s35, 0
      %p497 = por %p495, %p496
      %p498 = scmp.le.s32.totalorder 1, %s29
      %p499 = scmp.lt.s32.totalorder %s29, 3
      %p500 = pnand %p498, %p499
      %p501 = pneg %p500
      // Predicated region
      $region9: #{retriever_forward.1} parent=5 // pred_check
        _
      $region10: #{retriever_forward.1} parent=5 // pred_check_branch
        %503 = sbr.rel (%p500) target = $region12
      $region11: #{retriever_forward.1} parent=5 // pred_region
        %s504 = ssub.s32 %s29, 1
        // Predicated region
        $region13: #{retriever_forward.1} parent=11 // pred_check
          %p505 = pneg %p128
        $region14: #{retriever_forward.1} parent=11 // pred_check_branch
          %507 = sbr.rel (%p505) target = $region16
        $region15: #{retriever_forward.1} parent=11 // pred_region
          _
        $region16: #{retriever_forward.1} parent=11 // pred_fallthru
          _
        // Predicated region
        $region17: #{retriever_forward.1} parent=11 // pred_check
          %p508 = pneg %p149
        $region18: #{retriever_forward.1} parent=11 // pred_check_branch
          %510 = sbr.rel (%p508) target = $region20
        $region19: #{retriever_forward.1} parent=11 // pred_region
          _
        $region20: #{retriever_forward.1} parent=11 // pred_fallthru
          _
        // Predicated region
        $region21: #{retriever_forward.1} parent=11 // pred_check
          %p511 = pneg %p170
        $region22: #{retriever_forward.1} parent=11 // pred_check_branch
          %513 = sbr.rel (%p511) target = $region24
        $region23: #{retriever_forward.1} parent=11 // pred_region
          _
        $region24: #{retriever_forward.1} parent=11 // pred_fallthru
          _
        // Predicated region
        $region25: #{retriever_forward.1} parent=11 // pred_check
          %p514 = pneg %p191
        $region26: #{retriever_forward.1} parent=11 // pred_check_branch
          %516 = sbr.rel (%p514) target = $region28
        $region27: #{retriever_forward.1} parent=11 // pred_region
          _
        $region28: #{retriever_forward.1} parent=11 // pred_fallthru
          _
        // Predicated region
        $region29: #{retriever_forward.1} parent=11 // pred_check
          %p517 = pneg %p212
        $region30: #{retriever_forward.1} parent=11 // pred_check_branch
          %519 = sbr.rel (%p517) target = $region32
        $region31: #{retriever_forward.1} parent=11 // pred_region
          _
        $region32: #{retriever_forward.1} parent=11 // pred_fallthru
          _
        // Predicated region
        $region33: #{retriever_forward.1} parent=11 // pred_check
          %p520 = pneg %p233
        $region34: #{retriever_forward.1} parent=11 // pred_check_branch
          %522 = sbr.rel (%p520) target = $region36
        $region35: #{retriever_forward.1} parent=11 // pred_region
          _
        $region36: #{retriever_forward.1} parent=11 // pred_fallthru
          _
        // Predicated region
        $region37: #{retriever_forward.1} parent=11 // pred_check
          %p523 = pneg %p254
        $region38: #{retriever_forward.1} parent=11 // pred_check_branch
          %525 = sbr.rel (%p523) target = $region40
        $region39: #{retriever_forward.1} parent=11 // pred_region
          _
        $region40: #{retriever_forward.1} parent=11 // pred_fallthru
          _
        // Predicated region
        $region41: #{retriever_forward.1} parent=11 // pred_check
          %p526 = pneg %p275
        $region42: #{retriever_forward.1} parent=11 // pred_check_branch
          %528 = sbr.rel (%p526) target = $region44
        $region43: #{retriever_forward.1} parent=11 // pred_region
          _
        $region44: #{retriever_forward.1} parent=11 // pred_fallthru
          _
        // Predicated region
        $region45: #{retriever_forward.1} parent=11 // pred_check
          %p529 = pneg %p296
        $region46: #{retriever_forward.1} parent=11 // pred_check_branch
          %531 = sbr.rel (%p529) target = $region48
        $region47: #{retriever_forward.1} parent=11 // pred_region
          _
        $region48: #{retriever_forward.1} parent=11 // pred_fallthru
          _
        // Predicated region
        $region49: #{retriever_forward.1} parent=11 // pred_check
          %p532 = pneg %p317
        $region50: #{retriever_forward.1} parent=11 // pred_check_branch
          %534 = sbr.rel (%p532) target = $region52
        $region51: #{retriever_forward.1} parent=11 // pred_region
          _
        $region52: #{retriever_forward.1} parent=11 // pred_fallthru
          _
        // Predicated region
        $region53: #{retriever_forward.1} parent=11 // pred_check
          %p535 = pneg %p338
        $region54: #{retriever_forward.1} parent=11 // pred_check_branch
          %537 = sbr.rel (%p535) target = $region56
        $region55: #{retriever_forward.1} parent=11 // pred_region
          _
        $region56: #{retriever_forward.1} parent=11 // pred_fallthru
          _
        // Predicated region
        $region57: #{retriever_forward.1} parent=11 // pred_check
          %p538 = pneg %p359
        $region58: #{retriever_forward.1} parent=11 // pred_check_branch
          %540 = sbr.rel (%p538) target = $region60
        $region59: #{retriever_forward.1} parent=11 // pred_region
          _
        $region60: #{retriever_forward.1} parent=11 // pred_fallthru
          _
        // Predicated region
        $region61: #{retriever_forward.1} parent=11 // pred_check
          %p541 = pneg %p380
        $region62: #{retriever_forward.1} parent=11 // pred_check_branch
          %543 = sbr.rel (%p541) target = $region64
        $region63: #{retriever_forward.1} parent=11 // pred_region
          _
        $region64: #{retriever_forward.1} parent=11 // pred_fallthru
          _
        // Predicated region
        $region65: #{retriever_forward.1} parent=11 // pred_check
          %p544 = pneg %p401
        $region66: #{retriever_forward.1} parent=11 // pred_check_branch
          %546 = sbr.rel (%p544) target = $region68
        $region67: #{retriever_forward.1} parent=11 // pred_region
          _
        $region68: #{retriever_forward.1} parent=11 // pred_fallthru
          _
        // Predicated region
        $region69: #{retriever_forward.1} parent=11 // pred_check
          %p547 = pneg %p422
        $region70: #{retriever_forward.1} parent=11 // pred_check_branch
          %549 = sbr.rel (%p547) target = $region72
        $region71: #{retriever_forward.1} parent=11 // pred_region
          _
        $region72: #{retriever_forward.1} parent=11 // pred_fallthru
          _
        // Predicated region
        $region73: #{retriever_forward.1} parent=11 // pred_check
          %p550 = pneg %p443
        $region74: #{retriever_forward.1} parent=11 // pred_check_branch
          %552 = sbr.rel (%p550) target = $region76
        $region75: #{retriever_forward.1} parent=11 // pred_region
          _
        $region76: #{retriever_forward.1} parent=11 // pred_fallthru
          _
        // Predicated region
        $region77: #{retriever_forward.1} parent=11 // pred_check
          %p553 = pneg %p464
        $region78: #{retriever_forward.1} parent=11 // pred_check_branch
          %555 = sbr.rel (%p553) target = $region80
        $region79: #{retriever_forward.1} parent=11 // pred_region
          _
        $region80: #{retriever_forward.1} parent=11 // pred_fallthru
          _
      $region12: #{retriever_forward.1} parent=5 // pred_fallthru
        _
      %p556 = scmp.lt.s32.totalorder %s29, 2
      // Predicated region
      $region81: #{retriever_forward.1} parent=5 // pred_check
        %p557 = pneg %p556
      $region82: #{retriever_forward.1} parent=5 // pred_check_branch
        %559 = sbr.rel (%p557) target = $region84
      $region83: #{retriever_forward.1} parent=5 // pred_region
        // Predicated region
        $region85: #{retriever_forward.1} parent=83 // pred_check
          %p560 = pneg %p49
        $region86: #{retriever_forward.1} parent=83 // pred_check_branch
          %562 = sbr.rel (%p560) target = $region88
        $region87: #{retriever_forward.1} parent=83 // pred_region
          %p563 = scmp.lt.s32.totalorder %s29, 1
          %s564 = scalar_select %p563, %s29, 1
          %s565 = smul.addr %s564, 16
          %s566 = smul.addr %s565, 8
          %s567 = scalar_lea.vmem %s0, %s566
        $region88: #{retriever_forward.1} parent=83 // pred_fallthru
          _
        // Predicated region
        $region89: #{retriever_forward.1} parent=83 // pred_check
          %p568 = pneg %p75
        $region90: #{retriever_forward.1} parent=83 // pred_check_branch
          %570 = sbr.rel (%p568) target = $region92
        $region91: #{retriever_forward.1} parent=83 // pred_region
          %p571 = scmp.lt.s32.totalorder %s29, 1
          %s572 = scalar_select %p571, %s29, 1
          %s573 = scalar_lea.vmem %s1, %s572
        $region92: #{retriever_forward.1} parent=83 // pred_fallthru
          _
        // Predicated region
        $region93: #{retriever_forward.1} parent=83 // pred_check
          %p574 = pneg %p101
        $region94: #{retriever_forward.1} parent=83 // pred_check_branch
          %576 = sbr.rel (%p574) target = $region96
        $region95: #{retriever_forward.1} parent=83 // pred_region
          %p577 = scmp.lt.s32.totalorder %s29, 1
          %s578 = scalar_select %p577, %s29, 1
          %s579 = smul.addr %s578, 8
          %s580 = scalar_lea.vmem %s2, %s579
        $region96: #{retriever_forward.1} parent=83 // pred_fallthru
          _
      $region84: #{retriever_forward.1} parent=5 // pred_fallthru
        _
      %p581 = scmp.le.s32.totalorder 1, %s29
      %p582 = scmp.lt.s32.totalorder %s29, 3
      %p583 = pnand %p581, %p582
      %p584 = pneg %p583
      // Predicated region
      $region97: #{retriever_forward.1} parent=5 // pred_check
        _
      $region98: #{retriever_forward.1} parent=5 // pred_check_branch
        %586 = sbr.rel (%p583) target = $region100
      $region99: #{retriever_forward.1} parent=5 // pred_region
        %s587 = ssub.s32 %s29, 1
        %p588 = scmp.lt.s32.totalorder %s34, 1
        %s589 = scalar_select %p588, %s34, 1
        %s590 = smul.addr %s589, 16
        %s591 = smul.addr %s590, 8
        %s592 = scalar_lea.vmem %s0, %s591
        %p593 = pneg %p55
        %p594 = pneg %p52
        %p595 = scmp.lt.s32.totalorder %s34, 1
        %s596 = scalar_select %p595, %s34, 1
        %s597 = scalar_lea.vmem %s1, %s596
        %p598 = pneg %p81
        %p599 = pneg %p78
        %p600 = scmp.lt.s32.totalorder %s34, 1
        %s601 = scalar_select %p600, %s34, 1
        %s602 = smul.addr %s601, 8
        %s603 = scalar_lea.vmem %s2, %s602
        %p604 = pneg %p107
        %p605 = pneg %p104
        %p606 = pneg %p128
        %p607 = pneg %p125
        %p608 = pneg %p149
        %p609 = pneg %p146
        %p610 = pneg %p170
        %p611 = pneg %p167
        %p612 = pneg %p191
        %p613 = pneg %p188
        %p614 = pneg %p212
        %p615 = pneg %p209
        %p616 = pneg %p233
        %p617 = pneg %p230
        %p618 = pneg %p254
        %p619 = pneg %p251
        %p620 = pneg %p275
        %p621 = pneg %p272
        %p622 = pneg %p296
        %p623 = pneg %p293
        %p624 = pneg %p317
        %p625 = pneg %p314
        %p626 = pneg %p338
        %p627 = pneg %p335
        %p628 = pneg %p359
        %p629 = pneg %p356
        %p630 = pneg %p380
        %p631 = pneg %p377
        %p632 = pneg %p401
        %p633 = pneg %p398
        %p634 = pneg %p422
        %p635 = pneg %p419
        %p636 = pneg %p443
        %p637 = pneg %p440
        %p638 = pneg %p464
        %p639 = pneg %p461
        %p640 = pneg %p490
        %p641 = pneg %p487
        %s642 = sand.u32 %s477, 1
        %s643 = scalar_lea.sflag [#allocation3], %s642
        %s644 = sand.u32 %s477, 1
        %s645 = scalar_lea.vmem [#allocation2], %s644
        %p646 = scmp.lt.s32.totalorder %s34, 1
        %s647 = scalar_select %p646, %s34, 1
        %s648 = smul.addr %s647, 16
        %s649 = smul.addr %s648, 8
        %s650 = scalar_lea.vmem %s0, %s649
        %p651 = scmp.lt.s32.totalorder %s34, 1
        %s652 = scalar_select %p651, %s34, 1
        %s653 = scalar_lea.vmem %s1, %s652
        %p654 = scmp.lt.s32.totalorder %s34, 1
        %s655 = scalar_select %p654, %s34, 1
        %s656 = smul.addr %s655, 8
        %s657 = scalar_lea.vmem %s2, %s656
        %v659 = vld [vmem:[%s650] sm:$0xff]
        %v660 = vld [vmem:[%s650 + $0x8] sm:$0xff]
        %v661 = vld [vmem:[%s650 + $0x10] sm:$0xff]
        %v662 = vld [vmem:[%s650 + $0x18] sm:$0xff]
        %v663 = vld [vmem:[%s650 + $0x20] sm:$0xff]
        %v664 = vld [vmem:[%s650 + $0x28] sm:$0xff]
        %v665 = vld [vmem:[%s650 + $0x30] sm:$0xff]
        %v666 = vld [vmem:[%s650 + $0x38] sm:$0xff]
        %v667 = vld [vmem:[%s650 + $0x40] sm:$0xff]
        %v668 = vld [vmem:[%s650 + $0x48] sm:$0xff]
        %v669 = vld [vmem:[%s650 + $0x50] sm:$0xff]
        %v670 = vld [vmem:[%s650 + $0x58] sm:$0xff]
        %v671 = vld [vmem:[%s650 + $0x60] sm:$0xff]
        %v672 = vld [vmem:[%s650 + $0x68] sm:$0xff]
        %v673 = vld [vmem:[%s650 + $0x70] sm:$0xff]
        %v674 = vld [vmem:[%s650 + $0x78] sm:$0xff]
        %v675 = vld [vmem:[%s4] sm:$0x1]
        %v676 = vld [vmem:[%s5] sm:$0x1]
        %vm677 = vcmask 261120
        %v678 = vsel %vm677, %v659, 0.0
        %679 = vadd.xlane.f32.xlu0 %v678
        %v680 = vpop.xlane.xlu0 %679
        %v681 = vsel %vm677, %v660, 0.0
        %682 = vadd.xlane.f32.xlu0 %v681
        %v683 = vpop.xlane.xlu0 %682
        %v684 = vsel %vm677, %v661, 0.0
        %685 = vadd.xlane.f32.xlu0 %v684
        %v686 = vpop.xlane.xlu0 %685
        %v687 = vsel %vm677, %v662, 0.0
        %688 = vadd.xlane.f32.xlu0 %v687
        %v689 = vpop.xlane.xlu0 %688
        %v690 = vsel %vm677, %v663, 0.0
        %691 = vadd.xlane.f32.xlu0 %v690
        %v692 = vpop.xlane.xlu0 %691
        %v693 = vsel %vm677, %v664, 0.0
        %694 = vadd.xlane.f32.xlu0 %v693
        %v695 = vpop.xlane.xlu0 %694
        %v696 = vsel %vm677, %v665, 0.0
        %697 = vadd.xlane.f32.xlu0 %v696
        %v698 = vpop.xlane.xlu0 %697
        %v699 = vsel %vm677, %v666, 0.0
        %700 = vadd.xlane.f32.xlu0 %v699
        %v701 = vpop.xlane.xlu0 %700
        %v702 = vsel %vm677, %v667, 0.0
        %703 = vadd.xlane.f32.xlu0 %v702
        %v704 = vpop.xlane.xlu0 %703
        %v705 = vsel %vm677, %v668, 0.0
        %706 = vadd.xlane.f32.xlu0 %v705
        %v707 = vpop.xlane.xlu0 %706
        %v708 = vsel %vm677, %v669, 0.0
        %709 = vadd.xlane.f32.xlu0 %v708
        %v710 = vpop.xlane.xlu0 %709
        %v711 = vsel %vm677, %v670, 0.0
        %712 = vadd.xlane.f32.xlu0 %v711
        %v713 = vpop.xlane.xlu0 %712
        %v714 = vsel %vm677, %v671, 0.0
        %715 = vadd.xlane.f32.xlu0 %v714
        %v716 = vpop.xlane.xlu0 %715
        %v717 = vsel %vm677, %v672, 0.0
        %718 = vadd.xlane.f32.xlu0 %v717
        %v719 = vpop.xlane.xlu0 %718
        %v720 = vsel %vm677, %v673, 0.0
        %721 = vadd.xlane.f32.xlu0 %v720
        %v722 = vpop.xlane.xlu0 %721
        %v723 = vsel %vm677, %v674, 0.0
        %724 = vadd.xlane.f32.xlu0 %v723
        %v725 = vpop.xlane.xlu0 %724
        %v726 = vrcp.pop 32.0
        %v727 = vmul.f32 %v680, %v726
        %v728 = vmul.f32 %v683, %v726
        %v729 = vmul.f32 %v686, %v726
        %v730 = vmul.f32 %v689, %v726
        %v731 = vmul.f32 %v692, %v726
        %v732 = vmul.f32 %v695, %v726
        %v733 = vmul.f32 %v698, %v726
        %v734 = vmul.f32 %v701, %v726
        %v735 = vmul.f32 %v704, %v726
        %v736 = vmul.f32 %v707, %v726
        %v737 = vmul.f32 %v710, %v726
        %v738 = vmul.f32 %v713, %v726
        %v739 = vmul.f32 %v716, %v726
        %v740 = vmul.f32 %v719, %v726
        %v741 = vmul.f32 %v722, %v726
        %v742 = vmul.f32 %v725, %v726
        %v743 = vsub.f32 %v659, %v727
        %v744 = vsub.f32 %v660, %v728
        %v745 = vsub.f32 %v661, %v729
        %v746 = vsub.f32 %v662, %v730
        %v747 = vsub.f32 %v663, %v731
        %v748 = vsub.f32 %v664, %v732
        %v749 = vsub.f32 %v665, %v733
        %v750 = vsub.f32 %v666, %v734
        %v751 = vsub.f32 %v667, %v735
        %v752 = vsub.f32 %v668, %v736
        %v753 = vsub.f32 %v669, %v737
        %v754 = vsub.f32 %v670, %v738
        %v755 = vsub.f32 %v671, %v739
        %v756 = vsub.f32 %v672, %v740
        %v757 = vsub.f32 %v673, %v741
        %v758 = vsub.f32 %v674, %v742
        %v759 = vmul.f32 %v743, %v743
        %v760 = vmul.f32 %v744, %v744
        %v761 = vmul.f32 %v745, %v745
        %v762 = vmul.f32 %v746, %v746
        %v763 = vmul.f32 %v747, %v747
        %v764 = vmul.f32 %v748, %v748
        %v765 = vmul.f32 %v749, %v749
        %v766 = vmul.f32 %v750, %v750
        %v767 = vmul.f32 %v751, %v751
        %v768 = vmul.f32 %v752, %v752
        %v769 = vmul.f32 %v753, %v753
        %v770 = vmul.f32 %v754, %v754
        %v771 = vmul.f32 %v755, %v755
        %v772 = vmul.f32 %v756, %v756
        %v773 = vmul.f32 %v757, %v757
        %v774 = vmul.f32 %v758, %v758
        %v775 = vsel %vm677, %v759, 0.0
        %776 = vadd.xlane.f32.xlu0 %v775
        %v777 = vpop.xlane.xlu0 %776
        %v778 = vsel %vm677, %v760, 0.0
        %779 = vadd.xlane.f32.xlu0 %v778
        %v780 = vpop.xlane.xlu0 %779
        %v781 = vsel %vm677, %v761, 0.0
        %782 = vadd.xlane.f32.xlu0 %v781
        %v783 = vpop.xlane.xlu0 %782
        %v784 = vsel %vm677, %v762, 0.0
        %785 = vadd.xlane.f32.xlu0 %v784
        %v786 = vpop.xlane.xlu0 %785
        %v787 = vsel %vm677, %v763, 0.0
        %788 = vadd.xlane.f32.xlu0 %v787
        %v789 = vpop.xlane.xlu0 %788
        %v790 = vsel %vm677, %v764, 0.0
        %791 = vadd.xlane.f32.xlu0 %v790
        %v792 = vpop.xlane.xlu0 %791
        %v793 = vsel %vm677, %v765, 0.0
        %794 = vadd.xlane.f32.xlu0 %v793
        %v795 = vpop.xlane.xlu0 %794
        %v796 = vsel %vm677, %v766, 0.0
        %797 = vadd.xlane.f32.xlu0 %v796
        %v798 = vpop.xlane.xlu0 %797
        %v799 = vsel %vm677, %v767, 0.0
        %800 = vadd.xlane.f32.xlu0 %v799
        %v801 = vpop.xlane.xlu0 %800
        %v802 = vsel %vm677, %v768, 0.0
        %803 = vadd.xlane.f32.xlu0 %v802
        %v804 = vpop.xlane.xlu0 %803
        %v805 = vsel %vm677, %v769, 0.0
        %806 = vadd.xlane.f32.xlu0 %v805
        %v807 = vpop.xlane.xlu0 %806
        %v808 = vsel %vm677, %v770, 0.0
        %809 = vadd.xlane.f32.xlu0 %v808
        %v810 = vpop.xlane.xlu0 %809
        %v811 = vsel %vm677, %v771, 0.0
        %812 = vadd.xlane.f32.xlu0 %v811
        %v813 = vpop.xlane.xlu0 %812
        %v814 = vsel %vm677, %v772, 0.0
        %815 = vadd.xlane.f32.xlu0 %v814
        %v816 = vpop.xlane.xlu0 %815
        %v817 = vsel %vm677, %v773, 0.0
        %818 = vadd.xlane.f32.xlu0 %v817
        %v819 = vpop.xlane.xlu0 %818
        %v820 = vsel %vm677, %v774, 0.0
        %821 = vadd.xlane.f32.xlu0 %v820
        %v822 = vpop.xlane.xlu0 %821
        %v823 = vmul.f32 %v777, %v726
        %v824 = vmul.f32 %v780, %v726
        %v825 = vmul.f32 %v783, %v726
        %v826 = vmul.f32 %v786, %v726
        %v827 = vmul.f32 %v789, %v726
        %v828 = vmul.f32 %v792, %v726
        %v829 = vmul.f32 %v795, %v726
        %v830 = vmul.f32 %v798, %v726
        %v831 = vmul.f32 %v801, %v726
        %v832 = vmul.f32 %v804, %v726
        %v833 = vmul.f32 %v807, %v726
        %v834 = vmul.f32 %v810, %v726
        %v835 = vmul.f32 %v813, %v726
        %v836 = vmul.f32 %v816, %v726
        %v837 = vmul.f32 %v819, %v726
        %v838 = vmul.f32 %v822, %v726
        %v839 = vadd.f32 %v823, 1e-12
        %v840 = vadd.f32 %v824, 1e-12
        %v841 = vadd.f32 %v825, 1e-12
        %v842 = vadd.f32 %v826, 1e-12
        %v843 = vadd.f32 %v827, 1e-12
        %v844 = vadd.f32 %v828, 1e-12
        %v845 = vadd.f32 %v829, 1e-12
        %v846 = vadd.f32 %v830, 1e-12
        %v847 = vadd.f32 %v831, 1e-12
        %v848 = vadd.f32 %v832, 1e-12
        %v849 = vadd.f32 %v833, 1e-12
        %v850 = vadd.f32 %v834, 1e-12
        %v851 = vadd.f32 %v835, 1e-12
        %v852 = vadd.f32 %v836, 1e-12
        %v853 = vadd.f32 %v837, 1e-12
        %v854 = vadd.f32 %v838, 1e-12
        %v855 = vrsqrt.pop %v839
        %v856 = vrsqrt.pop %v840
        %v857 = vrsqrt.pop %v841
        %v858 = vrsqrt.pop %v842
        %v859 = vrsqrt.pop %v843
        %v860 = vrsqrt.pop %v844
        %v861 = vrsqrt.pop %v845
        %v862 = vrsqrt.pop %v846
        %v863 = vrsqrt.pop %v847
        %v864 = vrsqrt.pop %v848
        %v865 = vrsqrt.pop %v849
        %v866 = vrsqrt.pop %v850
        %v867 = vrsqrt.pop %v851
        %v868 = vrsqrt.pop %v852
        %v869 = vrsqrt.pop %v853
        %v870 = vrsqrt.pop %v854
        %v871 = vmul.f32 %v743, %v855
        %v872 = vmul.f32 %v744, %v856
        %v873 = vmul.f32 %v745, %v857
        %v874 = vmul.f32 %v746, %v858
        %v875 = vmul.f32 %v747, %v859
        %v876 = vmul.f32 %v748, %v860
        %v877 = vmul.f32 %v749, %v861
        %v878 = vmul.f32 %v750, %v862
        %v879 = vmul.f32 %v751, %v863
        %v880 = vmul.f32 %v752, %v864
        %v881 = vmul.f32 %v753, %v865
        %v882 = vmul.f32 %v754, %v866
        %v883 = vmul.f32 %v755, %v867
        %v884 = vmul.f32 %v756, %v868
        %v885 = vmul.f32 %v757, %v869
        %v886 = vmul.f32 %v758, %v870
        %v888 = vlaneseq
        %v889 = vshrl.u32 %v888, 7
        %v890 = vsub.s32 0, %v889
        %v891 = vrot.slane %v675, %v890
        %v893 = vmul.f32 %v871, %v891
        %v894 = vmul.f32 %v872, %v891
        %v895 = vmul.f32 %v873, %v891
        %v896 = vmul.f32 %v874, %v891
        %v897 = vmul.f32 %v875, %v891
        %v898 = vmul.f32 %v876, %v891
        %v899 = vmul.f32 %v877, %v891
        %v900 = vmul.f32 %v878, %v891
        %v901 = vmul.f32 %v879, %v891
        %v902 = vmul.f32 %v880, %v891
        %v903 = vmul.f32 %v881, %v891
        %v904 = vmul.f32 %v882, %v891
        %v905 = vmul.f32 %v883, %v891
        %v906 = vmul.f32 %v884, %v891
        %v907 = vmul.f32 %v885, %v891
        %v908 = vmul.f32 %v886, %v891
        %v910 = vlaneseq
        %v911 = vshrl.u32 %v910, 7
        %v912 = vsub.s32 0, %v911
        %v913 = vrot.slane %v676, %v912
        %v915 = vadd.f32 %v893, %v913
        %v916 = vadd.f32 %v894, %v913
        %v917 = vadd.f32 %v895, %v913
        %v918 = vadd.f32 %v896, %v913
        %v919 = vadd.f32 %v897, %v913
        %v920 = vadd.f32 %v898, %v913
        %v921 = vadd.f32 %v899, %v913
        %v922 = vadd.f32 %v900, %v913
        %v923 = vadd.f32 %v901, %v913
        %v924 = vadd.f32 %v902, %v913
        %v925 = vadd.f32 %v903, %v913
        %v926 = vadd.f32 %v904, %v913
        %v927 = vadd.f32 %v905, %v913
        %v928 = vadd.f32 %v906, %v913
        %v929 = vadd.f32 %v907, %v913
        %v930 = vadd.f32 %v908, %v913
        %v931 = vld [vmem:[%s3] sm:$0xff]
        %v932 = vld [vmem:[%s3 + $0x8] sm:$0xff]
        %v933 = vld [vmem:[%s3 + $0x10] sm:$0xff]
        %v934 = vld [vmem:[%s3 + $0x18] sm:$0xff]
        %v935 = vld [vmem:[%s3 + $0x20] sm:$0xff]
        %v936 = vld [vmem:[%s3 + $0x28] sm:$0xff]
        %v937 = vld [vmem:[%s3 + $0x30] sm:$0xff]
        %v938 = vld [vmem:[%s3 + $0x38] sm:$0xff]
        %v939 = vld [vmem:[%s3 + $0x40] sm:$0xff]
        %v940 = vld [vmem:[%s3 + $0x48] sm:$0xff]
        %v941 = vld [vmem:[%s3 + $0x50] sm:$0xff]
        %v942 = vld [vmem:[%s3 + $0x58] sm:$0xff]
        %v943 = vld [vmem:[%s3 + $0x60] sm:$0xff]
        %v944 = vld [vmem:[%s3 + $0x68] sm:$0xff]
        %v945 = vld [vmem:[%s3 + $0x70] sm:$0xff]
        %v946 = vld [vmem:[%s3 + $0x78] sm:$0xff]
        %v947 = vld [vmem:[%s653] sm:$0x1]
        %v949 = vlaneseq
        %v950 = vshrl.u32 %v949, 7
        %v951 = vsub.s32 0, %v950
        %v952 = vrot.slane %v947, %v951
        %v954 = vadd.f32 %v931, %v952
        %v955 = vadd.f32 %v932, %v952
        %v956 = vadd.f32 %v933, %v952
        %v957 = vadd.f32 %v934, %v952
        %v958 = vadd.f32 %v935, %v952
        %v959 = vadd.f32 %v936, %v952
        %v960 = vadd.f32 %v937, %v952
        %v961 = vadd.f32 %v938, %v952
        %v962 = vadd.f32 %v939, %v952
        %v963 = vadd.f32 %v940, %v952
        %v964 = vadd.f32 %v941, %v952
        %v965 = vadd.f32 %v942, %v952
        %v966 = vadd.f32 %v943, %v952
        %v967 = vadd.f32 %v944, %v952
        %v968 = vadd.f32 %v945, %v952
        %v969 = vadd.f32 %v946, %v952
        %v970 = vpack.c.bf16 %v916, %v915
        %v971 = vpack.c.bf16 %v918, %v917
        %v972 = vpack.c.bf16 %v920, %v919
        %v973 = vpack.c.bf16 %v922, %v921
        %v974 = vpack.c.bf16 %v924, %v923
        %v975 = vpack.c.bf16 %v926, %v925
        %v976 = vpack.c.bf16 %v928, %v927
        %v977 = vpack.c.bf16 %v930, %v929
        %v978 = vld [vmem:[%s6] sm:$0xf]
        %v979 = vld [vmem:[%s6 + $0x4] sm:$0xf]
        %v980 = vld [vmem:[%s6 + $0x8] sm:$0xf]
        %v981 = vld [vmem:[%s6 + $0xc] sm:$0xf]
        %v982 = vld [vmem:[%s7] sm:$0x1]
        %v984 = vlaneseq
        %v985 = vshrl.u32 %v984, 7
        %v986 = vsub.s32 0, %v985
        %v987 = vrot.slane %v982, %v986
        %v993 = vunpack.c.l.b16 %v978
        %v994 = vunpack.c.l.b16 %v979
        %v995 = vunpack.c.l.b16 %v980
        %v996 = vunpack.c.l.b16 %v981
        %v997 = vpack.c.b16 %v994, %v993
        %v998 = vpack.c.b16 %v996, %v995
        %v1002 = vsel %vm677, %v970, 0
        %v1005 = vsel %vm677, %v971, 0
        %v1008 = vsel %vm677, %v972, 0
        %v1011 = vsel %vm677, %v973, 0
        %v1014 = vsel %vm677, %v974, 0
        %v1017 = vsel %vm677, %v975, 0
        %v1020 = vsel %vm677, %v976, 0
        %v1023 = vsel %vm677, %v977, 0
        %1025 = vmatprep.subr.bf16.mxu0 0
        %1026 = vmatpush1.bf16.msra.mxu0 %v997
        %1027 = vmatprep.subr.bf16.mxu0 0
        %1028 = vmatpush1.bf16.msra.mxu0 %v998
        %1029 = vmatprep.subr.bf16.mxu0 0
        %1030 = vmatpush1.bf16.msra.mxu0 0
        %1031 = vmatprep.subr.bf16.mxu0 0
        %1032 = vmatpush1.bf16.msra.mxu0 0
        %1033 = vmatprep.subr.bf16.mxu0 0
        %1034 = vmatpush1.bf16.msra.mxu0 0
        %1035 = vmatprep.subr.bf16.mxu0 0
        %1036 = vmatpush1.bf16.msra.mxu0 0
        %1037 = vmatprep.subr.bf16.mxu0 0
        %1038 = vmatpush1.bf16.msra.mxu0 0
        %1039 = vmatprep.subr.bf16.mxu0 0
        %1040 = vmatpush1.bf16.msra.mxu0 0
        %1041 = vmatprep.subr.bf16.mxu0 0
        %1042 = vmatpush1.bf16.msra.mxu0 0
        %1043 = vmatprep.subr.bf16.mxu0 0
        %1044 = vmatpush1.bf16.msra.mxu0 0
        %1045 = vmatprep.subr.bf16.mxu0 0
        %1046 = vmatpush1.bf16.msra.mxu0 0
        %1047 = vmatprep.subr.bf16.mxu0 0
        %1048 = vmatpush1.bf16.msra.mxu0 0
        %1049 = vmatprep.subr.bf16.mxu0 0
        %1050 = vmatpush1.bf16.msra.mxu0 0
        %1051 = vmatprep.subr.bf16.mxu0 0
        %1052 = vmatpush1.bf16.msra.mxu0 0
        %1053 = vmatprep.subr.bf16.mxu0 0
        %1054 = vmatpush1.bf16.msra.mxu0 0
        %1055 = vmatprep.subr.bf16.mxu0 0
        %1056 = vmatpush1.bf16.msra.mxu0 0
        %1057 = vmatprep.mubr.bf16.mxu0 0
        %1058 = vmatmul.mubr.bf16.gmra.mrb[0].mxu0 %v1002
        %v1059 = vpop.f32.mrb[0].mxu0
        %v1060 = vadd.f32 %v987, %v1059
        %v1061 = vpop.f32.mrb[0].mxu0
        %v1062 = vpop.f32.mrb[0].mxu0
        %v1063 = vadd.f32 %v987, %v1062
        %v1064 = vpop.f32.mrb[0].mxu0
        %1065 = vmatprep.mubr.bf16.mxu0 0
        %1066 = vmatmul.mubr.bf16.gmra.mrb[0].mxu0 %v1005
        %v1067 = vpop.f32.mrb[0].mxu0
        %v1068 = vadd.f32 %v987, %v1067
        %v1069 = vpop.f32.mrb[0].mxu0
        %v1070 = vpop.f32.mrb[0].mxu0
        %v1071 = vadd.f32 %v987, %v1070
        %v1072 = vpop.f32.mrb[0].mxu0
        %1073 = vmatprep.mubr.bf16.mxu0 0
        %1074 = vmatmul.mubr.bf16.gmra.mrb[0].mxu0 %v1008
        %v1075 = vpop.f32.mrb[0].mxu0
        %v1076 = vadd.f32 %v987, %v1075
        %v1077 = vpop.f32.mrb[0].mxu0
        %v1078 = vpop.f32.mrb[0].mxu0
        %v1079 = vadd.f32 %v987, %v1078
        %v1080 = vpop.f32.mrb[0].mxu0
        %1081 = vmatprep.mubr.bf16.mxu0 0
        %1082 = vmatmul.mubr.bf16.gmra.mrb[0].mxu0 %v1011
        %v1083 = vpop.f32.mrb[0].mxu0
        %v1084 = vadd.f32 %v987, %v1083
        %v1085 = vpop.f32.mrb[0].mxu0
        %v1086 = vpop.f32.mrb[0].mxu0
        %v1087 = vadd.f32 %v987, %v1086
        %v1088 = vpop.f32.mrb[0].mxu0
        %1089 = vmatprep.mubr.bf16.mxu0 0
        %1090 = vmatmul.mubr.bf16.gmra.mrb[0].mxu0 %v1014
        %v1091 = vpop.f32.mrb[0].mxu0
        %v1092 = vadd.f32 %v987, %v1091
        %v1093 = vpop.f32.mrb[0].mxu0
        %v1094 = vpop.f32.mrb[0].mxu0
        %v1095 = vadd.f32 %v987, %v1094
        %v1096 = vpop.f32.mrb[0].mxu0
        %1097 = vmatprep.mubr.bf16.mxu0 0
        %1098 = vmatmul.mubr.bf16.gmra.mrb[0].mxu0 %v1017
        %v1099 = vpop.f32.mrb[0].mxu0
        %v1100 = vadd.f32 %v987, %v1099
        %v1101 = vpop.f32.mrb[0].mxu0
        %v1102 = vpop.f32.mrb[0].mxu0
        %v1103 = vadd.f32 %v987, %v1102
        %v1104 = vpop.f32.mrb[0].mxu0
        %1105 = vmatprep.mubr.bf16.mxu0 0
        %1106 = vmatmul.mubr.bf16.gmra.mrb[0].mxu0 %v1020
        %v1107 = vpop.f32.mrb[0].mxu0
        %v1108 = vadd.f32 %v987, %v1107
        %v1109 = vpop.f32.mrb[0].mxu0
        %v1110 = vpop.f32.mrb[0].mxu0
        %v1111 = vadd.f32 %v987, %v1110
        %v1112 = vpop.f32.mrb[0].mxu0
        %1113 = vmatprep.mubr.bf16.mxu0 0
        %1114 = vmatmul.mubr.bf16.gmra.mrb[0].mxu0 %v1023
        %v1115 = vpop.f32.mrb[0].mxu0
        %v1116 = vadd.f32 %v987, %v1115
        %v1117 = vpop.f32.mrb[0].mxu0
        %v1118 = vpop.f32.mrb[0].mxu0
        %v1119 = vadd.f32 %v987, %v1118
        %v1120 = vpop.f32.mrb[0].mxu0
        %1121 = vdwg.mxu0
        %v1122 = vpack.c.bf16 %v1063, %v1060
        %v1123 = vpack.c.bf16 %v1071, %v1068
        %v1124 = vpack.c.bf16 %v1079, %v1076
        %v1125 = vpack.c.bf16 %v1087, %v1084
        %v1126 = vpack.c.bf16 %v1095, %v1092
        %v1127 = vpack.c.bf16 %v1103, %v1100
        %v1128 = vpack.c.bf16 %v1111, %v1108
        %v1129 = vpack.c.bf16 %v1119, %v1116
        %1138 = vrot.lane.b32.xlu0 %v1122, 96
        %v1139 = vpop.permute.xlu0 %1138
        %1140 = vrot.lane.b32.xlu0 %v1123, 96
        %v1141 = vpop.permute.xlu0 %1140
        %1142 = vrot.lane.b32.xlu0 %v1124, 96
        %v1143 = vpop.permute.xlu0 %1142
        %1144 = vrot.lane.b32.xlu0 %v1125, 96
        %v1145 = vpop.permute.xlu0 %1144
        %1146 = vrot.lane.b32.xlu0 %v1126, 96
        %v1147 = vpop.permute.xlu0 %1146
        %1148 = vrot.lane.b32.xlu0 %v1127, 96
        %v1149 = vpop.permute.xlu0 %1148
        %1150 = vrot.lane.b32.xlu0 %v1128, 96
        %v1151 = vpop.permute.xlu0 %1150
        %1152 = vrot.lane.b32.xlu0 %v1129, 96
        %v1153 = vpop.permute.xlu0 %1152
        %vm1154 = vcmask 130048
        %v1156 = vsel %vm1154, %v1122, 0
        %v1159 = vsel %vm1154, %v1123, 0
        %v1162 = vsel %vm1154, %v1124, 0
        %v1165 = vsel %vm1154, %v1125, 0
        %v1168 = vsel %vm1154, %v1126, 0
        %v1171 = vsel %vm1154, %v1127, 0
        %v1174 = vsel %vm1154, %v1128, 0
        %v1177 = vsel %vm1154, %v1129, 0
        %v1180 = vsel %vm1154, %v1139, 0
        %v1183 = vsel %vm1154, %v1141, 0
        %v1186 = vsel %vm1154, %v1143, 0
        %v1189 = vsel %vm1154, %v1145, 0
        %v1192 = vsel %vm1154, %v1147, 0
        %v1195 = vsel %vm1154, %v1149, 0
        %v1198 = vsel %vm1154, %v1151, 0
        %v1201 = vsel %vm1154, %v1153, 0
        %1203 = vmatprep.subr.bf16.mxu0 0
        %1204 = vmatpush1.bf16.xpose.msra.mxu0 %v1180
        %1205 = vmatprep.subr.bf16.mxu0 0
        %1206 = vmatpush1.bf16.xpose.msra.mxu0 %v1183
        %1207 = vmatprep.subr.bf16.mxu0 0
        %1208 = vmatpush1.bf16.xpose.msra.mxu0 %v1186
        %1209 = vmatprep.subr.bf16.mxu0 0
        %1210 = vmatpush1.bf16.xpose.msra.mxu0 %v1189
        %1211 = vmatprep.subr.bf16.mxu0 0
        %1212 = vmatpush1.bf16.xpose.msra.mxu0 %v1192
        %1213 = vmatprep.subr.bf16.mxu0 0
        %1214 = vmatpush1.bf16.xpose.msra.mxu0 %v1195
        %1215 = vmatprep.subr.bf16.mxu0 0
        %1216 = vmatpush1.bf16.xpose.msra.mxu0 %v1198
        %1217 = vmatprep.subr.bf16.mxu0 0
        %1218 = vmatpush1.bf16.xpose.msra.mxu0 %v1201
        %1219 = vmatprep.subr.bf16.mxu0 0
        %1220 = vmatpush1.bf16.xpose.msra.mxu0 0
        %1221 = vmatprep.subr.bf16.mxu0 0
        %1222 = vmatpush1.bf16.xpose.msra.mxu0 0
        %1223 = vmatprep.subr.bf16.mxu0 0
        %1224 = vmatpush1.bf16.xpose.msra.mxu0 0
        %1225 = vmatprep.subr.bf16.mxu0 0
        %1226 = vmatpush1.bf16.xpose.msra.mxu0 0
        %1227 = vmatprep.subr.bf16.mxu0 0
        %1228 = vmatpush1.bf16.xpose.msra.mxu0 0
        %1229 = vmatprep.subr.bf16.mxu0 0
        %1230 = vmatpush1.bf16.xpose.msra.mxu0 0
        %1231 = vmatprep.subr.bf16.mxu0 0
        %1232 = vmatpush1.bf16.xpose.msra.mxu0 0
        %1233 = vmatprep.subr.bf16.mxu0 0
        %1234 = vmatpush1.bf16.xpose.msra.mxu0 0
        %1235 = vmatprep.mubr.bf16.mxu0 0
        %1236 = vmatmul.mubr.bf16.gmra.mrb[0].mxu0 %v1156
        %v1237 = vpop.f32.mrb[0].mxu0
        %v1238 = vadd.f32 0.0, %v1237
        %v1239 = vpop.f32.mrb[0].mxu0
        %v1240 = vpop.f32.mrb[0].mxu0
        %v1241 = vadd.f32 0.0, %v1240
        %v1242 = vpop.f32.mrb[0].mxu0
        %1243 = vmatprep.mubr.bf16.mxu0 0
        %1244 = vmatmul.mubr.bf16.gmra.mrb[0].mxu0 %v1159
        %v1245 = vpop.f32.mrb[0].mxu0
        %v1246 = vadd.f32 0.0, %v1245
        %v1247 = vpop.f32.mrb[0].mxu0
        %v1248 = vpop.f32.mrb[0].mxu0
        %v1249 = vadd.f32 0.0, %v1248
        %v1250 = vpop.f32.mrb[0].mxu0
        %1251 = vmatprep.mubr.bf16.mxu0 0
        %1252 = vmatmul.mubr.bf16.gmra.mrb[0].mxu0 %v1162
        %v1253 = vpop.f32.mrb[0].mxu0
        %v1254 = vadd.f32 0.0, %v1253
        %v1255 = vpop.f32.mrb[0].mxu0
        %v1256 = vpop.f32.mrb[0].mxu0
        %v1257 = vadd.f32 0.0, %v1256
        %v1258 = vpop.f32.mrb[0].mxu0
        %1259 = vmatprep.mubr.bf16.mxu0 0
        %1260 = vmatmul.mubr.bf16.gmra.mrb[0].mxu0 %v1165
        %v1261 = vpop.f32.mrb[0].mxu0
        %v1262 = vadd.f32 0.0, %v1261
        %v1263 = vpop.f32.mrb[0].mxu0
        %v1264 = vpop.f32.mrb[0].mxu0
        %v1265 = vadd.f32 0.0, %v1264
        %v1266 = vpop.f32.mrb[0].mxu0
        %1267 = vmatprep.mubr.bf16.mxu0 0
        %1268 = vmatmul.mubr.bf16.gmra.mrb[0].mxu0 %v1168
        %v1269 = vpop.f32.mrb[0].mxu0
        %v1270 = vadd.f32 0.0, %v1269
        %v1271 = vpop.f32.mrb[0].mxu0
        %v1272 = vpop.f32.mrb[0].mxu0
        %v1273 = vadd.f32 0.0, %v1272
        %v1274 = vpop.f32.mrb[0].mxu0
        %1275 = vmatprep.mubr.bf16.mxu0 0
        %1276 = vmatmul.mubr.bf16.gmra.mrb[0].mxu0 %v1171
        %v1277 = vpop.f32.mrb[0].mxu0
        %v1278 = vadd.f32 0.0, %v1277
        %v1279 = vpop.f32.mrb[0].mxu0
        %v1280 = vpop.f32.mrb[0].mxu0
        %v1281 = vadd.f32 0.0, %v1280
        %v1282 = vpop.f32.mrb[0].mxu0
        %1283 = vmatprep.mubr.bf16.mxu0 0
        %1284 = vmatmul.mubr.bf16.gmra.mrb[0].mxu0 %v1174
        %v1285 = vpop.f32.mrb[0].mxu0
        %v1286 = vadd.f32 0.0, %v1285
        %v1287 = vpop.f32.mrb[0].mxu0
        %v1288 = vpop.f32.mrb[0].mxu0
        %v1289 = vadd.f32 0.0, %v1288
        %v1290 = vpop.f32.mrb[0].mxu0
        %1291 = vmatprep.mubr.bf16.mxu0 0
        %1292 = vmatmul.mubr.bf16.gmra.mrb[0].mxu0 %v1177
        %v1293 = vpop.f32.mrb[0].mxu0
        %v1294 = vadd.f32 0.0, %v1293
        %v1295 = vpop.f32.mrb[0].mxu0
        %v1296 = vpop.f32.mrb[0].mxu0
        %v1297 = vadd.f32 0.0, %v1296
        %v1298 = vpop.f32.mrb[0].mxu0
        %1299 = vdwg.mxu0
        %v1300 = vmul.f32 %v1238, 0.25
        %v1301 = vmul.f32 %v1241, 0.25
        %v1302 = vmul.f32 %v1246, 0.25
        %v1303 = vmul.f32 %v1249, 0.25
        %v1304 = vmul.f32 %v1254, 0.25
        %v1305 = vmul.f32 %v1257, 0.25
        %v1306 = vmul.f32 %v1262, 0.25
        %v1307 = vmul.f32 %v1265, 0.25
        %v1308 = vmul.f32 %v1270, 0.25
        %v1309 = vmul.f32 %v1273, 0.25
        %v1310 = vmul.f32 %v1278, 0.25
        %v1311 = vmul.f32 %v1281, 0.25
        %v1312 = vmul.f32 %v1286, 0.25
        %v1313 = vmul.f32 %v1289, 0.25
        %v1314 = vmul.f32 %v1294, 0.25
        %v1315 = vmul.f32 %v1297, 0.25
        %v1316 = vadd.f32 %v1300, %v954
        %v1317 = vadd.f32 %v1301, %v955
        %v1318 = vadd.f32 %v1302, %v956
        %v1319 = vadd.f32 %v1303, %v957
        %v1320 = vadd.f32 %v1304, %v958
        %v1321 = vadd.f32 %v1305, %v959
        %v1322 = vadd.f32 %v1306, %v960
        %v1323 = vadd.f32 %v1307, %v961
        %v1324 = vadd.f32 %v1308, %v962
        %v1325 = vadd.f32 %v1309, %v963
        %v1326 = vadd.f32 %v1310, %v964
        %v1327 = vadd.f32 %v1311, %v965
        %v1328 = vadd.f32 %v1312, %v966
        %v1329 = vadd.f32 %v1313, %v967
        %v1330 = vadd.f32 %v1314, %v968
        %v1331 = vadd.f32 %v1315, %v969
        %1332 = vmax.xlane.f32.xlu0 %v1316
        %v1333 = vpop.xlane.xlu0 %1332
        %1334 = vmax.xlane.f32.xlu0 %v1317
        %v1335 = vpop.xlane.xlu0 %1334
        %1336 = vmax.xlane.f32.xlu0 %v1318
        %v1337 = vpop.xlane.xlu0 %1336
        %1338 = vmax.xlane.f32.xlu0 %v1319
        %v1339 = vpop.xlane.xlu0 %1338
        %1340 = vmax.xlane.f32.xlu0 %v1320
        %v1341 = vpop.xlane.xlu0 %1340
        %1342 = vmax.xlane.f32.xlu0 %v1321
        %v1343 = vpop.xlane.xlu0 %1342
        %1344 = vmax.xlane.f32.xlu0 %v1322
        %v1345 = vpop.xlane.xlu0 %1344
        %1346 = vmax.xlane.f32.xlu0 %v1323
        %v1347 = vpop.xlane.xlu0 %1346
        %1348 = vmax.xlane.f32.xlu0 %v1324
        %v1349 = vpop.xlane.xlu0 %1348
        %1350 = vmax.xlane.f32.xlu0 %v1325
        %v1351 = vpop.xlane.xlu0 %1350
        %1352 = vmax.xlane.f32.xlu0 %v1326
        %v1353 = vpop.xlane.xlu0 %1352
        %1354 = vmax.xlane.f32.xlu0 %v1327
        %v1355 = vpop.xlane.xlu0 %1354
        %1356 = vmax.xlane.f32.xlu0 %v1328
        %v1357 = vpop.xlane.xlu0 %1356
        %1358 = vmax.xlane.f32.xlu0 %v1329
        %v1359 = vpop.xlane.xlu0 %1358
        %1360 = vmax.xlane.f32.xlu0 %v1330
        %v1361 = vpop.xlane.xlu0 %1360
        %1362 = vmax.xlane.f32.xlu0 %v1331
        %v1363 = vpop.xlane.xlu0 %1362
        %v1364 = vsub.f32 %v1316, %v1333
        %v1365 = vsub.f32 %v1317, %v1335
        %v1366 = vsub.f32 %v1318, %v1337
        %v1367 = vsub.f32 %v1319, %v1339
        %v1368 = vsub.f32 %v1320, %v1341
        %v1369 = vsub.f32 %v1321, %v1343
        %v1370 = vsub.f32 %v1322, %v1345
        %v1371 = vsub.f32 %v1323, %v1347
        %v1372 = vsub.f32 %v1324, %v1349
        %v1373 = vsub.f32 %v1325, %v1351
        %v1374 = vsub.f32 %v1326, %v1353
        %v1375 = vsub.f32 %v1327, %v1355
        %v1376 = vsub.f32 %v1328, %v1357
        %v1377 = vsub.f32 %v1329, %v1359
        %v1378 = vsub.f32 %v1330, %v1361
        %v1379 = vsub.f32 %v1331, %v1363
        %v1380 = vmul.f32 %v1364, 1.442695
        %v1381 = vpow.pop %v1380
        %v1382 = vmul.f32 %v1365, 1.442695
        %v1383 = vpow.pop %v1382
        %v1384 = vmul.f32 %v1366, 1.442695
        %v1385 = vpow.pop %v1384
        %v1386 = vmul.f32 %v1367, 1.442695
        %v1387 = vpow.pop %v1386
        %v1388 = vmul.f32 %v1368, 1.442695
        %v1389 = vpow.pop %v1388
        %v1390 = vmul.f32 %v1369, 1.442695
        %v1391 = vpow.pop %v1390
        %v1392 = vmul.f32 %v1370, 1.442695
        %v1393 = vpow.pop %v1392
        %v1394 = vmul.f32 %v1371, 1.442695
        %v1395 = vpow.pop %v1394
        %v1396 = vmul.f32 %v1372, 1.442695
        %v1397 = vpow.pop %v1396
        %v1398 = vmul.f32 %v1373, 1.442695
        %v1399 = vpow.pop %v1398
        %v1400 = vmul.f32 %v1374, 1.442695
        %v1401 = vpow.pop %v1400
        %v1402 = vmul.f32 %v1375, 1.442695
        %v1403 = vpow.pop %v1402
        %v1404 = vmul.f32 %v1376, 1.442695
        %v1405 = vpow.pop %v1404
        %v1406 = vmul.f32 %v1377, 1.442695
        %v1407 = vpow.pop %v1406
        %v1408 = vmul.f32 %v1378, 1.442695
        %v1409 = vpow.pop %v1408
        %v1410 = vmul.f32 %v1379, 1.442695
        %v1411 = vpow.pop %v1410
        %1412 = vadd.xlane.f32.xlu0 %v1381
        %v1413 = vpop.xlane.xlu0 %1412
        %1414 = vadd.xlane.f32.xlu0 %v1383
        %v1415 = vpop.xlane.xlu0 %1414
        %1416 = vadd.xlane.f32.xlu0 %v1385
        %v1417 = vpop.xlane.xlu0 %1416
        %1418 = vadd.xlane.f32.xlu0 %v1387
        %v1419 = vpop.xlane.xlu0 %1418
        %1420 = vadd.xlane.f32.xlu0 %v1389
        %v1421 = vpop.xlane.xlu0 %1420
        %1422 = vadd.xlane.f32.xlu0 %v1391
        %v1423 = vpop.xlane.xlu0 %1422
        %1424 = vadd.xlane.f32.xlu0 %v1393
        %v1425 = vpop.xlane.xlu0 %1424
        %1426 = vadd.xlane.f32.xlu0 %v1395
        %v1427 = vpop.xlane.xlu0 %1426
        %1428 = vadd.xlane.f32.xlu0 %v1397
        %v1429 = vpop.xlane.xlu0 %1428
        %1430 = vadd.xlane.f32.xlu0 %v1399
        %v1431 = vpop.xlane.xlu0 %1430
        %1432 = vadd.xlane.f32.xlu0 %v1401
        %v1433 = vpop.xlane.xlu0 %1432
        %1434 = vadd.xlane.f32.xlu0 %v1403
        %v1435 = vpop.xlane.xlu0 %1434
        %1436 = vadd.xlane.f32.xlu0 %v1405
        %v1437 = vpop.xlane.xlu0 %1436
        %1438 = vadd.xlane.f32.xlu0 %v1407
        %v1439 = vpop.xlane.xlu0 %1438
        %1440 = vadd.xlane.f32.xlu0 %v1409
        %v1441 = vpop.xlane.xlu0 %1440
        %1442 = vadd.xlane.f32.xlu0 %v1411
        %v1443 = vpop.xlane.xlu0 %1442
        %v1444 = vrcp.pop %v1413
        %v1445 = vrcp.pop %v1415
        %v1446 = vrcp.pop %v1417
        %v1447 = vrcp.pop %v1419
        %v1448 = vrcp.pop %v1421
        %v1449 = vrcp.pop %v1423
        %v1450 = vrcp.pop %v1425
        %v1451 = vrcp.pop %v1427
        %v1452 = vrcp.pop %v1429
        %v1453 = vrcp.pop %v1431
        %v1454 = vrcp.pop %v1433
        %v1455 = vrcp.pop %v1435
        %v1456 = vrcp.pop %v1437
        %v1457 = vrcp.pop %v1439
        %v1458 = vrcp.pop %v1441
        %v1459 = vrcp.pop %v1443
        %v1460 = vmul.f32 %v1381, %v1444
        %v1461 = vmul.f32 %v1383, %v1445
        %v1462 = vmul.f32 %v1385, %v1446
        %v1463 = vmul.f32 %v1387, %v1447
        %v1464 = vmul.f32 %v1389, %v1448
        %v1465 = vmul.f32 %v1391, %v1449
        %v1466 = vmul.f32 %v1393, %v1450
        %v1467 = vmul.f32 %v1395, %v1451
        %v1468 = vmul.f32 %v1397, %v1452
        %v1469 = vmul.f32 %v1399, %v1453
        %v1470 = vmul.f32 %v1401, %v1454
        %v1471 = vmul.f32 %v1403, %v1455
        %v1472 = vmul.f32 %v1405, %v1456
        %v1473 = vmul.f32 %v1407, %v1457
        %v1474 = vmul.f32 %v1409, %v1458
        %v1475 = vmul.f32 %v1411, %v1459
        %v1476 = vpack.c.bf16 %v1461, %v1460
        %v1477 = vpack.c.bf16 %v1463, %v1462
        %v1478 = vpack.c.bf16 %v1465, %v1464
        %v1479 = vpack.c.bf16 %v1467, %v1466
        %v1480 = vpack.c.bf16 %v1469, %v1468
        %v1481 = vpack.c.bf16 %v1471, %v1470
        %v1482 = vpack.c.bf16 %v1473, %v1472
        %v1483 = vpack.c.bf16 %v1475, %v1474
        %1484 = vrot.lane.b32.xlu0 %v1122, 64
        %v1485 = vpop.permute.xlu0 %1484
        %1486 = vrot.lane.b32.xlu0 %v1123, 64
        %v1487 = vpop.permute.xlu0 %1486
        %1488 = vrot.lane.b32.xlu0 %v1124, 64
        %v1489 = vpop.permute.xlu0 %1488
        %1490 = vrot.lane.b32.xlu0 %v1125, 64
        %v1491 = vpop.permute.xlu0 %1490
        %1492 = vrot.lane.b32.xlu0 %v1126, 64
        %v1493 = vpop.permute.xlu0 %1492
        %1494 = vrot.lane.b32.xlu0 %v1127, 64
        %v1495 = vpop.permute.xlu0 %1494
        %1496 = vrot.lane.b32.xlu0 %v1128, 64
        %v1497 = vpop.permute.xlu0 %1496
        %1498 = vrot.lane.b32.xlu0 %v1129, 64
        %v1499 = vpop.permute.xlu0 %1498
        %1508 = vmatprep.subr.bf16.mxu0 0
        %1509 = vmatpush1.bf16.msra.mxu0 %v1485
        %1510 = vmatprep.subr.bf16.mxu0 0
        %1511 = vmatpush1.bf16.msra.mxu0 %v1487
        %1512 = vmatprep.subr.bf16.mxu0 0
        %1513 = vmatpush1.bf16.msra.mxu0 %v1489
        %1514 = vmatprep.subr.bf16.mxu0 0
        %1515 = vmatpush1.bf16.msra.mxu0 %v1491
        %1516 = vmatprep.subr.bf16.mxu0 0
        %1517 = vmatpush1.bf16.msra.mxu0 %v1493
        %1518 = vmatprep.subr.bf16.mxu0 0
        %1519 = vmatpush1.bf16.msra.mxu0 %v1495
        %1520 = vmatprep.subr.bf16.mxu0 0
        %1521 = vmatpush1.bf16.msra.mxu0 %v1497
        %1522 = vmatprep.subr.bf16.mxu0 0
        %1523 = vmatpush1.bf16.msra.mxu0 %v1499
        %1524 = vmatprep.subr.bf16.mxu0 0
        %1525 = vmatpush1.bf16.msra.mxu0 0
        %1526 = vmatprep.subr.bf16.mxu0 0
        %1527 = vmatpush1.bf16.msra.mxu0 0
        %1528 = vmatprep.subr.bf16.mxu0 0
        %1529 = vmatpush1.bf16.msra.mxu0 0
        %1530 = vmatprep.subr.bf16.mxu0 0
        %1531 = vmatpush1.bf16.msra.mxu0 0
        %1532 = vmatprep.subr.bf16.mxu0 0
        %1533 = vmatpush1.bf16.msra.mxu0 0
        %1534 = vmatprep.subr.bf16.mxu0 0
        %1535 = vmatpush1.bf16.msra.mxu0 0
        %1536 = vmatprep.subr.bf16.mxu0 0
        %1537 = vmatpush1.bf16.msra.mxu0 0
        %1538 = vmatprep.subr.bf16.mxu0 0
        %1539 = vmatpush1.bf16.msra.mxu0 0
        %1540 = vmatprep.mubr.bf16.mxu0 0
        %1541 = vmatmul.mubr.bf16.gmra.mrb[0].mxu0 %v1476
        %v1542 = vpop.f32.mrb[0].mxu0
        %v1543 = vadd.f32 0.0, %v1542
        %v1544 = vpop.f32.mrb[0].mxu0
        %v1545 = vpop.f32.mrb[0].mxu0
        %v1546 = vadd.f32 0.0, %v1545
        %v1547 = vpop.f32.mrb[0].mxu0
        %1548 = vmatprep.mubr.bf16.mxu0 0
        %1549 = vmatmul.mubr.bf16.gmra.mrb[0].mxu0 %v1477
        %v1550 = vpop.f32.mrb[0].mxu0
        %v1551 = vadd.f32 0.0, %v1550
        %v1552 = vpop.f32.mrb[0].mxu0
        %v1553 = vpop.f32.mrb[0].mxu0
        %v1554 = vadd.f32 0.0, %v1553
        %v1555 = vpop.f32.mrb[0].mxu0
        %1556 = vmatprep.mubr.bf16.mxu0 0
        %1557 = vmatmul.mubr.bf16.gmra.mrb[0].mxu0 %v1478
        %v1558 = vpop.f32.mrb[0].mxu0
        %v1559 = vadd.f32 0.0, %v1558
        %v1560 = vpop.f32.mrb[0].mxu0
        %v1561 = vpop.f32.mrb[0].mxu0
        %v1562 = vadd.f32 0.0, %v1561
        %v1563 = vpop.f32.mrb[0].mxu0
        %1564 = vmatprep.mubr.bf16.mxu0 0
        %1565 = vmatmul.mubr.bf16.gmra.mrb[0].mxu0 %v1479
        %v1566 = vpop.f32.mrb[0].mxu0
        %v1567 = vadd.f32 0.0, %v1566
        %v1568 = vpop.f32.mrb[0].mxu0
        %v1569 = vpop.f32.mrb[0].mxu0
        %v1570 = vadd.f32 0.0, %v1569
        %v1571 = vpop.f32.mrb[0].mxu0
        %1572 = vmatprep.mubr.bf16.mxu0 0
        %1573 = vmatmul.mubr.bf16.gmra.mrb[0].mxu0 %v1480
        %v1574 = vpop.f32.mrb[0].mxu0
        %v1575 = vadd.f32 0.0, %v1574
        %v1576 = vpop.f32.mrb[0].mxu0
        %v1577 = vpop.f32.mrb[0].mxu0
        %v1578 = vadd.f32 0.0, %v1577
        %v1579 = vpop.f32.mrb[0].mxu0
        %1580 = vmatprep.mubr.bf16.mxu0 0
        %1581 = vmatmul.mubr.bf16.gmra.mrb[0].mxu0 %v1481
        %v1582 = vpop.f32.mrb[0].mxu0
        %v1583 = vadd.f32 0.0, %v1582
        %v1584 = vpop.f32.mrb[0].mxu0
        %v1585 = vpop.f32.mrb[0].mxu0
        %v1586 = vadd.f32 0.0, %v1585
        %v1587 = vpop.f32.mrb[0].mxu0
        %1588 = vmatprep.mubr.bf16.mxu0 0
        %1589 = vmatmul.mubr.bf16.gmra.mrb[0].mxu0 %v1482
        %v1590 = vpop.f32.mrb[0].mxu0
        %v1591 = vadd.f32 0.0, %v1590
        %v1592 = vpop.f32.mrb[0].mxu0
        %v1593 = vpop.f32.mrb[0].mxu0
        %v1594 = vadd.f32 0.0, %v1593
        %v1595 = vpop.f32.mrb[0].mxu0
        %1596 = vmatprep.mubr.bf16.mxu0 0
        %1597 = vmatmul.mubr.bf16.gmra.mrb[0].mxu0 %v1483
        %v1598 = vpop.f32.mrb[0].mxu0
        %v1599 = vadd.f32 0.0, %v1598
        %v1600 = vpop.f32.mrb[0].mxu0
        %v1601 = vpop.f32.mrb[0].mxu0
        %v1602 = vadd.f32 0.0, %v1601
        %v1603 = vpop.f32.mrb[0].mxu0
        %1604 = vdwg.mxu0
        %1605 = vrot.lane.b32.xlu0 %v1122, 112
        %v1606 = vpop.permute.xlu0 %1605
        %1607 = vrot.lane.b32.xlu0 %v1123, 112
        %v1608 = vpop.permute.xlu0 %1607
        %1609 = vrot.lane.b32.xlu0 %v1124, 112
        %v1610 = vpop.permute.xlu0 %1609
        %1611 = vrot.lane.b32.xlu0 %v1125, 112
        %v1612 = vpop.permute.xlu0 %1611
        %1613 = vrot.lane.b32.xlu0 %v1126, 112
        %v1614 = vpop.permute.xlu0 %1613
        %1615 = vrot.lane.b32.xlu0 %v1127, 112
        %v1616 = vpop.permute.xlu0 %1615
        %1617 = vrot.lane.b32.xlu0 %v1128, 112
        %v1618 = vpop.permute.xlu0 %1617
        %1619 = vrot.lane.b32.xlu0 %v1129, 112
        %v1620 = vpop.permute.xlu0 %1619
        %1621 = vrot.lane.b32.xlu0 %v1122, 80
        %v1622 = vpop.permute.xlu0 %1621
        %1623 = vrot.lane.b32.xlu0 %v1123, 80
        %v1624 = vpop.permute.xlu0 %1623
        %1625 = vrot.lane.b32.xlu0 %v1124, 80
        %v1626 = vpop.permute.xlu0 %1625
        %1627 = vrot.lane.b32.xlu0 %v1125, 80
        %v1628 = vpop.permute.xlu0 %1627
        %1629 = vrot.lane.b32.xlu0 %v1126, 80
        %v1630 = vpop.permute.xlu0 %1629
        %1631 = vrot.lane.b32.xlu0 %v1127, 80
        %v1632 = vpop.permute.xlu0 %1631
        %1633 = vrot.lane.b32.xlu0 %v1128, 80
        %v1634 = vpop.permute.xlu0 %1633
        %1635 = vrot.lane.b32.xlu0 %v1129, 80
        %v1636 = vpop.permute.xlu0 %1635
        %v1638 = vsel %vm1154, %v1606, 0
        %v1641 = vsel %vm1154, %v1608, 0
        %v1644 = vsel %vm1154, %v1610, 0
        %v1647 = vsel %vm1154, %v1612, 0
        %v1650 = vsel %vm1154, %v1614, 0
        %v1653 = vsel %vm1154, %v1616, 0
        %v1656 = vsel %vm1154, %v1618, 0
        %v1659 = vsel %vm1154, %v1620, 0
        %v1662 = vsel %vm1154, %v1622, 0
        %v1665 = vsel %vm1154, %v1624, 0
        %v1668 = vsel %vm1154, %v1626, 0
        %v1671 = vsel %vm1154, %v1628, 0
        %v1674 = vsel %vm1154, %v1630, 0
        %v1677 = vsel %vm1154, %v1632, 0
        %v1680 = vsel %vm1154, %v1634, 0
        %v1683 = vsel %vm1154, %v1636, 0
        %1685 = vmatprep.subr.bf16.mxu0 0
        %1686 = vmatpush1.bf16.xpose.msra.mxu0 %v1662
        %1687 = vmatprep.subr.bf16.mxu0 0
        %1688 = vmatpush1.bf16.xpose.msra.mxu0 %v1665
        %1689 = vmatprep.subr.bf16.mxu0 0
        %1690 = vmatpush1.bf16.xpose.msra.mxu0 %v1668
        %1691 = vmatprep.subr.bf16.mxu0 0
        %1692 = vmatpush1.bf16.xpose.msra.mxu0 %v1671
        %1693 = vmatprep.subr.bf16.mxu0 0
        %1694 = vmatpush1.bf16.xpose.msra.mxu0 %v1674
        %1695 = vmatprep.subr.bf16.mxu0 0
        %1696 = vmatpush1.bf16.xpose.msra.mxu0 %v1677
        %1697 = vmatprep.subr.bf16.mxu0 0
        %1698 = vmatpush1.bf16.xpose.msra.mxu0 %v1680
        %1699 = vmatprep.subr.bf16.mxu0 0
        %1700 = vmatpush1.bf16.xpose.msra.mxu0 %v1683
        %1701 = vmatprep.subr.bf16.mxu0 0
        %1702 = vmatpush1.bf16.xpose.msra.mxu0 0
        %1703 = vmatprep.subr.bf16.mxu0 0
        %1704 = vmatpush1.bf16.xpose.msra.mxu0 0
        %1705 = vmatprep.subr.bf16.mxu0 0
        %1706 = vmatpush1.bf16.xpose.msra.mxu0 0
        %1707 = vmatprep.subr.bf16.mxu0 0
        %1708 = vmatpush1.bf16.xpose.msra.mxu0 0
        %1709 = vmatprep.subr.bf16.mxu0 0
        %1710 = vmatpush1.bf16.xpose.msra.mxu0 0
        %1711 = vmatprep.subr.bf16.mxu0 0
        %1712 = vmatpush1.bf16.xpose.msra.mxu0 0
        %1713 = vmatprep.subr.bf16.mxu0 0
        %1714 = vmatpush1.bf16.xpose.msra.mxu0 0
        %1715 = vmatprep.subr.bf16.mxu0 0
        %1716 = vmatpush1.bf16.xpose.msra.mxu0 0
        %1717 = vmatprep.mubr.bf16.mxu0 0
        %1718 = vmatmul.mubr.bf16.gmra.mrb[0].mxu0 %v1638
        %v1719 = vpop.f32.mrb[0].mxu0
        %v1720 = vadd.f32 0.0, %v1719
        %v1721 = vpop.f32.mrb[0].mxu0
        %v1722 = vpop.f32.mrb[0].mxu0
        %v1723 = vadd.f32 0.0, %v1722
        %v1724 = vpop.f32.mrb[0].mxu0
        %1725 = vmatprep.mubr.bf16.mxu0 0
        %1726 = vmatmul.mubr.bf16.gmra.mrb[0].mxu0 %v1641
        %v1727 = vpop.f32.mrb[0].mxu0
        %v1728 = vadd.f32 0.0, %v1727
        %v1729 = vpop.f32.mrb[0].mxu0
        %v1730 = vpop.f32.mrb[0].mxu0
        %v1731 = vadd.f32 0.0, %v1730
        %v1732 = vpop.f32.mrb[0].mxu0
        %1733 = vmatprep.mubr.bf16.mxu0 0
        %1734 = vmatmul.mubr.bf16.gmra.mrb[0].mxu0 %v1644
        %v1735 = vpop.f32.mrb[0].mxu0
        %v1736 = vadd.f32 0.0, %v1735
        %v1737 = vpop.f32.mrb[0].mxu0
        %v1738 = vpop.f32.mrb[0].mxu0
        %v1739 = vadd.f32 0.0, %v1738
        %v1740 = vpop.f32.mrb[0].mxu0
        %1741 = vmatprep.mubr.bf16.mxu0 0
        %1742 = vmatmul.mubr.bf16.gmra.mrb[0].mxu0 %v1647
        %v1743 = vpop.f32.mrb[0].mxu0
        %v1744 = vadd.f32 0.0, %v1743
        %v1745 = vpop.f32.mrb[0].mxu0
        %v1746 = vpop.f32.mrb[0].mxu0
        %v1747 = vadd.f32 0.0, %v1746
        %v1748 = vpop.f32.mrb[0].mxu0
        %1749 = vmatprep.mubr.bf16.mxu0 0
        %1750 = vmatmul.mubr.bf16.gmra.mrb[0].mxu0 %v1650
        %v1751 = vpop.f32.mrb[0].mxu0
        %v1752 = vadd.f32 0.0, %v1751
        %v1753 = vpop.f32.mrb[0].mxu0
        %v1754 = vpop.f32.mrb[0].mxu0
        %v1755 = vadd.f32 0.0, %v1754
        %v1756 = vpop.f32.mrb[0].mxu0
        %1757 = vmatprep.mubr.bf16.mxu0 0
        %1758 = vmatmul.mubr.bf16.gmra.mrb[0].mxu0 %v1653
        %v1759 = vpop.f32.mrb[0].mxu0
        %v1760 = vadd.f32 0.0, %v1759
        %v1761 = vpop.f32.mrb[0].mxu0
        %v1762 = vpop.f32.mrb[0].mxu0
        %v1763 = vadd.f32 0.0, %v1762
        %v1764 = vpop.f32.mrb[0].mxu0
        %1765 = vmatprep.mubr.bf16.mxu0 0
        %1766 = vmatmul.mubr.bf16.gmra.mrb[0].mxu0 %v1656
        %v1767 = vpop.f32.mrb[0].mxu0
        %v1768 = vadd.f32 0.0, %v1767
        %v1769 = vpop.f32.mrb[0].mxu0
        %v1770 = vpop.f32.mrb[0].mxu0
        %v1771 = vadd.f32 0.0, %v1770
        %v1772 = vpop.f32.mrb[0].mxu0
        %1773 = vmatprep.mubr.bf16.mxu0 0
        %1774 = vmatmul.mubr.bf16.gmra.mrb[0].mxu0 %v1659
        %v1775 = vpop.f32.mrb[0].mxu0
        %v1776 = vadd.f32 0.0, %v1775
        %v1777 = vpop.f32.mrb[0].mxu0
        %v1778 = vpop.f32.mrb[0].mxu0
        %v1779 = vadd.f32 0.0, %v1778
        %v1780 = vpop.f32.mrb[0].mxu0
        %1781 = vdwg.mxu0
        %v1782 = vmul.f32 %v1720, 0.25
        %v1783 = vmul.f32 %v1723, 0.25
        %v1784 = vmul.f32 %v1728, 0.25
        %v1785 = vmul.f32 %v1731, 0.25
        %v1786 = vmul.f32 %v1736, 0.25
        %v1787 = vmul.f32 %v1739, 0.25
        %v1788 = vmul.f32 %v1744, 0.25
        %v1789 = vmul.f32 %v1747, 0.25
        %v1790 = vmul.f32 %v1752, 0.25
        %v1791 = vmul.f32 %v1755, 0.25
        %v1792 = vmul.f32 %v1760, 0.25
        %v1793 = vmul.f32 %v1763, 0.25
        %v1794 = vmul.f32 %v1768, 0.25
        %v1795 = vmul.f32 %v1771, 0.25
        %v1796 = vmul.f32 %v1776, 0.25
        %v1797 = vmul.f32 %v1779, 0.25
        %v1798 = vadd.f32 %v1782, %v954
        %v1799 = vadd.f32 %v1783, %v955
        %v1800 = vadd.f32 %v1784, %v956
        %v1801 = vadd.f32 %v1785, %v957
        %v1802 = vadd.f32 %v1786, %v958
        %v1803 = vadd.f32 %v1787, %v959
        %v1804 = vadd.f32 %v1788, %v960
        %v1805 = vadd.f32 %v1789, %v961
        %v1806 = vadd.f32 %v1790, %v962
        %v1807 = vadd.f32 %v1791, %v963
        %v1808 = vadd.f32 %v1792, %v964
        %v1809 = vadd.f32 %v1793, %v965
        %v1810 = vadd.f32 %v1794, %v966
        %v1811 = vadd.f32 %v1795, %v967
        %v1812 = vadd.f32 %v1796, %v968
        %v1813 = vadd.f32 %v1797, %v969
        %1814 = vmax.xlane.f32.xlu0 %v1798
        %v1815 = vpop.xlane.xlu0 %1814
        %1816 = vmax.xlane.f32.xlu0 %v1799
        %v1817 = vpop.xlane.xlu0 %1816
        %1818 = vmax.xlane.f32.xlu0 %v1800
        %v1819 = vpop.xlane.xlu0 %1818
        %1820 = vmax.xlane.f32.xlu0 %v1801
        %v1821 = vpop.xlane.xlu0 %1820
        %1822 = vmax.xlane.f32.xlu0 %v1802
        %v1823 = vpop.xlane.xlu0 %1822
        %1824 = vmax.xlane.f32.xlu0 %v1803
        %v1825 = vpop.xlane.xlu0 %1824
        %1826 = vmax.xlane.f32.xlu0 %v1804
        %v1827 = vpop.xlane.xlu0 %1826
        %1828 = vmax.xlane.f32.xlu0 %v1805
        %v1829 = vpop.xlane.xlu0 %1828
        %1830 = vmax.xlane.f32.xlu0 %v1806
        %v1831 = vpop.xlane.xlu0 %1830
        %1832 = vmax.xlane.f32.xlu0 %v1807
        %v1833 = vpop.xlane.xlu0 %1832
        %1834 = vmax.xlane.f32.xlu0 %v1808
        %v1835 = vpop.xlane.xlu0 %1834
        %1836 = vmax.xlane.f32.xlu0 %v1809
        %v1837 = vpop.xlane.xlu0 %1836
        %1838 = vmax.xlane.f32.xlu0 %v1810
        %v1839 = vpop.xlane.xlu0 %1838
        %1840 = vmax.xlane.f32.xlu0 %v1811
        %v1841 = vpop.xlane.xlu0 %1840
        %1842 = vmax.xlane.f32.xlu0 %v1812
        %v1843 = vpop.xlane.xlu0 %1842
        %1844 = vmax.xlane.f32.xlu0 %v1813
        %v1845 = vpop.xlane.xlu0 %1844
        %v1846 = vsub.f32 %v1798, %v1815
        %v1847 = vsub.f32 %v1799, %v1817
        %v1848 = vsub.f32 %v1800, %v1819
        %v1849 = vsub.f32 %v1801, %v1821
        %v1850 = vsub.f32 %v1802, %v1823
        %v1851 = vsub.f32 %v1803, %v1825
        %v1852 = vsub.f32 %v1804, %v1827
        %v1853 = vsub.f32 %v1805, %v1829
        %v1854 = vsub.f32 %v1806, %v1831
        %v1855 = vsub.f32 %v1807, %v1833
        %v1856 = vsub.f32 %v1808, %v1835
        %v1857 = vsub.f32 %v1809, %v1837
        %v1858 = vsub.f32 %v1810, %v1839
        %v1859 = vsub.f32 %v1811, %v1841
        %v1860 = vsub.f32 %v1812, %v1843
        %v1861 = vsub.f32 %v1813, %v1845
        %v1862 = vmul.f32 %v1846, 1.442695
        %v1863 = vpow.pop %v1862
        %v1864 = vmul.f32 %v1847, 1.442695
        %v1865 = vpow.pop %v1864
        %v1866 = vmul.f32 %v1848, 1.442695
        %v1867 = vpow.pop %v1866
        %v1868 = vmul.f32 %v1849, 1.442695
        %v1869 = vpow.pop %v1868
        %v1870 = vmul.f32 %v1850, 1.442695
        %v1871 = vpow.pop %v1870
        %v1872 = vmul.f32 %v1851, 1.442695
        %v1873 = vpow.pop %v1872
        %v1874 = vmul.f32 %v1852, 1.442695
        %v1875 = vpow.pop %v1874
        %v1876 = vmul.f32 %v1853, 1.442695
        %v1877 = vpow.pop %v1876
        %v1878 = vmul.f32 %v1854, 1.442695
        %v1879 = vpow.pop %v1878
        %v1880 = vmul.f32 %v1855, 1.442695
        %v1881 = vpow.pop %v1880
        %v1882 = vmul.f32 %v1856, 1.442695
        %v1883 = vpow.pop %v1882
        %v1884 = vmul.f32 %v1857, 1.442695
        %v1885 = vpow.pop %v1884
        %v1886 = vmul.f32 %v1858, 1.442695
        %v1887 = vpow.pop %v1886
        %v1888 = vmul.f32 %v1859, 1.442695
        %v1889 = vpow.pop %v1888
        %v1890 = vmul.f32 %v1860, 1.442695
        %v1891 = vpow.pop %v1890
        %v1892 = vmul.f32 %v1861, 1.442695
        %v1893 = vpow.pop %v1892
        %1894 = vadd.xlane.f32.xlu0 %v1863
        %v1895 = vpop.xlane.xlu0 %1894
        %1896 = vadd.xlane.f32.xlu0 %v1865
        %v1897 = vpop.xlane.xlu0 %1896
        %1898 = vadd.xlane.f32.xlu0 %v1867
        %v1899 = vpop.xlane.xlu0 %1898
        %1900 = vadd.xlane.f32.xlu0 %v1869
        %v1901 = vpop.xlane.xlu0 %1900
        %1902 = vadd.xlane.f32.xlu0 %v1871
        %v1903 = vpop.xlane.xlu0 %1902
        %1904 = vadd.xlane.f32.xlu0 %v1873
        %v1905 = vpop.xlane.xlu0 %1904
        %1906 = vadd.xlane.f32.xlu0 %v1875
        %v1907 = vpop.xlane.xlu0 %1906
        %1908 = vadd.xlane.f32.xlu0 %v1877
        %v1909 = vpop.xlane.xlu0 %1908
        %1910 = vadd.xlane.f32.xlu0 %v1879
        %v1911 = vpop.xlane.xlu0 %1910
        %1912 = vadd.xlane.f32.xlu0 %v1881
        %v1913 = vpop.xlane.xlu0 %1912
        %1914 = vadd.xlane.f32.xlu0 %v1883
        %v1915 = vpop.xlane.xlu0 %1914
        %1916 = vadd.xlane.f32.xlu0 %v1885
        %v1917 = vpop.xlane.xlu0 %1916
        %1918 = vadd.xlane.f32.xlu0 %v1887
        %v1919 = vpop.xlane.xlu0 %1918
        %1920 = vadd.xlane.f32.xlu0 %v1889
        %v1921 = vpop.xlane.xlu0 %1920
        %1922 = vadd.xlane.f32.xlu0 %v1891
        %v1923 = vpop.xlane.xlu0 %1922
        %1924 = vadd.xlane.f32.xlu0 %v1893
        %v1925 = vpop.xlane.xlu0 %1924
        %v1926 = vrcp.pop %v1895
        %v1927 = vrcp.pop %v1897
        %v1928 = vrcp.pop %v1899
        %v1929 = vrcp.pop %v1901
        %v1930 = vrcp.pop %v1903
        %v1931 = vrcp.pop %v1905
        %v1932 = vrcp.pop %v1907
        %v1933 = vrcp.pop %v1909
        %v1934 = vrcp.pop %v1911
        %v1935 = vrcp.pop %v1913
        %v1936 = vrcp.pop %v1915
        %v1937 = vrcp.pop %v1917
        %v1938 = vrcp.pop %v1919
        %v1939 = vrcp.pop %v1921
        %v1940 = vrcp.pop %v1923
        %v1941 = vrcp.pop %v1925
        %v1942 = vmul.f32 %v1863, %v1926
        %v1943 = vmul.f32 %v1865, %v1927
        %v1944 = vmul.f32 %v1867, %v1928
        %v1945 = vmul.f32 %v1869, %v1929
        %v1946 = vmul.f32 %v1871, %v1930
        %v1947 = vmul.f32 %v1873, %v1931
        %v1948 = vmul.f32 %v1875, %v1932
        %v1949 = vmul.f32 %v1877, %v1933
        %v1950 = vmul.f32 %v1879, %v1934
        %v1951 = vmul.f32 %v1881, %v1935
        %v1952 = vmul.f32 %v1883, %v1936
        %v1953 = vmul.f32 %v1885, %v1937
        %v1954 = vmul.f32 %v1887, %v1938
        %v1955 = vmul.f32 %v1889, %v1939
        %v1956 = vmul.f32 %v1891, %v1940
        %v1957 = vmul.f32 %v1893, %v1941
        %v1958 = vpack.c.bf16 %v1943, %v1942
        %v1959 = vpack.c.bf16 %v1945, %v1944
        %v1960 = vpack.c.bf16 %v1947, %v1946
        %v1961 = vpack.c.bf16 %v1949, %v1948
        %v1962 = vpack.c.bf16 %v1951, %v1950
        %v1963 = vpack.c.bf16 %v1953, %v1952
        %v1964 = vpack.c.bf16 %v1955, %v1954
        %v1965 = vpack.c.bf16 %v1957, %v1956
        %1966 = vrot.lane.b32.xlu0 %v1122, 48
        %v1967 = vpop.permute.xlu0 %1966
        %1968 = vrot.lane.b32.xlu0 %v1123, 48
        %v1969 = vpop.permute.xlu0 %1968
        %1970 = vrot.lane.b32.xlu0 %v1124, 48
        %v1971 = vpop.permute.xlu0 %1970
        %1972 = vrot.lane.b32.xlu0 %v1125, 48
        %v1973 = vpop.permute.xlu0 %1972
        %1974 = vrot.lane.b32.xlu0 %v1126, 48
        %v1975 = vpop.permute.xlu0 %1974
        %1976 = vrot.lane.b32.xlu0 %v1127, 48
        %v1977 = vpop.permute.xlu0 %1976
        %1978 = vrot.lane.b32.xlu0 %v1128, 48
        %v1979 = vpop.permute.xlu0 %1978
        %1980 = vrot.lane.b32.xlu0 %v1129, 48
        %v1981 = vpop.permute.xlu0 %1980
        %1990 = vmatprep.subr.bf16.mxu0 0
        %1991 = vmatpush1.bf16.msra.mxu0 %v1967
        %1992 = vmatprep.subr.bf16.mxu0 0
        %1993 = vmatpush1.bf16.msra.mxu0 %v1969
        %1994 = vmatprep.subr.bf16.mxu0 0
        %1995 = vmatpush1.bf16.msra.mxu0 %v1971
        %1996 = vmatprep.subr.bf16.mxu0 0
        %1997 = vmatpush1.bf16.msra.mxu0 %v1973
        %1998 = vmatprep.subr.bf16.mxu0 0
        %1999 = vmatpush1.bf16.msra.mxu0 %v1975
        %2000 = vmatprep.subr.bf16.mxu0 0
        %2001 = vmatpush1.bf16.msra.mxu0 %v1977
        %2002 = vmatprep.subr.bf16.mxu0 0
        %2003 = vmatpush1.bf16.msra.mxu0 %v1979
        %2004 = vmatprep.subr.bf16.mxu0 0
        %2005 = vmatpush1.bf16.msra.mxu0 %v1981
        %2006 = vmatprep.subr.bf16.mxu0 0
        %2007 = vmatpush1.bf16.msra.mxu0 0
        %2008 = vmatprep.subr.bf16.mxu0 0
        %2009 = vmatpush1.bf16.msra.mxu0 0
        %2010 = vmatprep.subr.bf16.mxu0 0
        %2011 = vmatpush1.bf16.msra.mxu0 0
        %2012 = vmatprep.subr.bf16.mxu0 0
        %2013 = vmatpush1.bf16.msra.mxu0 0
        %2014 = vmatprep.subr.bf16.mxu0 0
        %2015 = vmatpush1.bf16.msra.mxu0 0
        %2016 = vmatprep.subr.bf16.mxu0 0
        %2017 = vmatpush1.bf16.msra.mxu0 0
        %2018 = vmatprep.subr.bf16.mxu0 0
        %2019 = vmatpush1.bf16.msra.mxu0 0
        %2020 = vmatprep.subr.bf16.mxu0 0
        %2021 = vmatpush1.bf16.msra.mxu0 0
        %2022 = vmatprep.mubr.bf16.mxu0 0
        %2023 = vmatmul.mubr.bf16.gmra.mrb[0].mxu0 %v1958
        %v2024 = vpop.f32.mrb[0].mxu0
        %v2025 = vadd.f32 0.0, %v2024
        %v2026 = vpop.f32.mrb[0].mxu0
        %v2027 = vpop.f32.mrb[0].mxu0
        %v2028 = vadd.f32 0.0, %v2027
        %v2029 = vpop.f32.mrb[0].mxu0
        %2030 = vmatprep.mubr.bf16.mxu0 0
        %2031 = vmatmul.mubr.bf16.gmra.mrb[0].mxu0 %v1959
        %v2032 = vpop.f32.mrb[0].mxu0
        %v2033 = vadd.f32 0.0, %v2032
        %v2034 = vpop.f32.mrb[0].mxu0
        %v2035 = vpop.f32.mrb[0].mxu0
        %v2036 = vadd.f32 0.0, %v2035
        %v2037 = vpop.f32.mrb[0].mxu0
        %2038 = vmatprep.mubr.bf16.mxu0 0
        %2039 = vmatmul.mubr.bf16.gmra.mrb[0].mxu0 %v1960
        %v2040 = vpop.f32.mrb[0].mxu0
        %v2041 = vadd.f32 0.0, %v2040
        %v2042 = vpop.f32.mrb[0].mxu0
        %v2043 = vpop.f32.mrb[0].mxu0
        %v2044 = vadd.f32 0.0, %v2043
        %v2045 = vpop.f32.mrb[0].mxu0
        %2046 = vmatprep.mubr.bf16.mxu0 0
        %2047 = vmatmul.mubr.bf16.gmra.mrb[0].mxu0 %v1961
        %v2048 = vpop.f32.mrb[0].mxu0
        %v2049 = vadd.f32 0.0, %v2048
        %v2050 = vpop.f32.mrb[0].mxu0
        %v2051 = vpop.f32.mrb[0].mxu0
        %v2052 = vadd.f32 0.0, %v2051
        %v2053 = vpop.f32.mrb[0].mxu0
        %2054 = vmatprep.mubr.bf16.mxu0 0
        %2055 = vmatmul.mubr.bf16.gmra.mrb[0].mxu0 %v1962
        %v2056 = vpop.f32.mrb[0].mxu0
        %v2057 = vadd.f32 0.0, %v2056
        %v2058 = vpop.f32.mrb[0].mxu0
        %v2059 = vpop.f32.mrb[0].mxu0
        %v2060 = vadd.f32 0.0, %v2059
        %v2061 = vpop.f32.mrb[0].mxu0
        %2062 = vmatprep.mubr.bf16.mxu0 0
        %2063 = vmatmul.mubr.bf16.gmra.mrb[0].mxu0 %v1963
        %v2064 = vpop.f32.mrb[0].mxu0
        %v2065 = vadd.f32 0.0, %v2064
        %v2066 = vpop.f32.mrb[0].mxu0
        %v2067 = vpop.f32.mrb[0].mxu0
        %v2068 = vadd.f32 0.0, %v2067
        %v2069 = vpop.f32.mrb[0].mxu0
        %2070 = vmatprep.mubr.bf16.mxu0 0
        %2071 = vmatmul.mubr.bf16.gmra.mrb[0].mxu0 %v1964
        %v2072 = vpop.f32.mrb[0].mxu0
        %v2073 = vadd.f32 0.0, %v2072
        %v2074 = vpop.f32.mrb[0].mxu0
        %v2075 = vpop.f32.mrb[0].mxu0
        %v2076 = vadd.f32 0.0, %v2075
        %v2077 = vpop.f32.mrb[0].mxu0
        %2078 = vmatprep.mubr.bf16.mxu0 0
        %2079 = vmatmul.mubr.bf16.gmra.mrb[0].mxu0 %v1965
        %v2080 = vpop.f32.mrb[0].mxu0
        %v2081 = vadd.f32 0.0, %v2080
        %v2082 = vpop.f32.mrb[0].mxu0
        %v2083 = vpop.f32.mrb[0].mxu0
        %v2084 = vadd.f32 0.0, %v2083
        %v2085 = vpop.f32.mrb[0].mxu0
        %2086 = vdwg.mxu0
        %2103 = vrot.lane.b32.xlu0 %v2025, 16
        %v2104 = vpop.permute.xlu0 %2103
        %2105 = vrot.lane.b32.xlu0 %v2028, 16
        %v2106 = vpop.permute.xlu0 %2105
        %2107 = vrot.lane.b32.xlu0 %v2033, 16
        %v2108 = vpop.permute.xlu0 %2107
        %2109 = vrot.lane.b32.xlu0 %v2036, 16
        %v2110 = vpop.permute.xlu0 %2109
        %2111 = vrot.lane.b32.xlu0 %v2041, 16
        %v2112 = vpop.permute.xlu0 %2111
        %2113 = vrot.lane.b32.xlu0 %v2044, 16
        %v2114 = vpop.permute.xlu0 %2113
        %2115 = vrot.lane.b32.xlu0 %v2049, 16
        %v2116 = vpop.permute.xlu0 %2115
        %2117 = vrot.lane.b32.xlu0 %v2052, 16
        %v2118 = vpop.permute.xlu0 %2117
        %2119 = vrot.lane.b32.xlu0 %v2057, 16
        %v2120 = vpop.permute.xlu0 %2119
        %2121 = vrot.lane.b32.xlu0 %v2060, 16
        %v2122 = vpop.permute.xlu0 %2121
        %2123 = vrot.lane.b32.xlu0 %v2065, 16
        %v2124 = vpop.permute.xlu0 %2123
        %2125 = vrot.lane.b32.xlu0 %v2068, 16
        %v2126 = vpop.permute.xlu0 %2125
        %2127 = vrot.lane.b32.xlu0 %v2073, 16
        %v2128 = vpop.permute.xlu0 %2127
        %2129 = vrot.lane.b32.xlu0 %v2076, 16
        %v2130 = vpop.permute.xlu0 %2129
        %2131 = vrot.lane.b32.xlu0 %v2081, 16
        %v2132 = vpop.permute.xlu0 %2131
        %2133 = vrot.lane.b32.xlu0 %v2084, 16
        %v2134 = vpop.permute.xlu0 %2133
        %v2151 = vsel %vm1154, %v1543, %v2104
        %v2152 = vsel %vm1154, %v1546, %v2106
        %v2153 = vsel %vm1154, %v1551, %v2108
        %v2154 = vsel %vm1154, %v1554, %v2110
        %v2155 = vsel %vm1154, %v1559, %v2112
        %v2156 = vsel %vm1154, %v1562, %v2114
        %v2157 = vsel %vm1154, %v1567, %v2116
        %v2158 = vsel %vm1154, %v1570, %v2118
        %v2159 = vsel %vm1154, %v1575, %v2120
        %v2160 = vsel %vm1154, %v1578, %v2122
        %v2161 = vsel %vm1154, %v1583, %v2124
        %v2162 = vsel %vm1154, %v1586, %v2126
        %v2163 = vsel %vm1154, %v1591, %v2128
        %v2164 = vsel %vm1154, %v1594, %v2130
        %v2165 = vsel %vm1154, %v1599, %v2132
        %v2166 = vsel %vm1154, %v1602, %v2134
        %v2167 = vpack.c.bf16 %v2152, %v2151
        %v2168 = vpack.c.bf16 %v2154, %v2153
        %v2169 = vpack.c.bf16 %v2156, %v2155
        %v2170 = vpack.c.bf16 %v2158, %v2157
        %v2171 = vpack.c.bf16 %v2160, %v2159
        %v2172 = vpack.c.bf16 %v2162, %v2161
        %v2173 = vpack.c.bf16 %v2164, %v2163
        %v2174 = vpack.c.bf16 %v2166, %v2165
        %v2175 = vld [vmem:[%s8] sm:$0xf]
        %v2176 = vld [vmem:[%s8 + $0x4] sm:$0xf]
        %v2177 = vld [vmem:[%s8 + $0x8] sm:$0xf]
        %v2178 = vld [vmem:[%s8 + $0xc] sm:$0xf]
        %v2179 = vld [vmem:[%s9] sm:$0x1]
        %v2181 = vlaneseq
        %v2182 = vshrl.u32 %v2181, 7
        %v2183 = vsub.s32 0, %v2182
        %v2184 = vrot.slane %v2179, %v2183
        %v2190 = vunpack.c.l.b16 %v2175
        %v2191 = vunpack.c.l.b16 %v2176
        %v2192 = vunpack.c.l.b16 %v2177
        %v2193 = vunpack.c.l.b16 %v2178
        %v2194 = vpack.c.b16 %v2191, %v2190
        %v2195 = vpack.c.b16 %v2193, %v2192
        %v2199 = vsel %vm677, %v2167, 0
        %v2202 = vsel %vm677, %v2168, 0
        %v2205 = vsel %vm677, %v2169, 0
        %v2208 = vsel %vm677, %v2170, 0
        %v2211 = vsel %vm677, %v2171, 0
        %v2214 = vsel %vm677, %v2172, 0
        %v2217 = vsel %vm677, %v2173, 0
        %v2220 = vsel %vm677, %v2174, 0
        %2222 = vmatprep.subr.bf16.mxu0 0
        %2223 = vmatpush1.bf16.msra.mxu0 %v2194
        %2224 = vmatprep.subr.bf16.mxu0 0
        %2225 = vmatpush1.bf16.msra.mxu0 %v2195
        %2226 = vmatprep.subr.bf16.mxu0 0
        %2227 = vmatpush1.bf16.msra.mxu0 0
        %2228 = vmatprep.subr.bf16.mxu0 0
        %2229 = vmatpush1.bf16.msra.mxu0 0
        %2230 = vmatprep.subr.bf16.mxu0 0
        %2231 = vmatpush1.bf16.msra.mxu0 0
        %2232 = vmatprep.subr.bf16.mxu0 0
        %2233 = vmatpush1.bf16.msra.mxu0 0
        %2234 = vmatprep.subr.bf16.mxu0 0
        %2235 = vmatpush1.bf16.msra.mxu0 0
        %2236 = vmatprep.subr.bf16.mxu0 0
        %2237 = vmatpush1.bf16.msra.mxu0 0
        %2238 = vmatprep.subr.bf16.mxu0 0
        %2239 = vmatpush1.bf16.msra.mxu0 0
        %2240 = vmatprep.subr.bf16.mxu0 0
        %2241 = vmatpush1.bf16.msra.mxu0 0
        %2242 = vmatprep.subr.bf16.mxu0 0
        %2243 = vmatpush1.bf16.msra.mxu0 0
        %2244 = vmatprep.subr.bf16.mxu0 0
        %2245 = vmatpush1.bf16.msra.mxu0 0
        %2246 = vmatprep.subr.bf16.mxu0 0
        %2247 = vmatpush1.bf16.msra.mxu0 0
        %2248 = vmatprep.subr.bf16.mxu0 0
        %2249 = vmatpush1.bf16.msra.mxu0 0
        %2250 = vmatprep.subr.bf16.mxu0 0
        %2251 = vmatpush1.bf16.msra.mxu0 0
        %2252 = vmatprep.subr.bf16.mxu0 0
        %2253 = vmatpush1.bf16.msra.mxu0 0
        %2254 = vmatprep.mubr.bf16.mxu0 0
        %2255 = vmatmul.mubr.bf16.gmra.mrb[0].mxu0 %v2199
        %v2256 = vpop.f32.mrb[0].mxu0
        %v2257 = vadd.f32 %v2184, %v2256
        %v2258 = vpop.f32.mrb[0].mxu0
        %v2259 = vpop.f32.mrb[0].mxu0
        %v2260 = vadd.f32 %v2184, %v2259
        %v2261 = vpop.f32.mrb[0].mxu0
        %2262 = vmatprep.mubr.bf16.mxu0 0
        %2263 = vmatmul.mubr.bf16.gmra.mrb[0].mxu0 %v2202
        %v2264 = vpop.f32.mrb[0].mxu0
        %v2265 = vadd.f32 %v2184, %v2264
        %v2266 = vpop.f32.mrb[0].mxu0
        %v2267 = vpop.f32.mrb[0].mxu0
        %v2268 = vadd.f32 %v2184, %v2267
        %v2269 = vpop.f32.mrb[0].mxu0
        %2270 = vmatprep.mubr.bf16.mxu0 0
        %2271 = vmatmul.mubr.bf16.gmra.mrb[0].mxu0 %v2205
        %v2272 = vpop.f32.mrb[0].mxu0
        %v2273 = vadd.f32 %v2184, %v2272
        %v2274 = vpop.f32.mrb[0].mxu0
        %v2275 = vpop.f32.mrb[0].mxu0
        %v2276 = vadd.f32 %v2184, %v2275
        %v2277 = vpop.f32.mrb[0].mxu0
        %2278 = vmatprep.mubr.bf16.mxu0 0
        %2279 = vmatmul.mubr.bf16.gmra.mrb[0].mxu0 %v2208
        %v2280 = vpop.f32.mrb[0].mxu0
        %v2281 = vadd.f32 %v2184, %v2280
        %v2282 = vpop.f32.mrb[0].mxu0
        %v2283 = vpop.f32.mrb[0].mxu0
        %v2284 = vadd.f32 %v2184, %v2283
        %v2285 = vpop.f32.mrb[0].mxu0
        %2286 = vmatprep.mubr.bf16.mxu0 0
        %2287 = vmatmul.mubr.bf16.gmra.mrb[0].mxu0 %v2211
        %v2288 = vpop.f32.mrb[0].mxu0
        %v2289 = vadd.f32 %v2184, %v2288
        %v2290 = vpop.f32.mrb[0].mxu0
        %v2291 = vpop.f32.mrb[0].mxu0
        %v2292 = vadd.f32 %v2184, %v2291
        %v2293 = vpop.f32.mrb[0].mxu0
        %2294 = vmatprep.mubr.bf16.mxu0 0
        %2295 = vmatmul.mubr.bf16.gmra.mrb[0].mxu0 %v2214
        %v2296 = vpop.f32.mrb[0].mxu0
        %v2297 = vadd.f32 %v2184, %v2296
        %v2298 = vpop.f32.mrb[0].mxu0
        %v2299 = vpop.f32.mrb[0].mxu0
        %v2300 = vadd.f32 %v2184, %v2299
        %v2301 = vpop.f32.mrb[0].mxu0
        %2302 = vmatprep.mubr.bf16.mxu0 0
        %2303 = vmatmul.mubr.bf16.gmra.mrb[0].mxu0 %v2217
        %v2304 = vpop.f32.mrb[0].mxu0
        %v2305 = vadd.f32 %v2184, %v2304
        %v2306 = vpop.f32.mrb[0].mxu0
        %v2307 = vpop.f32.mrb[0].mxu0
        %v2308 = vadd.f32 %v2184, %v2307
        %v2309 = vpop.f32.mrb[0].mxu0
        %2310 = vmatprep.mubr.bf16.mxu0 0
        %2311 = vmatmul.mubr.bf16.gmra.mrb[0].mxu0 %v2220
        %v2312 = vpop.f32.mrb[0].mxu0
        %v2313 = vadd.f32 %v2184, %v2312
        %v2314 = vpop.f32.mrb[0].mxu0
        %v2315 = vpop.f32.mrb[0].mxu0
        %v2316 = vadd.f32 %v2184, %v2315
        %v2317 = vpop.f32.mrb[0].mxu0
        %2318 = vdwg.mxu0
        %v2319 = vadd.f32 %v915, %v2257
        %v2320 = vadd.f32 %v916, %v2260
        %v2321 = vadd.f32 %v917, %v2265
        %v2322 = vadd.f32 %v918, %v2268
        %v2323 = vadd.f32 %v919, %v2273
        %v2324 = vadd.f32 %v920, %v2276
        %v2325 = vadd.f32 %v921, %v2281
        %v2326 = vadd.f32 %v922, %v2284
        %v2327 = vadd.f32 %v923, %v2289
        %v2328 = vadd.f32 %v924, %v2292
        %v2329 = vadd.f32 %v925, %v2297
        %v2330 = vadd.f32 %v926, %v2300
        %v2331 = vadd.f32 %v927, %v2305
        %v2332 = vadd.f32 %v928, %v2308
        %v2333 = vadd.f32 %v929, %v2313
        %v2334 = vadd.f32 %v930, %v2316
        %v2335 = vld [vmem:[%s10] sm:$0x1]
        %v2336 = vld [vmem:[%s11] sm:$0x1]
        %v2337 = vsel %vm677, %v2319, 0.0
        %2338 = vadd.xlane.f32.xlu0 %v2337
        %v2339 = vpop.xlane.xlu0 %2338
        %v2340 = vsel %vm677, %v2320, 0.0
        %2341 = vadd.xlane.f32.xlu0 %v2340
        %v2342 = vpop.xlane.xlu0 %2341
        %v2343 = vsel %vm677, %v2321, 0.0
        %2344 = vadd.xlane.f32.xlu0 %v2343
        %v2345 = vpop.xlane.xlu0 %2344
        %v2346 = vsel %vm677, %v2322, 0.0
        %2347 = vadd.xlane.f32.xlu0 %v2346
        %v2348 = vpop.xlane.xlu0 %2347
        %v2349 = vsel %vm677, %v2323, 0.0
        %2350 = vadd.xlane.f32.xlu0 %v2349
        %v2351 = vpop.xlane.xlu0 %2350
        %v2352 = vsel %vm677, %v2324, 0.0
        %2353 = vadd.xlane.f32.xlu0 %v2352
        %v2354 = vpop.xlane.xlu0 %2353
        %v2355 = vsel %vm677, %v2325, 0.0
        %2356 = vadd.xlane.f32.xlu0 %v2355
        %v2357 = vpop.xlane.xlu0 %2356
        %v2358 = vsel %vm677, %v2326, 0.0
        %2359 = vadd.xlane.f32.xlu0 %v2358
        %v2360 = vpop.xlane.xlu0 %2359
        %v2361 = vsel %vm677, %v2327, 0.0
        %2362 = vadd.xlane.f32.xlu0 %v2361
        %v2363 = vpop.xlane.xlu0 %2362
        %v2364 = vsel %vm677, %v2328, 0.0
        %2365 = vadd.xlane.f32.xlu0 %v2364
        %v2366 = vpop.xlane.xlu0 %2365
        %v2367 = vsel %vm677, %v2329, 0.0
        %2368 = vadd.xlane.f32.xlu0 %v2367
        %v2369 = vpop.xlane.xlu0 %2368
        %v2370 = vsel %vm677, %v2330, 0.0
        %2371 = vadd.xlane.f32.xlu0 %v2370
        %v2372 = vpop.xlane.xlu0 %2371
        %v2373 = vsel %vm677, %v2331, 0.0
        %2374 = vadd.xlane.f32.xlu0 %v2373
        %v2375 = vpop.xlane.xlu0 %2374
        %v2376 = vsel %vm677, %v2332, 0.0
        %2377 = vadd.xlane.f32.xlu0 %v2376
        %v2378 = vpop.xlane.xlu0 %2377
        %v2379 = vsel %vm677, %v2333, 0.0
        %2380 = vadd.xlane.f32.xlu0 %v2379
        %v2381 = vpop.xlane.xlu0 %2380
        %v2382 = vsel %vm677, %v2334, 0.0
        %2383 = vadd.xlane.f32.xlu0 %v2382
        %v2384 = vpop.xlane.xlu0 %2383
        %v2385 = vmul.f32 %v2339, %v726
        %v2386 = vmul.f32 %v2342, %v726
        %v2387 = vmul.f32 %v2345, %v726
        %v2388 = vmul.f32 %v2348, %v726
        %v2389 = vmul.f32 %v2351, %v726
        %v2390 = vmul.f32 %v2354, %v726
        %v2391 = vmul.f32 %v2357, %v726
        %v2392 = vmul.f32 %v2360, %v726
        %v2393 = vmul.f32 %v2363, %v726
        %v2394 = vmul.f32 %v2366, %v726
        %v2395 = vmul.f32 %v2369, %v726
        %v2396 = vmul.f32 %v2372, %v726
        %v2397 = vmul.f32 %v2375, %v726
        %v2398 = vmul.f32 %v2378, %v726
        %v2399 = vmul.f32 %v2381, %v726
        %v2400 = vmul.f32 %v2384, %v726
        %v2401 = vsub.f32 %v2319, %v2385
        %v2402 = vsub.f32 %v2320, %v2386
        %v2403 = vsub.f32 %v2321, %v2387
        %v2404 = vsub.f32 %v2322, %v2388
        %v2405 = vsub.f32 %v2323, %v2389
        %v2406 = vsub.f32 %v2324, %v2390
        %v2407 = vsub.f32 %v2325, %v2391
        %v2408 = vsub.f32 %v2326, %v2392
        %v2409 = vsub.f32 %v2327, %v2393
        %v2410 = vsub.f32 %v2328, %v2394
        %v2411 = vsub.f32 %v2329, %v2395
        %v2412 = vsub.f32 %v2330, %v2396
        %v2413 = vsub.f32 %v2331, %v2397
        %v2414 = vsub.f32 %v2332, %v2398
        %v2415 = vsub.f32 %v2333, %v2399
        %v2416 = vsub.f32 %v2334, %v2400
        %v2417 = vmul.f32 %v2401, %v2401
        %v2418 = vmul.f32 %v2402, %v2402
        %v2419 = vmul.f32 %v2403, %v2403
        %v2420 = vmul.f32 %v2404, %v2404
        %v2421 = vmul.f32 %v2405, %v2405
        %v2422 = vmul.f32 %v2406, %v2406
        %v2423 = vmul.f32 %v2407, %v2407
        %v2424 = vmul.f32 %v2408, %v2408
        %v2425 = vmul.f32 %v2409, %v2409
        %v2426 = vmul.f32 %v2410, %v2410
        %v2427 = vmul.f32 %v2411, %v2411
        %v2428 = vmul.f32 %v2412, %v2412
        %v2429 = vmul.f32 %v2413, %v2413
        %v2430 = vmul.f32 %v2414, %v2414
        %v2431 = vmul.f32 %v2415, %v2415
        %v2432 = vmul.f32 %v2416, %v2416
        %v2433 = vsel %vm677, %v2417, 0.0
        %2434 = vadd.xlane.f32.xlu0 %v2433
        %v2435 = vpop.xlane.xlu0 %2434
        %v2436 = vsel %vm677, %v2418, 0.0
        %2437 = vadd.xlane.f32.xlu0 %v2436
        %v2438 = vpop.xlane.xlu0 %2437
        %v2439 = vsel %vm677, %v2419, 0.0
        %2440 = vadd.xlane.f32.xlu0 %v2439
        %v2441 = vpop.xlane.xlu0 %2440
        %v2442 = vsel %vm677, %v2420, 0.0
        %2443 = vadd.xlane.f32.xlu0 %v2442
        %v2444 = vpop.xlane.xlu0 %2443
        %v2445 = vsel %vm677, %v2421, 0.0
        %2446 = vadd.xlane.f32.xlu0 %v2445
        %v2447 = vpop.xlane.xlu0 %2446
        %v2448 = vsel %vm677, %v2422, 0.0
        %2449 = vadd.xlane.f32.xlu0 %v2448
        %v2450 = vpop.xlane.xlu0 %2449
        %v2451 = vsel %vm677, %v2423, 0.0
        %2452 = vadd.xlane.f32.xlu0 %v2451
        %v2453 = vpop.xlane.xlu0 %2452
        %v2454 = vsel %vm677, %v2424, 0.0
        %2455 = vadd.xlane.f32.xlu0 %v2454
        %v2456 = vpop.xlane.xlu0 %2455
        %v2457 = vsel %vm677, %v2425, 0.0
        %2458 = vadd.xlane.f32.xlu0 %v2457
        %v2459 = vpop.xlane.xlu0 %2458
        %v2460 = vsel %vm677, %v2426, 0.0
        %2461 = vadd.xlane.f32.xlu0 %v2460
        %v2462 = vpop.xlane.xlu0 %2461
        %v2463 = vsel %vm677, %v2427, 0.0
        %2464 = vadd.xlane.f32.xlu0 %v2463
        %v2465 = vpop.xlane.xlu0 %2464
        %v2466 = vsel %vm677, %v2428, 0.0
        %2467 = vadd.xlane.f32.xlu0 %v2466
        %v2468 = vpop.xlane.xlu0 %2467
        %v2469 = vsel %vm677, %v2429, 0.0
        %2470 = vadd.xlane.f32.xlu0 %v2469
        %v2471 = vpop.xlane.xlu0 %2470
        %v2472 = vsel %vm677, %v2430, 0.0
        %2473 = vadd.xlane.f32.xlu0 %v2472
        %v2474 = vpop.xlane.xlu0 %2473
        %v2475 = vsel %vm677, %v2431, 0.0
        %2476 = vadd.xlane.f32.xlu0 %v2475
        %v2477 = vpop.xlane.xlu0 %2476
        %v2478 = vsel %vm677, %v2432, 0.0
        %2479 = vadd.xlane.f32.xlu0 %v2478
        %v2480 = vpop.xlane.xlu0 %2479
        %v2481 = vmul.f32 %v2435, %v726
        %v2482 = vmul.f32 %v2438, %v726
        %v2483 = vmul.f32 %v2441, %v726
        %v2484 = vmul.f32 %v2444, %v726
        %v2485 = vmul.f32 %v2447, %v726
        %v2486 = vmul.f32 %v2450, %v726
        %v2487 = vmul.f32 %v2453, %v726
        %v2488 = vmul.f32 %v2456, %v726
        %v2489 = vmul.f32 %v2459, %v726
        %v2490 = vmul.f32 %v2462, %v726
        %v2491 = vmul.f32 %v2465, %v726
        %v2492 = vmul.f32 %v2468, %v726
        %v2493 = vmul.f32 %v2471, %v726
        %v2494 = vmul.f32 %v2474, %v726
        %v2495 = vmul.f32 %v2477, %v726
        %v2496 = vmul.f32 %v2480, %v726
        %v2497 = vadd.f32 %v2481, 1e-12
        %v2498 = vadd.f32 %v2482, 1e-12
        %v2499 = vadd.f32 %v2483, 1e-12
        %v2500 = vadd.f32 %v2484, 1e-12
        %v2501 = vadd.f32 %v2485, 1e-12
        %v2502 = vadd.f32 %v2486, 1e-12
        %v2503 = vadd.f32 %v2487, 1e-12
        %v2504 = vadd.f32 %v2488, 1e-12
        %v2505 = vadd.f32 %v2489, 1e-12
        %v2506 = vadd.f32 %v2490, 1e-12
        %v2507 = vadd.f32 %v2491, 1e-12
        %v2508 = vadd.f32 %v2492, 1e-12
        %v2509 = vadd.f32 %v2493, 1e-12
        %v2510 = vadd.f32 %v2494, 1e-12
        %v2511 = vadd.f32 %v2495, 1e-12
        %v2512 = vadd.f32 %v2496, 1e-12
        %v2513 = vrsqrt.pop %v2497
        %v2514 = vrsqrt.pop %v2498
        %v2515 = vrsqrt.pop %v2499
        %v2516 = vrsqrt.pop %v2500
        %v2517 = vrsqrt.pop %v2501
        %v2518 = vrsqrt.pop %v2502
        %v2519 = vrsqrt.pop %v2503
        %v2520 = vrsqrt.pop %v2504
        %v2521 = vrsqrt.pop %v2505
        %v2522 = vrsqrt.pop %v2506
        %v2523 = vrsqrt.pop %v2507
        %v2524 = vrsqrt.pop %v2508
        %v2525 = vrsqrt.pop %v2509
        %v2526 = vrsqrt.pop %v2510
        %v2527 = vrsqrt.pop %v2511
        %v2528 = vrsqrt.pop %v2512
        %v2529 = vmul.f32 %v2401, %v2513
        %v2530 = vmul.f32 %v2402, %v2514
        %v2531 = vmul.f32 %v2403, %v2515
        %v2532 = vmul.f32 %v2404, %v2516
        %v2533 = vmul.f32 %v2405, %v2517
        %v2534 = vmul.f32 %v2406, %v2518
        %v2535 = vmul.f32 %v2407, %v2519
        %v2536 = vmul.f32 %v2408, %v2520
        %v2537 = vmul.f32 %v2409, %v2521
        %v2538 = vmul.f32 %v2410, %v2522
        %v2539 = vmul.f32 %v2411, %v2523
        %v2540 = vmul.f32 %v2412, %v2524
        %v2541 = vmul.f32 %v2413, %v2525
        %v2542 = vmul.f32 %v2414, %v2526
        %v2543 = vmul.f32 %v2415, %v2527
        %v2544 = vmul.f32 %v2416, %v2528
        %v2546 = vlaneseq
        %v2547 = vshrl.u32 %v2546, 7
        %v2548 = vsub.s32 0, %v2547
        %v2549 = vrot.slane %v2335, %v2548
        %v2551 = vmul.f32 %v2529, %v2549
        %v2552 = vmul.f32 %v2530, %v2549
        %v2553 = vmul.f32 %v2531, %v2549
        %v2554 = vmul.f32 %v2532, %v2549
        %v2555 = vmul.f32 %v2533, %v2549
        %v2556 = vmul.f32 %v2534, %v2549
        %v2557 = vmul.f32 %v2535, %v2549
        %v2558 = vmul.f32 %v2536, %v2549
        %v2559 = vmul.f32 %v2537, %v2549
        %v2560 = vmul.f32 %v2538, %v2549
        %v2561 = vmul.f32 %v2539, %v2549
        %v2562 = vmul.f32 %v2540, %v2549
        %v2563 = vmul.f32 %v2541, %v2549
        %v2564 = vmul.f32 %v2542, %v2549
        %v2565 = vmul.f32 %v2543, %v2549
        %v2566 = vmul.f32 %v2544, %v2549
        %v2568 = vlaneseq
        %v2569 = vshrl.u32 %v2568, 7
        %v2570 = vsub.s32 0, %v2569
        %v2571 = vrot.slane %v2336, %v2570
        %v2573 = vadd.f32 %v2551, %v2571
        %v2574 = vadd.f32 %v2552, %v2571
        %v2575 = vadd.f32 %v2553, %v2571
        %v2576 = vadd.f32 %v2554, %v2571
        %v2577 = vadd.f32 %v2555, %v2571
        %v2578 = vadd.f32 %v2556, %v2571
        %v2579 = vadd.f32 %v2557, %v2571
        %v2580 = vadd.f32 %v2558, %v2571
        %v2581 = vadd.f32 %v2559, %v2571
        %v2582 = vadd.f32 %v2560, %v2571
        %v2583 = vadd.f32 %v2561, %v2571
        %v2584 = vadd.f32 %v2562, %v2571
        %v2585 = vadd.f32 %v2563, %v2571
        %v2586 = vadd.f32 %v2564, %v2571
        %v2587 = vadd.f32 %v2565, %v2571
        %v2588 = vadd.f32 %v2566, %v2571
        %v2589 = vpack.c.bf16 %v2574, %v2573
        %v2590 = vpack.c.bf16 %v2576, %v2575
        %v2591 = vpack.c.bf16 %v2578, %v2577
        %v2592 = vpack.c.bf16 %v2580, %v2579
        %v2593 = vpack.c.bf16 %v2582, %v2581
        %v2594 = vpack.c.bf16 %v2584, %v2583
        %v2595 = vpack.c.bf16 %v2586, %v2585
        %v2596 = vpack.c.bf16 %v2588, %v2587
        %v2597 = vld [vmem:[%s12] sm:$0xf]
        %v2598 = vld [vmem:[%s12 + $0x4] sm:$0xf]
        %v2599 = vld [vmem:[%s12 + $0x8] sm:$0xf]
        %v2600 = vld [vmem:[%s12 + $0xc] sm:$0xf]
        %v2601 = vld [vmem:[%s13] sm:$0x1]
        %v2603 = vlaneseq
        %v2604 = vshrl.u32 %v2603, 7
        %v2605 = vsub.s32 0, %v2604
        %v2606 = vrot.slane %v2601, %v2605
        %v2612 = vunpack.c.l.b16 %v2597
        %v2613 = vunpack.c.l.b16 %v2598
        %v2614 = vunpack.c.l.b16 %v2599
        %v2615 = vunpack.c.l.b16 %v2600
        %v2616 = vpack.c.b16 %v2613, %v2612
        %v2617 = vpack.c.b16 %v2615, %v2614
        %v2621 = vsel %vm677, %v2589, 0
        %v2624 = vsel %vm677, %v2590, 0
        %v2627 = vsel %vm677, %v2591, 0
        %v2630 = vsel %vm677, %v2592, 0
        %v2633 = vsel %vm677, %v2593, 0
        %v2636 = vsel %vm677, %v2594, 0
        %v2639 = vsel %vm677, %v2595, 0
        %v2642 = vsel %vm677, %v2596, 0
        %2644 = vmatprep.subr.bf16.mxu0 0
        %2645 = vmatpush1.bf16.msra.mxu0 %v2616
        %2646 = vmatprep.subr.bf16.mxu0 0
        %2647 = vmatpush1.bf16.msra.mxu0 %v2617
        %2648 = vmatprep.subr.bf16.mxu0 0
        %2649 = vmatpush1.bf16.msra.mxu0 0
        %2650 = vmatprep.subr.bf16.mxu0 0
        %2651 = vmatpush1.bf16.msra.mxu0 0
        %2652 = vmatprep.subr.bf16.mxu0 0
        %2653 = vmatpush1.bf16.msra.mxu0 0
        %2654 = vmatprep.subr.bf16.mxu0 0
        %2655 = vmatpush1.bf16.msra.mxu0 0
        %2656 = vmatprep.subr.bf16.mxu0 0
        %2657 = vmatpush1.bf16.msra.mxu0 0
        %2658 = vmatprep.subr.bf16.mxu0 0
        %2659 = vmatpush1.bf16.msra.mxu0 0
        %2660 = vmatprep.subr.bf16.mxu0 0
        %2661 = vmatpush1.bf16.msra.mxu0 0
        %2662 = vmatprep.subr.bf16.mxu0 0
        %2663 = vmatpush1.bf16.msra.mxu0 0
        %2664 = vmatprep.subr.bf16.mxu0 0
        %2665 = vmatpush1.bf16.msra.mxu0 0
        %2666 = vmatprep.subr.bf16.mxu0 0
        %2667 = vmatpush1.bf16.msra.mxu0 0
        %2668 = vmatprep.subr.bf16.mxu0 0
        %2669 = vmatpush1.bf16.msra.mxu0 0
        %2670 = vmatprep.subr.bf16.mxu0 0
        %2671 = vmatpush1.bf16.msra.mxu0 0
        %2672 = vmatprep.subr.bf16.mxu0 0
        %2673 = vmatpush1.bf16.msra.mxu0 0
        %2674 = vmatprep.subr.bf16.mxu0 0
        %2675 = vmatpush1.bf16.msra.mxu0 0
        %2676 = vmatprep.mubr.bf16.mxu0 0
        %2677 = vmatmul.mubr.bf16.gmra.mrb[0].mxu0 %v2621
        %v2678 = vpop.f32.mrb[0].mxu0
        %v2679 = vadd.f32 %v2606, %v2678
        %v2680 = vpop.f32.mrb[0].mxu0
        %v2681 = vpop.f32.mrb[0].mxu0
        %v2682 = vadd.f32 %v2606, %v2681
        %v2683 = vpop.f32.mrb[0].mxu0
        %2684 = vmatprep.mubr.bf16.mxu0 0
        %2685 = vmatmul.mubr.bf16.gmra.mrb[0].mxu0 %v2624
        %v2686 = vpop.f32.mrb[0].mxu0
        %v2687 = vadd.f32 %v2606, %v2686
        %v2688 = vpop.f32.mrb[0].mxu0
        %v2689 = vpop.f32.mrb[0].mxu0
        %v2690 = vadd.f32 %v2606, %v2689
        %v2691 = vpop.f32.mrb[0].mxu0
        %2692 = vmatprep.mubr.bf16.mxu0 0
        %2693 = vmatmul.mubr.bf16.gmra.mrb[0].mxu0 %v2627
        %v2694 = vpop.f32.mrb[0].mxu0
        %v2695 = vadd.f32 %v2606, %v2694
        %v2696 = vpop.f32.mrb[0].mxu0
        %v2697 = vpop.f32.mrb[0].mxu0
        %v2698 = vadd.f32 %v2606, %v2697
        %v2699 = vpop.f32.mrb[0].mxu0
        %2700 = vmatprep.mubr.bf16.mxu0 0
        %2701 = vmatmul.mubr.bf16.gmra.mrb[0].mxu0 %v2630
        %v2702 = vpop.f32.mrb[0].mxu0
        %v2703 = vadd.f32 %v2606, %v2702
        %v2704 = vpop.f32.mrb[0].mxu0
        %v2705 = vpop.f32.mrb[0].mxu0
        %v2706 = vadd.f32 %v2606, %v2705
        %v2707 = vpop.f32.mrb[0].mxu0
        %2708 = vmatprep.mubr.bf16.mxu0 0
        %2709 = vmatmul.mubr.bf16.gmra.mrb[0].mxu0 %v2633
        %v2710 = vpop.f32.mrb[0].mxu0
        %v2711 = vadd.f32 %v2606, %v2710
        %v2712 = vpop.f32.mrb[0].mxu0
        %v2713 = vpop.f32.mrb[0].mxu0
        %v2714 = vadd.f32 %v2606, %v2713
        %v2715 = vpop.f32.mrb[0].mxu0
        %2716 = vmatprep.mubr.bf16.mxu0 0
        %2717 = vmatmul.mubr.bf16.gmra.mrb[0].mxu0 %v2636
        %v2718 = vpop.f32.mrb[0].mxu0
        %v2719 = vadd.f32 %v2606, %v2718
        %v2720 = vpop.f32.mrb[0].mxu0
        %v2721 = vpop.f32.mrb[0].mxu0
        %v2722 = vadd.f32 %v2606, %v2721
        %v2723 = vpop.f32.mrb[0].mxu0
        %2724 = vmatprep.mubr.bf16.mxu0 0
        %2725 = vmatmul.mubr.bf16.gmra.mrb[0].mxu0 %v2639
        %v2726 = vpop.f32.mrb[0].mxu0
        %v2727 = vadd.f32 %v2606, %v2726
        %v2728 = vpop.f32.mrb[0].mxu0
        %v2729 = vpop.f32.mrb[0].mxu0
        %v2730 = vadd.f32 %v2606, %v2729
        %v2731 = vpop.f32.mrb[0].mxu0
        %2732 = vmatprep.mubr.bf16.mxu0 0
        %2733 = vmatmul.mubr.bf16.gmra.mrb[0].mxu0 %v2642
        %v2734 = vpop.f32.mrb[0].mxu0
        %v2735 = vadd.f32 %v2606, %v2734
        %v2736 = vpop.f32.mrb[0].mxu0
        %v2737 = vpop.f32.mrb[0].mxu0
        %v2738 = vadd.f32 %v2606, %v2737
        %v2739 = vpop.f32.mrb[0].mxu0
        %2740 = vdwg.mxu0
        %v2741 = vmul.f32 %v2679, %v2679
        %v2742 = vmul.f32 %v2682, %v2682
        %v2743 = vmul.f32 %v2687, %v2687
        %v2744 = vmul.f32 %v2690, %v2690
        %v2745 = vmul.f32 %v2695, %v2695
        %v2746 = vmul.f32 %v2698, %v2698
        %v2747 = vmul.f32 %v2703, %v2703
        %v2748 = vmul.f32 %v2706, %v2706
        %v2749 = vmul.f32 %v2711, %v2711
        %v2750 = vmul.f32 %v2714, %v2714
        %v2751 = vmul.f32 %v2719, %v2719
        %v2752 = vmul.f32 %v2722, %v2722
        %v2753 = vmul.f32 %v2727, %v2727
        %v2754 = vmul.f32 %v2730, %v2730
        %v2755 = vmul.f32 %v2735, %v2735
        %v2756 = vmul.f32 %v2738, %v2738
        %v2757 = vmul.f32 %v2679, %v2741
        %v2758 = vmul.f32 %v2682, %v2742
        %v2759 = vmul.f32 %v2687, %v2743
        %v2760 = vmul.f32 %v2690, %v2744
        %v2761 = vmul.f32 %v2695, %v2745
        %v2762 = vmul.f32 %v2698, %v2746
        %v2763 = vmul.f32 %v2703, %v2747
        %v2764 = vmul.f32 %v2706, %v2748
        %v2765 = vmul.f32 %v2711, %v2749
        %v2766 = vmul.f32 %v2714, %v2750
        %v2767 = vmul.f32 %v2719, %v2751
        %v2768 = vmul.f32 %v2722, %v2752
        %v2769 = vmul.f32 %v2727, %v2753
        %v2770 = vmul.f32 %v2730, %v2754
        %v2771 = vmul.f32 %v2735, %v2755
        %v2772 = vmul.f32 %v2738, %v2756
        %v2773 = vmul.f32 %v2757, 0.044715
        %v2774 = vmul.f32 %v2758, 0.044715
        %v2775 = vmul.f32 %v2759, 0.044715
        %v2776 = vmul.f32 %v2760, 0.044715
        %v2777 = vmul.f32 %v2761, 0.044715
        %v2778 = vmul.f32 %v2762, 0.044715
        %v2779 = vmul.f32 %v2763, 0.044715
        %v2780 = vmul.f32 %v2764, 0.044715
        %v2781 = vmul.f32 %v2765, 0.044715
        %v2782 = vmul.f32 %v2766, 0.044715
        %v2783 = vmul.f32 %v2767, 0.044715
        %v2784 = vmul.f32 %v2768, 0.044715
        %v2785 = vmul.f32 %v2769, 0.044715
        %v2786 = vmul.f32 %v2770, 0.044715
        %v2787 = vmul.f32 %v2771, 0.044715
        %v2788 = vmul.f32 %v2772, 0.044715
        %v2789 = vadd.f32 %v2679, %v2773
        %v2790 = vadd.f32 %v2682, %v2774
        %v2791 = vadd.f32 %v2687, %v2775
        %v2792 = vadd.f32 %v2690, %v2776
        %v2793 = vadd.f32 %v2695, %v2777
        %v2794 = vadd.f32 %v2698, %v2778
        %v2795 = vadd.f32 %v2703, %v2779
        %v2796 = vadd.f32 %v2706, %v2780
        %v2797 = vadd.f32 %v2711, %v2781
        %v2798 = vadd.f32 %v2714, %v2782
        %v2799 = vadd.f32 %v2719, %v2783
        %v2800 = vadd.f32 %v2722, %v2784
        %v2801 = vadd.f32 %v2727, %v2785
        %v2802 = vadd.f32 %v2730, %v2786
        %v2803 = vadd.f32 %v2735, %v2787
        %v2804 = vadd.f32 %v2738, %v2788
        %v2805 = vmul.f32 %v2789, 0.7978846
        %v2806 = vmul.f32 %v2790, 0.7978846
        %v2807 = vmul.f32 %v2791, 0.7978846
        %v2808 = vmul.f32 %v2792, 0.7978846
        %v2809 = vmul.f32 %v2793, 0.7978846
        %v2810 = vmul.f32 %v2794, 0.7978846
        %v2811 = vmul.f32 %v2795, 0.7978846
        %v2812 = vmul.f32 %v2796, 0.7978846
        %v2813 = vmul.f32 %v2797, 0.7978846
        %v2814 = vmul.f32 %v2798, 0.7978846
        %v2815 = vmul.f32 %v2799, 0.7978846
        %v2816 = vmul.f32 %v2800, 0.7978846
        %v2817 = vmul.f32 %v2801, 0.7978846
        %v2818 = vmul.f32 %v2802, 0.7978846
        %v2819 = vmul.f32 %v2803, 0.7978846
        %v2820 = vmul.f32 %v2804, 0.7978846
        %v2821 = vtanh.pop %v2805
        %v2822 = vtanh.pop %v2806
        %v2823 = vtanh.pop %v2807
        %v2824 = vtanh.pop %v2808
        %v2825 = vtanh.pop %v2809
        %v2826 = vtanh.pop %v2810
        %v2827 = vtanh.pop %v2811
        %v2828 = vtanh.pop %v2812
        %v2829 = vtanh.pop %v2813
        %v2830 = vtanh.pop %v2814
        %v2831 = vtanh.pop %v2815
        %v2832 = vtanh.pop %v2816
        %v2833 = vtanh.pop %v2817
        %v2834 = vtanh.pop %v2818
        %v2835 = vtanh.pop %v2819
        %v2836 = vtanh.pop %v2820
        %v2837 = vadd.f32 %v2821, 1.0
        %v2838 = vadd.f32 %v2822, 1.0
        %v2839 = vadd.f32 %v2823, 1.0
        %v2840 = vadd.f32 %v2824, 1.0
        %v2841 = vadd.f32 %v2825, 1.0
        %v2842 = vadd.f32 %v2826, 1.0
        %v2843 = vadd.f32 %v2827, 1.0
        %v2844 = vadd.f32 %v2828, 1.0
        %v2845 = vadd.f32 %v2829, 1.0
        %v2846 = vadd.f32 %v2830, 1.0
        %v2847 = vadd.f32 %v2831, 1.0
        %v2848 = vadd.f32 %v2832, 1.0
        %v2849 = vadd.f32 %v2833, 1.0
        %v2850 = vadd.f32 %v2834, 1.0
        %v2851 = vadd.f32 %v2835, 1.0
        %v2852 = vadd.f32 %v2836, 1.0
        %v2853 = vmul.f32 %v2837, 0.5
        %v2854 = vmul.f32 %v2838, 0.5
        %v2855 = vmul.f32 %v2839, 0.5
        %v2856 = vmul.f32 %v2840, 0.5
        %v2857 = vmul.f32 %v2841, 0.5
        %v2858 = vmul.f32 %v2842, 0.5
        %v2859 = vmul.f32 %v2843, 0.5
        %v2860 = vmul.f32 %v2844, 0.5
        %v2861 = vmul.f32 %v2845, 0.5
        %v2862 = vmul.f32 %v2846, 0.5
        %v2863 = vmul.f32 %v2847, 0.5
        %v2864 = vmul.f32 %v2848, 0.5
        %v2865 = vmul.f32 %v2849, 0.5
        %v2866 = vmul.f32 %v2850, 0.5
        %v2867 = vmul.f32 %v2851, 0.5
        %v2868 = vmul.f32 %v2852, 0.5
        %v2869 = vmul.f32 %v2679, %v2853
        %v2870 = vmul.f32 %v2682, %v2854
        %v2871 = vmul.f32 %v2687, %v2855
        %v2872 = vmul.f32 %v2690, %v2856
        %v2873 = vmul.f32 %v2695, %v2857
        %v2874 = vmul.f32 %v2698, %v2858
        %v2875 = vmul.f32 %v2703, %v2859
        %v2876 = vmul.f32 %v2706, %v2860
        %v2877 = vmul.f32 %v2711, %v2861
        %v2878 = vmul.f32 %v2714, %v2862
        %v2879 = vmul.f32 %v2719, %v2863
        %v2880 = vmul.f32 %v2722, %v2864
        %v2881 = vmul.f32 %v2727, %v2865
        %v2882 = vmul.f32 %v2730, %v2866
        %v2883 = vmul.f32 %v2735, %v2867
        %v2884 = vmul.f32 %v2738, %v2868
        %v2885 = vpack.c.bf16 %v2870, %v2869
        %v2886 = vpack.c.bf16 %v2872, %v2871
        %v2887 = vpack.c.bf16 %v2874, %v2873
        %v2888 = vpack.c.bf16 %v2876, %v2875
        %v2889 = vpack.c.bf16 %v2878, %v2877
        %v2890 = vpack.c.bf16 %v2880, %v2879
        %v2891 = vpack.c.bf16 %v2882, %v2881
        %v2892 = vpack.c.bf16 %v2884, %v2883
        %v2893 = vld [vmem:[%s14] sm:$0xf]
        %v2894 = vld [vmem:[%s14 + $0x4] sm:$0xf]
        %v2895 = vld [vmem:[%s14 + $0x8] sm:$0xf]
        %v2896 = vld [vmem:[%s14 + $0xc] sm:$0xf]
        %v2897 = vld [vmem:[%s14 + $0x10] sm:$0xf]
        %v2898 = vld [vmem:[%s14 + $0x14] sm:$0xf]
        %v2899 = vld [vmem:[%s14 + $0x18] sm:$0xf]
        %v2900 = vld [vmem:[%s14 + $0x1c] sm:$0xf]
        %v2901 = vld [vmem:[%s15] sm:$0x1]
        %v2903 = vlaneseq
        %v2904 = vshrl.u32 %v2903, 7
        %v2905 = vsub.s32 0, %v2904
        %v2906 = vrot.slane %v2901, %v2905
        %v2916 = vunpack.c.l.b16 %v2893
        %v2917 = vunpack.c.l.b16 %v2894
        %v2918 = vunpack.c.l.b16 %v2895
        %v2919 = vunpack.c.l.b16 %v2896
        %v2920 = vunpack.c.l.b16 %v2897
        %v2921 = vunpack.c.l.b16 %v2898
        %v2922 = vunpack.c.l.b16 %v2899
        %v2923 = vunpack.c.l.b16 %v2900
        %v2924 = vpack.c.b16 %v2917, %v2916
        %v2925 = vpack.c.b16 %v2919, %v2918
        %v2926 = vpack.c.b16 %v2921, %v2920
        %v2927 = vpack.c.b16 %v2923, %v2922
        %vm2932 = vcmask 523264
        %v2934 = vsel %vm2932, %v2885, 0
        %v2937 = vsel %vm2932, %v2886, 0
        %v2940 = vsel %vm2932, %v2887, 0
        %v2943 = vsel %vm2932, %v2888, 0
        %v2946 = vsel %vm2932, %v2889, 0
        %v2949 = vsel %vm2932, %v2890, 0
        %v2952 = vsel %vm2932, %v2891, 0
        %v2955 = vsel %vm2932, %v2892, 0
        %2957 = vmatprep.subr.bf16.mxu0 0
        %2958 = vmatpush1.bf16.msra.mxu0 %v2924
        %2959 = vmatprep.subr.bf16.mxu0 0
        %2960 = vmatpush1.bf16.msra.mxu0 %v2925
        %2961 = vmatprep.subr.bf16.mxu0 0
        %2962 = vmatpush1.bf16.msra.mxu0 %v2926
        %2963 = vmatprep.subr.bf16.mxu0 0
        %2964 = vmatpush1.bf16.msra.mxu0 %v2927
        %2965 = vmatprep.subr.bf16.mxu0 0
        %2966 = vmatpush1.bf16.msra.mxu0 0
        %2967 = vmatprep.subr.bf16.mxu0 0
        %2968 = vmatpush1.bf16.msra.mxu0 0
        %2969 = vmatprep.subr.bf16.mxu0 0
        %2970 = vmatpush1.bf16.msra.mxu0 0
        %2971 = vmatprep.subr.bf16.mxu0 0
        %2972 = vmatpush1.bf16.msra.mxu0 0
        %2973 = vmatprep.subr.bf16.mxu0 0
        %2974 = vmatpush1.bf16.msra.mxu0 0
        %2975 = vmatprep.subr.bf16.mxu0 0
        %2976 = vmatpush1.bf16.msra.mxu0 0
        %2977 = vmatprep.subr.bf16.mxu0 0
        %2978 = vmatpush1.bf16.msra.mxu0 0
        %2979 = vmatprep.subr.bf16.mxu0 0
        %2980 = vmatpush1.bf16.msra.mxu0 0
        %2981 = vmatprep.subr.bf16.mxu0 0
        %2982 = vmatpush1.bf16.msra.mxu0 0
        %2983 = vmatprep.subr.bf16.mxu0 0
        %2984 = vmatpush1.bf16.msra.mxu0 0
        %2985 = vmatprep.subr.bf16.mxu0 0
        %2986 = vmatpush1.bf16.msra.mxu0 0
        %2987 = vmatprep.subr.bf16.mxu0 0
        %2988 = vmatpush1.bf16.msra.mxu0 0
        %2989 = vmatprep.mubr.bf16.mxu0 0
        %2990 = vmatmul.mubr.bf16.gmra.mrb[0].mxu0 %v2934
        %v2991 = vpop.f32.mrb[0].mxu0
        %v2992 = vadd.f32 %v2906, %v2991
        %v2993 = vpop.f32.mrb[0].mxu0
        %v2994 = vpop.f32.mrb[0].mxu0
        %v2995 = vadd.f32 %v2906, %v2994
        %v2996 = vpop.f32.mrb[0].mxu0
        %2997 = vmatprep.mubr.bf16.mxu0 0
        %2998 = vmatmul.mubr.bf16.gmra.mrb[0].mxu0 %v2937
        %v2999 = vpop.f32.mrb[0].mxu0
        %v3000 = vadd.f32 %v2906, %v2999
        %v3001 = vpop.f32.mrb[0].mxu0
        %v3002 = vpop.f32.mrb[0].mxu0
        %v3003 = vadd.f32 %v2906, %v3002
        %v3004 = vpop.f32.mrb[0].mxu0
        %3005 = vmatprep.mubr.bf16.mxu0 0
        %3006 = vmatmul.mubr.bf16.gmra.mrb[0].mxu0 %v2940
        %v3007 = vpop.f32.mrb[0].mxu0
        %v3008 = vadd.f32 %v2906, %v3007
        %v3009 = vpop.f32.mrb[0].mxu0
        %v3010 = vpop.f32.mrb[0].mxu0
        %v3011 = vadd.f32 %v2906, %v3010
        %v3012 = vpop.f32.mrb[0].mxu0
        %3013 = vmatprep.mubr.bf16.mxu0 0
        %3014 = vmatmul.mubr.bf16.gmra.mrb[0].mxu0 %v2943
        %v3015 = vpop.f32.mrb[0].mxu0
        %v3016 = vadd.f32 %v2906, %v3015
        %v3017 = vpop.f32.mrb[0].mxu0
        %v3018 = vpop.f32.mrb[0].mxu0
        %v3019 = vadd.f32 %v2906, %v3018
        %v3020 = vpop.f32.mrb[0].mxu0
        %3021 = vmatprep.mubr.bf16.mxu0 0
        %3022 = vmatmul.mubr.bf16.gmra.mrb[0].mxu0 %v2946
        %v3023 = vpop.f32.mrb[0].mxu0
        %v3024 = vadd.f32 %v2906, %v3023
        %v3025 = vpop.f32.mrb[0].mxu0
        %v3026 = vpop.f32.mrb[0].mxu0
        %v3027 = vadd.f32 %v2906, %v3026
        %v3028 = vpop.f32.mrb[0].mxu0
        %3029 = vmatprep.mubr.bf16.mxu0 0
        %3030 = vmatmul.mubr.bf16.gmra.mrb[0].mxu0 %v2949
        %v3031 = vpop.f32.mrb[0].mxu0
        %v3032 = vadd.f32 %v2906, %v3031
        %v3033 = vpop.f32.mrb[0].mxu0
        %v3034 = vpop.f32.mrb[0].mxu0
        %v3035 = vadd.f32 %v2906, %v3034
        %v3036 = vpop.f32.mrb[0].mxu0
        %3037 = vmatprep.mubr.bf16.mxu0 0
        %3038 = vmatmul.mubr.bf16.gmra.mrb[0].mxu0 %v2952
        %v3039 = vpop.f32.mrb[0].mxu0
        %v3040 = vadd.f32 %v2906, %v3039
        %v3041 = vpop.f32.mrb[0].mxu0
        %v3042 = vpop.f32.mrb[0].mxu0
        %v3043 = vadd.f32 %v2906, %v3042
        %v3044 = vpop.f32.mrb[0].mxu0
        %3045 = vmatprep.mubr.bf16.mxu0 0
        %3046 = vmatmul.mubr.bf16.gmra.mrb[0].mxu0 %v2955
        %v3047 = vpop.f32.mrb[0].mxu0
        %v3048 = vadd.f32 %v2906, %v3047
        %v3049 = vpop.f32.mrb[0].mxu0
        %v3050 = vpop.f32.mrb[0].mxu0
        %v3051 = vadd.f32 %v2906, %v3050
        %v3052 = vpop.f32.mrb[0].mxu0
        %3053 = vdwg.mxu0
        %v3054 = vadd.f32 %v2573, %v2992
        %v3055 = vadd.f32 %v2574, %v2995
        %v3056 = vadd.f32 %v2575, %v3000
        %v3057 = vadd.f32 %v2576, %v3003
        %v3058 = vadd.f32 %v2577, %v3008
        %v3059 = vadd.f32 %v2578, %v3011
        %v3060 = vadd.f32 %v2579, %v3016
        %v3061 = vadd.f32 %v2580, %v3019
        %v3062 = vadd.f32 %v2581, %v3024
        %v3063 = vadd.f32 %v2582, %v3027
        %v3064 = vadd.f32 %v2583, %v3032
        %v3065 = vadd.f32 %v2584, %v3035
        %v3066 = vadd.f32 %v2585, %v3040
        %v3067 = vadd.f32 %v2586, %v3043
        %v3068 = vadd.f32 %v2587, %v3048
        %v3069 = vadd.f32 %v2588, %v3051
        %v3070 = vld [vmem:[%s16] sm:$0x1]
        %v3071 = vld [vmem:[%s17] sm:$0x1]
        %v3072 = vsel %vm677, %v3054, 0.0
        %3073 = vadd.xlane.f32.xlu0 %v3072
        %v3074 = vpop.xlane.xlu0 %3073
        %v3075 = vsel %vm677, %v3055, 0.0
        %3076 = vadd.xlane.f32.xlu0 %v3075
        %v3077 = vpop.xlane.xlu0 %3076
        %v3078 = vsel %vm677, %v3056, 0.0
        %3079 = vadd.xlane.f32.xlu0 %v3078
        %v3080 = vpop.xlane.xlu0 %3079
        %v3081 = vsel %vm677, %v3057, 0.0
        %3082 = vadd.xlane.f32.xlu0 %v3081
        %v3083 = vpop.xlane.xlu0 %3082
        %v3084 = vsel %vm677, %v3058, 0.0
        %3085 = vadd.xlane.f32.xlu0 %v3084
        %v3086 = vpop.xlane.xlu0 %3085
        %v3087 = vsel %vm677, %v3059, 0.0
        %3088 = vadd.xlane.f32.xlu0 %v3087
        %v3089 = vpop.xlane.xlu0 %3088
        %v3090 = vsel %vm677, %v3060, 0.0
        %3091 = vadd.xlane.f32.xlu0 %v3090
        %v3092 = vpop.xlane.xlu0 %3091
        %v3093 = vsel %vm677, %v3061, 0.0
        %3094 = vadd.xlane.f32.xlu0 %v3093
        %v3095 = vpop.xlane.xlu0 %3094
        %v3096 = vsel %vm677, %v3062, 0.0
        %3097 = vadd.xlane.f32.xlu0 %v3096
        %v3098 = vpop.xlane.xlu0 %3097
        %v3099 = vsel %vm677, %v3063, 0.0
        %3100 = vadd.xlane.f32.xlu0 %v3099
        %v3101 = vpop.xlane.xlu0 %3100
        %v3102 = vsel %vm677, %v3064, 0.0
        %3103 = vadd.xlane.f32.xlu0 %v3102
        %v3104 = vpop.xlane.xlu0 %3103
        %v3105 = vsel %vm677, %v3065, 0.0
        %3106 = vadd.xlane.f32.xlu0 %v3105
        %v3107 = vpop.xlane.xlu0 %3106
        %v3108 = vsel %vm677, %v3066, 0.0
        %3109 = vadd.xlane.f32.xlu0 %v3108
        %v3110 = vpop.xlane.xlu0 %3109
        %v3111 = vsel %vm677, %v3067, 0.0
        %3112 = vadd.xlane.f32.xlu0 %v3111
        %v3113 = vpop.xlane.xlu0 %3112
        %v3114 = vsel %vm677, %v3068, 0.0
        %3115 = vadd.xlane.f32.xlu0 %v3114
        %v3116 = vpop.xlane.xlu0 %3115
        %v3117 = vsel %vm677, %v3069, 0.0
        %3118 = vadd.xlane.f32.xlu0 %v3117
        %v3119 = vpop.xlane.xlu0 %3118
        %v3120 = vmul.f32 %v3074, %v726
        %v3121 = vmul.f32 %v3077, %v726
        %v3122 = vmul.f32 %v3080, %v726
        %v3123 = vmul.f32 %v3083, %v726
        %v3124 = vmul.f32 %v3086, %v726
        %v3125 = vmul.f32 %v3089, %v726
        %v3126 = vmul.f32 %v3092, %v726
        %v3127 = vmul.f32 %v3095, %v726
        %v3128 = vmul.f32 %v3098, %v726
        %v3129 = vmul.f32 %v3101, %v726
        %v3130 = vmul.f32 %v3104, %v726
        %v3131 = vmul.f32 %v3107, %v726
        %v3132 = vmul.f32 %v3110, %v726
        %v3133 = vmul.f32 %v3113, %v726
        %v3134 = vmul.f32 %v3116, %v726
        %v3135 = vmul.f32 %v3119, %v726
        %v3136 = vsub.f32 %v3054, %v3120
        %v3137 = vsub.f32 %v3055, %v3121
        %v3138 = vsub.f32 %v3056, %v3122
        %v3139 = vsub.f32 %v3057, %v3123
        %v3140 = vsub.f32 %v3058, %v3124
        %v3141 = vsub.f32 %v3059, %v3125
        %v3142 = vsub.f32 %v3060, %v3126
        %v3143 = vsub.f32 %v3061, %v3127
        %v3144 = vsub.f32 %v3062, %v3128
        %v3145 = vsub.f32 %v3063, %v3129
        %v3146 = vsub.f32 %v3064, %v3130
        %v3147 = vsub.f32 %v3065, %v3131
        %v3148 = vsub.f32 %v3066, %v3132
        %v3149 = vsub.f32 %v3067, %v3133
        %v3150 = vsub.f32 %v3068, %v3134
        %v3151 = vsub.f32 %v3069, %v3135
        %v3152 = vmul.f32 %v3136, %v3136
        %v3153 = vmul.f32 %v3137, %v3137
        %v3154 = vmul.f32 %v3138, %v3138
        %v3155 = vmul.f32 %v3139, %v3139
        %v3156 = vmul.f32 %v3140, %v3140
        %v3157 = vmul.f32 %v3141, %v3141
        %v3158 = vmul.f32 %v3142, %v3142
        %v3159 = vmul.f32 %v3143, %v3143
        %v3160 = vmul.f32 %v3144, %v3144
        %v3161 = vmul.f32 %v3145, %v3145
        %v3162 = vmul.f32 %v3146, %v3146
        %v3163 = vmul.f32 %v3147, %v3147
        %v3164 = vmul.f32 %v3148, %v3148
        %v3165 = vmul.f32 %v3149, %v3149
        %v3166 = vmul.f32 %v3150, %v3150
        %v3167 = vmul.f32 %v3151, %v3151
        %v3168 = vsel %vm677, %v3152, 0.0
        %3169 = vadd.xlane.f32.xlu0 %v3168
        %v3170 = vpop.xlane.xlu0 %3169
        %v3171 = vsel %vm677, %v3153, 0.0
        %3172 = vadd.xlane.f32.xlu0 %v3171
        %v3173 = vpop.xlane.xlu0 %3172
        %v3174 = vsel %vm677, %v3154, 0.0
        %3175 = vadd.xlane.f32.xlu0 %v3174
        %v3176 = vpop.xlane.xlu0 %3175
        %v3177 = vsel %vm677, %v3155, 0.0
        %3178 = vadd.xlane.f32.xlu0 %v3177
        %v3179 = vpop.xlane.xlu0 %3178
        %v3180 = vsel %vm677, %v3156, 0.0
        %3181 = vadd.xlane.f32.xlu0 %v3180
        %v3182 = vpop.xlane.xlu0 %3181
        %v3183 = vsel %vm677, %v3157, 0.0
        %3184 = vadd.xlane.f32.xlu0 %v3183
        %v3185 = vpop.xlane.xlu0 %3184
        %v3186 = vsel %vm677, %v3158, 0.0
        %3187 = vadd.xlane.f32.xlu0 %v3186
        %v3188 = vpop.xlane.xlu0 %3187
        %v3189 = vsel %vm677, %v3159, 0.0
        %3190 = vadd.xlane.f32.xlu0 %v3189
        %v3191 = vpop.xlane.xlu0 %3190
        %v3192 = vsel %vm677, %v3160, 0.0
        %3193 = vadd.xlane.f32.xlu0 %v3192
        %v3194 = vpop.xlane.xlu0 %3193
        %v3195 = vsel %vm677, %v3161, 0.0
        %3196 = vadd.xlane.f32.xlu0 %v3195
        %v3197 = vpop.xlane.xlu0 %3196
        %v3198 = vsel %vm677, %v3162, 0.0
        %3199 = vadd.xlane.f32.xlu0 %v3198
        %v3200 = vpop.xlane.xlu0 %3199
        %v3201 = vsel %vm677, %v3163, 0.0
        %3202 = vadd.xlane.f32.xlu0 %v3201
        %v3203 = vpop.xlane.xlu0 %3202
        %v3204 = vsel %vm677, %v3164, 0.0
        %3205 = vadd.xlane.f32.xlu0 %v3204
        %v3206 = vpop.xlane.xlu0 %3205
        %v3207 = vsel %vm677, %v3165, 0.0
        %3208 = vadd.xlane.f32.xlu0 %v3207
        %v3209 = vpop.xlane.xlu0 %3208
        %v3210 = vsel %vm677, %v3166, 0.0
        %3211 = vadd.xlane.f32.xlu0 %v3210
        %v3212 = vpop.xlane.xlu0 %3211
        %v3213 = vsel %vm677, %v3167, 0.0
        %3214 = vadd.xlane.f32.xlu0 %v3213
        %v3215 = vpop.xlane.xlu0 %3214
        %v3216 = vmul.f32 %v3170, %v726
        %v3217 = vmul.f32 %v3173, %v726
        %v3218 = vmul.f32 %v3176, %v726
        %v3219 = vmul.f32 %v3179, %v726
        %v3220 = vmul.f32 %v3182, %v726
        %v3221 = vmul.f32 %v3185, %v726
        %v3222 = vmul.f32 %v3188, %v726
        %v3223 = vmul.f32 %v3191, %v726
        %v3224 = vmul.f32 %v3194, %v726
        %v3225 = vmul.f32 %v3197, %v726
        %v3226 = vmul.f32 %v3200, %v726
        %v3227 = vmul.f32 %v3203, %v726
        %v3228 = vmul.f32 %v3206, %v726
        %v3229 = vmul.f32 %v3209, %v726
        %v3230 = vmul.f32 %v3212, %v726
        %v3231 = vmul.f32 %v3215, %v726
        %v3232 = vadd.f32 %v3216, 1e-12
        %v3233 = vadd.f32 %v3217, 1e-12
        %v3234 = vadd.f32 %v3218, 1e-12
        %v3235 = vadd.f32 %v3219, 1e-12
        %v3236 = vadd.f32 %v3220, 1e-12
        %v3237 = vadd.f32 %v3221, 1e-12
        %v3238 = vadd.f32 %v3222, 1e-12
        %v3239 = vadd.f32 %v3223, 1e-12
        %v3240 = vadd.f32 %v3224, 1e-12
        %v3241 = vadd.f32 %v3225, 1e-12
        %v3242 = vadd.f32 %v3226, 1e-12
        %v3243 = vadd.f32 %v3227, 1e-12
        %v3244 = vadd.f32 %v3228, 1e-12
        %v3245 = vadd.f32 %v3229, 1e-12
        %v3246 = vadd.f32 %v3230, 1e-12
        %v3247 = vadd.f32 %v3231, 1e-12
        %v3248 = vrsqrt.pop %v3232
        %v3249 = vrsqrt.pop %v3233
        %v3250 = vrsqrt.pop %v3234
        %v3251 = vrsqrt.pop %v3235
        %v3252 = vrsqrt.pop %v3236
        %v3253 = vrsqrt.pop %v3237
        %v3254 = vrsqrt.pop %v3238
        %v3255 = vrsqrt.pop %v3239
        %v3256 = vrsqrt.pop %v3240
        %v3257 = vrsqrt.pop %v3241
        %v3258 = vrsqrt.pop %v3242
        %v3259 = vrsqrt.pop %v3243
        %v3260 = vrsqrt.pop %v3244
        %v3261 = vrsqrt.pop %v3245
        %v3262 = vrsqrt.pop %v3246
        %v3263 = vrsqrt.pop %v3247
        %v3264 = vmul.f32 %v3136, %v3248
        %v3265 = vmul.f32 %v3137, %v3249
        %v3266 = vmul.f32 %v3138, %v3250
        %v3267 = vmul.f32 %v3139, %v3251
        %v3268 = vmul.f32 %v3140, %v3252
        %v3269 = vmul.f32 %v3141, %v3253
        %v3270 = vmul.f32 %v3142, %v3254
        %v3271 = vmul.f32 %v3143, %v3255
        %v3272 = vmul.f32 %v3144, %v3256
        %v3273 = vmul.f32 %v3145, %v3257
        %v3274 = vmul.f32 %v3146, %v3258
        %v3275 = vmul.f32 %v3147, %v3259
        %v3276 = vmul.f32 %v3148, %v3260
        %v3277 = vmul.f32 %v3149, %v3261
        %v3278 = vmul.f32 %v3150, %v3262
        %v3279 = vmul.f32 %v3151, %v3263
        %v3281 = vlaneseq
        %v3282 = vshrl.u32 %v3281, 7
        %v3283 = vsub.s32 0, %v3282
        %v3284 = vrot.slane %v3070, %v3283
        %v3286 = vmul.f32 %v3264, %v3284
        %v3287 = vmul.f32 %v3265, %v3284
        %v3288 = vmul.f32 %v3266, %v3284
        %v3289 = vmul.f32 %v3267, %v3284
        %v3290 = vmul.f32 %v3268, %v3284
        %v3291 = vmul.f32 %v3269, %v3284
        %v3292 = vmul.f32 %v3270, %v3284
        %v3293 = vmul.f32 %v3271, %v3284
        %v3294 = vmul.f32 %v3272, %v3284
        %v3295 = vmul.f32 %v3273, %v3284
        %v3296 = vmul.f32 %v3274, %v3284
        %v3297 = vmul.f32 %v3275, %v3284
        %v3298 = vmul.f32 %v3276, %v3284
        %v3299 = vmul.f32 %v3277, %v3284
        %v3300 = vmul.f32 %v3278, %v3284
        %v3301 = vmul.f32 %v3279, %v3284
        %v3303 = vlaneseq
        %v3304 = vshrl.u32 %v3303, 7
        %v3305 = vsub.s32 0, %v3304
        %v3306 = vrot.slane %v3071, %v3305
        %v3308 = vadd.f32 %v3286, %v3306
        %v3309 = vadd.f32 %v3287, %v3306
        %v3310 = vadd.f32 %v3288, %v3306
        %v3311 = vadd.f32 %v3289, %v3306
        %v3312 = vadd.f32 %v3290, %v3306
        %v3313 = vadd.f32 %v3291, %v3306
        %v3314 = vadd.f32 %v3292, %v3306
        %v3315 = vadd.f32 %v3293, %v3306
        %v3316 = vadd.f32 %v3294, %v3306
        %v3317 = vadd.f32 %v3295, %v3306
        %v3318 = vadd.f32 %v3296, %v3306
        %v3319 = vadd.f32 %v3297, %v3306
        %v3320 = vadd.f32 %v3298, %v3306
        %v3321 = vadd.f32 %v3299, %v3306
        %v3322 = vadd.f32 %v3300, %v3306
        %v3323 = vadd.f32 %v3301, %v3306
        %v3324 = vpack.c.bf16 %v3309, %v3308
        %v3325 = vpack.c.bf16 %v3311, %v3310
        %v3326 = vpack.c.bf16 %v3313, %v3312
        %v3327 = vpack.c.bf16 %v3315, %v3314
        %v3328 = vpack.c.bf16 %v3317, %v3316
        %v3329 = vpack.c.bf16 %v3319, %v3318
        %v3330 = vpack.c.bf16 %v3321, %v3320
        %v3331 = vpack.c.bf16 %v3323, %v3322
        %s3332 = scalar_lea.vmem %s6, 16
        %v3333 = vld [vmem:[%s3332] sm:$0xf]
        %v3334 = vld [vmem:[%s3332 + $0x4] sm:$0xf]
        %v3335 = vld [vmem:[%s3332 + $0x8] sm:$0xf]
        %v3336 = vld [vmem:[%s3332 + $0xc] sm:$0xf]
        %s3337 = scalar_lea.vmem %s7, 1
        %v3338 = vld [vmem:[%s3337] sm:$0x1]
        %v3340 = vlaneseq
        %v3341 = vshrl.u32 %v3340, 7
        %v3342 = vsub.s32 0, %v3341
        %v3343 = vrot.slane %v3338, %v3342
        %v3349 = vunpack.c.l.b16 %v3333
        %v3350 = vunpack.c.l.b16 %v3334
        %v3351 = vunpack.c.l.b16 %v3335
        %v3352 = vunpack.c.l.b16 %v3336
        %v3353 = vpack.c.b16 %v3350, %v3349
        %v3354 = vpack.c.b16 %v3352, %v3351
        %v3358 = vsel %vm677, %v3324, 0
        %v3361 = vsel %vm677, %v3325, 0
        %v3364 = vsel %vm677, %v3326, 0
        %v3367 = vsel %vm677, %v3327, 0
        %v3370 = vsel %vm677, %v3328, 0
        %v3373 = vsel %vm677, %v3329, 0
        %v3376 = vsel %vm677, %v3330, 0
        %v3379 = vsel %vm677, %v3331, 0
        %3381 = vmatprep.subr.bf16.mxu0 0
        %3382 = vmatpush1.bf16.msra.mxu0 %v3353
        %3383 = vmatprep.subr.bf16.mxu0 0
        %3384 = vmatpush1.bf16.msra.mxu0 %v3354
        %3385 = vmatprep.subr.bf16.mxu0 0
        %3386 = vmatpush1.bf16.msra.mxu0 0
        %3387 = vmatprep.subr.bf16.mxu0 0
        %3388 = vmatpush1.bf16.msra.mxu0 0
        %3389 = vmatprep.subr.bf16.mxu0 0
        %3390 = vmatpush1.bf16.msra.mxu0 0
        %3391 = vmatprep.subr.bf16.mxu0 0
        %3392 = vmatpush1.bf16.msra.mxu0 0
        %3393 = vmatprep.subr.bf16.mxu0 0
        %3394 = vmatpush1.bf16.msra.mxu0 0
        %3395 = vmatprep.subr.bf16.mxu0 0
        %3396 = vmatpush1.bf16.msra.mxu0 0
        %3397 = vmatprep.subr.bf16.mxu0 0
        %3398 = vmatpush1.bf16.msra.mxu0 0
        %3399 = vmatprep.subr.bf16.mxu0 0
        %3400 = vmatpush1.bf16.msra.mxu0 0
        %3401 = vmatprep.subr.bf16.mxu0 0
        %3402 = vmatpush1.bf16.msra.mxu0 0
        %3403 = vmatprep.subr.bf16.mxu0 0
        %3404 = vmatpush1.bf16.msra.mxu0 0
        %3405 = vmatprep.subr.bf16.mxu0 0
        %3406 = vmatpush1.bf16.msra.mxu0 0
        %3407 = vmatprep.subr.bf16.mxu0 0
        %3408 = vmatpush1.bf16.msra.mxu0 0
        %3409 = vmatprep.subr.bf16.mxu0 0
        %3410 = vmatpush1.bf16.msra.mxu0 0
        %3411 = vmatprep.subr.bf16.mxu0 0
        %3412 = vmatpush1.bf16.msra.mxu0 0
        %3413 = vmatprep.mubr.bf16.mxu0 0
        %3414 = vmatmul.mubr.bf16.gmra.mrb[0].mxu0 %v3358
        %v3415 = vpop.f32.mrb[0].mxu0
        %v3416 = vadd.f32 %v3343, %v3415
        %v3417 = vpop.f32.mrb[0].mxu0
        %v3418 = vpop.f32.mrb[0].mxu0
        %v3419 = vadd.f32 %v3343, %v3418
        %v3420 = vpop.f32.mrb[0].mxu0
        %3421 = vmatprep.mubr.bf16.mxu0 0
        %3422 = vmatmul.mubr.bf16.gmra.mrb[0].mxu0 %v3361
        %v3423 = vpop.f32.mrb[0].mxu0
        %v3424 = vadd.f32 %v3343, %v3423
        %v3425 = vpop.f32.mrb[0].mxu0
        %v3426 = vpop.f32.mrb[0].mxu0
        %v3427 = vadd.f32 %v3343, %v3426
        %v3428 = vpop.f32.mrb[0].mxu0
        %3429 = vmatprep.mubr.bf16.mxu0 0
        %3430 = vmatmul.mubr.bf16.gmra.mrb[0].mxu0 %v3364
        %v3431 = vpop.f32.mrb[0].mxu0
        %v3432 = vadd.f32 %v3343, %v3431
        %v3433 = vpop.f32.mrb[0].mxu0
        %v3434 = vpop.f32.mrb[0].mxu0
        %v3435 = vadd.f32 %v3343, %v3434
        %v3436 = vpop.f32.mrb[0].mxu0
        %3437 = vmatprep.mubr.bf16.mxu0 0
        %3438 = vmatmul.mubr.bf16.gmra.mrb[0].mxu0 %v3367
        %v3439 = vpop.f32.mrb[0].mxu0
        %v3440 = vadd.f32 %v3343, %v3439
        %v3441 = vpop.f32.mrb[0].mxu0
        %v3442 = vpop.f32.mrb[0].mxu0
        %v3443 = vadd.f32 %v3343, %v3442
        %v3444 = vpop.f32.mrb[0].mxu0
        %3445 = vmatprep.mubr.bf16.mxu0 0
        %3446 = vmatmul.mubr.bf16.gmra.mrb[0].mxu0 %v3370
        %v3447 = vpop.f32.mrb[0].mxu0
        %v3448 = vadd.f32 %v3343, %v3447
        %v3449 = vpop.f32.mrb[0].mxu0
        %v3450 = vpop.f32.mrb[0].mxu0
        %v3451 = vadd.f32 %v3343, %v3450
        %v3452 = vpop.f32.mrb[0].mxu0
        %3453 = vmatprep.mubr.bf16.mxu0 0
        %3454 = vmatmul.mubr.bf16.gmra.mrb[0].mxu0 %v3373
        %v3455 = vpop.f32.mrb[0].mxu0
        %v3456 = vadd.f32 %v3343, %v3455
        %v3457 = vpop.f32.mrb[0].mxu0
        %v3458 = vpop.f32.mrb[0].mxu0
        %v3459 = vadd.f32 %v3343, %v3458
        %v3460 = vpop.f32.mrb[0].mxu0
        %3461 = vmatprep.mubr.bf16.mxu0 0
        %3462 = vmatmul.mubr.bf16.gmra.mrb[0].mxu0 %v3376
        %v3463 = vpop.f32.mrb[0].mxu0
        %v3464 = vadd.f32 %v3343, %v3463
        %v3465 = vpop.f32.mrb[0].mxu0
        %v3466 = vpop.f32.mrb[0].mxu0
        %v3467 = vadd.f32 %v3343, %v3466
        %v3468 = vpop.f32.mrb[0].mxu0
        %3469 = vmatprep.mubr.bf16.mxu0 0
        %3470 = vmatmul.mubr.bf16.gmra.mrb[0].mxu0 %v3379
        %v3471 = vpop.f32.mrb[0].mxu0
        %v3472 = vadd.f32 %v3343, %v3471
        %v3473 = vpop.f32.mrb[0].mxu0
        %v3474 = vpop.f32.mrb[0].mxu0
        %v3475 = vadd.f32 %v3343, %v3474
        %v3476 = vpop.f32.mrb[0].mxu0
        %3477 = vdwg.mxu0
        %v3478 = vpack.c.bf16 %v3419, %v3416
        %v3479 = vpack.c.bf16 %v3427, %v3424
        %v3480 = vpack.c.bf16 %v3435, %v3432
        %v3481 = vpack.c.bf16 %v3443, %v3440
        %v3482 = vpack.c.bf16 %v3451, %v3448
        %v3483 = vpack.c.bf16 %v3459, %v3456
        %v3484 = vpack.c.bf16 %v3467, %v3464
        %v3485 = vpack.c.bf16 %v3475, %v3472
        %3494 = vrot.lane.b32.xlu0 %v3478, 96
        %v3495 = vpop.permute.xlu0 %3494
        %3496 = vrot.lane.b32.xlu0 %v3479, 96
        %v3497 = vpop.permute.xlu0 %3496
        %3498 = vrot.lane.b32.xlu0 %v3480, 96
        %v3499 = vpop.permute.xlu0 %3498
        %3500 = vrot.lane.b32.xlu0 %v3481, 96
        %v3501 = vpop.permute.xlu0 %3500
        %3502 = vrot.lane.b32.xlu0 %v3482, 96
        %v3503 = vpop.permute.xlu0 %3502
        %3504 = vrot.lane.b32.xlu0 %v3483, 96
        %v3505 = vpop.permute.xlu0 %3504
        %3506 = vrot.lane.b32.xlu0 %v3484, 96
        %v3507 = vpop.permute.xlu0 %3506
        %3508 = vrot.lane.b32.xlu0 %v3485, 96
        %v3509 = vpop.permute.xlu0 %3508
        %v3511 = vsel %vm1154, %v3478, 0
        %v3514 = vsel %vm1154, %v3479, 0
        %v3517 = vsel %vm1154, %v3480, 0
        %v3520 = vsel %vm1154, %v3481, 0
        %v3523 = vsel %vm1154, %v3482, 0
        %v3526 = vsel %vm1154, %v3483, 0
        %v3529 = vsel %vm1154, %v3484, 0
        %v3532 = vsel %vm1154, %v3485, 0
        %v3535 = vsel %vm1154, %v3495, 0
        %v3538 = vsel %vm1154, %v3497, 0
        %v3541 = vsel %vm1154, %v3499, 0
        %v3544 = vsel %vm1154, %v3501, 0
        %v3547 = vsel %vm1154, %v3503, 0
        %v3550 = vsel %vm1154, %v3505, 0
        %v3553 = vsel %vm1154, %v3507, 0
        %v3556 = vsel %vm1154, %v3509, 0
        %3558 = vmatprep.subr.bf16.mxu0 0
        %3559 = vmatpush1.bf16.xpose.msra.mxu0 %v3535
        %3560 = vmatprep.subr.bf16.mxu0 0
        %3561 = vmatpush1.bf16.xpose.msra.mxu0 %v3538
        %3562 = vmatprep.subr.bf16.mxu0 0
        %3563 = vmatpush1.bf16.xpose.msra.mxu0 %v3541
        %3564 = vmatprep.subr.bf16.mxu0 0
        %3565 = vmatpush1.bf16.xpose.msra.mxu0 %v3544
        %3566 = vmatprep.subr.bf16.mxu0 0
        %3567 = vmatpush1.bf16.xpose.msra.mxu0 %v3547
        %3568 = vmatprep.subr.bf16.mxu0 0
        %3569 = vmatpush1.bf16.xpose.msra.mxu0 %v3550
        %3570 = vmatprep.subr.bf16.mxu0 0
        %3571 = vmatpush1.bf16.xpose.msra.mxu0 %v3553
        %3572 = vmatprep.subr.bf16.mxu0 0
        %3573 = vmatpush1.bf16.xpose.msra.mxu0 %v3556
        %3574 = vmatprep.subr.bf16.mxu0 0
        %3575 = vmatpush1.bf16.xpose.msra.mxu0 0
        %3576 = vmatprep.subr.bf16.mxu0 0
        %3577 = vmatpush1.bf16.xpose.msra.mxu0 0
        %3578 = vmatprep.subr.bf16.mxu0 0
        %3579 = vmatpush1.bf16.xpose.msra.mxu0 0
        %3580 = vmatprep.subr.bf16.mxu0 0
        %3581 = vmatpush1.bf16.xpose.msra.mxu0 0
        %3582 = vmatprep.subr.bf16.mxu0 0
        %3583 = vmatpush1.bf16.xpose.msra.mxu0 0
        %3584 = vmatprep.subr.bf16.mxu0 0
        %3585 = vmatpush1.bf16.xpose.msra.mxu0 0
        %3586 = vmatprep.subr.bf16.mxu0 0
        %3587 = vmatpush1.bf16.xpose.msra.mxu0 0
        %3588 = vmatprep.subr.bf16.mxu0 0
        %3589 = vmatpush1.bf16.xpose.msra.mxu0 0
        %3590 = vmatprep.mubr.bf16.mxu0 0
        %3591 = vmatmul.mubr.bf16.gmra.mrb[0].mxu0 %v3511
        %v3592 = vpop.f32.mrb[0].mxu0
        %v3593 = vadd.f32 0.0, %v3592
        %v3594 = vpop.f32.mrb[0].mxu0
        %v3595 = vpop.f32.mrb[0].mxu0
        %v3596 = vadd.f32 0.0, %v3595
        %v3597 = vpop.f32.mrb[0].mxu0
        %3598 = vmatprep.mubr.bf16.mxu0 0
        %3599 = vmatmul.mubr.bf16.gmra.mrb[0].mxu0 %v3514
        %v3600 = vpop.f32.mrb[0].mxu0
        %v3601 = vadd.f32 0.0, %v3600
        %v3602 = vpop.f32.mrb[0].mxu0
        %v3603 = vpop.f32.mrb[0].mxu0
        %v3604 = vadd.f32 0.0, %v3603
        %v3605 = vpop.f32.mrb[0].mxu0
        %3606 = vmatprep.mubr.bf16.mxu0 0
        %3607 = vmatmul.mubr.bf16.gmra.mrb[0].mxu0 %v3517
        %v3608 = vpop.f32.mrb[0].mxu0
        %v3609 = vadd.f32 0.0, %v3608
        %v3610 = vpop.f32.mrb[0].mxu0
        %v3611 = vpop.f32.mrb[0].mxu0
        %v3612 = vadd.f32 0.0, %v3611
        %v3613 = vpop.f32.mrb[0].mxu0
        %3614 = vmatprep.mubr.bf16.mxu0 0
        %3615 = vmatmul.mubr.bf16.gmra.mrb[0].mxu0 %v3520
        %v3616 = vpop.f32.mrb[0].mxu0
        %v3617 = vadd.f32 0.0, %v3616
        %v3618 = vpop.f32.mrb[0].mxu0
        %v3619 = vpop.f32.mrb[0].mxu0
        %v3620 = vadd.f32 0.0, %v3619
        %v3621 = vpop.f32.mrb[0].mxu0
        %3622 = vmatprep.mubr.bf16.mxu0 0
        %3623 = vmatmul.mubr.bf16.gmra.mrb[0].mxu0 %v3523
        %v3624 = vpop.f32.mrb[0].mxu0
        %v3625 = vadd.f32 0.0, %v3624
        %v3626 = vpop.f32.mrb[0].mxu0
        %v3627 = vpop.f32.mrb[0].mxu0
        %v3628 = vadd.f32 0.0, %v3627
        %v3629 = vpop.f32.mrb[0].mxu0
        %3630 = vmatprep.mubr.bf16.mxu0 0
        %3631 = vmatmul.mubr.bf16.gmra.mrb[0].mxu0 %v3526
        %v3632 = vpop.f32.mrb[0].mxu0
        %v3633 = vadd.f32 0.0, %v3632
        %v3634 = vpop.f32.mrb[0].mxu0
        %v3635 = vpop.f32.mrb[0].mxu0
        %v3636 = vadd.f32 0.0, %v3635
        %v3637 = vpop.f32.mrb[0].mxu0
        %3638 = vmatprep.mubr.bf16.mxu0 0
        %3639 = vmatmul.mubr.bf16.gmra.mrb[0].mxu0 %v3529
        %v3640 = vpop.f32.mrb[0].mxu0
        %v3641 = vadd.f32 0.0, %v3640
        %v3642 = vpop.f32.mrb[0].mxu0
        %v3643 = vpop.f32.mrb[0].mxu0
        %v3644 = vadd.f32 0.0, %v3643
        %v3645 = vpop.f32.mrb[0].mxu0
        %3646 = vmatprep.mubr.bf16.mxu0 0
        %3647 = vmatmul.mubr.bf16.gmra.mrb[0].mxu0 %v3532
        %v3648 = vpop.f32.mrb[0].mxu0
        %v3649 = vadd.f32 0.0, %v3648
        %v3650 = vpop.f32.mrb[0].mxu0
        %v3651 = vpop.f32.mrb[0].mxu0
        %v3652 = vadd.f32 0.0, %v3651
        %v3653 = vpop.f32.mrb[0].mxu0
        %3654 = vdwg.mxu0
        %v3655 = vmul.f32 %v3593, 0.25
        %v3656 = vmul.f32 %v3596, 0.25
        %v3657 = vmul.f32 %v3601, 0.25
        %v3658 = vmul.f32 %v3604, 0.25
        %v3659 = vmul.f32 %v3609, 0.25
        %v3660 = vmul.f32 %v3612, 0.25
        %v3661 = vmul.f32 %v3617, 0.25
        %v3662 = vmul.f32 %v3620, 0.25
        %v3663 = vmul.f32 %v3625, 0.25
        %v3664 = vmul.f32 %v3628, 0.25
        %v3665 = vmul.f32 %v3633, 0.25
        %v3666 = vmul.f32 %v3636, 0.25
        %v3667 = vmul.f32 %v3641, 0.25
        %v3668 = vmul.f32 %v3644, 0.25
        %v3669 = vmul.f32 %v3649, 0.25
        %v3670 = vmul.f32 %v3652, 0.25
        %v3671 = vadd.f32 %v3655, %v954
        %v3672 = vadd.f32 %v3656, %v955
        %v3673 = vadd.f32 %v3657, %v956
        %v3674 = vadd.f32 %v3658, %v957
        %v3675 = vadd.f32 %v3659, %v958
        %v3676 = vadd.f32 %v3660, %v959
        %v3677 = vadd.f32 %v3661, %v960
        %v3678 = vadd.f32 %v3662, %v961
        %v3679 = vadd.f32 %v3663, %v962
        %v3680 = vadd.f32 %v3664, %v963
        %v3681 = vadd.f32 %v3665, %v964
        %v3682 = vadd.f32 %v3666, %v965
        %v3683 = vadd.f32 %v3667, %v966
        %v3684 = vadd.f32 %v3668, %v967
        %v3685 = vadd.f32 %v3669, %v968
        %v3686 = vadd.f32 %v3670, %v969
        %3687 = vmax.xlane.f32.xlu0 %v3671
        %v3688 = vpop.xlane.xlu0 %3687
        %3689 = vmax.xlane.f32.xlu0 %v3672
        %v3690 = vpop.xlane.xlu0 %3689
        %3691 = vmax.xlane.f32.xlu0 %v3673
        %v3692 = vpop.xlane.xlu0 %3691
        %3693 = vmax.xlane.f32.xlu0 %v3674
        %v3694 = vpop.xlane.xlu0 %3693
        %3695 = vmax.xlane.f32.xlu0 %v3675
        %v3696 = vpop.xlane.xlu0 %3695
        %3697 = vmax.xlane.f32.xlu0 %v3676
        %v3698 = vpop.xlane.xlu0 %3697
        %3699 = vmax.xlane.f32.xlu0 %v3677
        %v3700 = vpop.xlane.xlu0 %3699
        %3701 = vmax.xlane.f32.xlu0 %v3678
        %v3702 = vpop.xlane.xlu0 %3701
        %3703 = vmax.xlane.f32.xlu0 %v3679
        %v3704 = vpop.xlane.xlu0 %3703
        %3705 = vmax.xlane.f32.xlu0 %v3680
        %v3706 = vpop.xlane.xlu0 %3705
        %3707 = vmax.xlane.f32.xlu0 %v3681
        %v3708 = vpop.xlane.xlu0 %3707
        %3709 = vmax.xlane.f32.xlu0 %v3682
        %v3710 = vpop.xlane.xlu0 %3709
        %3711 = vmax.xlane.f32.xlu0 %v3683
        %v3712 = vpop.xlane.xlu0 %3711
        %3713 = vmax.xlane.f32.xlu0 %v3684
        %v3714 = vpop.xlane.xlu0 %3713
        %3715 = vmax.xlane.f32.xlu0 %v3685
        %v3716 = vpop.xlane.xlu0 %3715
        %3717 = vmax.xlane.f32.xlu0 %v3686
        %v3718 = vpop.xlane.xlu0 %3717
        %v3719 = vsub.f32 %v3671, %v3688
        %v3720 = vsub.f32 %v3672, %v3690
        %v3721 = vsub.f32 %v3673, %v3692
        %v3722 = vsub.f32 %v3674, %v3694
        %v3723 = vsub.f32 %v3675, %v3696
        %v3724 = vsub.f32 %v3676, %v3698
        %v3725 = vsub.f32 %v3677, %v3700
        %v3726 = vsub.f32 %v3678, %v3702
        %v3727 = vsub.f32 %v3679, %v3704
        %v3728 = vsub.f32 %v3680, %v3706
        %v3729 = vsub.f32 %v3681, %v3708
        %v3730 = vsub.f32 %v3682, %v3710
        %v3731 = vsub.f32 %v3683, %v3712
        %v3732 = vsub.f32 %v3684, %v3714
        %v3733 = vsub.f32 %v3685, %v3716
        %v3734 = vsub.f32 %v3686, %v3718
        %v3735 = vmul.f32 %v3719, 1.442695
        %v3736 = vpow.pop %v3735
        %v3737 = vmul.f32 %v3720, 1.442695
        %v3738 = vpow.pop %v3737
        %v3739 = vmul.f32 %v3721, 1.442695
        %v3740 = vpow.pop %v3739
        %v3741 = vmul.f32 %v3722, 1.442695
        %v3742 = vpow.pop %v3741
        %v3743 = vmul.f32 %v3723, 1.442695
        %v3744 = vpow.pop %v3743
        %v3745 = vmul.f32 %v3724, 1.442695
        %v3746 = vpow.pop %v3745
        %v3747 = vmul.f32 %v3725, 1.442695
        %v3748 = vpow.pop %v3747
        %v3749 = vmul.f32 %v3726, 1.442695
        %v3750 = vpow.pop %v3749
        %v3751 = vmul.f32 %v3727, 1.442695
        %v3752 = vpow.pop %v3751
        %v3753 = vmul.f32 %v3728, 1.442695
        %v3754 = vpow.pop %v3753
        %v3755 = vmul.f32 %v3729, 1.442695
        %v3756 = vpow.pop %v3755
        %v3757 = vmul.f32 %v3730, 1.442695
        %v3758 = vpow.pop %v3757
        %v3759 = vmul.f32 %v3731, 1.442695
        %v3760 = vpow.pop %v3759
        %v3761 = vmul.f32 %v3732, 1.442695
        %v3762 = vpow.pop %v3761
        %v3763 = vmul.f32 %v3733, 1.442695
        %v3764 = vpow.pop %v3763
        %v3765 = vmul.f32 %v3734, 1.442695
        %v3766 = vpow.pop %v3765
        %3767 = vadd.xlane.f32.xlu0 %v3736
        %v3768 = vpop.xlane.xlu0 %3767
        %3769 = vadd.xlane.f32.xlu0 %v3738
        %v3770 = vpop.xlane.xlu0 %3769
        %3771 = vadd.xlane.f32.xlu0 %v3740
        %v3772 = vpop.xlane.xlu0 %3771
        %3773 = vadd.xlane.f32.xlu0 %v3742
        %v3774 = vpop.xlane.xlu0 %3773
        %3775 = vadd.xlane.f32.xlu0 %v3744
        %v3776 = vpop.xlane.xlu0 %3775
        %3777 = vadd.xlane.f32.xlu0 %v3746
        %v3778 = vpop.xlane.xlu0 %3777
        %3779 = vadd.xlane.f32.xlu0 %v3748
        %v3780 = vpop.xlane.xlu0 %3779
        %3781 = vadd.xlane.f32.xlu0 %v3750
        %v3782 = vpop.xlane.xlu0 %3781
        %3783 = vadd.xlane.f32.xlu0 %v3752
        %v3784 = vpop.xlane.xlu0 %3783
        %3785 = vadd.xlane.f32.xlu0 %v3754
        %v3786 = vpop.xlane.xlu0 %3785
        %3787 = vadd.xlane.f32.xlu0 %v3756
        %v3788 = vpop.xlane.xlu0 %3787
        %3789 = vadd.xlane.f32.xlu0 %v3758
        %v3790 = vpop.xlane.xlu0 %3789
        %3791 = vadd.xlane.f32.xlu0 %v3760
        %v3792 = vpop.xlane.xlu0 %3791
        %3793 = vadd.xlane.f32.xlu0 %v3762
        %v3794 = vpop.xlane.xlu0 %3793
        %3795 = vadd.xlane.f32.xlu0 %v3764
        %v3796 = vpop.xlane.xlu0 %3795
        %3797 = vadd.xlane.f32.xlu0 %v3766
        %v3798 = vpop.xlane.xlu0 %3797
        %v3799 = vrcp.pop %v3768
        %v3800 = vrcp.pop %v3770
        %v3801 = vrcp.pop %v3772
        %v3802 = vrcp.pop %v3774
        %v3803 = vrcp.pop %v3776
        %v3804 = vrcp.pop %v3778
        %v3805 = vrcp.pop %v3780
        %v3806 = vrcp.pop %v3782
        %v3807 = vrcp.pop %v3784
        %v3808 = vrcp.pop %v3786
        %v3809 = vrcp.pop %v3788
        %v3810 = vrcp.pop %v3790
        %v3811 = vrcp.pop %v3792
        %v3812 = vrcp.pop %v3794
        %v3813 = vrcp.pop %v3796
        %v3814 = vrcp.pop %v3798
        %v3815 = vmul.f32 %v3736, %v3799
        %v3816 = vmul.f32 %v3738, %v3800
        %v3817 = vmul.f32 %v3740, %v3801
        %v3818 = vmul.f32 %v3742, %v3802
        %v3819 = vmul.f32 %v3744, %v3803
        %v3820 = vmul.f32 %v3746, %v3804
        %v3821 = vmul.f32 %v3748, %v3805
        %v3822 = vmul.f32 %v3750, %v3806
        %v3823 = vmul.f32 %v3752, %v3807
        %v3824 = vmul.f32 %v3754, %v3808
        %v3825 = vmul.f32 %v3756, %v3809
        %v3826 = vmul.f32 %v3758, %v3810
        %v3827 = vmul.f32 %v3760, %v3811
        %v3828 = vmul.f32 %v3762, %v3812
        %v3829 = vmul.f32 %v3764, %v3813
        %v3830 = vmul.f32 %v3766, %v3814
        %v3831 = vpack.c.bf16 %v3816, %v3815
        %v3832 = vpack.c.bf16 %v3818, %v3817
        %v3833 = vpack.c.bf16 %v3820, %v3819
        %v3834 = vpack.c.bf16 %v3822, %v3821
        %v3835 = vpack.c.bf16 %v3824, %v3823
        %v3836 = vpack.c.bf16 %v3826, %v3825
        %v3837 = vpack.c.bf16 %v3828, %v3827
        %v3838 = vpack.c.bf16 %v3830, %v3829
        %3839 = vrot.lane.b32.xlu0 %v3478, 64
        %v3840 = vpop.permute.xlu0 %3839
        %3841 = vrot.lane.b32.xlu0 %v3479, 64
        %v3842 = vpop.permute.xlu0 %3841
        %3843 = vrot.lane.b32.xlu0 %v3480, 64
        %v3844 = vpop.permute.xlu0 %3843
        %3845 = vrot.lane.b32.xlu0 %v3481, 64
        %v3846 = vpop.permute.xlu0 %3845
        %3847 = vrot.lane.b32.xlu0 %v3482, 64
        %v3848 = vpop.permute.xlu0 %3847
        %3849 = vrot.lane.b32.xlu0 %v3483, 64
        %v3850 = vpop.permute.xlu0 %3849
        %3851 = vrot.lane.b32.xlu0 %v3484, 64
        %v3852 = vpop.permute.xlu0 %3851
        %3853 = vrot.lane.b32.xlu0 %v3485, 64
        %v3854 = vpop.permute.xlu0 %3853
        %3863 = vmatprep.subr.bf16.mxu0 0
        %3864 = vmatpush1.bf16.msra.mxu0 %v3840
        %3865 = vmatprep.subr.bf16.mxu0 0
        %3866 = vmatpush1.bf16.msra.mxu0 %v3842
        %3867 = vmatprep.subr.bf16.mxu0 0
        %3868 = vmatpush1.bf16.msra.mxu0 %v3844
        %3869 = vmatprep.subr.bf16.mxu0 0
        %3870 = vmatpush1.bf16.msra.mxu0 %v3846
        %3871 = vmatprep.subr.bf16.mxu0 0
        %3872 = vmatpush1.bf16.msra.mxu0 %v3848
        %3873 = vmatprep.subr.bf16.mxu0 0
        %3874 = vmatpush1.bf16.msra.mxu0 %v3850
        %3875 = vmatprep.subr.bf16.mxu0 0
        %3876 = vmatpush1.bf16.msra.mxu0 %v3852
        %3877 = vmatprep.subr.bf16.mxu0 0
        %3878 = vmatpush1.bf16.msra.mxu0 %v3854
        %3879 = vmatprep.subr.bf16.mxu0 0
        %3880 = vmatpush1.bf16.msra.mxu0 0
        %3881 = vmatprep.subr.bf16.mxu0 0
        %3882 = vmatpush1.bf16.msra.mxu0 0
        %3883 = vmatprep.subr.bf16.mxu0 0
        %3884 = vmatpush1.bf16.msra.mxu0 0
        %3885 = vmatprep.subr.bf16.mxu0 0
        %3886 = vmatpush1.bf16.msra.mxu0 0
        %3887 = vmatprep.subr.bf16.mxu0 0
        %3888 = vmatpush1.bf16.msra.mxu0 0
        %3889 = vmatprep.subr.bf16.mxu0 0
        %3890 = vmatpush1.bf16.msra.mxu0 0
        %3891 = vmatprep.subr.bf16.mxu0 0
        %3892 = vmatpush1.bf16.msra.mxu0 0
        %3893 = vmatprep.subr.bf16.mxu0 0
        %3894 = vmatpush1.bf16.msra.mxu0 0
        %3895 = vmatprep.mubr.bf16.mxu0 0
        %3896 = vmatmul.mubr.bf16.gmra.mrb[0].mxu0 %v3831
        %v3897 = vpop.f32.mrb[0].mxu0
        %v3898 = vadd.f32 0.0, %v3897
        %v3899 = vpop.f32.mrb[0].mxu0
        %v3900 = vpop.f32.mrb[0].mxu0
        %v3901 = vadd.f32 0.0, %v3900
        %v3902 = vpop.f32.mrb[0].mxu0
        %3903 = vmatprep.mubr.bf16.mxu0 0
        %3904 = vmatmul.mubr.bf16.gmra.mrb[0].mxu0 %v3832
        %v3905 = vpop.f32.mrb[0].mxu0
        %v3906 = vadd.f32 0.0, %v3905
        %v3907 = vpop.f32.mrb[0].mxu0
        %v3908 = vpop.f32.mrb[0].mxu0
        %v3909 = vadd.f32 0.0, %v3908
        %v3910 = vpop.f32.mrb[0].mxu0
        %3911 = vmatprep.mubr.bf16.mxu0 0
        %3912 = vmatmul.mubr.bf16.gmra.mrb[0].mxu0 %v3833
        %v3913 = vpop.f32.mrb[0].mxu0
        %v3914 = vadd.f32 0.0, %v3913
        %v3915 = vpop.f32.mrb[0].mxu0
        %v3916 = vpop.f32.mrb[0].mxu0
        %v3917 = vadd.f32 0.0, %v3916
        %v3918 = vpop.f32.mrb[0].mxu0
        %3919 = vmatprep.mubr.bf16.mxu0 0
        %3920 = vmatmul.mubr.bf16.gmra.mrb[0].mxu0 %v3834
        %v3921 = vpop.f32.mrb[0].mxu0
        %v3922 = vadd.f32 0.0, %v3921
        %v3923 = vpop.f32.mrb[0].mxu0
        %v3924 = vpop.f32.mrb[0].mxu0
        %v3925 = vadd.f32 0.0, %v3924
        %v3926 = vpop.f32.mrb[0].mxu0
        %3927 = vmatprep.mubr.bf16.mxu0 0
        %3928 = vmatmul.mubr.bf16.gmra.mrb[0].mxu0 %v3835
        %v3929 = vpop.f32.mrb[0].mxu0
        %v3930 = vadd.f32 0.0, %v3929
        %v3931 = vpop.f32.mrb[0].mxu0
        %v3932 = vpop.f32.mrb[0].mxu0
        %v3933 = vadd.f32 0.0, %v3932
        %v3934 = vpop.f32.mrb[0].mxu0
        %3935 = vmatprep.mubr.bf16.mxu0 0
        %3936 = vmatmul.mubr.bf16.gmra.mrb[0].mxu0 %v3836
        %v3937 = vpop.f32.mrb[0].mxu0
        %v3938 = vadd.f32 0.0, %v3937
        %v3939 = vpop.f32.mrb[0].mxu0
        %v3940 = vpop.f32.mrb[0].mxu0
        %v3941 = vadd.f32 0.0, %v3940
        %v3942 = vpop.f32.mrb[0].mxu0
        %3943 = vmatprep.mubr.bf16.mxu0 0
        %3944 = vmatmul.mubr.bf16.gmra.mrb[0].mxu0 %v3837
        %v3945 = vpop.f32.mrb[0].mxu0
        %v3946 = vadd.f32 0.0, %v3945
        %v3947 = vpop.f32.mrb[0].mxu0
        %v3948 = vpop.f32.mrb[0].mxu0
        %v3949 = vadd.f32 0.0, %v3948
        %v3950 = vpop.f32.mrb[0].mxu0
        %3951 = vmatprep.mubr.bf16.mxu0 0
        %3952 = vmatmul.mubr.bf16.gmra.mrb[0].mxu0 %v3838
        %v3953 = vpop.f32.mrb[0].mxu0
        %v3954 = vadd.f32 0.0, %v3953
        %v3955 = vpop.f32.mrb[0].mxu0
        %v3956 = vpop.f32.mrb[0].mxu0
        %v3957 = vadd.f32 0.0, %v3956
        %v3958 = vpop.f32.mrb[0].mxu0
        %3959 = vdwg.mxu0
        %3960 = vrot.lane.b32.xlu0 %v3478, 112
        %v3961 = vpop.permute.xlu0 %3960
        %3962 = vrot.lane.b32.xlu0 %v3479, 112
        %v3963 = vpop.permute.xlu0 %3962
        %3964 = vrot.lane.b32.xlu0 %v3480, 112
        %v3965 = vpop.permute.xlu0 %3964
        %3966 = vrot.lane.b32.xlu0 %v3481, 112
        %v3967 = vpop.permute.xlu0 %3966
        %3968 = vrot.lane.b32.xlu0 %v3482, 112
        %v3969 = vpop.permute.xlu0 %3968
        %3970 = vrot.lane.b32.xlu0 %v3483, 112
        %v3971 = vpop.permute.xlu0 %3970
        %3972 = vrot.lane.b32.xlu0 %v3484, 112
        %v3973 = vpop.permute.xlu0 %3972
        %3974 = vrot.lane.b32.xlu0 %v3485, 112
        %v3975 = vpop.permute.xlu0 %3974
        %3976 = vrot.lane.b32.xlu0 %v3478, 80
        %v3977 = vpop.permute.xlu0 %3976
        %3978 = vrot.lane.b32.xlu0 %v3479, 80
        %v3979 = vpop.permute.xlu0 %3978
        %3980 = vrot.lane.b32.xlu0 %v3480, 80
        %v3981 = vpop.permute.xlu0 %3980
        %3982 = vrot.lane.b32.xlu0 %v3481, 80
        %v3983 = vpop.permute.xlu0 %3982
        %3984 = vrot.lane.b32.xlu0 %v3482, 80
        %v3985 = vpop.permute.xlu0 %3984
        %3986 = vrot.lane.b32.xlu0 %v3483, 80
        %v3987 = vpop.permute.xlu0 %3986
        %3988 = vrot.lane.b32.xlu0 %v3484, 80
        %v3989 = vpop.permute.xlu0 %3988
        %3990 = vrot.lane.b32.xlu0 %v3485, 80
        %v3991 = vpop.permute.xlu0 %3990
        %v3993 = vsel %vm1154, %v3961, 0
        %v3996 = vsel %vm1154, %v3963, 0
        %v3999 = vsel %vm1154, %v3965, 0
        %v4002 = vsel %vm1154, %v3967, 0
        %v4005 = vsel %vm1154, %v3969, 0
        %v4008 = vsel %vm1154, %v3971, 0
        %v4011 = vsel %vm1154, %v3973, 0
        %v4014 = vsel %vm1154, %v3975, 0
        %v4017 = vsel %vm1154, %v3977, 0
        %v4020 = vsel %vm1154, %v3979, 0
        %v4023 = vsel %vm1154, %v3981, 0
        %v4026 = vsel %vm1154, %v3983, 0
        %v4029 = vsel %vm1154, %v3985, 0
        %v4032 = vsel %vm1154, %v3987, 0
        %v4035 = vsel %vm1154, %v3989, 0
        %v4038 = vsel %vm1154, %v3991, 0
        %4040 = vmatprep.subr.bf16.mxu0 0
        %4041 = vmatpush1.bf16.xpose.msra.mxu0 %v4017
        %4042 = vmatprep.subr.bf16.mxu0 0
        %4043 = vmatpush1.bf16.xpose.msra.mxu0 %v4020
        %4044 = vmatprep.subr.bf16.mxu0 0
        %4045 = vmatpush1.bf16.xpose.msra.mxu0 %v4023
        %4046 = vmatprep.subr.bf16.mxu0 0
        %4047 = vmatpush1.bf16.xpose.msra.mxu0 %v4026
        %4048 = vmatprep.subr.bf16.mxu0 0
        %4049 = vmatpush1.bf16.xpose.msra.mxu0 %v4029
        %4050 = vmatprep.subr.bf16.mxu0 0
        %4051 = vmatpush1.bf16.xpose.msra.mxu0 %v4032
        %4052 = vmatprep.subr.bf16.mxu0 0
        %4053 = vmatpush1.bf16.xpose.msra.mxu0 %v4035
        %4054 = vmatprep.subr.bf16.mxu0 0
        %4055 = vmatpush1.bf16.xpose.msra.mxu0 %v4038
        %4056 = vmatprep.subr.bf16.mxu0 0
        %4057 = vmatpush1.bf16.xpose.msra.mxu0 0
        %4058 = vmatprep.subr.bf16.mxu0 0
        %4059 = vmatpush1.bf16.xpose.msra.mxu0 0
        %4060 = vmatprep.subr.bf16.mxu0 0
        %4061 = vmatpush1.bf16.xpose.msra.mxu0 0
        %4062 = vmatprep.subr.bf16.mxu0 0
        %4063 = vmatpush1.bf16.xpose.msra.mxu0 0
        %4064 = vmatprep.subr.bf16.mxu0 0
        %4065 = vmatpush1.bf16.xpose.msra.mxu0 0
        %4066 = vmatprep.subr.bf16.mxu0 0
        %4067 = vmatpush1.bf16.xpose.msra.mxu0 0
        %4068 = vmatprep.subr.bf16.mxu0 0
        %4069 = vmatpush1.bf16.xpose.msra.mxu0 0
        %4070 = vmatprep.subr.bf16.mxu0 0
        %4071 = vmatpush1.bf16.xpose.msra.mxu0 0
        %4072 = vmatprep.mubr.bf16.mxu0 0
        %4073 = vmatmul.mubr.bf16.gmra.mrb[0].mxu0 %v3993
        %v4074 = vpop.f32.mrb[0].mxu0
        %v4075 = vadd.f32 0.0, %v4074
        %v4076 = vpop.f32.mrb[0].mxu0
        %v4077 = vpop.f32.mrb[0].mxu0
        %v4078 = vadd.f32 0.0, %v4077
        %v4079 = vpop.f32.mrb[0].mxu0
        %4080 = vmatprep.mubr.bf16.mxu0 0
        %4081 = vmatmul.mubr.bf16.gmra.mrb[0].mxu0 %v3996
        %v4082 = vpop.f32.mrb[0].mxu0
        %v4083 = vadd.f32 0.0, %v4082
        %v4084 = vpop.f32.mrb[0].mxu0
        %v4085 = vpop.f32.mrb[0].mxu0
        %v4086 = vadd.f32 0.0, %v4085
        %v4087 = vpop.f32.mrb[0].mxu0
        %4088 = vmatprep.mubr.bf16.mxu0 0
        %4089 = vmatmul.mubr.bf16.gmra.mrb[0].mxu0 %v3999
        %v4090 = vpop.f32.mrb[0].mxu0
        %v4091 = vadd.f32 0.0, %v4090
        %v4092 = vpop.f32.mrb[0].mxu0
        %v4093 = vpop.f32.mrb[0].mxu0
        %v4094 = vadd.f32 0.0, %v4093
        %v4095 = vpop.f32.mrb[0].mxu0
        %4096 = vmatprep.mubr.bf16.mxu0 0
        %4097 = vmatmul.mubr.bf16.gmra.mrb[0].mxu0 %v4002
        %v4098 = vpop.f32.mrb[0].mxu0
        %v4099 = vadd.f32 0.0, %v4098
        %v4100 = vpop.f32.mrb[0].mxu0
        %v4101 = vpop.f32.mrb[0].mxu0
        %v4102 = vadd.f32 0.0, %v4101
        %v4103 = vpop.f32.mrb[0].mxu0
        %4104 = vmatprep.mubr.bf16.mxu0 0
        %4105 = vmatmul.mubr.bf16.gmra.mrb[0].mxu0 %v4005
        %v4106 = vpop.f32.mrb[0].mxu0
        %v4107 = vadd.f32 0.0, %v4106
        %v4108 = vpop.f32.mrb[0].mxu0
        %v4109 = vpop.f32.mrb[0].mxu0
        %v4110 = vadd.f32 0.0, %v4109
        %v4111 = vpop.f32.mrb[0].mxu0
        %4112 = vmatprep.mubr.bf16.mxu0 0
        %4113 = vmatmul.mubr.bf16.gmra.mrb[0].mxu0 %v4008
        %v4114 = vpop.f32.mrb[0].mxu0
        %v4115 = vadd.f32 0.0, %v4114
        %v4116 = vpop.f32.mrb[0].mxu0
        %v4117 = vpop.f32.mrb[0].mxu0
        %v4118 = vadd.f32 0.0, %v4117
        %v4119 = vpop.f32.mrb[0].mxu0
        %4120 = vmatprep.mubr.bf16.mxu0 0
        %4121 = vmatmul.mubr.bf16.gmra.mrb[0].mxu0 %v4011
        %v4122 = vpop.f32.mrb[0].mxu0
        %v4123 = vadd.f32 0.0, %v4122
        %v4124 = vpop.f32.mrb[0].mxu0
        %v4125 = vpop.f32.mrb[0].mxu0
        %v4126 = vadd.f32 0.0, %v4125
        %v4127 = vpop.f32.mrb[0].mxu0
        %4128 = vmatprep.mubr.bf16.mxu0 0
        %4129 = vmatmul.mubr.bf16.gmra.mrb[0].mxu0 %v4014
        %v4130 = vpop.f32.mrb[0].mxu0
        %v4131 = vadd.f32 0.0, %v4130
        %v4132 = vpop.f32.mrb[0].mxu0
        %v4133 = vpop.f32.mrb[0].mxu0
        %v4134 = vadd.f32 0.0, %v4133
        %v4135 = vpop.f32.mrb[0].mxu0
        %4136 = vdwg.mxu0
        %v4137 = vmul.f32 %v4075, 0.25
        %v4138 = vmul.f32 %v4078, 0.25
        %v4139 = vmul.f32 %v4083, 0.25
        %v4140 = vmul.f32 %v4086, 0.25
        %v4141 = vmul.f32 %v4091, 0.25
        %v4142 = vmul.f32 %v4094, 0.25
        %v4143 = vmul.f32 %v4099, 0.25
        %v4144 = vmul.f32 %v4102, 0.25
        %v4145 = vmul.f32 %v4107, 0.25
        %v4146 = vmul.f32 %v4110, 0.25
        %v4147 = vmul.f32 %v4115, 0.25
        %v4148 = vmul.f32 %v4118, 0.25
        %v4149 = vmul.f32 %v4123, 0.25
        %v4150 = vmul.f32 %v4126, 0.25
        %v4151 = vmul.f32 %v4131, 0.25
        %v4152 = vmul.f32 %v4134, 0.25
        %v4153 = vadd.f32 %v4137, %v954
        %v4154 = vadd.f32 %v4138, %v955
        %v4155 = vadd.f32 %v4139, %v956
        %v4156 = vadd.f32 %v4140, %v957
        %v4157 = vadd.f32 %v4141, %v958
        %v4158 = vadd.f32 %v4142, %v959
        %v4159 = vadd.f32 %v4143, %v960
        %v4160 = vadd.f32 %v4144, %v961
        %v4161 = vadd.f32 %v4145, %v962
        %v4162 = vadd.f32 %v4146, %v963
        %v4163 = vadd.f32 %v4147, %v964
        %v4164 = vadd.f32 %v4148, %v965
        %v4165 = vadd.f32 %v4149, %v966
        %v4166 = vadd.f32 %v4150, %v967
        %v4167 = vadd.f32 %v4151, %v968
        %v4168 = vadd.f32 %v4152, %v969
        %4169 = vmax.xlane.f32.xlu0 %v4153
        %v4170 = vpop.xlane.xlu0 %4169
        %4171 = vmax.xlane.f32.xlu0 %v4154
        %v4172 = vpop.xlane.xlu0 %4171
        %4173 = vmax.xlane.f32.xlu0 %v4155
        %v4174 = vpop.xlane.xlu0 %4173
        %4175 = vmax.xlane.f32.xlu0 %v4156
        %v4176 = vpop.xlane.xlu0 %4175
        %4177 = vmax.xlane.f32.xlu0 %v4157
        %v4178 = vpop.xlane.xlu0 %4177
        %4179 = vmax.xlane.f32.xlu0 %v4158
        %v4180 = vpop.xlane.xlu0 %4179
        %4181 = vmax.xlane.f32.xlu0 %v4159
        %v4182 = vpop.xlane.xlu0 %4181
        %4183 = vmax.xlane.f32.xlu0 %v4160
        %v4184 = vpop.xlane.xlu0 %4183
        %4185 = vmax.xlane.f32.xlu0 %v4161
        %v4186 = vpop.xlane.xlu0 %4185
        %4187 = vmax.xlane.f32.xlu0 %v4162
        %v4188 = vpop.xlane.xlu0 %4187
        %4189 = vmax.xlane.f32.xlu0 %v4163
        %v4190 = vpop.xlane.xlu0 %4189
        %4191 = vmax.xlane.f32.xlu0 %v4164
        %v4192 = vpop.xlane.xlu0 %4191
        %4193 = vmax.xlane.f32.xlu0 %v4165
        %v4194 = vpop.xlane.xlu0 %4193
        %4195 = vmax.xlane.f32.xlu0 %v4166
        %v4196 = vpop.xlane.xlu0 %4195
        %4197 = vmax.xlane.f32.xlu0 %v4167
        %v4198 = vpop.xlane.xlu0 %4197
        %4199 = vmax.xlane.f32.xlu0 %v4168
        %v4200 = vpop.xlane.xlu0 %4199
        %v4201 = vsub.f32 %v4153, %v4170
        %v4202 = vsub.f32 %v4154, %v4172
        %v4203 = vsub.f32 %v4155, %v4174
        %v4204 = vsub.f32 %v4156, %v4176
        %v4205 = vsub.f32 %v4157, %v4178
        %v4206 = vsub.f32 %v4158, %v4180
        %v4207 = vsub.f32 %v4159, %v4182
        %v4208 = vsub.f32 %v4160, %v4184
        %v4209 = vsub.f32 %v4161, %v4186
        %v4210 = vsub.f32 %v4162, %v4188
        %v4211 = vsub.f32 %v4163, %v4190
        %v4212 = vsub.f32 %v4164, %v4192
        %v4213 = vsub.f32 %v4165, %v4194
        %v4214 = vsub.f32 %v4166, %v4196
        %v4215 = vsub.f32 %v4167, %v4198
        %v4216 = vsub.f32 %v4168, %v4200
        %v4217 = vmul.f32 %v4201, 1.442695
        %v4218 = vpow.pop %v4217
        %v4219 = vmul.f32 %v4202, 1.442695
        %v4220 = vpow.pop %v4219
        %v4221 = vmul.f32 %v4203, 1.442695
        %v4222 = vpow.pop %v4221
        %v4223 = vmul.f32 %v4204, 1.442695
        %v4224 = vpow.pop %v4223
        %v4225 = vmul.f32 %v4205, 1.442695
        %v4226 = vpow.pop %v4225
        %v4227 = vmul.f32 %v4206, 1.442695
        %v4228 = vpow.pop %v4227
        %v4229 = vmul.f32 %v4207, 1.442695
        %v4230 = vpow.pop %v4229
        %v4231 = vmul.f32 %v4208, 1.442695
        %v4232 = vpow.pop %v4231
        %v4233 = vmul.f32 %v4209, 1.442695
        %v4234 = vpow.pop %v4233
        %v4235 = vmul.f32 %v4210, 1.442695
        %v4236 = vpow.pop %v4235
        %v4237 = vmul.f32 %v4211, 1.442695
        %v4238 = vpow.pop %v4237
        %v4239 = vmul.f32 %v4212, 1.442695
        %v4240 = vpow.pop %v4239
        %v4241 = vmul.f32 %v4213, 1.442695
        %v4242 = vpow.pop %v4241
        %v4243 = vmul.f32 %v4214, 1.442695
        %v4244 = vpow.pop %v4243
        %v4245 = vmul.f32 %v4215, 1.442695
        %v4246 = vpow.pop %v4245
        %v4247 = vmul.f32 %v4216, 1.442695
        %v4248 = vpow.pop %v4247
        %4249 = vadd.xlane.f32.xlu0 %v4218
        %v4250 = vpop.xlane.xlu0 %4249
        %4251 = vadd.xlane.f32.xlu0 %v4220
        %v4252 = vpop.xlane.xlu0 %4251
        %4253 = vadd.xlane.f32.xlu0 %v4222
        %v4254 = vpop.xlane.xlu0 %4253
        %4255 = vadd.xlane.f32.xlu0 %v4224
        %v4256 = vpop.xlane.xlu0 %4255
        %4257 = vadd.xlane.f32.xlu0 %v4226
        %v4258 = vpop.xlane.xlu0 %4257
        %4259 = vadd.xlane.f32.xlu0 %v4228
        %v4260 = vpop.xlane.xlu0 %4259
        %4261 = vadd.xlane.f32.xlu0 %v4230
        %v4262 = vpop.xlane.xlu0 %4261
        %4263 = vadd.xlane.f32.xlu0 %v4232
        %v4264 = vpop.xlane.xlu0 %4263
        %4265 = vadd.xlane.f32.xlu0 %v4234
        %v4266 = vpop.xlane.xlu0 %4265
        %4267 = vadd.xlane.f32.xlu0 %v4236
        %v4268 = vpop.xlane.xlu0 %4267
        %4269 = vadd.xlane.f32.xlu0 %v4238
        %v4270 = vpop.xlane.xlu0 %4269
        %4271 = vadd.xlane.f32.xlu0 %v4240
        %v4272 = vpop.xlane.xlu0 %4271
        %4273 = vadd.xlane.f32.xlu0 %v4242
        %v4274 = vpop.xlane.xlu0 %4273
        %4275 = vadd.xlane.f32.xlu0 %v4244
        %v4276 = vpop.xlane.xlu0 %4275
        %4277 = vadd.xlane.f32.xlu0 %v4246
        %v4278 = vpop.xlane.xlu0 %4277
        %4279 = vadd.xlane.f32.xlu0 %v4248
        %v4280 = vpop.xlane.xlu0 %4279
        %v4281 = vrcp.pop %v4250
        %v4282 = vrcp.pop %v4252
        %v4283 = vrcp.pop %v4254
        %v4284 = vrcp.pop %v4256
        %v4285 = vrcp.pop %v4258
        %v4286 = vrcp.pop %v4260
        %v4287 = vrcp.pop %v4262
        %v4288 = vrcp.pop %v4264
        %v4289 = vrcp.pop %v4266
        %v4290 = vrcp.pop %v4268
        %v4291 = vrcp.pop %v4270
        %v4292 = vrcp.pop %v4272
        %v4293 = vrcp.pop %v4274
        %v4294 = vrcp.pop %v4276
        %v4295 = vrcp.pop %v4278
        %v4296 = vrcp.pop %v4280
        %v4297 = vmul.f32 %v4218, %v4281
        %v4298 = vmul.f32 %v4220, %v4282
        %v4299 = vmul.f32 %v4222, %v4283
        %v4300 = vmul.f32 %v4224, %v4284
        %v4301 = vmul.f32 %v4226, %v4285
        %v4302 = vmul.f32 %v4228, %v4286
        %v4303 = vmul.f32 %v4230, %v4287
        %v4304 = vmul.f32 %v4232, %v4288
        %v4305 = vmul.f32 %v4234, %v4289
        %v4306 = vmul.f32 %v4236, %v4290
        %v4307 = vmul.f32 %v4238, %v4291
        %v4308 = vmul.f32 %v4240, %v4292
        %v4309 = vmul.f32 %v4242, %v4293
        %v4310 = vmul.f32 %v4244, %v4294
        %v4311 = vmul.f32 %v4246, %v4295
        %v4312 = vmul.f32 %v4248, %v4296
        %v4313 = vpack.c.bf16 %v4298, %v4297
        %v4314 = vpack.c.bf16 %v4300, %v4299
        %v4315 = vpack.c.bf16 %v4302, %v4301
        %v4316 = vpack.c.bf16 %v4304, %v4303
        %v4317 = vpack.c.bf16 %v4306, %v4305
        %v4318 = vpack.c.bf16 %v4308, %v4307
        %v4319 = vpack.c.bf16 %v4310, %v4309
        %v4320 = vpack.c.bf16 %v4312, %v4311
        %4321 = vrot.lane.b32.xlu0 %v3478, 48
        %v4322 = vpop.permute.xlu0 %4321
        %4323 = vrot.lane.b32.xlu0 %v3479, 48
        %v4324 = vpop.permute.xlu0 %4323
        %4325 = vrot.lane.b32.xlu0 %v3480, 48
        %v4326 = vpop.permute.xlu0 %4325
        %4327 = vrot.lane.b32.xlu0 %v3481, 48
        %v4328 = vpop.permute.xlu0 %4327
        %4329 = vrot.lane.b32.xlu0 %v3482, 48
        %v4330 = vpop.permute.xlu0 %4329
        %4331 = vrot.lane.b32.xlu0 %v3483, 48
        %v4332 = vpop.permute.xlu0 %4331
        %4333 = vrot.lane.b32.xlu0 %v3484, 48
        %v4334 = vpop.permute.xlu0 %4333
        %4335 = vrot.lane.b32.xlu0 %v3485, 48
        %v4336 = vpop.permute.xlu0 %4335
        %4345 = vmatprep.subr.bf16.mxu0 0
        %4346 = vmatpush1.bf16.msra.mxu0 %v4322
        %4347 = vmatprep.subr.bf16.mxu0 0
        %4348 = vmatpush1.bf16.msra.mxu0 %v4324
        %4349 = vmatprep.subr.bf16.mxu0 0
        %4350 = vmatpush1.bf16.msra.mxu0 %v4326
        %4351 = vmatprep.subr.bf16.mxu0 0
        %4352 = vmatpush1.bf16.msra.mxu0 %v4328
        %4353 = vmatprep.subr.bf16.mxu0 0
        %4354 = vmatpush1.bf16.msra.mxu0 %v4330
        %4355 = vmatprep.subr.bf16.mxu0 0
        %4356 = vmatpush1.bf16.msra.mxu0 %v4332
        %4357 = vmatprep.subr.bf16.mxu0 0
        %4358 = vmatpush1.bf16.msra.mxu0 %v4334
        %4359 = vmatprep.subr.bf16.mxu0 0
        %4360 = vmatpush1.bf16.msra.mxu0 %v4336
        %4361 = vmatprep.subr.bf16.mxu0 0
        %4362 = vmatpush1.bf16.msra.mxu0 0
        %4363 = vmatprep.subr.bf16.mxu0 0
        %4364 = vmatpush1.bf16.msra.mxu0 0
        %4365 = vmatprep.subr.bf16.mxu0 0
        %4366 = vmatpush1.bf16.msra.mxu0 0
        %4367 = vmatprep.subr.bf16.mxu0 0
        %4368 = vmatpush1.bf16.msra.mxu0 0
        %4369 = vmatprep.subr.bf16.mxu0 0
        %4370 = vmatpush1.bf16.msra.mxu0 0
        %4371 = vmatprep.subr.bf16.mxu0 0
        %4372 = vmatpush1.bf16.msra.mxu0 0
        %4373 = vmatprep.subr.bf16.mxu0 0
        %4374 = vmatpush1.bf16.msra.mxu0 0
        %4375 = vmatprep.subr.bf16.mxu0 0
        %4376 = vmatpush1.bf16.msra.mxu0 0
        %4377 = vmatprep.mubr.bf16.mxu0 0
        %4378 = vmatmul.mubr.bf16.gmra.mrb[0].mxu0 %v4313
        %v4379 = vpop.f32.mrb[0].mxu0
        %v4380 = vadd.f32 0.0, %v4379
        %v4381 = vpop.f32.mrb[0].mxu0
        %v4382 = vpop.f32.mrb[0].mxu0
        %v4383 = vadd.f32 0.0, %v4382
        %v4384 = vpop.f32.mrb[0].mxu0
        %4385 = vmatprep.mubr.bf16.mxu0 0
        %4386 = vmatmul.mubr.bf16.gmra.mrb[0].mxu0 %v4314
        %v4387 = vpop.f32.mrb[0].mxu0
        %v4388 = vadd.f32 0.0, %v4387
        %v4389 = vpop.f32.mrb[0].mxu0
        %v4390 = vpop.f32.mrb[0].mxu0
        %v4391 = vadd.f32 0.0, %v4390
        %v4392 = vpop.f32.mrb[0].mxu0
        %4393 = vmatprep.mubr.bf16.mxu0 0
        %4394 = vmatmul.mubr.bf16.gmra.mrb[0].mxu0 %v4315
        %v4395 = vpop.f32.mrb[0].mxu0
        %v4396 = vadd.f32 0.0, %v4395
        %v4397 = vpop.f32.mrb[0].mxu0
        %v4398 = vpop.f32.mrb[0].mxu0
        %v4399 = vadd.f32 0.0, %v4398
        %v4400 = vpop.f32.mrb[0].mxu0
        %4401 = vmatprep.mubr.bf16.mxu0 0
        %4402 = vmatmul.mubr.bf16.gmra.mrb[0].mxu0 %v4316
        %v4403 = vpop.f32.mrb[0].mxu0
        %v4404 = vadd.f32 0.0, %v4403
        %v4405 = vpop.f32.mrb[0].mxu0
        %v4406 = vpop.f32.mrb[0].mxu0
        %v4407 = vadd.f32 0.0, %v4406
        %v4408 = vpop.f32.mrb[0].mxu0
        %4409 = vmatprep.mubr.bf16.mxu0 0
        %4410 = vmatmul.mubr.bf16.gmra.mrb[0].mxu0 %v4317
        %v4411 = vpop.f32.mrb[0].mxu0
        %v4412 = vadd.f32 0.0, %v4411
        %v4413 = vpop.f32.mrb[0].mxu0
        %v4414 = vpop.f32.mrb[0].mxu0
        %v4415 = vadd.f32 0.0, %v4414
        %v4416 = vpop.f32.mrb[0].mxu0
        %4417 = vmatprep.mubr.bf16.mxu0 0
        %4418 = vmatmul.mubr.bf16.gmra.mrb[0].mxu0 %v4318
        %v4419 = vpop.f32.mrb[0].mxu0
        %v4420 = vadd.f32 0.0, %v4419
        %v4421 = vpop.f32.mrb[0].mxu0
        %v4422 = vpop.f32.mrb[0].mxu0
        %v4423 = vadd.f32 0.0, %v4422
        %v4424 = vpop.f32.mrb[0].mxu0
        %4425 = vmatprep.mubr.bf16.mxu0 0
        %4426 = vmatmul.mubr.bf16.gmra.mrb[0].mxu0 %v4319
        %v4427 = vpop.f32.mrb[0].mxu0
        %v4428 = vadd.f32 0.0, %v4427
        %v4429 = vpop.f32.mrb[0].mxu0
        %v4430 = vpop.f32.mrb[0].mxu0
        %v4431 = vadd.f32 0.0, %v4430
        %v4432 = vpop.f32.mrb[0].mxu0
        %4433 = vmatprep.mubr.bf16.mxu0 0
        %4434 = vmatmul.mubr.bf16.gmra.mrb[0].mxu0 %v4320
        %v4435 = vpop.f32.mrb[0].mxu0
        %v4436 = vadd.f32 0.0, %v4435
        %v4437 = vpop.f32.mrb[0].mxu0
        %v4438 = vpop.f32.mrb[0].mxu0
        %v4439 = vadd.f32 0.0, %v4438
        %v4440 = vpop.f32.mrb[0].mxu0
        %4441 = vdwg.mxu0
        %4458 = vrot.lane.b32.xlu0 %v4380, 16
        %v4459 = vpop.permute.xlu0 %4458
        %4460 = vrot.lane.b32.xlu0 %v4383, 16
        %v4461 = vpop.permute.xlu0 %4460
        %4462 = vrot.lane.b32.xlu0 %v4388, 16
        %v4463 = vpop.permute.xlu0 %4462
        %4464 = vrot.lane.b32.xlu0 %v4391, 16
        %v4465 = vpop.permute.xlu0 %4464
        %4466 = vrot.lane.b32.xlu0 %v4396, 16
        %v4467 = vpop.permute.xlu0 %4466
        %4468 = vrot.lane.b32.xlu0 %v4399, 16
        %v4469 = vpop.permute.xlu0 %4468
        %4470 = vrot.lane.b32.xlu0 %v4404, 16
        %v4471 = vpop.permute.xlu0 %4470
        %4472 = vrot.lane.b32.xlu0 %v4407, 16
        %v4473 = vpop.permute.xlu0 %4472
        %4474 = vrot.lane.b32.xlu0 %v4412, 16
        %v4475 = vpop.permute.xlu0 %4474
        %4476 = vrot.lane.b32.xlu0 %v4415, 16
        %v4477 = vpop.permute.xlu0 %4476
        %4478 = vrot.lane.b32.xlu0 %v4420, 16
        %v4479 = vpop.permute.xlu0 %4478
        %4480 = vrot.lane.b32.xlu0 %v4423, 16
        %v4481 = vpop.permute.xlu0 %4480
        %4482 = vrot.lane.b32.xlu0 %v4428, 16
        %v4483 = vpop.permute.xlu0 %4482
        %4484 = vrot.lane.b32.xlu0 %v4431, 16
        %v4485 = vpop.permute.xlu0 %4484
        %4486 = vrot.lane.b32.xlu0 %v4436, 16
        %v4487 = vpop.permute.xlu0 %4486
        %4488 = vrot.lane.b32.xlu0 %v4439, 16
        %v4489 = vpop.permute.xlu0 %4488
        %v4506 = vsel %vm1154, %v3898, %v4459
        %v4507 = vsel %vm1154, %v3901, %v4461
        %v4508 = vsel %vm1154, %v3906, %v4463
        %v4509 = vsel %vm1154, %v3909, %v4465
        %v4510 = vsel %vm1154, %v3914, %v4467
        %v4511 = vsel %vm1154, %v3917, %v4469
        %v4512 = vsel %vm1154, %v3922, %v4471
        %v4513 = vsel %vm1154, %v3925, %v4473
        %v4514 = vsel %vm1154, %v3930, %v4475
        %v4515 = vsel %vm1154, %v3933, %v4477
        %v4516 = vsel %vm1154, %v3938, %v4479
        %v4517 = vsel %vm1154, %v3941, %v4481
        %v4518 = vsel %vm1154, %v3946, %v4483
        %v4519 = vsel %vm1154, %v3949, %v4485
        %v4520 = vsel %vm1154, %v3954, %v4487
        %v4521 = vsel %vm1154, %v3957, %v4489
        %v4522 = vpack.c.bf16 %v4507, %v4506
        %v4523 = vpack.c.bf16 %v4509, %v4508
        %v4524 = vpack.c.bf16 %v4511, %v4510
        %v4525 = vpack.c.bf16 %v4513, %v4512
        %v4526 = vpack.c.bf16 %v4515, %v4514
        %v4527 = vpack.c.bf16 %v4517, %v4516
        %v4528 = vpack.c.bf16 %v4519, %v4518
        %v4529 = vpack.c.bf16 %v4521, %v4520
        %s4530 = scalar_lea.vmem %s8, 16
        %v4531 = vld [vmem:[%s4530] sm:$0xf]
        %v4532 = vld [vmem:[%s4530 + $0x4] sm:$0xf]
        %v4533 = vld [vmem:[%s4530 + $0x8] sm:$0xf]
        %v4534 = vld [vmem:[%s4530 + $0xc] sm:$0xf]
        %s4535 = scalar_lea.vmem %s9, 1
        %v4536 = vld [vmem:[%s4535] sm:$0x1]
        %v4538 = vlaneseq
        %v4539 = vshrl.u32 %v4538, 7
        %v4540 = vsub.s32 0, %v4539
        %v4541 = vrot.slane %v4536, %v4540
        %v4547 = vunpack.c.l.b16 %v4531
        %v4548 = vunpack.c.l.b16 %v4532
        %v4549 = vunpack.c.l.b16 %v4533
        %v4550 = vunpack.c.l.b16 %v4534
        %v4551 = vpack.c.b16 %v4548, %v4547
        %v4552 = vpack.c.b16 %v4550, %v4549
        %v4556 = vsel %vm677, %v4522, 0
        %v4559 = vsel %vm677, %v4523, 0
        %v4562 = vsel %vm677, %v4524, 0
        %v4565 = vsel %vm677, %v4525, 0
        %v4568 = vsel %vm677, %v4526, 0
        %v4571 = vsel %vm677, %v4527, 0
        %v4574 = vsel %vm677, %v4528, 0
        %v4577 = vsel %vm677, %v4529, 0
        %4579 = vmatprep.subr.bf16.mxu0 0
        %4580 = vmatpush1.bf16.msra.mxu0 %v4551
        %4581 = vmatprep.subr.bf16.mxu0 0
        %4582 = vmatpush1.bf16.msra.mxu0 %v4552
        %4583 = vmatprep.subr.bf16.mxu0 0
        %4584 = vmatpush1.bf16.msra.mxu0 0
        %4585 = vmatprep.subr.bf16.mxu0 0
        %4586 = vmatpush1.bf16.msra.mxu0 0
        %4587 = vmatprep.subr.bf16.mxu0 0
        %4588 = vmatpush1.bf16.msra.mxu0 0
        %4589 = vmatprep.subr.bf16.mxu0 0
        %4590 = vmatpush1.bf16.msra.mxu0 0
        %4591 = vmatprep.subr.bf16.mxu0 0
        %4592 = vmatpush1.bf16.msra.mxu0 0
        %4593 = vmatprep.subr.bf16.mxu0 0
        %4594 = vmatpush1.bf16.msra.mxu0 0
        %4595 = vmatprep.subr.bf16.mxu0 0
        %4596 = vmatpush1.bf16.msra.mxu0 0
        %4597 = vmatprep.subr.bf16.mxu0 0
        %4598 = vmatpush1.bf16.msra.mxu0 0
        %4599 = vmatprep.subr.bf16.mxu0 0
        %4600 = vmatpush1.bf16.msra.mxu0 0
        %4601 = vmatprep.subr.bf16.mxu0 0
        %4602 = vmatpush1.bf16.msra.mxu0 0
        %4603 = vmatprep.subr.bf16.mxu0 0
        %4604 = vmatpush1.bf16.msra.mxu0 0
        %4605 = vmatprep.subr.bf16.mxu0 0
        %4606 = vmatpush1.bf16.msra.mxu0 0
        %4607 = vmatprep.subr.bf16.mxu0 0
        %4608 = vmatpush1.bf16.msra.mxu0 0
        %4609 = vmatprep.subr.bf16.mxu0 0
        %4610 = vmatpush1.bf16.msra.mxu0 0
        %4611 = vmatprep.mubr.bf16.mxu0 0
        %4612 = vmatmul.mubr.bf16.gmra.mrb[0].mxu0 %v4556
        %v4613 = vpop.f32.mrb[0].mxu0
        %v4614 = vadd.f32 %v4541, %v4613
        %v4615 = vpop.f32.mrb[0].mxu0
        %v4616 = vpop.f32.mrb[0].mxu0
        %v4617 = vadd.f32 %v4541, %v4616
        %v4618 = vpop.f32.mrb[0].mxu0
        %4619 = vmatprep.mubr.bf16.mxu0 0
        %4620 = vmatmul.mubr.bf16.gmra.mrb[0].mxu0 %v4559
        %v4621 = vpop.f32.mrb[0].mxu0
        %v4622 = vadd.f32 %v4541, %v4621
        %v4623 = vpop.f32.mrb[0].mxu0
        %v4624 = vpop.f32.mrb[0].mxu0
        %v4625 = vadd.f32 %v4541, %v4624
        %v4626 = vpop.f32.mrb[0].mxu0
        %4627 = vmatprep.mubr.bf16.mxu0 0
        %4628 = vmatmul.mubr.bf16.gmra.mrb[0].mxu0 %v4562
        %v4629 = vpop.f32.mrb[0].mxu0
        %v4630 = vadd.f32 %v4541, %v4629
        %v4631 = vpop.f32.mrb[0].mxu0
        %v4632 = vpop.f32.mrb[0].mxu0
        %v4633 = vadd.f32 %v4541, %v4632
        %v4634 = vpop.f32.mrb[0].mxu0
        %4635 = vmatprep.mubr.bf16.mxu0 0
        %4636 = vmatmul.mubr.bf16.gmra.mrb[0].mxu0 %v4565
        %v4637 = vpop.f32.mrb[0].mxu0
        %v4638 = vadd.f32 %v4541, %v4637
        %v4639 = vpop.f32.mrb[0].mxu0
        %v4640 = vpop.f32.mrb[0].mxu0
        %v4641 = vadd.f32 %v4541, %v4640
        %v4642 = vpop.f32.mrb[0].mxu0
        %4643 = vmatprep.mubr.bf16.mxu0 0
        %4644 = vmatmul.mubr.bf16.gmra.mrb[0].mxu0 %v4568
        %v4645 = vpop.f32.mrb[0].mxu0
        %v4646 = vadd.f32 %v4541, %v4645
        %v4647 = vpop.f32.mrb[0].mxu0
        %v4648 = vpop.f32.mrb[0].mxu0
        %v4649 = vadd.f32 %v4541, %v4648
        %v4650 = vpop.f32.mrb[0].mxu0
        %4651 = vmatprep.mubr.bf16.mxu0 0
        %4652 = vmatmul.mubr.bf16.gmra.mrb[0].mxu0 %v4571
        %v4653 = vpop.f32.mrb[0].mxu0
        %v4654 = vadd.f32 %v4541, %v4653
        %v4655 = vpop.f32.mrb[0].mxu0
        %v4656 = vpop.f32.mrb[0].mxu0
        %v4657 = vadd.f32 %v4541, %v4656
        %v4658 = vpop.f32.mrb[0].mxu0
        %4659 = vmatprep.mubr.bf16.mxu0 0
        %4660 = vmatmul.mubr.bf16.gmra.mrb[0].mxu0 %v4574
        %v4661 = vpop.f32.mrb[0].mxu0
        %v4662 = vadd.f32 %v4541, %v4661
        %v4663 = vpop.f32.mrb[0].mxu0
        %v4664 = vpop.f32.mrb[0].mxu0
        %v4665 = vadd.f32 %v4541, %v4664
        %v4666 = vpop.f32.mrb[0].mxu0
        %4667 = vmatprep.mubr.bf16.mxu0 0
        %4668 = vmatmul.mubr.bf16.gmra.mrb[0].mxu0 %v4577
        %v4669 = vpop.f32.mrb[0].mxu0
        %v4670 = vadd.f32 %v4541, %v4669
        %v4671 = vpop.f32.mrb[0].mxu0
        %v4672 = vpop.f32.mrb[0].mxu0
        %v4673 = vadd.f32 %v4541, %v4672
        %v4674 = vpop.f32.mrb[0].mxu0
        %4675 = vdwg.mxu0
        %v4676 = vadd.f32 %v3308, %v4614
        %v4677 = vadd.f32 %v3309, %v4617
        %v4678 = vadd.f32 %v3310, %v4622
        %v4679 = vadd.f32 %v3311, %v4625
        %v4680 = vadd.f32 %v3312, %v4630
        %v4681 = vadd.f32 %v3313, %v4633
        %v4682 = vadd.f32 %v3314, %v4638
        %v4683 = vadd.f32 %v3315, %v4641
        %v4684 = vadd.f32 %v3316, %v4646
        %v4685 = vadd.f32 %v3317, %v4649
        %v4686 = vadd.f32 %v3318, %v4654
        %v4687 = vadd.f32 %v3319, %v4657
        %v4688 = vadd.f32 %v3320, %v4662
        %v4689 = vadd.f32 %v3321, %v4665
        %v4690 = vadd.f32 %v3322, %v4670
        %v4691 = vadd.f32 %v3323, %v4673
        %s4692 = scalar_lea.vmem %s10, 1
        %v4693 = vld [vmem:[%s4692] sm:$0x1]
        %s4694 = scalar_lea.vmem %s11, 1
        %v4695 = vld [vmem:[%s4694] sm:$0x1]
        %v4696 = vsel %vm677, %v4676, 0.0
        %4697 = vadd.xlane.f32.xlu0 %v4696
        %v4698 = vpop.xlane.xlu0 %4697
        %v4699 = vsel %vm677, %v4677, 0.0
        %4700 = vadd.xlane.f32.xlu0 %v4699
        %v4701 = vpop.xlane.xlu0 %4700
        %v4702 = vsel %vm677, %v4678, 0.0
        %4703 = vadd.xlane.f32.xlu0 %v4702
        %v4704 = vpop.xlane.xlu0 %4703
        %v4705 = vsel %vm677, %v4679, 0.0
        %4706 = vadd.xlane.f32.xlu0 %v4705
        %v4707 = vpop.xlane.xlu0 %4706
        %v4708 = vsel %vm677, %v4680, 0.0
        %4709 = vadd.xlane.f32.xlu0 %v4708
        %v4710 = vpop.xlane.xlu0 %4709
        %v4711 = vsel %vm677, %v4681, 0.0
        %4712 = vadd.xlane.f32.xlu0 %v4711
        %v4713 = vpop.xlane.xlu0 %4712
        %v4714 = vsel %vm677, %v4682, 0.0
        %4715 = vadd.xlane.f32.xlu0 %v4714
        %v4716 = vpop.xlane.xlu0 %4715
        %v4717 = vsel %vm677, %v4683, 0.0
        %4718 = vadd.xlane.f32.xlu0 %v4717
        %v4719 = vpop.xlane.xlu0 %4718
        %v4720 = vsel %vm677, %v4684, 0.0
        %4721 = vadd.xlane.f32.xlu0 %v4720
        %v4722 = vpop.xlane.xlu0 %4721
        %v4723 = vsel %vm677, %v4685, 0.0
        %4724 = vadd.xlane.f32.xlu0 %v4723
        %v4725 = vpop.xlane.xlu0 %4724
        %v4726 = vsel %vm677, %v4686, 0.0
        %4727 = vadd.xlane.f32.xlu0 %v4726
        %v4728 = vpop.xlane.xlu0 %4727
        %v4729 = vsel %vm677, %v4687, 0.0
        %4730 = vadd.xlane.f32.xlu0 %v4729
        %v4731 = vpop.xlane.xlu0 %4730
        %v4732 = vsel %vm677, %v4688, 0.0
        %4733 = vadd.xlane.f32.xlu0 %v4732
        %v4734 = vpop.xlane.xlu0 %4733
        %v4735 = vsel %vm677, %v4689, 0.0
        %4736 = vadd.xlane.f32.xlu0 %v4735
        %v4737 = vpop.xlane.xlu0 %4736
        %v4738 = vsel %vm677, %v4690, 0.0
        %4739 = vadd.xlane.f32.xlu0 %v4738
        %v4740 = vpop.xlane.xlu0 %4739
        %v4741 = vsel %vm677, %v4691, 0.0
        %4742 = vadd.xlane.f32.xlu0 %v4741
        %v4743 = vpop.xlane.xlu0 %4742
        %v4744 = vmul.f32 %v4698, %v726
        %v4745 = vmul.f32 %v4701, %v726
        %v4746 = vmul.f32 %v4704, %v726
        %v4747 = vmul.f32 %v4707, %v726
        %v4748 = vmul.f32 %v4710, %v726
        %v4749 = vmul.f32 %v4713, %v726
        %v4750 = vmul.f32 %v4716, %v726
        %v4751 = vmul.f32 %v4719, %v726
        %v4752 = vmul.f32 %v4722, %v726
        %v4753 = vmul.f32 %v4725, %v726
        %v4754 = vmul.f32 %v4728, %v726
        %v4755 = vmul.f32 %v4731, %v726
        %v4756 = vmul.f32 %v4734, %v726
        %v4757 = vmul.f32 %v4737, %v726
        %v4758 = vmul.f32 %v4740, %v726
        %v4759 = vmul.f32 %v4743, %v726
        %v4760 = vsub.f32 %v4676, %v4744
        %v4761 = vsub.f32 %v4677, %v4745
        %v4762 = vsub.f32 %v4678, %v4746
        %v4763 = vsub.f32 %v4679, %v4747
        %v4764 = vsub.f32 %v4680, %v4748
        %v4765 = vsub.f32 %v4681, %v4749
        %v4766 = vsub.f32 %v4682, %v4750
        %v4767 = vsub.f32 %v4683, %v4751
        %v4768 = vsub.f32 %v4684, %v4752
        %v4769 = vsub.f32 %v4685, %v4753
        %v4770 = vsub.f32 %v4686, %v4754
        %v4771 = vsub.f32 %v4687, %v4755
        %v4772 = vsub.f32 %v4688, %v4756
        %v4773 = vsub.f32 %v4689, %v4757
        %v4774 = vsub.f32 %v4690, %v4758
        %v4775 = vsub.f32 %v4691, %v4759
        %v4776 = vmul.f32 %v4760, %v4760
        %v4777 = vmul.f32 %v4761, %v4761
        %v4778 = vmul.f32 %v4762, %v4762
        %v4779 = vmul.f32 %v4763, %v4763
        %v4780 = vmul.f32 %v4764, %v4764
        %v4781 = vmul.f32 %v4765, %v4765
        %v4782 = vmul.f32 %v4766, %v4766
        %v4783 = vmul.f32 %v4767, %v4767
        %v4784 = vmul.f32 %v4768, %v4768
        %v4785 = vmul.f32 %v4769, %v4769
        %v4786 = vmul.f32 %v4770, %v4770
        %v4787 = vmul.f32 %v4771, %v4771
        %v4788 = vmul.f32 %v4772, %v4772
        %v4789 = vmul.f32 %v4773, %v4773
        %v4790 = vmul.f32 %v4774, %v4774
        %v4791 = vmul.f32 %v4775, %v4775
        %v4792 = vsel %vm677, %v4776, 0.0
        %4793 = vadd.xlane.f32.xlu0 %v4792
        %v4794 = vpop.xlane.xlu0 %4793
        %v4795 = vsel %vm677, %v4777, 0.0
        %4796 = vadd.xlane.f32.xlu0 %v4795
        %v4797 = vpop.xlane.xlu0 %4796
        %v4798 = vsel %vm677, %v4778, 0.0
        %4799 = vadd.xlane.f32.xlu0 %v4798
        %v4800 = vpop.xlane.xlu0 %4799
        %v4801 = vsel %vm677, %v4779, 0.0
        %4802 = vadd.xlane.f32.xlu0 %v4801
        %v4803 = vpop.xlane.xlu0 %4802
        %v4804 = vsel %vm677, %v4780, 0.0
        %4805 = vadd.xlane.f32.xlu0 %v4804
        %v4806 = vpop.xlane.xlu0 %4805
        %v4807 = vsel %vm677, %v4781, 0.0
        %4808 = vadd.xlane.f32.xlu0 %v4807
        %v4809 = vpop.xlane.xlu0 %4808
        %v4810 = vsel %vm677, %v4782, 0.0
        %4811 = vadd.xlane.f32.xlu0 %v4810
        %v4812 = vpop.xlane.xlu0 %4811
        %v4813 = vsel %vm677, %v4783, 0.0
        %4814 = vadd.xlane.f32.xlu0 %v4813
        %v4815 = vpop.xlane.xlu0 %4814
        %v4816 = vsel %vm677, %v4784, 0.0
        %4817 = vadd.xlane.f32.xlu0 %v4816
        %v4818 = vpop.xlane.xlu0 %4817
        %v4819 = vsel %vm677, %v4785, 0.0
        %4820 = vadd.xlane.f32.xlu0 %v4819
        %v4821 = vpop.xlane.xlu0 %4820
        %v4822 = vsel %vm677, %v4786, 0.0
        %4823 = vadd.xlane.f32.xlu0 %v4822
        %v4824 = vpop.xlane.xlu0 %4823
        %v4825 = vsel %vm677, %v4787, 0.0
        %4826 = vadd.xlane.f32.xlu0 %v4825
        %v4827 = vpop.xlane.xlu0 %4826
        %v4828 = vsel %vm677, %v4788, 0.0
        %4829 = vadd.xlane.f32.xlu0 %v4828
        %v4830 = vpop.xlane.xlu0 %4829
        %v4831 = vsel %vm677, %v4789, 0.0
        %4832 = vadd.xlane.f32.xlu0 %v4831
        %v4833 = vpop.xlane.xlu0 %4832
        %v4834 = vsel %vm677, %v4790, 0.0
        %4835 = vadd.xlane.f32.xlu0 %v4834
        %v4836 = vpop.xlane.xlu0 %4835
        %v4837 = vsel %vm677, %v4791, 0.0
        %4838 = vadd.xlane.f32.xlu0 %v4837
        %v4839 = vpop.xlane.xlu0 %4838
        %v4840 = vmul.f32 %v4794, %v726
        %v4841 = vmul.f32 %v4797, %v726
        %v4842 = vmul.f32 %v4800, %v726
        %v4843 = vmul.f32 %v4803, %v726
        %v4844 = vmul.f32 %v4806, %v726
        %v4845 = vmul.f32 %v4809, %v726
        %v4846 = vmul.f32 %v4812, %v726
        %v4847 = vmul.f32 %v4815, %v726
        %v4848 = vmul.f32 %v4818, %v726
        %v4849 = vmul.f32 %v4821, %v726
        %v4850 = vmul.f32 %v4824, %v726
        %v4851 = vmul.f32 %v4827, %v726
        %v4852 = vmul.f32 %v4830, %v726
        %v4853 = vmul.f32 %v4833, %v726
        %v4854 = vmul.f32 %v4836, %v726
        %v4855 = vmul.f32 %v4839, %v726
        %v4856 = vadd.f32 %v4840, 1e-12
        %v4857 = vadd.f32 %v4841, 1e-12
        %v4858 = vadd.f32 %v4842, 1e-12
        %v4859 = vadd.f32 %v4843, 1e-12
        %v4860 = vadd.f32 %v4844, 1e-12
        %v4861 = vadd.f32 %v4845, 1e-12
        %v4862 = vadd.f32 %v4846, 1e-12
        %v4863 = vadd.f32 %v4847, 1e-12
        %v4864 = vadd.f32 %v4848, 1e-12
        %v4865 = vadd.f32 %v4849, 1e-12
        %v4866 = vadd.f32 %v4850, 1e-12
        %v4867 = vadd.f32 %v4851, 1e-12
        %v4868 = vadd.f32 %v4852, 1e-12
        %v4869 = vadd.f32 %v4853, 1e-12
        %v4870 = vadd.f32 %v4854, 1e-12
        %v4871 = vadd.f32 %v4855, 1e-12
        %v4872 = vrsqrt.pop %v4856
        %v4873 = vrsqrt.pop %v4857
        %v4874 = vrsqrt.pop %v4858
        %v4875 = vrsqrt.pop %v4859
        %v4876 = vrsqrt.pop %v4860
        %v4877 = vrsqrt.pop %v4861
        %v4878 = vrsqrt.pop %v4862
        %v4879 = vrsqrt.pop %v4863
        %v4880 = vrsqrt.pop %v4864
        %v4881 = vrsqrt.pop %v4865
        %v4882 = vrsqrt.pop %v4866
        %v4883 = vrsqrt.pop %v4867
        %v4884 = vrsqrt.pop %v4868
        %v4885 = vrsqrt.pop %v4869
        %v4886 = vrsqrt.pop %v4870
        %v4887 = vrsqrt.pop %v4871
        %v4888 = vmul.f32 %v4760, %v4872
        %v4889 = vmul.f32 %v4761, %v4873
        %v4890 = vmul.f32 %v4762, %v4874
        %v4891 = vmul.f32 %v4763, %v4875
        %v4892 = vmul.f32 %v4764, %v4876
        %v4893 = vmul.f32 %v4765, %v4877
        %v4894 = vmul.f32 %v4766, %v4878
        %v4895 = vmul.f32 %v4767, %v4879
        %v4896 = vmul.f32 %v4768, %v4880
        %v4897 = vmul.f32 %v4769, %v4881
        %v4898 = vmul.f32 %v4770, %v4882
        %v4899 = vmul.f32 %v4771, %v4883
        %v4900 = vmul.f32 %v4772, %v4884
        %v4901 = vmul.f32 %v4773, %v4885
        %v4902 = vmul.f32 %v4774, %v4886
        %v4903 = vmul.f32 %v4775, %v4887
        %v4905 = vlaneseq
        %v4906 = vshrl.u32 %v4905, 7
        %v4907 = vsub.s32 0, %v4906
        %v4908 = vrot.slane %v4693, %v4907
        %v4910 = vmul.f32 %v4888, %v4908
        %v4911 = vmul.f32 %v4889, %v4908
        %v4912 = vmul.f32 %v4890, %v4908
        %v4913 = vmul.f32 %v4891, %v4908
        %v4914 = vmul.f32 %v4892, %v4908
        %v4915 = vmul.f32 %v4893, %v4908
        %v4916 = vmul.f32 %v4894, %v4908
        %v4917 = vmul.f32 %v4895, %v4908
        %v4918 = vmul.f32 %v4896, %v4908
        %v4919 = vmul.f32 %v4897, %v4908
        %v4920 = vmul.f32 %v4898, %v4908
        %v4921 = vmul.f32 %v4899, %v4908
        %v4922 = vmul.f32 %v4900, %v4908
        %v4923 = vmul.f32 %v4901, %v4908
        %v4924 = vmul.f32 %v4902, %v4908
        %v4925 = vmul.f32 %v4903, %v4908
        %v4927 = vlaneseq
        %v4928 = vshrl.u32 %v4927, 7
        %v4929 = vsub.s32 0, %v4928
        %v4930 = vrot.slane %v4695, %v4929
        %v4932 = vadd.f32 %v4910, %v4930
        %v4933 = vadd.f32 %v4911, %v4930
        %v4934 = vadd.f32 %v4912, %v4930
        %v4935 = vadd.f32 %v4913, %v4930
        %v4936 = vadd.f32 %v4914, %v4930
        %v4937 = vadd.f32 %v4915, %v4930
        %v4938 = vadd.f32 %v4916, %v4930
        %v4939 = vadd.f32 %v4917, %v4930
        %v4940 = vadd.f32 %v4918, %v4930
        %v4941 = vadd.f32 %v4919, %v4930
        %v4942 = vadd.f32 %v4920, %v4930
        %v4943 = vadd.f32 %v4921, %v4930
        %v4944 = vadd.f32 %v4922, %v4930
        %v4945 = vadd.f32 %v4923, %v4930
        %v4946 = vadd.f32 %v4924, %v4930
        %v4947 = vadd.f32 %v4925, %v4930
        %v4948 = vpack.c.bf16 %v4933, %v4932
        %v4949 = vpack.c.bf16 %v4935, %v4934
        %v4950 = vpack.c.bf16 %v4937, %v4936
        %v4951 = vpack.c.bf16 %v4939, %v4938
        %v4952 = vpack.c.bf16 %v4941, %v4940
        %v4953 = vpack.c.bf16 %v4943, %v4942
        %v4954 = vpack.c.bf16 %v4945, %v4944
        %v4955 = vpack.c.bf16 %v4947, %v4946
        %s4956 = scalar_lea.vmem %s12, 16
        %v4957 = vld [vmem:[%s4956] sm:$0xf]
        %v4958 = vld [vmem:[%s4956 + $0x4] sm:$0xf]
        %v4959 = vld [vmem:[%s4956 + $0x8] sm:$0xf]
        %v4960 = vld [vmem:[%s4956 + $0xc] sm:$0xf]
        %s4961 = scalar_lea.vmem %s13, 1
        %v4962 = vld [vmem:[%s4961] sm:$0x1]
        %v4964 = vlaneseq
        %v4965 = vshrl.u32 %v4964, 7
        %v4966 = vsub.s32 0, %v4965
        %v4967 = vrot.slane %v4962, %v4966
        %v4973 = vunpack.c.l.b16 %v4957
        %v4974 = vunpack.c.l.b16 %v4958
        %v4975 = vunpack.c.l.b16 %v4959
        %v4976 = vunpack.c.l.b16 %v4960
        %v4977 = vpack.c.b16 %v4974, %v4973
        %v4978 = vpack.c.b16 %v4976, %v4975
        %v4982 = vsel %vm677, %v4948, 0
        %v4985 = vsel %vm677, %v4949, 0
        %v4988 = vsel %vm677, %v4950, 0
        %v4991 = vsel %vm677, %v4951, 0
        %v4994 = vsel %vm677, %v4952, 0
        %v4997 = vsel %vm677, %v4953, 0
        %v5000 = vsel %vm677, %v4954, 0
        %v5003 = vsel %vm677, %v4955, 0
        %5005 = vmatprep.subr.bf16.mxu0 0
        %5006 = vmatpush1.bf16.msra.mxu0 %v4977
        %5007 = vmatprep.subr.bf16.mxu0 0
        %5008 = vmatpush1.bf16.msra.mxu0 %v4978
        %5009 = vmatprep.subr.bf16.mxu0 0
        %5010 = vmatpush1.bf16.msra.mxu0 0
        %5011 = vmatprep.subr.bf16.mxu0 0
        %5012 = vmatpush1.bf16.msra.mxu0 0
        %5013 = vmatprep.subr.bf16.mxu0 0
        %5014 = vmatpush1.bf16.msra.mxu0 0
        %5015 = vmatprep.subr.bf16.mxu0 0
        %5016 = vmatpush1.bf16.msra.mxu0 0
        %5017 = vmatprep.subr.bf16.mxu0 0
        %5018 = vmatpush1.bf16.msra.mxu0 0
        %5019 = vmatprep.subr.bf16.mxu0 0
        %5020 = vmatpush1.bf16.msra.mxu0 0
        %5021 = vmatprep.subr.bf16.mxu0 0
        %5022 = vmatpush1.bf16.msra.mxu0 0
        %5023 = vmatprep.subr.bf16.mxu0 0
        %5024 = vmatpush1.bf16.msra.mxu0 0
        %5025 = vmatprep.subr.bf16.mxu0 0
        %5026 = vmatpush1.bf16.msra.mxu0 0
        %5027 = vmatprep.subr.bf16.mxu0 0
        %5028 = vmatpush1.bf16.msra.mxu0 0
        %5029 = vmatprep.subr.bf16.mxu0 0
        %5030 = vmatpush1.bf16.msra.mxu0 0
        %5031 = vmatprep.subr.bf16.mxu0 0
        %5032 = vmatpush1.bf16.msra.mxu0 0
        %5033 = vmatprep.subr.bf16.mxu0 0
        %5034 = vmatpush1.bf16.msra.mxu0 0
        %5035 = vmatprep.subr.bf16.mxu0 0
        %5036 = vmatpush1.bf16.msra.mxu0 0
        %5037 = vmatprep.mubr.bf16.mxu0 0
        %5038 = vmatmul.mubr.bf16.gmra.mrb[0].mxu0 %v4982
        %v5039 = vpop.f32.mrb[0].mxu0
        %v5040 = vadd.f32 %v4967, %v5039
        %v5041 = vpop.f32.mrb[0].mxu0
        %v5042 = vpop.f32.mrb[0].mxu0
        %v5043 = vadd.f32 %v4967, %v5042
        %v5044 = vpop.f32.mrb[0].mxu0
        %5045 = vmatprep.mubr.bf16.mxu0 0
        %5046 = vmatmul.mubr.bf16.gmra.mrb[0].mxu0 %v4985
        %v5047 = vpop.f32.mrb[0].mxu0
        %v5048 = vadd.f32 %v4967, %v5047
        %v5049 = vpop.f32.mrb[0].mxu0
        %v5050 = vpop.f32.mrb[0].mxu0
        %v5051 = vadd.f32 %v4967, %v5050
        %v5052 = vpop.f32.mrb[0].mxu0
        %5053 = vmatprep.mubr.bf16.mxu0 0
        %5054 = vmatmul.mubr.bf16.gmra.mrb[0].mxu0 %v4988
        %v5055 = vpop.f32.mrb[0].mxu0
        %v5056 = vadd.f32 %v4967, %v5055
        %v5057 = vpop.f32.mrb[0].mxu0
        %v5058 = vpop.f32.mrb[0].mxu0
        %v5059 = vadd.f32 %v4967, %v5058
        %v5060 = vpop.f32.mrb[0].mxu0
        %5061 = vmatprep.mubr.bf16.mxu0 0
        %5062 = vmatmul.mubr.bf16.gmra.mrb[0].mxu0 %v4991
        %v5063 = vpop.f32.mrb[0].mxu0
        %v5064 = vadd.f32 %v4967, %v5063
        %v5065 = vpop.f32.mrb[0].mxu0
        %v5066 = vpop.f32.mrb[0].mxu0
        %v5067 = vadd.f32 %v4967, %v5066
        %v5068 = vpop.f32.mrb[0].mxu0
        %5069 = vmatprep.mubr.bf16.mxu0 0
        %5070 = vmatmul.mubr.bf16.gmra.mrb[0].mxu0 %v4994
        %v5071 = vpop.f32.mrb[0].mxu0
        %v5072 = vadd.f32 %v4967, %v5071
        %v5073 = vpop.f32.mrb[0].mxu0
        %v5074 = vpop.f32.mrb[0].mxu0
        %v5075 = vadd.f32 %v4967, %v5074
        %v5076 = vpop.f32.mrb[0].mxu0
        %5077 = vmatprep.mubr.bf16.mxu0 0
        %5078 = vmatmul.mubr.bf16.gmra.mrb[0].mxu0 %v4997
        %v5079 = vpop.f32.mrb[0].mxu0
        %v5080 = vadd.f32 %v4967, %v5079
        %v5081 = vpop.f32.mrb[0].mxu0
        %v5082 = vpop.f32.mrb[0].mxu0
        %v5083 = vadd.f32 %v4967, %v5082
        %v5084 = vpop.f32.mrb[0].mxu0
        %5085 = vmatprep.mubr.bf16.mxu0 0
        %5086 = vmatmul.mubr.bf16.gmra.mrb[0].mxu0 %v5000
        %v5087 = vpop.f32.mrb[0].mxu0
        %v5088 = vadd.f32 %v4967, %v5087
        %v5089 = vpop.f32.mrb[0].mxu0
        %v5090 = vpop.f32.mrb[0].mxu0
        %v5091 = vadd.f32 %v4967, %v5090
        %v5092 = vpop.f32.mrb[0].mxu0
        %5093 = vmatprep.mubr.bf16.mxu0 0
        %5094 = vmatmul.mubr.bf16.gmra.mrb[0].mxu0 %v5003
        %v5095 = vpop.f32.mrb[0].mxu0
        %v5096 = vadd.f32 %v4967, %v5095
        %v5097 = vpop.f32.mrb[0].mxu0
        %v5098 = vpop.f32.mrb[0].mxu0
        %v5099 = vadd.f32 %v4967, %v5098
        %v5100 = vpop.f32.mrb[0].mxu0
        %5101 = vdwg.mxu0
        %v5102 = vmul.f32 %v5040, %v5040
        %v5103 = vmul.f32 %v5043, %v5043
        %v5104 = vmul.f32 %v5048, %v5048
        %v5105 = vmul.f32 %v5051, %v5051
        %v5106 = vmul.f32 %v5056, %v5056
        %v5107 = vmul.f32 %v5059, %v5059
        %v5108 = vmul.f32 %v5064, %v5064
        %v5109 = vmul.f32 %v5067, %v5067
        %v5110 = vmul.f32 %v5072, %v5072
        %v5111 = vmul.f32 %v5075, %v5075
        %v5112 = vmul.f32 %v5080, %v5080
        %v5113 = vmul.f32 %v5083, %v5083
        %v5114 = vmul.f32 %v5088, %v5088
        %v5115 = vmul.f32 %v5091, %v5091
        %v5116 = vmul.f32 %v5096, %v5096
        %v5117 = vmul.f32 %v5099, %v5099
        %v5118 = vmul.f32 %v5040, %v5102
        %v5119 = vmul.f32 %v5043, %v5103
        %v5120 = vmul.f32 %v5048, %v5104
        %v5121 = vmul.f32 %v5051, %v5105
        %v5122 = vmul.f32 %v5056, %v5106
        %v5123 = vmul.f32 %v5059, %v5107
        %v5124 = vmul.f32 %v5064, %v5108
        %v5125 = vmul.f32 %v5067, %v5109
        %v5126 = vmul.f32 %v5072, %v5110
        %v5127 = vmul.f32 %v5075, %v5111
        %v5128 = vmul.f32 %v5080, %v5112
        %v5129 = vmul.f32 %v5083, %v5113
        %v5130 = vmul.f32 %v5088, %v5114
        %v5131 = vmul.f32 %v5091, %v5115
        %v5132 = vmul.f32 %v5096, %v5116
        %v5133 = vmul.f32 %v5099, %v5117
        %v5134 = vmul.f32 %v5118, 0.044715
        %v5135 = vmul.f32 %v5119, 0.044715
        %v5136 = vmul.f32 %v5120, 0.044715
        %v5137 = vmul.f32 %v5121, 0.044715
        %v5138 = vmul.f32 %v5122, 0.044715
        %v5139 = vmul.f32 %v5123, 0.044715
        %v5140 = vmul.f32 %v5124, 0.044715
        %v5141 = vmul.f32 %v5125, 0.044715
        %v5142 = vmul.f32 %v5126, 0.044715
        %v5143 = vmul.f32 %v5127, 0.044715
        %v5144 = vmul.f32 %v5128, 0.044715
        %v5145 = vmul.f32 %v5129, 0.044715
        %v5146 = vmul.f32 %v5130, 0.044715
        %v5147 = vmul.f32 %v5131, 0.044715
        %v5148 = vmul.f32 %v5132, 0.044715
        %v5149 = vmul.f32 %v5133, 0.044715
        %v5150 = vadd.f32 %v5040, %v5134
        %v5151 = vadd.f32 %v5043, %v5135
        %v5152 = vadd.f32 %v5048, %v5136
        %v5153 = vadd.f32 %v5051, %v5137
        %v5154 = vadd.f32 %v5056, %v5138
        %v5155 = vadd.f32 %v5059, %v5139
        %v5156 = vadd.f32 %v5064, %v5140
        %v5157 = vadd.f32 %v5067, %v5141
        %v5158 = vadd.f32 %v5072, %v5142
        %v5159 = vadd.f32 %v5075, %v5143
        %v5160 = vadd.f32 %v5080, %v5144
        %v5161 = vadd.f32 %v5083, %v5145
        %v5162 = vadd.f32 %v5088, %v5146
        %v5163 = vadd.f32 %v5091, %v5147
        %v5164 = vadd.f32 %v5096, %v5148
        %v5165 = vadd.f32 %v5099, %v5149
        %v5166 = vmul.f32 %v5150, 0.7978846
        %v5167 = vmul.f32 %v5151, 0.7978846
        %v5168 = vmul.f32 %v5152, 0.7978846
        %v5169 = vmul.f32 %v5153, 0.7978846
        %v5170 = vmul.f32 %v5154, 0.7978846
        %v5171 = vmul.f32 %v5155, 0.7978846
        %v5172 = vmul.f32 %v5156, 0.7978846
        %v5173 = vmul.f32 %v5157, 0.7978846
        %v5174 = vmul.f32 %v5158, 0.7978846
        %v5175 = vmul.f32 %v5159, 0.7978846
        %v5176 = vmul.f32 %v5160, 0.7978846
        %v5177 = vmul.f32 %v5161, 0.7978846
        %v5178 = vmul.f32 %v5162, 0.7978846
        %v5179 = vmul.f32 %v5163, 0.7978846
        %v5180 = vmul.f32 %v5164, 0.7978846
        %v5181 = vmul.f32 %v5165, 0.7978846
        %v5182 = vtanh.pop %v5166
        %v5183 = vtanh.pop %v5167
        %v5184 = vtanh.pop %v5168
        %v5185 = vtanh.pop %v5169
        %v5186 = vtanh.pop %v5170
        %v5187 = vtanh.pop %v5171
        %v5188 = vtanh.pop %v5172
        %v5189 = vtanh.pop %v5173
        %v5190 = vtanh.pop %v5174
        %v5191 = vtanh.pop %v5175
        %v5192 = vtanh.pop %v5176
        %v5193 = vtanh.pop %v5177
        %v5194 = vtanh.pop %v5178
        %v5195 = vtanh.pop %v5179
        %v5196 = vtanh.pop %v5180
        %v5197 = vtanh.pop %v5181
        %v5198 = vadd.f32 %v5182, 1.0
        %v5199 = vadd.f32 %v5183, 1.0
        %v5200 = vadd.f32 %v5184, 1.0
        %v5201 = vadd.f32 %v5185, 1.0
        %v5202 = vadd.f32 %v5186, 1.0
        %v5203 = vadd.f32 %v5187, 1.0
        %v5204 = vadd.f32 %v5188, 1.0
        %v5205 = vadd.f32 %v5189, 1.0
        %v5206 = vadd.f32 %v5190, 1.0
        %v5207 = vadd.f32 %v5191, 1.0
        %v5208 = vadd.f32 %v5192, 1.0
        %v5209 = vadd.f32 %v5193, 1.0
        %v5210 = vadd.f32 %v5194, 1.0
        %v5211 = vadd.f32 %v5195, 1.0
        %v5212 = vadd.f32 %v5196, 1.0
        %v5213 = vadd.f32 %v5197, 1.0
        %v5214 = vmul.f32 %v5198, 0.5
        %v5215 = vmul.f32 %v5199, 0.5
        %v5216 = vmul.f32 %v5200, 0.5
        %v5217 = vmul.f32 %v5201, 0.5
        %v5218 = vmul.f32 %v5202, 0.5
        %v5219 = vmul.f32 %v5203, 0.5
        %v5220 = vmul.f32 %v5204, 0.5
        %v5221 = vmul.f32 %v5205, 0.5
        %v5222 = vmul.f32 %v5206, 0.5
        %v5223 = vmul.f32 %v5207, 0.5
        %v5224 = vmul.f32 %v5208, 0.5
        %v5225 = vmul.f32 %v5209, 0.5
        %v5226 = vmul.f32 %v5210, 0.5
        %v5227 = vmul.f32 %v5211, 0.5
        %v5228 = vmul.f32 %v5212, 0.5
        %v5229 = vmul.f32 %v5213, 0.5
        %v5230 = vmul.f32 %v5040, %v5214
        %v5231 = vmul.f32 %v5043, %v5215
        %v5232 = vmul.f32 %v5048, %v5216
        %v5233 = vmul.f32 %v5051, %v5217
        %v5234 = vmul.f32 %v5056, %v5218
        %v5235 = vmul.f32 %v5059, %v5219
        %v5236 = vmul.f32 %v5064, %v5220
        %v5237 = vmul.f32 %v5067, %v5221
        %v5238 = vmul.f32 %v5072, %v5222
        %v5239 = vmul.f32 %v5075, %v5223
        %v5240 = vmul.f32 %v5080, %v5224
        %v5241 = vmul.f32 %v5083, %v5225
        %v5242 = vmul.f32 %v5088, %v5226
        %v5243 = vmul.f32 %v5091, %v5227
        %v5244 = vmul.f32 %v5096, %v5228
        %v5245 = vmul.f32 %v5099, %v5229
        %v5246 = vpack.c.bf16 %v5231, %v5230
        %v5247 = vpack.c.bf16 %v5233, %v5232
        %v5248 = vpack.c.bf16 %v5235, %v5234
        %v5249 = vpack.c.bf16 %v5237, %v5236
        %v5250 = vpack.c.bf16 %v5239, %v5238
        %v5251 = vpack.c.bf16 %v5241, %v5240
        %v5252 = vpack.c.bf16 %v5243, %v5242
        %v5253 = vpack.c.bf16 %v5245, %v5244
        %s5254 = scalar_lea.vmem %s14, 32
        %v5255 = vld [vmem:[%s5254] sm:$0xf]
        %v5256 = vld [vmem:[%s5254 + $0x4] sm:$0xf]
        %v5257 = vld [vmem:[%s5254 + $0x8] sm:$0xf]
        %v5258 = vld [vmem:[%s5254 + $0xc] sm:$0xf]
        %v5259 = vld [vmem:[%s5254 + $0x10] sm:$0xf]
        %v5260 = vld [vmem:[%s5254 + $0x14] sm:$0xf]
        %v5261 = vld [vmem:[%s5254 + $0x18] sm:$0xf]
        %v5262 = vld [vmem:[%s5254 + $0x1c] sm:$0xf]
        %s5263 = scalar_lea.vmem %s15, 1
        %v5264 = vld [vmem:[%s5263] sm:$0x1]
        %v5266 = vlaneseq
        %v5267 = vshrl.u32 %v5266, 7
        %v5268 = vsub.s32 0, %v5267
        %v5269 = vrot.slane %v5264, %v5268
        %v5279 = vunpack.c.l.b16 %v5255
        %v5280 = vunpack.c.l.b16 %v5256
        %v5281 = vunpack.c.l.b16 %v5257
        %v5282 = vunpack.c.l.b16 %v5258
        %v5283 = vunpack.c.l.b16 %v5259
        %v5284 = vunpack.c.l.b16 %v5260
        %v5285 = vunpack.c.l.b16 %v5261
        %v5286 = vunpack.c.l.b16 %v5262
        %v5287 = vpack.c.b16 %v5280, %v5279
        %v5288 = vpack.c.b16 %v5282, %v5281
        %v5289 = vpack.c.b16 %v5284, %v5283
        %v5290 = vpack.c.b16 %v5286, %v5285
        %v5296 = vsel %vm2932, %v5246, 0
        %v5299 = vsel %vm2932, %v5247, 0
        %v5302 = vsel %vm2932, %v5248, 0
        %v5305 = vsel %vm2932, %v5249, 0
        %v5308 = vsel %vm2932, %v5250, 0
        %v5311 = vsel %vm2932, %v5251, 0
        %v5314 = vsel %vm2932, %v5252, 0
        %v5317 = vsel %vm2932, %v5253, 0
        %5319 = vmatprep.subr.bf16.mxu0 0
        %5320 = vmatpush1.bf16.msra.mxu0 %v5287
        %5321 = vmatprep.subr.bf16.mxu0 0
        %5322 = vmatpush1.bf16.msra.mxu0 %v5288
        %5323 = vmatprep.subr.bf16.mxu0 0
        %5324 = vmatpush1.bf16.msra.mxu0 %v5289
        %5325 = vmatprep.subr.bf16.mxu0 0
        %5326 = vmatpush1.bf16.msra.mxu0 %v5290
        %5327 = vmatprep.subr.bf16.mxu0 0
        %5328 = vmatpush1.bf16.msra.mxu0 0
        %5329 = vmatprep.subr.bf16.mxu0 0
        %5330 = vmatpush1.bf16.msra.mxu0 0
        %5331 = vmatprep.subr.bf16.mxu0 0
        %5332 = vmatpush1.bf16.msra.mxu0 0
        %5333 = vmatprep.subr.bf16.mxu0 0
        %5334 = vmatpush1.bf16.msra.mxu0 0
        %5335 = vmatprep.subr.bf16.mxu0 0
        %5336 = vmatpush1.bf16.msra.mxu0 0
        %5337 = vmatprep.subr.bf16.mxu0 0
        %5338 = vmatpush1.bf16.msra.mxu0 0
        %5339 = vmatprep.subr.bf16.mxu0 0
        %5340 = vmatpush1.bf16.msra.mxu0 0
        %5341 = vmatprep.subr.bf16.mxu0 0
        %5342 = vmatpush1.bf16.msra.mxu0 0
        %5343 = vmatprep.subr.bf16.mxu0 0
        %5344 = vmatpush1.bf16.msra.mxu0 0
        %5345 = vmatprep.subr.bf16.mxu0 0
        %5346 = vmatpush1.bf16.msra.mxu0 0
        %5347 = vmatprep.subr.bf16.mxu0 0
        %5348 = vmatpush1.bf16.msra.mxu0 0
        %5349 = vmatprep.subr.bf16.mxu0 0
        %5350 = vmatpush1.bf16.msra.mxu0 0
        %5351 = vmatprep.mubr.bf16.mxu0 0
        %5352 = vmatmul.mubr.bf16.gmra.mrb[0].mxu0 %v5296
        %v5353 = vpop.f32.mrb[0].mxu0
        %v5354 = vadd.f32 %v5269, %v5353
        %v5355 = vpop.f32.mrb[0].mxu0
        %v5356 = vpop.f32.mrb[0].mxu0
        %v5357 = vadd.f32 %v5269, %v5356
        %v5358 = vpop.f32.mrb[0].mxu0
        %5359 = vmatprep.mubr.bf16.mxu0 0
        %5360 = vmatmul.mubr.bf16.gmra.mrb[0].mxu0 %v5299
        %v5361 = vpop.f32.mrb[0].mxu0
        %v5362 = vadd.f32 %v5269, %v5361
        %v5363 = vpop.f32.mrb[0].mxu0
        %v5364 = vpop.f32.mrb[0].mxu0
        %v5365 = vadd.f32 %v5269, %v5364
        %v5366 = vpop.f32.mrb[0].mxu0
        %5367 = vmatprep.mubr.bf16.mxu0 0
        %5368 = vmatmul.mubr.bf16.gmra.mrb[0].mxu0 %v5302
        %v5369 = vpop.f32.mrb[0].mxu0
        %v5370 = vadd.f32 %v5269, %v5369
        %v5371 = vpop.f32.mrb[0].mxu0
        %v5372 = vpop.f32.mrb[0].mxu0
        %v5373 = vadd.f32 %v5269, %v5372
        %v5374 = vpop.f32.mrb[0].mxu0
        %5375 = vmatprep.mubr.bf16.mxu0 0
        %5376 = vmatmul.mubr.bf16.gmra.mrb[0].mxu0 %v5305
        %v5377 = vpop.f32.mrb[0].mxu0
        %v5378 = vadd.f32 %v5269, %v5377
        %v5379 = vpop.f32.mrb[0].mxu0
        %v5380 = vpop.f32.mrb[0].mxu0
        %v5381 = vadd.f32 %v5269, %v5380
        %v5382 = vpop.f32.mrb[0].mxu0
        %5383 = vmatprep.mubr.bf16.mxu0 0
        %5384 = vmatmul.mubr.bf16.gmra.mrb[0].mxu0 %v5308
        %v5385 = vpop.f32.mrb[0].mxu0
        %v5386 = vadd.f32 %v5269, %v5385
        %v5387 = vpop.f32.mrb[0].mxu0
        %v5388 = vpop.f32.mrb[0].mxu0
        %v5389 = vadd.f32 %v5269, %v5388
        %v5390 = vpop.f32.mrb[0].mxu0
        %5391 = vmatprep.mubr.bf16.mxu0 0
        %5392 = vmatmul.mubr.bf16.gmra.mrb[0].mxu0 %v5311
        %v5393 = vpop.f32.mrb[0].mxu0
        %v5394 = vadd.f32 %v5269, %v5393
        %v5395 = vpop.f32.mrb[0].mxu0
        %v5396 = vpop.f32.mrb[0].mxu0
        %v5397 = vadd.f32 %v5269, %v5396
        %v5398 = vpop.f32.mrb[0].mxu0
        %5399 = vmatprep.mubr.bf16.mxu0 0
        %5400 = vmatmul.mubr.bf16.gmra.mrb[0].mxu0 %v5314
        %v5401 = vpop.f32.mrb[0].mxu0
        %v5402 = vadd.f32 %v5269, %v5401
        %v5403 = vpop.f32.mrb[0].mxu0
        %v5404 = vpop.f32.mrb[0].mxu0
        %v5405 = vadd.f32 %v5269, %v5404
        %v5406 = vpop.f32.mrb[0].mxu0
        %5407 = vmatprep.mubr.bf16.mxu0 0
        %5408 = vmatmul.mubr.bf16.gmra.mrb[0].mxu0 %v5317
        %v5409 = vpop.f32.mrb[0].mxu0
        %v5410 = vadd.f32 %v5269, %v5409
        %v5411 = vpop.f32.mrb[0].mxu0
        %v5412 = vpop.f32.mrb[0].mxu0
        %v5413 = vadd.f32 %v5269, %v5412
        %v5414 = vpop.f32.mrb[0].mxu0
        %5415 = vdwg.mxu0
        %v5416 = vadd.f32 %v4932, %v5354
        %v5417 = vadd.f32 %v4933, %v5357
        %v5418 = vadd.f32 %v4934, %v5362
        %v5419 = vadd.f32 %v4935, %v5365
        %v5420 = vadd.f32 %v4936, %v5370
        %v5421 = vadd.f32 %v4937, %v5373
        %v5422 = vadd.f32 %v4938, %v5378
        %v5423 = vadd.f32 %v4939, %v5381
        %v5424 = vadd.f32 %v4940, %v5386
        %v5425 = vadd.f32 %v4941, %v5389
        %v5426 = vadd.f32 %v4942, %v5394
        %v5427 = vadd.f32 %v4943, %v5397
        %v5428 = vadd.f32 %v4944, %v5402
        %v5429 = vadd.f32 %v4945, %v5405
        %v5430 = vadd.f32 %v4946, %v5410
        %v5431 = vadd.f32 %v4947, %v5413
        %s5432 = scalar_lea.vmem %s16, 1
        %v5433 = vld [vmem:[%s5432] sm:$0x1]
        %s5434 = scalar_lea.vmem %s17, 1
        %v5435 = vld [vmem:[%s5434] sm:$0x1]
        %v5436 = vsel %vm677, %v5416, 0.0
        %5437 = vadd.xlane.f32.xlu0 %v5436
        %v5438 = vpop.xlane.xlu0 %5437
        %v5439 = vsel %vm677, %v5417, 0.0
        %5440 = vadd.xlane.f32.xlu0 %v5439
        %v5441 = vpop.xlane.xlu0 %5440
        %v5442 = vsel %vm677, %v5418, 0.0
        %5443 = vadd.xlane.f32.xlu0 %v5442
        %v5444 = vpop.xlane.xlu0 %5443
        %v5445 = vsel %vm677, %v5419, 0.0
        %5446 = vadd.xlane.f32.xlu0 %v5445
        %v5447 = vpop.xlane.xlu0 %5446
        %v5448 = vsel %vm677, %v5420, 0.0
        %5449 = vadd.xlane.f32.xlu0 %v5448
        %v5450 = vpop.xlane.xlu0 %5449
        %v5451 = vsel %vm677, %v5421, 0.0
        %5452 = vadd.xlane.f32.xlu0 %v5451
        %v5453 = vpop.xlane.xlu0 %5452
        %v5454 = vsel %vm677, %v5422, 0.0
        %5455 = vadd.xlane.f32.xlu0 %v5454
        %v5456 = vpop.xlane.xlu0 %5455
        %v5457 = vsel %vm677, %v5423, 0.0
        %5458 = vadd.xlane.f32.xlu0 %v5457
        %v5459 = vpop.xlane.xlu0 %5458
        %v5460 = vsel %vm677, %v5424, 0.0
        %5461 = vadd.xlane.f32.xlu0 %v5460
        %v5462 = vpop.xlane.xlu0 %5461
        %v5463 = vsel %vm677, %v5425, 0.0
        %5464 = vadd.xlane.f32.xlu0 %v5463
        %v5465 = vpop.xlane.xlu0 %5464
        %v5466 = vsel %vm677, %v5426, 0.0
        %5467 = vadd.xlane.f32.xlu0 %v5466
        %v5468 = vpop.xlane.xlu0 %5467
        %v5469 = vsel %vm677, %v5427, 0.0
        %5470 = vadd.xlane.f32.xlu0 %v5469
        %v5471 = vpop.xlane.xlu0 %5470
        %v5472 = vsel %vm677, %v5428, 0.0
        %5473 = vadd.xlane.f32.xlu0 %v5472
        %v5474 = vpop.xlane.xlu0 %5473
        %v5475 = vsel %vm677, %v5429, 0.0
        %5476 = vadd.xlane.f32.xlu0 %v5475
        %v5477 = vpop.xlane.xlu0 %5476
        %v5478 = vsel %vm677, %v5430, 0.0
        %5479 = vadd.xlane.f32.xlu0 %v5478
        %v5480 = vpop.xlane.xlu0 %5479
        %v5481 = vsel %vm677, %v5431, 0.0
        %5482 = vadd.xlane.f32.xlu0 %v5481
        %v5483 = vpop.xlane.xlu0 %5482
        %v5484 = vmul.f32 %v5438, %v726
        %v5485 = vmul.f32 %v5441, %v726
        %v5486 = vmul.f32 %v5444, %v726
        %v5487 = vmul.f32 %v5447, %v726
        %v5488 = vmul.f32 %v5450, %v726
        %v5489 = vmul.f32 %v5453, %v726
        %v5490 = vmul.f32 %v5456, %v726
        %v5491 = vmul.f32 %v5459, %v726
        %v5492 = vmul.f32 %v5462, %v726
        %v5493 = vmul.f32 %v5465, %v726
        %v5494 = vmul.f32 %v5468, %v726
        %v5495 = vmul.f32 %v5471, %v726
        %v5496 = vmul.f32 %v5474, %v726
        %v5497 = vmul.f32 %v5477, %v726
        %v5498 = vmul.f32 %v5480, %v726
        %v5499 = vmul.f32 %v5483, %v726
        %v5500 = vsub.f32 %v5416, %v5484
        %v5501 = vsub.f32 %v5417, %v5485
        %v5502 = vsub.f32 %v5418, %v5486
        %v5503 = vsub.f32 %v5419, %v5487
        %v5504 = vsub.f32 %v5420, %v5488
        %v5505 = vsub.f32 %v5421, %v5489
        %v5506 = vsub.f32 %v5422, %v5490
        %v5507 = vsub.f32 %v5423, %v5491
        %v5508 = vsub.f32 %v5424, %v5492
        %v5509 = vsub.f32 %v5425, %v5493
        %v5510 = vsub.f32 %v5426, %v5494
        %v5511 = vsub.f32 %v5427, %v5495
        %v5512 = vsub.f32 %v5428, %v5496
        %v5513 = vsub.f32 %v5429, %v5497
        %v5514 = vsub.f32 %v5430, %v5498
        %v5515 = vsub.f32 %v5431, %v5499
        %v5516 = vmul.f32 %v5500, %v5500
        %v5517 = vmul.f32 %v5501, %v5501
        %v5518 = vmul.f32 %v5502, %v5502
        %v5519 = vmul.f32 %v5503, %v5503
        %v5520 = vmul.f32 %v5504, %v5504
        %v5521 = vmul.f32 %v5505, %v5505
        %v5522 = vmul.f32 %v5506, %v5506
        %v5523 = vmul.f32 %v5507, %v5507
        %v5524 = vmul.f32 %v5508, %v5508
        %v5525 = vmul.f32 %v5509, %v5509
        %v5526 = vmul.f32 %v5510, %v5510
        %v5527 = vmul.f32 %v5511, %v5511
        %v5528 = vmul.f32 %v5512, %v5512
        %v5529 = vmul.f32 %v5513, %v5513
        %v5530 = vmul.f32 %v5514, %v5514
        %v5531 = vmul.f32 %v5515, %v5515
        %v5532 = vsel %vm677, %v5516, 0.0
        %5533 = vadd.xlane.f32.xlu0 %v5532
        %v5534 = vpop.xlane.xlu0 %5533
        %v5535 = vsel %vm677, %v5517, 0.0
        %5536 = vadd.xlane.f32.xlu0 %v5535
        %v5537 = vpop.xlane.xlu0 %5536
        %v5538 = vsel %vm677, %v5518, 0.0
        %5539 = vadd.xlane.f32.xlu0 %v5538
        %v5540 = vpop.xlane.xlu0 %5539
        %v5541 = vsel %vm677, %v5519, 0.0
        %5542 = vadd.xlane.f32.xlu0 %v5541
        %v5543 = vpop.xlane.xlu0 %5542
        %v5544 = vsel %vm677, %v5520, 0.0
        %5545 = vadd.xlane.f32.xlu0 %v5544
        %v5546 = vpop.xlane.xlu0 %5545
        %v5547 = vsel %vm677, %v5521, 0.0
        %5548 = vadd.xlane.f32.xlu0 %v5547
        %v5549 = vpop.xlane.xlu0 %5548
        %v5550 = vsel %vm677, %v5522, 0.0
        %5551 = vadd.xlane.f32.xlu0 %v5550
        %v5552 = vpop.xlane.xlu0 %5551
        %v5553 = vsel %vm677, %v5523, 0.0
        %5554 = vadd.xlane.f32.xlu0 %v5553
        %v5555 = vpop.xlane.xlu0 %5554
        %v5556 = vsel %vm677, %v5524, 0.0
        %5557 = vadd.xlane.f32.xlu0 %v5556
        %v5558 = vpop.xlane.xlu0 %5557
        %v5559 = vsel %vm677, %v5525, 0.0
        %5560 = vadd.xlane.f32.xlu0 %v5559
        %v5561 = vpop.xlane.xlu0 %5560
        %v5562 = vsel %vm677, %v5526, 0.0
        %5563 = vadd.xlane.f32.xlu0 %v5562
        %v5564 = vpop.xlane.xlu0 %5563
        %v5565 = vsel %vm677, %v5527, 0.0
        %5566 = vadd.xlane.f32.xlu0 %v5565
        %v5567 = vpop.xlane.xlu0 %5566
        %v5568 = vsel %vm677, %v5528, 0.0
        %5569 = vadd.xlane.f32.xlu0 %v5568
        %v5570 = vpop.xlane.xlu0 %5569
        %v5571 = vsel %vm677, %v5529, 0.0
        %5572 = vadd.xlane.f32.xlu0 %v5571
        %v5573 = vpop.xlane.xlu0 %5572
        %v5574 = vsel %vm677, %v5530, 0.0
        %5575 = vadd.xlane.f32.xlu0 %v5574
        %v5576 = vpop.xlane.xlu0 %5575
        %v5577 = vsel %vm677, %v5531, 0.0
        %5578 = vadd.xlane.f32.xlu0 %v5577
        %v5579 = vpop.xlane.xlu0 %5578
        %v5580 = vmul.f32 %v5534, %v726
        %v5581 = vmul.f32 %v5537, %v726
        %v5582 = vmul.f32 %v5540, %v726
        %v5583 = vmul.f32 %v5543, %v726
        %v5584 = vmul.f32 %v5546, %v726
        %v5585 = vmul.f32 %v5549, %v726
        %v5586 = vmul.f32 %v5552, %v726
        %v5587 = vmul.f32 %v5555, %v726
        %v5588 = vmul.f32 %v5558, %v726
        %v5589 = vmul.f32 %v5561, %v726
        %v5590 = vmul.f32 %v5564, %v726
        %v5591 = vmul.f32 %v5567, %v726
        %v5592 = vmul.f32 %v5570, %v726
        %v5593 = vmul.f32 %v5573, %v726
        %v5594 = vmul.f32 %v5576, %v726
        %v5595 = vmul.f32 %v5579, %v726
        %v5596 = vadd.f32 %v5580, 1e-12
        %v5597 = vadd.f32 %v5581, 1e-12
        %v5598 = vadd.f32 %v5582, 1e-12
        %v5599 = vadd.f32 %v5583, 1e-12
        %v5600 = vadd.f32 %v5584, 1e-12
        %v5601 = vadd.f32 %v5585, 1e-12
        %v5602 = vadd.f32 %v5586, 1e-12
        %v5603 = vadd.f32 %v5587, 1e-12
        %v5604 = vadd.f32 %v5588, 1e-12
        %v5605 = vadd.f32 %v5589, 1e-12
        %v5606 = vadd.f32 %v5590, 1e-12
        %v5607 = vadd.f32 %v5591, 1e-12
        %v5608 = vadd.f32 %v5592, 1e-12
        %v5609 = vadd.f32 %v5593, 1e-12
        %v5610 = vadd.f32 %v5594, 1e-12
        %v5611 = vadd.f32 %v5595, 1e-12
        %v5612 = vrsqrt.pop %v5596
        %v5613 = vrsqrt.pop %v5597
        %v5614 = vrsqrt.pop %v5598
        %v5615 = vrsqrt.pop %v5599
        %v5616 = vrsqrt.pop %v5600
        %v5617 = vrsqrt.pop %v5601
        %v5618 = vrsqrt.pop %v5602
        %v5619 = vrsqrt.pop %v5603
        %v5620 = vrsqrt.pop %v5604
        %v5621 = vrsqrt.pop %v5605
        %v5622 = vrsqrt.pop %v5606
        %v5623 = vrsqrt.pop %v5607
        %v5624 = vrsqrt.pop %v5608
        %v5625 = vrsqrt.pop %v5609
        %v5626 = vrsqrt.pop %v5610
        %v5627 = vrsqrt.pop %v5611
        %v5628 = vmul.f32 %v5500, %v5612
        %v5629 = vmul.f32 %v5501, %v5613
        %v5630 = vmul.f32 %v5502, %v5614
        %v5631 = vmul.f32 %v5503, %v5615
        %v5632 = vmul.f32 %v5504, %v5616
        %v5633 = vmul.f32 %v5505, %v5617
        %v5634 = vmul.f32 %v5506, %v5618
        %v5635 = vmul.f32 %v5507, %v5619
        %v5636 = vmul.f32 %v5508, %v5620
        %v5637 = vmul.f32 %v5509, %v5621
        %v5638 = vmul.f32 %v5510, %v5622
        %v5639 = vmul.f32 %v5511, %v5623
        %v5640 = vmul.f32 %v5512, %v5624
        %v5641 = vmul.f32 %v5513, %v5625
        %v5642 = vmul.f32 %v5514, %v5626
        %v5643 = vmul.f32 %v5515, %v5627
        %v5645 = vlaneseq
        %v5646 = vshrl.u32 %v5645, 7
        %v5647 = vsub.s32 0, %v5646
        %v5648 = vrot.slane %v5433, %v5647
        %v5650 = vmul.f32 %v5628, %v5648
        %v5651 = vmul.f32 %v5629, %v5648
        %v5652 = vmul.f32 %v5630, %v5648
        %v5653 = vmul.f32 %v5631, %v5648
        %v5654 = vmul.f32 %v5632, %v5648
        %v5655 = vmul.f32 %v5633, %v5648
        %v5656 = vmul.f32 %v5634, %v5648
        %v5657 = vmul.f32 %v5635, %v5648
        %v5658 = vmul.f32 %v5636, %v5648
        %v5659 = vmul.f32 %v5637, %v5648
        %v5660 = vmul.f32 %v5638, %v5648
        %v5661 = vmul.f32 %v5639, %v5648
        %v5662 = vmul.f32 %v5640, %v5648
        %v5663 = vmul.f32 %v5641, %v5648
        %v5664 = vmul.f32 %v5642, %v5648
        %v5665 = vmul.f32 %v5643, %v5648
        %v5667 = vlaneseq
        %v5668 = vshrl.u32 %v5667, 7
        %v5669 = vsub.s32 0, %v5668
        %v5670 = vrot.slane %v5435, %v5669
        %v5672 = vadd.f32 %v5650, %v5670
        %v5673 = vadd.f32 %v5651, %v5670
        %v5674 = vadd.f32 %v5652, %v5670
        %v5675 = vadd.f32 %v5653, %v5670
        %v5676 = vadd.f32 %v5654, %v5670
        %v5677 = vadd.f32 %v5655, %v5670
        %v5678 = vadd.f32 %v5656, %v5670
        %v5679 = vadd.f32 %v5657, %v5670
        %v5680 = vadd.f32 %v5658, %v5670
        %v5681 = vadd.f32 %v5659, %v5670
        %v5682 = vadd.f32 %v5660, %v5670
        %v5683 = vadd.f32 %v5661, %v5670
        %v5684 = vadd.f32 %v5662, %v5670
        %v5685 = vadd.f32 %v5663, %v5670
        %v5686 = vadd.f32 %v5664, %v5670
        %v5687 = vadd.f32 %v5665, %v5670
        %v5688 = vld [vmem:[%s657] sm:$0xff]
        %5689 = vmatprep.subr.mxu0 0.0
        %5690 = vmatpush1.msra.mxu0 %v5672
        %5691 = vmatprep.subr.mxu0 0.0
        %5692 = vmatpush1.msra.mxu0 %v5673
        %5693 = vmatprep.subr.mxu0 0.0
        %5694 = vmatpush1.msra.mxu0 %v5674
        %5695 = vmatprep.subr.mxu0 0.0
        %5696 = vmatpush1.msra.mxu0 %v5675
        %5697 = vmatprep.subr.mxu0 0.0
        %5698 = vmatpush1.msra.mxu0 %v5676
        %5699 = vmatprep.subr.mxu0 0.0
        %5700 = vmatpush1.msra.mxu0 %v5677
        %5701 = vmatprep.subr.mxu0 0.0
        %5702 = vmatpush1.msra.mxu0 %v5678
        %5703 = vmatprep.subr.mxu0 0.0
        %5704 = vmatpush1.msra.mxu0 %v5679
        %5705 = vmatprep.subr.mxu0 0.0
        %5706 = vmatpush1.msra.mxu0 %v5680
        %5707 = vmatprep.subr.mxu0 0.0
        %5708 = vmatpush1.msra.mxu0 %v5681
        %5709 = vmatprep.subr.mxu0 0.0
        %5710 = vmatpush1.msra.mxu0 %v5682
        %5711 = vmatprep.subr.mxu0 0.0
        %5712 = vmatpush1.msra.mxu0 %v5683
        %5713 = vmatprep.subr.mxu0 0.0
        %5714 = vmatpush1.msra.mxu0 %v5684
        %5715 = vmatprep.subr.mxu0 0.0
        %5716 = vmatpush1.msra.mxu0 %v5685
        %5717 = vmatprep.subr.mxu0 0.0
        %5718 = vmatpush1.msra.mxu0 %v5686
        %5719 = vmatprep.subr.mxu0 0.0
        %5720 = vmatpush1.msra.mxu0 %v5687
        %5721 = vmatprep.subr.mxu0 0.0
        %5722 = vmatpush1.msra.mxu0 0.0
        %5723 = vmatprep.subr.mxu0 0.0
        %5724 = vmatpush1.msra.mxu0 0.0
        %5725 = vmatprep.subr.mxu0 0.0
        %5726 = vmatpush1.msra.mxu0 0.0
        %5727 = vmatprep.subr.mxu0 0.0
        %5728 = vmatpush1.msra.mxu0 0.0
        %5729 = vmatprep.subr.mxu0 0.0
        %5730 = vmatpush1.msra.mxu0 0.0
        %5731 = vmatprep.subr.mxu0 0.0
        %5732 = vmatpush1.msra.mxu0 0.0
        %5733 = vmatprep.subr.mxu0 0.0
        %5734 = vmatpush1.msra.mxu0 0.0
        %5735 = vmatprep.subr.mxu0 0.0
        %5736 = vmatpush1.msra.mxu0 0.0
        %5737 = vmatprep.subr.mxu0 0.0
        %5738 = vmatpush1.msra.mxu0 0.0
        %5739 = vmatprep.subr.mxu0 0.0
        %5740 = vmatpush1.msra.mxu0 0.0
        %5741 = vmatprep.subr.mxu0 0.0
        %5742 = vmatpush1.msra.mxu0 0.0
        %5743 = vmatprep.subr.mxu0 0.0
        %5744 = vmatpush1.msra.mxu0 0.0
        %5745 = vmatprep.subr.mxu0 0.0
        %5746 = vmatpush1.msra.mxu0 0.0
        %5747 = vmatprep.subr.mxu0 0.0
        %5748 = vmatpush1.msra.mxu0 0.0
        %5749 = vmatprep.subr.mxu0 0.0
        %5750 = vmatpush1.msra.mxu0 0.0
        %5751 = vmatprep.subr.mxu0 0.0
        %5752 = vmatpush1.msra.mxu0 0.0
        %5753 = vmatprep.mubr.f32.mxu0 0.0
        %5754 = vmatmul.mubr.f32.gmra.mrb[0].mxu0 %v5688
        %v5755 = vpop.f32.mrb[0].mxu0
        %v5756 = vadd.f32 0.0, %v5755
        %v5757 = vpop.f32.mrb[0].mxu0
        %5758 = vdwg.mxu0
        %v5759 = vld [vmem:[%s18] sm:$0xff]
        %v5760 = vld [vmem:[%s18 + $0x8] sm:$0xff]
        %v5761 = vld [vmem:[%s18 + $0x10] sm:$0xff]
        %v5762 = vld [vmem:[%s18 + $0x18] sm:$0xff]
        %v5763 = vld [vmem:[%s19] sm:$0x1]
        %v5765 = vlaneseq
        %v5766 = vshrl.u32 %v5765, 7
        %v5767 = vsub.s32 0, %v5766
        %v5768 = vrot.slane %v5763, %v5767
        %v5771 = vsel %vm677, %v5756, 0
        %5773 = vmatprep.subr.mxu0 0.0
        %5774 = vmatpush1.msra.mxu0 %v5759
        %5775 = vmatprep.subr.mxu0 0.0
        %5776 = vmatpush1.msra.mxu0 %v5760
        %5777 = vmatprep.subr.mxu0 0.0
        %5778 = vmatpush1.msra.mxu0 %v5761
        %5779 = vmatprep.subr.mxu0 0.0
        %5780 = vmatpush1.msra.mxu0 %v5762
        %5781 = vmatprep.subr.mxu0 0.0
        %5782 = vmatpush1.msra.mxu0 0.0
        %5783 = vmatprep.subr.mxu0 0.0
        %5784 = vmatpush1.msra.mxu0 0.0
        %5785 = vmatprep.subr.mxu0 0.0
        %5786 = vmatpush1.msra.mxu0 0.0
        %5787 = vmatprep.subr.mxu0 0.0
        %5788 = vmatpush1.msra.mxu0 0.0
        %5789 = vmatprep.subr.mxu0 0.0
        %5790 = vmatpush1.msra.mxu0 0.0
        %5791 = vmatprep.subr.mxu0 0.0
        %5792 = vmatpush1.msra.mxu0 0.0
        %5793 = vmatprep.subr.mxu0 0.0
        %5794 = vmatpush1.msra.mxu0 0.0
        %5795 = vmatprep.subr.mxu0 0.0
        %5796 = vmatpush1.msra.mxu0 0.0
        %5797 = vmatprep.subr.mxu0 0.0
        %5798 = vmatpush1.msra.mxu0 0.0
        %5799 = vmatprep.subr.mxu0 0.0
        %5800 = vmatpush1.msra.mxu0 0.0
        %5801 = vmatprep.subr.mxu0 0.0
        %5802 = vmatpush1.msra.mxu0 0.0
        %5803 = vmatprep.subr.mxu0 0.0
        %5804 = vmatpush1.msra.mxu0 0.0
        %5805 = vmatprep.subr.mxu0 0.0
        %5806 = vmatpush1.msra.mxu0 0.0
        %5807 = vmatprep.subr.mxu0 0.0
        %5808 = vmatpush1.msra.mxu0 0.0
        %5809 = vmatprep.subr.mxu0 0.0
        %5810 = vmatpush1.msra.mxu0 0.0
        %5811 = vmatprep.subr.mxu0 0.0
        %5812 = vmatpush1.msra.mxu0 0.0
        %5813 = vmatprep.subr.mxu0 0.0
        %5814 = vmatpush1.msra.mxu0 0.0
        %5815 = vmatprep.subr.mxu0 0.0
        %5816 = vmatpush1.msra.mxu0 0.0
        %5817 = vmatprep.subr.mxu0 0.0
        %5818 = vmatpush1.msra.mxu0 0.0
        %5819 = vmatprep.subr.mxu0 0.0
        %5820 = vmatpush1.msra.mxu0 0.0
        %5821 = vmatprep.subr.mxu0 0.0
        %5822 = vmatpush1.msra.mxu0 0.0
        %5823 = vmatprep.subr.mxu0 0.0
        %5824 = vmatpush1.msra.mxu0 0.0
        %5825 = vmatprep.subr.mxu0 0.0
        %5826 = vmatpush1.msra.mxu0 0.0
        %5827 = vmatprep.subr.mxu0 0.0
        %5828 = vmatpush1.msra.mxu0 0.0
        %5829 = vmatprep.subr.mxu0 0.0
        %5830 = vmatpush1.msra.mxu0 0.0
        %5831 = vmatprep.subr.mxu0 0.0
        %5832 = vmatpush1.msra.mxu0 0.0
        %5833 = vmatprep.subr.mxu0 0.0
        %5834 = vmatpush1.msra.mxu0 0.0
        %5835 = vmatprep.subr.mxu0 0.0
        %5836 = vmatpush1.msra.mxu0 0.0
        %5837 = vmatprep.mubr.f32.mxu0 0.0
        %5838 = vmatmul.mubr.f32.gmra.mrb[0].mxu0 %v5771
        %v5839 = vpop.f32.mrb[0].mxu0
        %v5840 = vadd.f32 %v5768, %v5839
        %v5841 = vpop.f32.mrb[0].mxu0
        %5842 = vdwg.mxu0
        %v5843 = vtanh.pop %v5840
        %v5844 = vlaneseq
        %v5845 = vshrl.u32 %v5844, 7
        %v5846 = vsub.s32 0, %v5845
        %v5847 = vrot.slane %v5756, %v5846
        %v5848 = vmul.f32 %v5843, %v5847
        %vm5849 = vcmask 261121
        %v5850 = vsel %vm5849, %v5848, 0.0
        %5851 = vadd.xlane.f32.xlu0 %v5850
        %v5852 = vpop.xlane.xlu0 %5851
        %v5853 = vmul.f32 %v5852, 0.17677669
        %v5855 = vlaneseq
        %v5856 = vand.u32 %v5855, 127
        %v5857 = vadd.s32 %v5856, 1
        %v5858 = vlaneseq
        %v5859 = vshrl.u32 %v5858, 7
        %v5860 = vsub.s32 %v5857, %v5859
        %v5861 = vrot.slane %v5853, %v5860
        %vm5863 = vcmask 50177
        %5864 = vst.msk [vmem:[%s645 - $0x1] sm:$0x2] %vm5863, %v5861
        %s5865 = sand.u32 %s477, 1
        %s5866 = scalar_lea.sflag [#allocation3], %s5865
        %s5867 = sand.u32 %s477, 1
        %s5868 = scalar_lea.vmem [#allocation2], %s5867
        // Predicated region
        $region101: #{retriever_forward.1} parent=99 // pred_check
          %p5869 = pneg %p487
        $region102: #{retriever_forward.1} parent=99 // pred_check_branch
          %5871 = sbr.rel (%p5869) target = $region104
        $region103: #{retriever_forward.1} parent=99 // pred_region
          %s5873 = ssub.s32 16, 16
          %5874 = vsyncadd %s5866, %s5873
          %s5875 = smul.addr %s34, 16
          %s5876 = scalar_lea.hbm %s20, %s5875
          %s5878 = sshll.u32 %s5868, 4
          %s5879 = int_to_ptr.vmem [resolvable:$true] %s5878
          %5881 = dma.vmem_to_hbm [thread:$0]  %s5879, 16, %s5876, %s5866
        $region104: #{retriever_forward.1} parent=99 // pred_fallthru
          _
      $region100: #{retriever_forward.1} parent=5 // pred_fallthru
        _
      %p5882 = scmp.le.s32.totalorder 2, %s29
      // Predicated region
      $region105: #{retriever_forward.1} parent=5 // pred_check
        %p5883 = pneg %p5882
      $region106: #{retriever_forward.1} parent=5 // pred_check_branch
        %5885 = sbr.rel (%p5883) target = $region108
      $region107: #{retriever_forward.1} parent=5 // pred_region
        %s5886 = ssub.s32 %s29, 2
        // Predicated region
        $region109: #{retriever_forward.1} parent=107 // pred_check
          %p5887 = pneg %p493
        $region110: #{retriever_forward.1} parent=107 // pred_check_branch
          %5889 = sbr.rel (%p5887) target = $region112
        $region111: #{retriever_forward.1} parent=107 // pred_region
          %s5890 = sand.u32 %s478, 1
          %s5891 = scalar_lea.sflag [#allocation3], %s5890
          %s5892 = sand.u32 %s478, 1
          %s5893 = scalar_lea.vmem [#allocation2], %s5892
          %5894 = dma.done %s5891, 16
        $region112: #{retriever_forward.1} parent=107 // pred_fallthru
          _
      $region108: #{retriever_forward.1} parent=5 // pred_fallthru
        _
    $region6: #{retriever_forward.1} parent=1 // loop_footer
      %s33 = sadd.s32 1, %s29
    $region7: #{retriever_forward.1} parent=1 // loop_footer_branch
      %28 = sbr.rel target = $region3
    $region8: #{retriever_forward.1} parent=1 // loop_exit
      _
    %5895 = vsyncpa [#allocation3], 1
    %s5896 = scalar_lea.sflag [#allocation3], 1
    %5897 = vsyncpa %s5896, 1

</llo_original>
